<compile_context>
chip_gen: v7x
topology: tpu7x:2x2x1
jax: 0.10.0
libtpu: 0.0.40
codegen_flags: <defaults>
</compile_context>

<pallas_src>
import jax
import jax.numpy as jnp
from jax.experimental import pallas as pl
from jax.experimental.pallas import tpu as pltpu

BN_EPS = 1e-5
PHASE_LEN = 125          # valid samples per batch element inside every phase
LANE = 128               # each per-batch block is padded to 128 lanes
N_STAGES = 4             # 4 x (upsample x2 + conv)  ->  2**4 = 16 output phases


# ----------------------------------------------------------------------------
# Fused kernel
# ----------------------------------------------------------------------------
def _generator_kernel(
    z_ref, w1_ref, b1_ref, g0_ref, be0_ref,
    wc0_ref, g1_ref, be1_ref,
    wc1_ref, g2_ref, be2_ref,
    wc2_ref, g3_ref, be3_ref,
    wc3_ref, g4_ref, be4_ref,
    out_ref,
):
    batch, latent = z_ref.shape
    n_cols = batch * LANE                     # lane-aligned columns per phase
    valid = float(batch * PHASE_LEN)          # valid (non-pad) columns per phase

    # ---- per-block lane position, validity + shift masks (built once) ------
    tau = jax.lax.broadcasted_iota(jnp.int32, (1, n_cols), 1) % LANE
    lane_valid = (tau < PHASE_LEN).astype(jnp.float32)          # pad-lane mask
    shift_masks = {
        q: ((tau + q >= 0) & (tau + q < PHASE_LEN)).astype(jnp.float32)
        for q in (-2, -1, 1, 2)
    }

    def batch_norm(phase_list, g_ref, be_ref):
        """Train-mode BN, single pass (sum + sum-of-squares), pad lanes masked.

        Phases partition (B, L), so masked sums over phases == PyTorch's
        per-channel batch statistics with divisor len(phase_list) * B * 125.
        """
        count = float(len(phase_list)) * valid
        s = None
        ss = None
        for p in phase_list:
            pm = p * lane_valid
            ps = jnp.sum(pm, axis=1, keepdims=True)
            pss = jnp.sum(pm * p, axis=1, keepdims=True)
            s = ps if s is None else s + ps
            ss = pss if ss is None else ss + pss
        mean = s / count
        var = ss / count - mean * mean
        scale = jax.lax.rsqrt(var + BN_EPS) * g_ref[...]
        offset = be_ref[...] - mean * scale
        return [p * scale + offset for p in phase_list]

    # ---- Linear(latent, 64*500) -> channel-major (256, B*128) --------------
    # (latent*B broadcast-FMAs on the VPU; negligible at small B.)
    per_batch = []
    for b in range(batch):
        acc = b1_ref[...]                                     # (256, 128) bias
        for d in range(latent):
            acc = acc + z_ref[b:b + 1, d:d + 1] * w1_ref[d]   # VPU broadcast-FMA
        per_batch.append(acc)
    x0 = per_batch[0] if batch == 1 else jnp.concatenate(per_batch, axis=1)

    # BatchNorm1d(256) before the first upsample.
    phases = batch_norm([x0], g0_ref, be0_ref)

    stage_refs = [
        (wc0_ref, g1_ref, be1_ref, "leaky"),
        (wc1_ref, g2_ref, be2_ref, "leaky"),
        (wc2_ref, g3_ref, be3_ref, "leaky"),
        (wc3_ref, g4_ref, be4_ref, "tanh"),
    ]

    # ---- 4 x (Upsample x2 -> Conv1d(k=9, pad=4) -> BN -> act), polyphase ----
    # conv(upsample(x)) == interleave(We @ im2col5(x), Wo @ im2col5(x)); the
    # interleave is never materialised (phase arrays of shape (C, B*128)).
    for wc_ref, g_ref, be_ref, act in stage_refs:
        p_cnt = len(phases)                                   # input phase count
        w_cat = wc_ref[...]                                   # (2*C_out, 5*C_in) bf16
        c_out = w_cat.shape[0] // 2

        slab_cache = {}

        def get_slab(delta, _phases=phases, _p=p_cnt, _cache=slab_cache):
            """Shifted bf16 view of input phase r = delta % p, shift q = delta // p."""
            r, q = delta % _p, delta // _p                    # python floor div/mod
            if (r, q) not in _cache:
                x = _phases[r]
                if q != 0:
                    # circular roll + block-validity mask == in-block shift with
                    # zero fill; pad-lane / cross-block wrap values never reach a
                    # valid output column.
                    x = pltpu.roll(x, shift=(-q) % n_cols, axis=1) * shift_masks[q]
                _cache[(r, q)] = x.astype(jnp.bfloat16)
            return _cache[(r, q)]

        # One wide-N matmul per stage: rows grouped by im2col slot j (matching
        # the folded weight layout), columns grouped by input phase h.
        # TODO(synk): on v7x, splitting this into 5 accumulating K-chunk dots
        # (one per slot) would avoid the row concat thanks to the MRB.
        x_all = jnp.concatenate(
            [jnp.concatenate([get_slab(h - 2 + j) for h in range(p_cnt)], axis=1)
             for j in range(5)],
            axis=0)                                           # (5*C_in, p_cnt*n_cols)
        y_all = jnp.dot(w_cat, x_all, preferred_element_type=jnp.float32)

        new_phases = []
        for h in range(p_cnt):
            y = y_all[:, h * n_cols:(h + 1) * n_cols]         # (2*C_out, n_cols)
            new_phases.append(y[:c_out])                      # output phase 2h
            new_phases.append(y[c_out:])                      # output phase 2h + 1

        if act == "leaky":
            phases = [
                jnp.where(p > 0.0, p, 0.2 * p)
                for p in batch_norm(new_phases, g_ref, be_ref)
            ]
        else:
            # Final stage: Conv1d(8 -> 1) -> BatchNorm1d(1) (global stats) -> Tanh.
            full = jnp.concatenate(new_phases, axis=0)        # (16, n_cols), rho order
            count = float(len(new_phases)) * valid
            fm = full * lane_valid
            s = jnp.sum(jnp.sum(fm, axis=1, keepdims=True), axis=0, keepdims=True)
            ss = jnp.sum(jnp.sum(fm * full, axis=1, keepdims=True),
                         axis=0, keepdims=True)
            mean = s / count
            var = ss / count - mean * mean
            scale = jax.lax.rsqrt(var + BN_EPS) * g_ref[...]
            out_ref[...] = jnp.tanh((full - mean) * scale + be_ref[...])


# ----------------------------------------------------------------------------
# Wrapper
# ----------------------------------------------------------------------------
def _fold_conv_weight(w):
    """(C_out, C_in, 9) Conv1d weight -> (2*C_out, 5*C_in) bf16 polyphase weight.

    Rows [0:C_out]       = even output phase: slots use taps (0+1, 2+3, 4+5, 6+7, 8).
    Rows [C_out:2*C_out] = odd  output phase: slots use taps (0, 1+2, 3+4, 5+6, 7+8).
    """
    even = jnp.concatenate(
        [w[:, :, 0] + w[:, :, 1], w[:, :, 2] + w[:, :, 3], w[:, :, 4] + w[:, :, 5],
         w[:, :, 6] + w[:, :, 7], w[:, :, 8]], axis=1)
    odd = jnp.concatenate(
        [w[:, :, 0], w[:, :, 1] + w[:, :, 2], w[:, :, 3] + w[:, :, 4],
         w[:, :, 5] + w[:, :, 6], w[:, :, 7] + w[:, :, 8]], axis=1)
    return jnp.concatenate([even, odd], axis=0).astype(jnp.bfloat16)


@jax.jit
def generator_forward(params, z):
    batch, latent = z.shape
    assert params["wc3"].shape[0] == 1, "final conv must have 1 output channel"

    pad = LANE - PHASE_LEN
    w1p = jnp.pad(params["w1"].reshape(latent, 256, PHASE_LEN),
                  ((0, 0), (0, 0), (0, pad)))                 # pad lanes stay zero
    b1p = jnp.pad(params["b1"].reshape(256, PHASE_LEN), ((0, 0), (0, pad)))

    inputs = [
        z, w1p, b1p,
        params["g0"].reshape(256, 1), params["be0"].reshape(256, 1),
    ]
    for i in range(N_STAGES):
        w = params[f"wc{i}"]                                  # (C_out, C_in, 9)
        c_out = w.shape[0]
        # Conv bias bc{i} intentionally NOT passed: a per-channel constant is
        # exactly cancelled by the batch-statistics BN that follows the conv.
        inputs += [
            _fold_conv_weight(w),
            params[f"g{i + 1}"].reshape(c_out, 1),
            params[f"be{i + 1}"].reshape(c_out, 1),
        ]

    n_phases = 2 ** N_STAGES                                  # 16
    phased = pl.pallas_call(
        _generator_kernel,
        out_shape=jax.ShapeDtypeStruct((n_phases, batch * LANE), jnp.float32),
        compiler_params=pltpu.CompilerParams(vmem_limit_bytes=32 * 1024 * 1024),
    )(*inputs)

    # De-interleave phases: out[b, 0, 16*t + rho] = phased[rho, b*128 + t], t < 125.
    out = jnp.transpose(phased.reshape(n_phases, batch, LANE), (1, 2, 0))
    out = out[:, :PHASE_LEN, :]
    return out.reshape(batch, 1, n_phases * PHASE_LEN)


# ----------------------------------------------------------------------------
# Parameter init (deterministic, PyTorch-default-like uniform ranges)
# ----------------------------------------------------------------------------
def init_params(key, latent_dim, channels):
    def uniform(k, shape, bound):
        return jax.random.uniform(k, shape, jnp.float32, -bound, bound)

    keys = jax.random.split(key, 10)
    params = {}

    bound = 1.0 / latent_dim ** 0.5
    params["w1"] = uniform(keys[0], (latent_dim, 64 * 500), bound)   # (in, out)
    params["b1"] = uniform(keys[1], (64 * 500,), bound)

    conv_shapes = [(256, 128), (128, 32), (32, 8), (8, channels)]
    for i, (cin, cout) in enumerate(conv_shapes):
        bound = 1.0 / (cin * 9) ** 0.5
        params[f"wc{i}"] = uniform(keys[2 + 2 * i], (cout, cin, 9), bound)
        params[f"bc{i}"] = uniform(keys[3 + 2 * i], (cout,), bound)

    for i, c in enumerate([256, 128, 32, 8, 1]):
        params[f"g{i}"] = jnp.ones((c,), jnp.float32)
        params[f"be{i}"] = jnp.zeros((c,), jnp.float32)
    return params


# ----------------------------------------------------------------------------
# Pure-JAX reference (for a correctness check only; includes the conv biases)
# ----------------------------------------------------------------------------
def _reference_forward(params, z):
    hi = jax.lax.Precision.HIGHEST

    def bn(x, g, b):
        mean = jnp.mean(x, axis=(0, 2), keepdims=True)
        var = jnp.mean((x - mean) ** 2, axis=(0, 2), keepdims=True)
        return ((x - mean) * jax.lax.rsqrt(var + BN_EPS) * g[None, :, None]
                + b[None, :, None])

    x = jnp.dot(z, params["w1"], precision=hi) + params["b1"][None, :]
    x = x.reshape(z.shape[0], 256, PHASE_LEN)
    x = bn(x, params["g0"], params["be0"])

    for i, act in enumerate(["leaky", "leaky", "leaky", "tanh"]):
        x = jnp.repeat(x, 2, axis=-1)                         # nearest upsample x2
        length = x.shape[-1]
        xp = jnp.pad(x, ((0, 0), (0, 0), (4, 4)))
        w = params[f"wc{i}"]
        y = params[f"bc{i}"][None, :, None]
        for k in range(9):
            y = y + jnp.einsum("oc,bcl->bol", w[:, :, k], xp[:, :, k:k + length],
                               precision=hi)
        y = bn(y, params[f"g{i + 1}"], params[f"be{i + 1}"])
        x = jnp.where(y > 0, y, 0.2 * y) if act == "leaky" else jnp.tanh(y)
    return x


if __name__ == "__main__":
    LATENT_DIM = 16   # stand-in for opt.latent_dim
    CHANNELS = 1      # stand-in for opt.channels (BatchNorm1d(1) after last conv)
    BATCH = 2

    key = jax.random.PRNGKey(0)
    pkey, zkey = jax.random.split(key)
    params = init_params(pkey, LATENT_DIM, CHANNELS)
    z = jax.random.normal(zkey, (BATCH, LATENT_DIM), jnp.float32)

    img = jax.block_until_ready(generator_forward(params, z))

    assert img.shape == (BATCH, CHANNELS, 2000), img.shape
    assert img.dtype == jnp.float32
    assert bool(jnp.all(jnp.isfinite(img)))
    assert bool(jnp.max(jnp.abs(img)) <= 1.0 + 1e-5)          # tanh output range

    ref = _reference_forward(params, z)
    err = float(jnp.max(jnp.abs(img - ref)))
    # bf16 MXU operands with f32 accumulation: post-BN activations are O(1),
    # so the end-to-end error stays well inside this tolerance.
    assert err < 5e-2, f"max abs diff vs reference: {err}"

    print("KERNEL_OK")
</pallas_src>

<mosaic_0001>
module attributes {stable_mosaic.version = 11 : i64} {
  func.func @_generator_kernel(%arg0: memref<2x16xf32, #tpu.memory_space<vmem>>, %arg1: memref<16x256x128xf32, #tpu.memory_space<vmem>>, %arg2: memref<256x128xf32, #tpu.memory_space<vmem>>, %arg3: memref<256x1xf32, #tpu.memory_space<vmem>>, %arg4: memref<256x1xf32, #tpu.memory_space<vmem>>, %arg5: memref<256x1280xbf16, #tpu.memory_space<vmem>>, %arg6: memref<128x1xf32, #tpu.memory_space<vmem>>, %arg7: memref<128x1xf32, #tpu.memory_space<vmem>>, %arg8: memref<64x640xbf16, #tpu.memory_space<vmem>>, %arg9: memref<32x1xf32, #tpu.memory_space<vmem>>, %arg10: memref<32x1xf32, #tpu.memory_space<vmem>>, %arg11: memref<16x160xbf16, #tpu.memory_space<vmem>>, %arg12: memref<8x1xf32, #tpu.memory_space<vmem>>, %arg13: memref<8x1xf32, #tpu.memory_space<vmem>>, %arg14: memref<2x40xbf16, #tpu.memory_space<vmem>>, %arg15: memref<1x1xf32, #tpu.memory_space<vmem>>, %arg16: memref<1x1xf32, #tpu.memory_space<vmem>>, %arg17: memref<16x256xf32, #tpu.memory_space<vmem>>) attributes {dimension_semantics = [], scalar_prefetch = 0 : i64, scratch_operands = 0 : i64, tpu.core_type = #tpu.core_type<tc>} {
    %0 = tpu.iota {dimensions = array<i32: 1>} : vector<1x256xi32>
    %c128_i32 = arith.constant 128 : i32
    %c0_i32 = arith.constant 0 : i32
    %1 = arith.cmpi eq, %c128_i32, %c0_i32 : i32
    %c1_i32 = arith.constant 1 : i32
    %2 = arith.select %1, %c1_i32, %c128_i32 : i32
    %3 = vector.broadcast %2 : i32 to vector<1x256xi32>
    %4 = arith.remsi %0, %3 : vector<1x256xi32>
    %c0_i32_0 = arith.constant 0 : i32
    %5 = vector.broadcast %c0_i32_0 : i32 to vector<1x256xi32>
    %6 = arith.cmpi ne, %4, %5 : vector<1x256xi32>
    %c0_i32_1 = arith.constant 0 : i32
    %7 = vector.broadcast %c0_i32_1 : i32 to vector<1x256xi32>
    %8 = arith.cmpi slt, %4, %7 : vector<1x256xi32>
    %c0_i32_2 = arith.constant 0 : i32
    %9 = arith.cmpi slt, %2, %c0_i32_2 : i32
    %10 = vector.broadcast %9 : i1 to vector<1x256xi1>
    %11 = vector.broadcast %10 : vector<1x256xi1> to vector<1x256xi1>
    %12 = arith.xori %8, %11 : vector<1x256xi1>
    %13 = arith.andi %12, %6 : vector<1x256xi1>
    %14 = vector.broadcast %2 : i32 to vector<1x256xi32>
    %15 = arith.addi %4, %14 : vector<1x256xi32>
    %16 = arith.select %13, %15, %4 : vector<1x256xi1>, vector<1x256xi32>
    %c125_i32 = arith.constant 125 : i32
    %17 = vector.broadcast %c125_i32 : i32 to vector<1x256xi32>
    %18 = arith.cmpi slt, %16, %17 : vector<1x256xi32>
    %19 = arith.extui %18 : vector<1x256xi1> to vector<1x256xi32>
    %20 = arith.sitofp %19 : vector<1x256xi32> to vector<1x256xf32>
    %c-2_i32 = arith.constant -2 : i32
    %21 = vector.broadcast %c-2_i32 : i32 to vector<1x256xi32>
    %22 = arith.addi %16, %21 : vector<1x256xi32>
    %c0_i32_3 = arith.constant 0 : i32
    %23 = vector.broadcast %c0_i32_3 : i32 to vector<1x256xi32>
    %24 = arith.cmpi sge, %22, %23 : vector<1x256xi32>
    %c-2_i32_4 = arith.constant -2 : i32
    %25 = vector.broadcast %c-2_i32_4 : i32 to vector<1x256xi32>
    %26 = arith.addi %16, %25 : vector<1x256xi32>
    %c125_i32_5 = arith.constant 125 : i32
    %27 = vector.broadcast %c125_i32_5 : i32 to vector<1x256xi32>
    %28 = arith.cmpi slt, %26, %27 : vector<1x256xi32>
    %29 = arith.andi %24, %28 : vector<1x256xi1>
    %30 = arith.extui %29 : vector<1x256xi1> to vector<1x256xi32>
    %31 = arith.sitofp %30 : vector<1x256xi32> to vector<1x256xf32>
    %c-1_i32 = arith.constant -1 : i32
    %32 = vector.broadcast %c-1_i32 : i32 to vector<1x256xi32>
    %33 = arith.addi %16, %32 : vector<1x256xi32>
    %c0_i32_6 = arith.constant 0 : i32
    %34 = vector.broadcast %c0_i32_6 : i32 to vector<1x256xi32>
    %35 = arith.cmpi sge, %33, %34 : vector<1x256xi32>
    %c-1_i32_7 = arith.constant -1 : i32
    %36 = vector.broadcast %c-1_i32_7 : i32 to vector<1x256xi32>
    %37 = arith.addi %16, %36 : vector<1x256xi32>
    %c125_i32_8 = arith.constant 125 : i32
    %38 = vector.broadcast %c125_i32_8 : i32 to vector<1x256xi32>
    %39 = arith.cmpi slt, %37, %38 : vector<1x256xi32>
    %40 = arith.andi %35, %39 : vector<1x256xi1>
    %41 = arith.extui %40 : vector<1x256xi1> to vector<1x256xi32>
    %42 = arith.sitofp %41 : vector<1x256xi32> to vector<1x256xf32>
    %c1_i32_9 = arith.constant 1 : i32
    %43 = vector.broadcast %c1_i32_9 : i32 to vector<1x256xi32>
    %44 = arith.addi %16, %43 : vector<1x256xi32>
    %c0_i32_10 = arith.constant 0 : i32
    %45 = vector.broadcast %c0_i32_10 : i32 to vector<1x256xi32>
    %46 = arith.cmpi sge, %44, %45 : vector<1x256xi32>
    %c1_i32_11 = arith.constant 1 : i32
    %47 = vector.broadcast %c1_i32_11 : i32 to vector<1x256xi32>
    %48 = arith.addi %16, %47 : vector<1x256xi32>
    %c125_i32_12 = arith.constant 125 : i32
    %49 = vector.broadcast %c125_i32_12 : i32 to vector<1x256xi32>
    %50 = arith.cmpi slt, %48, %49 : vector<1x256xi32>
    %51 = arith.andi %46, %50 : vector<1x256xi1>
    %52 = arith.extui %51 : vector<1x256xi1> to vector<1x256xi32>
    %53 = arith.sitofp %52 : vector<1x256xi32> to vector<1x256xf32>
    %c2_i32 = arith.constant 2 : i32
    %54 = vector.broadcast %c2_i32 : i32 to vector<1x256xi32>
    %55 = arith.addi %16, %54 : vector<1x256xi32>
    %c0_i32_13 = arith.constant 0 : i32
    %56 = vector.broadcast %c0_i32_13 : i32 to vector<1x256xi32>
    %57 = arith.cmpi sge, %55, %56 : vector<1x256xi32>
    %c2_i32_14 = arith.constant 2 : i32
    %58 = vector.broadcast %c2_i32_14 : i32 to vector<1x256xi32>
    %59 = arith.addi %16, %58 : vector<1x256xi32>
    %c125_i32_15 = arith.constant 125 : i32
    %60 = vector.broadcast %c125_i32_15 : i32 to vector<1x256xi32>
    %61 = arith.cmpi slt, %59, %60 : vector<1x256xi32>
    %62 = arith.andi %57, %61 : vector<1x256xi1>
    %63 = arith.extui %62 : vector<1x256xi1> to vector<1x256xi32>
    %64 = arith.sitofp %63 : vector<1x256xi32> to vector<1x256xf32>
    %c0 = arith.constant 0 : index
    %c0_16 = arith.constant 0 : index
    %65 = vector.load %arg2[%c0, %c0_16] : memref<256x128xf32, #tpu.memory_space<vmem>>, vector<256x128xf32>
    %c0_17 = arith.constant 0 : index
    %c0_18 = arith.constant 0 : index
    %66 = vector.load %arg0[%c0_17, %c0_18] : memref<2x16xf32, #tpu.memory_space<vmem>>, vector<1x1xf32>
    %c0_19 = arith.constant 0 : index
    %c0_20 = arith.constant 0 : index
    %c0_21 = arith.constant 0 : index
    %67 = vector.load %arg1[%c0_19, %c0_20, %c0_21] : memref<16x256x128xf32, #tpu.memory_space<vmem>>, vector<1x256x128xf32>
    %68 = vector.shape_cast %67 : vector<1x256x128xf32> to vector<256x128xf32>
    %69 = vector.broadcast %66 : vector<1x1xf32> to vector<256x128xf32>
    %70 = arith.mulf %69, %68 : vector<256x128xf32>
    %71 = arith.addf %65, %70 : vector<256x128xf32>
    %c0_22 = arith.constant 0 : index
    %c1 = arith.constant 1 : index
    %72 = vector.load %arg0[%c0_22, %c1] : memref<2x16xf32, #tpu.memory_space<vmem>>, vector<1x1xf32>
    %c1_23 = arith.constant 1 : index
    %c0_24 = arith.constant 0 : index
    %c0_25 = arith.constant 0 : index
    %73 = vector.load %arg1[%c1_23, %c0_24, %c0_25] : memref<16x256x128xf32, #tpu.memory_space<vmem>>, vector<1x256x128xf32>
    %74 = vector.shape_cast %73 : vector<1x256x128xf32> to vector<256x128xf32>
    %75 = vector.broadcast %72 : vector<1x1xf32> to vector<256x128xf32>
    %76 = arith.mulf %75, %74 : vector<256x128xf32>
    %77 = arith.addf %71, %76 : vector<256x128xf32>
    %c0_26 = arith.constant 0 : index
    %c2 = arith.constant 2 : index
    %78 = vector.load %arg0[%c0_26, %c2] : memref<2x16xf32, #tpu.memory_space<vmem>>, vector<1x1xf32>
    %c2_27 = arith.constant 2 : index
    %c0_28 = arith.constant 0 : index
    %c0_29 = arith.constant 0 : index
    %79 = vector.load %arg1[%c2_27, %c0_28, %c0_29] : memref<16x256x128xf32, #tpu.memory_space<vmem>>, vector<1x256x128xf32>
    %80 = vector.shape_cast %79 : vector<1x256x128xf32> to vector<256x128xf32>
    %81 = vector.broadcast %78 : vector<1x1xf32> to vector<256x128xf32>
    %82 = arith.mulf %81, %80 : vector<256x128xf32>
    %83 = arith.addf %77, %82 : vector<256x128xf32>
    %c0_30 = arith.constant 0 : index
    %c3 = arith.constant 3 : index
    %84 = vector.load %arg0[%c0_30, %c3] : memref<2x16xf32, #tpu.memory_space<vmem>>, vector<1x1xf32>
    %c3_31 = arith.constant 3 : index
    %c0_32 = arith.constant 0 : index
    %c0_33 = arith.constant 0 : index
    %85 = vector.load %arg1[%c3_31, %c0_32, %c0_33] : memref<16x256x128xf32, #tpu.memory_space<vmem>>, vector<1x256x128xf32>
    %86 = vector.shape_cast %85 : vector<1x256x128xf32> to vector<256x128xf32>
    %87 = vector.broadcast %84 : vector<1x1xf32> to vector<256x128xf32>
    %88 = arith.mulf %87, %86 : vector<256x128xf32>
    %89 = arith.addf %83, %88 : vector<256x128xf32>
    %c0_34 = arith.constant 0 : index
    %c4 = arith.constant 4 : index
    %90 = vector.load %arg0[%c0_34, %c4] : memref<2x16xf32, #tpu.memory_space<vmem>>, vector<1x1xf32>
    %c4_35 = arith.constant 4 : index
    %c0_36 = arith.constant 0 : index
    %c0_37 = arith.constant 0 : index
    %91 = vector.load %arg1[%c4_35, %c0_36, %c0_37] : memref<16x256x128xf32, #tpu.memory_space<vmem>>, vector<1x256x128xf32>
    %92 = vector.shape_cast %91 : vector<1x256x128xf32> to vector<256x128xf32>
    %93 = vector.broadcast %90 : vector<1x1xf32> to vector<256x128xf32>
    %94 = arith.mulf %93, %92 : vector<256x128xf32>
    %95 = arith.addf %89, %94 : vector<256x128xf32>
    %c0_38 = arith.constant 0 : index
    %c5 = arith.constant 5 : index
    %96 = vector.load %arg0[%c0_38, %c5] : memref<2x16xf32, #tpu.memory_space<vmem>>, vector<1x1xf32>
    %c5_39 = arith.constant 5 : index
    %c0_40 = arith.constant 0 : index
    %c0_41 = arith.constant 0 : index
    %97 = vector.load %arg1[%c5_39, %c0_40, %c0_41] : memref<16x256x128xf32, #tpu.memory_space<vmem>>, vector<1x256x128xf32>
    %98 = vector.shape_cast %97 : vector<1x256x128xf32> to vector<256x128xf32>
    %99 = vector.broadcast %96 : vector<1x1xf32> to vector<256x128xf32>
    %100 = arith.mulf %99, %98 : vector<256x128xf32>
    %101 = arith.addf %95, %100 : vector<256x128xf32>
    %c0_42 = arith.constant 0 : index
    %c6 = arith.constant 6 : index
    %102 = vector.load %arg0[%c0_42, %c6] : memref<2x16xf32, #tpu.memory_space<vmem>>, vector<1x1xf32>
    %c6_43 = arith.constant 6 : index
    %c0_44 = arith.constant 0 : index
    %c0_45 = arith.constant 0 : index
    %103 = vector.load %arg1[%c6_43, %c0_44, %c0_45] : memref<16x256x128xf32, #tpu.memory_space<vmem>>, vector<1x256x128xf32>
    %104 = vector.shape_cast %103 : vector<1x256x128xf32> to vector<256x128xf32>
    %105 = vector.broadcast %102 : vector<1x1xf32> to vector<256x128xf32>
    %106 = arith.mulf %105, %104 : vector<256x128xf32>
    %107 = arith.addf %101, %106 : vector<256x128xf32>
    %c0_46 = arith.constant 0 : index
    %c7 = arith.constant 7 : index
    %108 = vector.load %arg0[%c0_46, %c7] : memref<2x16xf32, #tpu.memory_space<vmem>>, vector<1x1xf32>
    %c7_47 = arith.constant 7 : index
    %c0_48 = arith.constant 0 : index
    %c0_49 = arith.constant 0 : index
    %109 = vector.load %arg1[%c7_47, %c0_48, %c0_49] : memref<16x256x128xf32, #tpu.memory_space<vmem>>, vector<1x256x128xf32>
    %110 = vector.shape_cast %109 : vector<1x256x128xf32> to vector<256x128xf32>
    %111 = vector.broadcast %108 : vector<1x1xf32> to vector<256x128xf32>
    %112 = arith.mulf %111, %110 : vector<256x128xf32>
    %113 = arith.addf %107, %112 : vector<256x128xf32>
    %c0_50 = arith.constant 0 : index
    %c8 = arith.constant 8 : index
    %114 = vector.load %arg0[%c0_50, %c8] : memref<2x16xf32, #tpu.memory_space<vmem>>, vector<1x1xf32>
    %c8_51 = arith.constant 8 : index
    %c0_52 = arith.constant 0 : index
    %c0_53 = arith.constant 0 : index
    %115 = vector.load %arg1[%c8_51, %c0_52, %c0_53] : memref<16x256x128xf32, #tpu.memory_space<vmem>>, vector<1x256x128xf32>
    %116 = vector.shape_cast %115 : vector<1x256x128xf32> to vector<256x128xf32>
    %117 = vector.broadcast %114 : vector<1x1xf32> to vector<256x128xf32>
    %118 = arith.mulf %117, %116 : vector<256x128xf32>
    %119 = arith.addf %113, %118 : vector<256x128xf32>
    %c0_54 = arith.constant 0 : index
    %c9 = arith.constant 9 : index
    %120 = vector.load %arg0[%c0_54, %c9] : memref<2x16xf32, #tpu.memory_space<vmem>>, vector<1x1xf32>
    %c9_55 = arith.constant 9 : index
    %c0_56 = arith.constant 0 : index
    %c0_57 = arith.constant 0 : index
    %121 = vector.load %arg1[%c9_55, %c0_56, %c0_57] : memref<16x256x128xf32, #tpu.memory_space<vmem>>, vector<1x256x128xf32>
    %122 = vector.shape_cast %121 : vector<1x256x128xf32> to vector<256x128xf32>
    %123 = vector.broadcast %120 : vector<1x1xf32> to vector<256x128xf32>
    %124 = arith.mulf %123, %122 : vector<256x128xf32>
    %125 = arith.addf %119, %124 : vector<256x128xf32>
    %c0_58 = arith.constant 0 : index
    %c10 = arith.constant 10 : index
    %126 = vector.load %arg0[%c0_58, %c10] : memref<2x16xf32, #tpu.memory_space<vmem>>, vector<1x1xf32>
    %c10_59 = arith.constant 10 : index
    %c0_60 = arith.constant 0 : index
    %c0_61 = arith.constant 0 : index
    %127 = vector.load %arg1[%c10_59, %c0_60, %c0_61] : memref<16x256x128xf32, #tpu.memory_space<vmem>>, vector<1x256x128xf32>
    %128 = vector.shape_cast %127 : vector<1x256x128xf32> to vector<256x128xf32>
    %129 = vector.broadcast %126 : vector<1x1xf32> to vector<256x128xf32>
    %130 = arith.mulf %129, %128 : vector<256x128xf32>
    %131 = arith.addf %125, %130 : vector<256x128xf32>
    %c0_62 = arith.constant 0 : index
    %c11 = arith.constant 11 : index
    %132 = vector.load %arg0[%c0_62, %c11] : memref<2x16xf32, #tpu.memory_space<vmem>>, vector<1x1xf32>
    %c11_63 = arith.constant 11 : index
    %c0_64 = arith.constant 0 : index
    %c0_65 = arith.constant 0 : index
    %133 = vector.load %arg1[%c11_63, %c0_64, %c0_65] : memref<16x256x128xf32, #tpu.memory_space<vmem>>, vector<1x256x128xf32>
    %134 = vector.shape_cast %133 : vector<1x256x128xf32> to vector<256x128xf32>
    %135 = vector.broadcast %132 : vector<1x1xf32> to vector<256x128xf32>
    %136 = arith.mulf %135, %134 : vector<256x128xf32>
    %137 = arith.addf %131, %136 : vector<256x128xf32>
    %c0_66 = arith.constant 0 : index
    %c12 = arith.constant 12 : index
    %138 = vector.load %arg0[%c0_66, %c12] : memref<2x16xf32, #tpu.memory_space<vmem>>, vector<1x1xf32>
    %c12_67 = arith.constant 12 : index
    %c0_68 = arith.constant 0 : index
    %c0_69 = arith.constant 0 : index
    %139 = vector.load %arg1[%c12_67, %c0_68, %c0_69] : memref<16x256x128xf32, #tpu.memory_space<vmem>>, vector<1x256x128xf32>
    %140 = vector.shape_cast %139 : vector<1x256x128xf32> to vector<256x128xf32>
    %141 = vector.broadcast %138 : vector<1x1xf32> to vector<256x128xf32>
    %142 = arith.mulf %141, %140 : vector<256x128xf32>
    %143 = arith.addf %137, %142 : vector<256x128xf32>
    %c0_70 = arith.constant 0 : index
    %c13 = arith.constant 13 : index
    %144 = vector.load %arg0[%c0_70, %c13] : memref<2x16xf32, #tpu.memory_space<vmem>>, vector<1x1xf32>
    %c13_71 = arith.constant 13 : index
    %c0_72 = arith.constant 0 : index
    %c0_73 = arith.constant 0 : index
    %145 = vector.load %arg1[%c13_71, %c0_72, %c0_73] : memref<16x256x128xf32, #tpu.memory_space<vmem>>, vector<1x256x128xf32>
    %146 = vector.shape_cast %145 : vector<1x256x128xf32> to vector<256x128xf32>
    %147 = vector.broadcast %144 : vector<1x1xf32> to vector<256x128xf32>
    %148 = arith.mulf %147, %146 : vector<256x128xf32>
    %149 = arith.addf %143, %148 : vector<256x128xf32>
    %c0_74 = arith.constant 0 : index
    %c14 = arith.constant 14 : index
    %150 = vector.load %arg0[%c0_74, %c14] : memref<2x16xf32, #tpu.memory_space<vmem>>, vector<1x1xf32>
    %c14_75 = arith.constant 14 : index
    %c0_76 = arith.constant 0 : index
    %c0_77 = arith.constant 0 : index
    %151 = vector.load %arg1[%c14_75, %c0_76, %c0_77] : memref<16x256x128xf32, #tpu.memory_space<vmem>>, vector<1x256x128xf32>
    %152 = vector.shape_cast %151 : vector<1x256x128xf32> to vector<256x128xf32>
    %153 = vector.broadcast %150 : vector<1x1xf32> to vector<256x128xf32>
    %154 = arith.mulf %153, %152 : vector<256x128xf32>
    %155 = arith.addf %149, %154 : vector<256x128xf32>
    %c0_78 = arith.constant 0 : index
    %c15 = arith.constant 15 : index
    %156 = vector.load %arg0[%c0_78, %c15] : memref<2x16xf32, #tpu.memory_space<vmem>>, vector<1x1xf32>
    %c15_79 = arith.constant 15 : index
    %c0_80 = arith.constant 0 : index
    %c0_81 = arith.constant 0 : index
    %157 = vector.load %arg1[%c15_79, %c0_80, %c0_81] : memref<16x256x128xf32, #tpu.memory_space<vmem>>, vector<1x256x128xf32>
    %158 = vector.shape_cast %157 : vector<1x256x128xf32> to vector<256x128xf32>
    %159 = vector.broadcast %156 : vector<1x1xf32> to vector<256x128xf32>
    %160 = arith.mulf %159, %158 : vector<256x128xf32>
    %161 = arith.addf %155, %160 : vector<256x128xf32>
    %c0_82 = arith.constant 0 : index
    %c0_83 = arith.constant 0 : index
    %162 = vector.load %arg2[%c0_82, %c0_83] : memref<256x128xf32, #tpu.memory_space<vmem>>, vector<256x128xf32>
    %c1_84 = arith.constant 1 : index
    %c0_85 = arith.constant 0 : index
    %163 = vector.load %arg0[%c1_84, %c0_85] : memref<2x16xf32, #tpu.memory_space<vmem>>, vector<1x1xf32>
    %c0_86 = arith.constant 0 : index
    %c0_87 = arith.constant 0 : index
    %c0_88 = arith.constant 0 : index
    %164 = vector.load %arg1[%c0_86, %c0_87, %c0_88] : memref<16x256x128xf32, #tpu.memory_space<vmem>>, vector<1x256x128xf32>
    %165 = vector.shape_cast %164 : vector<1x256x128xf32> to vector<256x128xf32>
    %166 = vector.broadcast %163 : vector<1x1xf32> to vector<256x128xf32>
    %167 = arith.mulf %166, %165 : vector<256x128xf32>
    %168 = arith.addf %162, %167 : vector<256x128xf32>
    %c1_89 = arith.constant 1 : index
    %c1_90 = arith.constant 1 : index
    %169 = vector.load %arg0[%c1_89, %c1_90] : memref<2x16xf32, #tpu.memory_space<vmem>>, vector<1x1xf32>
    %c1_91 = arith.constant 1 : index
    %c0_92 = arith.constant 0 : index
    %c0_93 = arith.constant 0 : index
    %170 = vector.load %arg1[%c1_91, %c0_92, %c0_93] : memref<16x256x128xf32, #tpu.memory_space<vmem>>, vector<1x256x128xf32>
    %171 = vector.shape_cast %170 : vector<1x256x128xf32> to vector<256x128xf32>
    %172 = vector.broadcast %169 : vector<1x1xf32> to vector<256x128xf32>
    %173 = arith.mulf %172, %171 : vector<256x128xf32>
    %174 = arith.addf %168, %173 : vector<256x128xf32>
    %c1_94 = arith.constant 1 : index
    %c2_95 = arith.constant 2 : index
    %175 = vector.load %arg0[%c1_94, %c2_95] : memref<2x16xf32, #tpu.memory_space<vmem>>, vector<1x1xf32>
    %c2_96 = arith.constant 2 : index
    %c0_97 = arith.constant 0 : index
    %c0_98 = arith.constant 0 : index
    %176 = vector.load %arg1[%c2_96, %c0_97, %c0_98] : memref<16x256x128xf32, #tpu.memory_space<vmem>>, vector<1x256x128xf32>
    %177 = vector.shape_cast %176 : vector<1x256x128xf32> to vector<256x128xf32>
    %178 = vector.broadcast %175 : vector<1x1xf32> to vector<256x128xf32>
    %179 = arith.mulf %178, %177 : vector<256x128xf32>
    %180 = arith.addf %174, %179 : vector<256x128xf32>
    %c1_99 = arith.constant 1 : index
    %c3_100 = arith.constant 3 : index
    %181 = vector.load %arg0[%c1_99, %c3_100] : memref<2x16xf32, #tpu.memory_space<vmem>>, vector<1x1xf32>
    %c3_101 = arith.constant 3 : index
    %c0_102 = arith.constant 0 : index
    %c0_103 = arith.constant 0 : index
    %182 = vector.load %arg1[%c3_101, %c0_102, %c0_103] : memref<16x256x128xf32, #tpu.memory_space<vmem>>, vector<1x256x128xf32>
    %183 = vector.shape_cast %182 : vector<1x256x128xf32> to vector<256x128xf32>
    %184 = vector.broadcast %181 : vector<1x1xf32> to vector<256x128xf32>
    %185 = arith.mulf %184, %183 : vector<256x128xf32>
    %186 = arith.addf %180, %185 : vector<256x128xf32>
    %c1_104 = arith.constant 1 : index
    %c4_105 = arith.constant 4 : index
    %187 = vector.load %arg0[%c1_104, %c4_105] : memref<2x16xf32, #tpu.memory_space<vmem>>, vector<1x1xf32>
    %c4_106 = arith.constant 4 : index
    %c0_107 = arith.constant 0 : index
    %c0_108 = arith.constant 0 : index
    %188 = vector.load %arg1[%c4_106, %c0_107, %c0_108] : memref<16x256x128xf32, #tpu.memory_space<vmem>>, vector<1x256x128xf32>
    %189 = vector.shape_cast %188 : vector<1x256x128xf32> to vector<256x128xf32>
    %190 = vector.broadcast %187 : vector<1x1xf32> to vector<256x128xf32>
    %191 = arith.mulf %190, %189 : vector<256x128xf32>
    %192 = arith.addf %186, %191 : vector<256x128xf32>
    %c1_109 = arith.constant 1 : index
    %c5_110 = arith.constant 5 : index
    %193 = vector.load %arg0[%c1_109, %c5_110] : memref<2x16xf32, #tpu.memory_space<vmem>>, vector<1x1xf32>
    %c5_111 = arith.constant 5 : index
    %c0_112 = arith.constant 0 : index
    %c0_113 = arith.constant 0 : index
    %194 = vector.load %arg1[%c5_111, %c0_112, %c0_113] : memref<16x256x128xf32, #tpu.memory_space<vmem>>, vector<1x256x128xf32>
    %195 = vector.shape_cast %194 : vector<1x256x128xf32> to vector<256x128xf32>
    %196 = vector.broadcast %193 : vector<1x1xf32> to vector<256x128xf32>
    %197 = arith.mulf %196, %195 : vector<256x128xf32>
    %198 = arith.addf %192, %197 : vector<256x128xf32>
    %c1_114 = arith.constant 1 : index
    %c6_115 = arith.constant 6 : index
    %199 = vector.load %arg0[%c1_114, %c6_115] : memref<2x16xf32, #tpu.memory_space<vmem>>, vector<1x1xf32>
    %c6_116 = arith.constant 6 : index
    %c0_117 = arith.constant 0 : index
    %c0_118 = arith.constant 0 : index
    %200 = vector.load %arg1[%c6_116, %c0_117, %c0_118] : memref<16x256x128xf32, #tpu.memory_space<vmem>>, vector<1x256x128xf32>
    %201 = vector.shape_cast %200 : vector<1x256x128xf32> to vector<256x128xf32>
    %202 = vector.broadcast %199 : vector<1x1xf32> to vector<256x128xf32>
    %203 = arith.mulf %202, %201 : vector<256x128xf32>
    %204 = arith.addf %198, %203 : vector<256x128xf32>
    %c1_119 = arith.constant 1 : index
    %c7_120 = arith.constant 7 : index
    %205 = vector.load %arg0[%c1_119, %c7_120] : memref<2x16xf32, #tpu.memory_space<vmem>>, vector<1x1xf32>
    %c7_121 = arith.constant 7 : index
    %c0_122 = arith.constant 0 : index
    %c0_123 = arith.constant 0 : index
    %206 = vector.load %arg1[%c7_121, %c0_122, %c0_123] : memref<16x256x128xf32, #tpu.memory_space<vmem>>, vector<1x256x128xf32>
    %207 = vector.shape_cast %206 : vector<1x256x128xf32> to vector<256x128xf32>
    %208 = vector.broadcast %205 : vector<1x1xf32> to vector<256x128xf32>
    %209 = arith.mulf %208, %207 : vector<256x128xf32>
    %210 = arith.addf %204, %209 : vector<256x128xf32>
    %c1_124 = arith.constant 1 : index
    %c8_125 = arith.constant 8 : index
    %211 = vector.load %arg0[%c1_124, %c8_125] : memref<2x16xf32, #tpu.memory_space<vmem>>, vector<1x1xf32>
    %c8_126 = arith.constant 8 : index
    %c0_127 = arith.constant 0 : index
    %c0_128 = arith.constant 0 : index
    %212 = vector.load %arg1[%c8_126, %c0_127, %c0_128] : memref<16x256x128xf32, #tpu.memory_space<vmem>>, vector<1x256x128xf32>
    %213 = vector.shape_cast %212 : vector<1x256x128xf32> to vector<256x128xf32>
    %214 = vector.broadcast %211 : vector<1x1xf32> to vector<256x128xf32>
    %215 = arith.mulf %214, %213 : vector<256x128xf32>
    %216 = arith.addf %210, %215 : vector<256x128xf32>
    %c1_129 = arith.constant 1 : index
    %c9_130 = arith.constant 9 : index
    %217 = vector.load %arg0[%c1_129, %c9_130] : memref<2x16xf32, #tpu.memory_space<vmem>>, vector<1x1xf32>
    %c9_131 = arith.constant 9 : index
    %c0_132 = arith.constant 0 : index
    %c0_133 = arith.constant 0 : index
    %218 = vector.load %arg1[%c9_131, %c0_132, %c0_133] : memref<16x256x128xf32, #tpu.memory_space<vmem>>, vector<1x256x128xf32>
    %219 = vector.shape_cast %218 : vector<1x256x128xf32> to vector<256x128xf32>
    %220 = vector.broadcast %217 : vector<1x1xf32> to vector<256x128xf32>
    %221 = arith.mulf %220, %219 : vector<256x128xf32>
    %222 = arith.addf %216, %221 : vector<256x128xf32>
    %c1_134 = arith.constant 1 : index
    %c10_135 = arith.constant 10 : index
    %223 = vector.load %arg0[%c1_134, %c10_135] : memref<2x16xf32, #tpu.memory_space<vmem>>, vector<1x1xf32>
    %c10_136 = arith.constant 10 : index
    %c0_137 = arith.constant 0 : index
    %c0_138 = arith.constant 0 : index
    %224 = vector.load %arg1[%c10_136, %c0_137, %c0_138] : memref<16x256x128xf32, #tpu.memory_space<vmem>>, vector<1x256x128xf32>
    %225 = vector.shape_cast %224 : vector<1x256x128xf32> to vector<256x128xf32>
    %226 = vector.broadcast %223 : vector<1x1xf32> to vector<256x128xf32>
    %227 = arith.mulf %226, %225 : vector<256x128xf32>
    %228 = arith.addf %222, %227 : vector<256x128xf32>
    %c1_139 = arith.constant 1 : index
    %c11_140 = arith.constant 11 : index
    %229 = vector.load %arg0[%c1_139, %c11_140] : memref<2x16xf32, #tpu.memory_space<vmem>>, vector<1x1xf32>
    %c11_141 = arith.constant 11 : index
    %c0_142 = arith.constant 0 : index
    %c0_143 = arith.constant 0 : index
    %230 = vector.load %arg1[%c11_141, %c0_142, %c0_143] : memref<16x256x128xf32, #tpu.memory_space<vmem>>, vector<1x256x128xf32>
    %231 = vector.shape_cast %230 : vector<1x256x128xf32> to vector<256x128xf32>
    %232 = vector.broadcast %229 : vector<1x1xf32> to vector<256x128xf32>
    %233 = arith.mulf %232, %231 : vector<256x128xf32>
    %234 = arith.addf %228, %233 : vector<256x128xf32>
    %c1_144 = arith.constant 1 : index
    %c12_145 = arith.constant 12 : index
    %235 = vector.load %arg0[%c1_144, %c12_145] : memref<2x16xf32, #tpu.memory_space<vmem>>, vector<1x1xf32>
    %c12_146 = arith.constant 12 : index
    %c0_147 = arith.constant 0 : index
    %c0_148 = arith.constant 0 : index
    %236 = vector.load %arg1[%c12_146, %c0_147, %c0_148] : memref<16x256x128xf32, #tpu.memory_space<vmem>>, vector<1x256x128xf32>
    %237 = vector.shape_cast %236 : vector<1x256x128xf32> to vector<256x128xf32>
    %238 = vector.broadcast %235 : vector<1x1xf32> to vector<256x128xf32>
    %239 = arith.mulf %238, %237 : vector<256x128xf32>
    %240 = arith.addf %234, %239 : vector<256x128xf32>
    %c1_149 = arith.constant 1 : index
    %c13_150 = arith.constant 13 : index
    %241 = vector.load %arg0[%c1_149, %c13_150] : memref<2x16xf32, #tpu.memory_space<vmem>>, vector<1x1xf32>
    %c13_151 = arith.constant 13 : index
    %c0_152 = arith.constant 0 : index
    %c0_153 = arith.constant 0 : index
    %242 = vector.load %arg1[%c13_151, %c0_152, %c0_153] : memref<16x256x128xf32, #tpu.memory_space<vmem>>, vector<1x256x128xf32>
    %243 = vector.shape_cast %242 : vector<1x256x128xf32> to vector<256x128xf32>
    %244 = vector.broadcast %241 : vector<1x1xf32> to vector<256x128xf32>
    %245 = arith.mulf %244, %243 : vector<256x128xf32>
    %246 = arith.addf %240, %245 : vector<256x128xf32>
    %c1_154 = arith.constant 1 : index
    %c14_155 = arith.constant 14 : index
    %247 = vector.load %arg0[%c1_154, %c14_155] : memref<2x16xf32, #tpu.memory_space<vmem>>, vector<1x1xf32>
    %c14_156 = arith.constant 14 : index
    %c0_157 = arith.constant 0 : index
    %c0_158 = arith.constant 0 : index
    %248 = vector.load %arg1[%c14_156, %c0_157, %c0_158] : memref<16x256x128xf32, #tpu.memory_space<vmem>>, vector<1x256x128xf32>
    %249 = vector.shape_cast %248 : vector<1x256x128xf32> to vector<256x128xf32>
    %250 = vector.broadcast %247 : vector<1x1xf32> to vector<256x128xf32>
    %251 = arith.mulf %250, %249 : vector<256x128xf32>
    %252 = arith.addf %246, %251 : vector<256x128xf32>
    %c1_159 = arith.constant 1 : index
    %c15_160 = arith.constant 15 : index
    %253 = vector.load %arg0[%c1_159, %c15_160] : memref<2x16xf32, #tpu.memory_space<vmem>>, vector<1x1xf32>
    %c15_161 = arith.constant 15 : index
    %c0_162 = arith.constant 0 : index
    %c0_163 = arith.constant 0 : index
    %254 = vector.load %arg1[%c15_161, %c0_162, %c0_163] : memref<16x256x128xf32, #tpu.memory_space<vmem>>, vector<1x256x128xf32>
    %255 = vector.shape_cast %254 : vector<1x256x128xf32> to vector<256x128xf32>
    %256 = vector.broadcast %253 : vector<1x1xf32> to vector<256x128xf32>
    %257 = arith.mulf %256, %255 : vector<256x128xf32>
    %258 = arith.addf %252, %257 : vector<256x128xf32>
    %259 = tpu.concatenate %161, %258 in 1 : vector<256x128xf32>, vector<256x128xf32> -> vector<256x256xf32>
    %260 = vector.broadcast %20 : vector<1x256xf32> to vector<256x256xf32>
    %261 = arith.mulf %259, %260 : vector<256x256xf32>
    %cst = arith.constant dense<0.000000e+00> : vector<256xf32>
    %262 = vector.multi_reduction <add>, %261, %cst [1] : vector<256x256xf32> to vector<256xf32>
    %263 = vector.shape_cast %262 : vector<256xf32> to vector<256x1xf32>
    %264 = arith.mulf %261, %259 : vector<256x256xf32>
    %cst_164 = arith.constant dense<0.000000e+00> : vector<256xf32>
    %265 = vector.multi_reduction <add>, %264, %cst_164 [1] : vector<256x256xf32> to vector<256xf32>
    %266 = vector.shape_cast %265 : vector<256xf32> to vector<256x1xf32>
    %cst_165 = arith.constant 2.500000e+02 : f32
    %267 = vector.broadcast %cst_165 : f32 to vector<256x1xf32>
    %268 = arith.divf %263, %267 : vector<256x1xf32>
    %cst_166 = arith.constant 2.500000e+02 : f32
    %269 = vector.broadcast %cst_166 : f32 to vector<256x1xf32>
    %270 = arith.divf %266, %269 : vector<256x1xf32>
    %271 = arith.mulf %268, %268 : vector<256x1xf32>
    %272 = arith.subf %270, %271 : vector<256x1xf32>
    %cst_167 = arith.constant 9.99999974E-6 : f32
    %273 = vector.broadcast %cst_167 : f32 to vector<256x1xf32>
    %274 = arith.addf %272, %273 : vector<256x1xf32>
    %275 = math.rsqrt %274 : vector<256x1xf32>
    %c0_168 = arith.constant 0 : index
    %c0_169 = arith.constant 0 : index
    %276 = vector.load %arg3[%c0_168, %c0_169] : memref<256x1xf32, #tpu.memory_space<vmem>>, vector<256x1xf32>
    %277 = arith.mulf %275, %276 : vector<256x1xf32>
    %c0_170 = arith.constant 0 : index
    %c0_171 = arith.constant 0 : index
    %278 = vector.load %arg4[%c0_170, %c0_171] : memref<256x1xf32, #tpu.memory_space<vmem>>, vector<256x1xf32>
    %279 = arith.mulf %268, %277 : vector<256x1xf32>
    %280 = arith.subf %278, %279 : vector<256x1xf32>
    %281 = vector.broadcast %277 : vector<256x1xf32> to vector<256x256xf32>
    %282 = arith.mulf %259, %281 : vector<256x256xf32>
    %283 = vector.broadcast %280 : vector<256x1xf32> to vector<256x256xf32>
    %284 = arith.addf %282, %283 : vector<256x256xf32>
    %c0_172 = arith.constant 0 : index
    %c0_173 = arith.constant 0 : index
    %285 = vector.load %arg5[%c0_172, %c0_173] : memref<256x1280xbf16, #tpu.memory_space<vmem>>, vector<256x1280xbf16>
    %c2_i32_174 = arith.constant 2 : i32
    %286 = tpu.dynamic_rotate %284 by %c2_i32_174 dim 1 : vector<256x256xf32>, i32 -> vector<256x256xf32>
    %287 = vector.broadcast %31 : vector<1x256xf32> to vector<256x256xf32>
    %288 = arith.mulf %286, %287 : vector<256x256xf32>
    %289 = arith.truncf %288 : vector<256x256xf32> to vector<256x256xbf16>
    %c1_i32_175 = arith.constant 1 : i32
    %290 = tpu.dynamic_rotate %284 by %c1_i32_175 dim 1 : vector<256x256xf32>, i32 -> vector<256x256xf32>
    %291 = vector.broadcast %42 : vector<1x256xf32> to vector<256x256xf32>
    %292 = arith.mulf %290, %291 : vector<256x256xf32>
    %293 = arith.truncf %292 : vector<256x256xf32> to vector<256x256xbf16>
    %294 = arith.truncf %284 : vector<256x256xf32> to vector<256x256xbf16>
    %c255_i32 = arith.constant 255 : i32
    %295 = tpu.dynamic_rotate %284 by %c255_i32 dim 1 : vector<256x256xf32>, i32 -> vector<256x256xf32>
    %296 = vector.broadcast %53 : vector<1x256xf32> to vector<256x256xf32>
    %297 = arith.mulf %295, %296 : vector<256x256xf32>
    %298 = arith.truncf %297 : vector<256x256xf32> to vector<256x256xbf16>
    %c254_i32 = arith.constant 254 : i32
    %299 = tpu.dynamic_rotate %284 by %c254_i32 dim 1 : vector<256x256xf32>, i32 -> vector<256x256xf32>
    %300 = vector.broadcast %64 : vector<1x256xf32> to vector<256x256xf32>
    %301 = arith.mulf %299, %300 : vector<256x256xf32>
    %302 = arith.truncf %301 : vector<256x256xf32> to vector<256x256xbf16>
    %303 = tpu.concatenate %289, %293, %294, %298, %302 in 0 : vector<256x256xbf16>, vector<256x256xbf16>, vector<256x256xbf16>, vector<256x256xbf16>, vector<256x256xbf16> -> vector<1280x256xbf16>
    %cst_176 = arith.constant dense<0.000000e+00> : vector<256x256xf32>
    %304 = tpu.matmul %285, %303, %cst_176 {dimension_numbers = #tpu.dot_dimension_numbers<[1], [0], [0], [1], [0, 0, 1, 1], [], []>} : vector<256x1280xbf16>, vector<1280x256xbf16>, vector<256x256xf32> -> vector<256x256xf32>
    %305 = vector.extract_strided_slice %304 {offsets = [0, 0], sizes = [128, 256], strides = [1, 1]} : vector<256x256xf32> to vector<128x256xf32>
    %306 = vector.extract_strided_slice %304 {offsets = [128, 0], sizes = [128, 256], strides = [1, 1]} : vector<256x256xf32> to vector<128x256xf32>
    %307 = vector.broadcast %20 : vector<1x256xf32> to vector<128x256xf32>
    %308 = arith.mulf %305, %307 : vector<128x256xf32>
    %cst_177 = arith.constant dense<0.000000e+00> : vector<128xf32>
    %309 = vector.multi_reduction <add>, %308, %cst_177 [1] : vector<128x256xf32> to vector<128xf32>
    %310 = vector.shape_cast %309 : vector<128xf32> to vector<128x1xf32>
    %311 = arith.mulf %308, %305 : vector<128x256xf32>
    %cst_178 = arith.constant dense<0.000000e+00> : vector<128xf32>
    %312 = vector.multi_reduction <add>, %311, %cst_178 [1] : vector<128x256xf32> to vector<128xf32>
    %313 = vector.shape_cast %312 : vector<128xf32> to vector<128x1xf32>
    %314 = vector.broadcast %20 : vector<1x256xf32> to vector<128x256xf32>
    %315 = arith.mulf %306, %314 : vector<128x256xf32>
    %cst_179 = arith.constant dense<0.000000e+00> : vector<128xf32>
    %316 = vector.multi_reduction <add>, %315, %cst_179 [1] : vector<128x256xf32> to vector<128xf32>
    %317 = vector.shape_cast %316 : vector<128xf32> to vector<128x1xf32>
    %318 = arith.mulf %315, %306 : vector<128x256xf32>
    %cst_180 = arith.constant dense<0.000000e+00> : vector<128xf32>
    %319 = vector.multi_reduction <add>, %318, %cst_180 [1] : vector<128x256xf32> to vector<128xf32>
    %320 = vector.shape_cast %319 : vector<128xf32> to vector<128x1xf32>
    %321 = arith.addf %310, %317 : vector<128x1xf32>
    %322 = arith.addf %313, %320 : vector<128x1xf32>
    %cst_181 = arith.constant 5.000000e+02 : f32
    %323 = vector.broadcast %cst_181 : f32 to vector<128x1xf32>
    %324 = arith.divf %321, %323 : vector<128x1xf32>
    %cst_182 = arith.constant 5.000000e+02 : f32
    %325 = vector.broadcast %cst_182 : f32 to vector<128x1xf32>
    %326 = arith.divf %322, %325 : vector<128x1xf32>
    %327 = arith.mulf %324, %324 : vector<128x1xf32>
    %328 = arith.subf %326, %327 : vector<128x1xf32>
    %cst_183 = arith.constant 9.99999974E-6 : f32
    %329 = vector.broadcast %cst_183 : f32 to vector<128x1xf32>
    %330 = arith.addf %328, %329 : vector<128x1xf32>
    %331 = math.rsqrt %330 : vector<128x1xf32>
    %c0_184 = arith.constant 0 : index
    %c0_185 = arith.constant 0 : index
    %332 = vector.load %arg6[%c0_184, %c0_185] : memref<128x1xf32, #tpu.memory_space<vmem>>, vector<128x1xf32>
    %333 = arith.mulf %331, %332 : vector<128x1xf32>
    %c0_186 = arith.constant 0 : index
    %c0_187 = arith.constant 0 : index
    %334 = vector.load %arg7[%c0_186, %c0_187] : memref<128x1xf32, #tpu.memory_space<vmem>>, vector<128x1xf32>
    %335 = arith.mulf %324, %333 : vector<128x1xf32>
    %336 = arith.subf %334, %335 : vector<128x1xf32>
    %337 = vector.broadcast %333 : vector<128x1xf32> to vector<128x256xf32>
    %338 = arith.mulf %305, %337 : vector<128x256xf32>
    %339 = vector.broadcast %336 : vector<128x1xf32> to vector<128x256xf32>
    %340 = arith.addf %338, %339 : vector<128x256xf32>
    %341 = vector.broadcast %333 : vector<128x1xf32> to vector<128x256xf32>
    %342 = arith.mulf %306, %341 : vector<128x256xf32>
    %343 = vector.broadcast %336 : vector<128x1xf32> to vector<128x256xf32>
    %344 = arith.addf %342, %343 : vector<128x256xf32>
    %cst_188 = arith.constant 0.000000e+00 : f32
    %345 = vector.broadcast %cst_188 : f32 to vector<128x256xf32>
    %346 = arith.cmpf ogt, %340, %345 : vector<128x256xf32>
    %cst_189 = arith.constant 2.000000e-01 : f32
    %347 = vector.broadcast %cst_189 : f32 to vector<128x256xf32>
    %348 = arith.mulf %347, %340 : vector<128x256xf32>
    %349 = arith.select %346, %340, %348 : vector<128x256xi1>, vector<128x256xf32>
    %cst_190 = arith.constant 0.000000e+00 : f32
    %350 = vector.broadcast %cst_190 : f32 to vector<128x256xf32>
    %351 = arith.cmpf ogt, %344, %350 : vector<128x256xf32>
    %cst_191 = arith.constant 2.000000e-01 : f32
    %352 = vector.broadcast %cst_191 : f32 to vector<128x256xf32>
    %353 = arith.mulf %352, %344 : vector<128x256xf32>
    %354 = arith.select %351, %344, %353 : vector<128x256xi1>, vector<128x256xf32>
    %c0_192 = arith.constant 0 : index
    %c0_193 = arith.constant 0 : index
    %355 = vector.load %arg8[%c0_192, %c0_193] : memref<64x640xbf16, #tpu.memory_space<vmem>>, vector<64x640xbf16>
    %c1_i32_194 = arith.constant 1 : i32
    %356 = tpu.dynamic_rotate %349 by %c1_i32_194 dim 1 : vector<128x256xf32>, i32 -> vector<128x256xf32>
    %357 = vector.broadcast %42 : vector<1x256xf32> to vector<128x256xf32>
    %358 = arith.mulf %356, %357 : vector<128x256xf32>
    %359 = arith.truncf %358 : vector<128x256xf32> to vector<128x256xbf16>
    %c1_i32_195 = arith.constant 1 : i32
    %360 = tpu.dynamic_rotate %354 by %c1_i32_195 dim 1 : vector<128x256xf32>, i32 -> vector<128x256xf32>
    %361 = vector.broadcast %42 : vector<1x256xf32> to vector<128x256xf32>
    %362 = arith.mulf %360, %361 : vector<128x256xf32>
    %363 = arith.truncf %362 : vector<128x256xf32> to vector<128x256xbf16>
    %364 = tpu.concatenate %359, %363 in 1 : vector<128x256xbf16>, vector<128x256xbf16> -> vector<128x512xbf16>
    %365 = arith.truncf %349 : vector<128x256xf32> to vector<128x256xbf16>
    %366 = tpu.concatenate %363, %365 in 1 : vector<128x256xbf16>, vector<128x256xbf16> -> vector<128x512xbf16>
    %367 = arith.truncf %354 : vector<128x256xf32> to vector<128x256xbf16>
    %368 = tpu.concatenate %365, %367 in 1 : vector<128x256xbf16>, vector<128x256xbf16> -> vector<128x512xbf16>
    %c255_i32_196 = arith.constant 255 : i32
    %369 = tpu.dynamic_rotate %349 by %c255_i32_196 dim 1 : vector<128x256xf32>, i32 -> vector<128x256xf32>
    %370 = vector.broadcast %53 : vector<1x256xf32> to vector<128x256xf32>
    %371 = arith.mulf %369, %370 : vector<128x256xf32>
    %372 = arith.truncf %371 : vector<128x256xf32> to vector<128x256xbf16>
    %373 = tpu.concatenate %367, %372 in 1 : vector<128x256xbf16>, vector<128x256xbf16> -> vector<128x512xbf16>
    %c255_i32_197 = arith.constant 255 : i32
    %374 = tpu.dynamic_rotate %354 by %c255_i32_197 dim 1 : vector<128x256xf32>, i32 -> vector<128x256xf32>
    %375 = vector.broadcast %53 : vector<1x256xf32> to vector<128x256xf32>
    %376 = arith.mulf %374, %375 : vector<128x256xf32>
    %377 = arith.truncf %376 : vector<128x256xf32> to vector<128x256xbf16>
    %378 = tpu.concatenate %372, %377 in 1 : vector<128x256xbf16>, vector<128x256xbf16> -> vector<128x512xbf16>
    %379 = tpu.concatenate %364, %366, %368, %373, %378 in 0 : vector<128x512xbf16>, vector<128x512xbf16>, vector<128x512xbf16>, vector<128x512xbf16>, vector<128x512xbf16> -> vector<640x512xbf16>
    %cst_198 = arith.constant dense<0.000000e+00> : vector<64x512xf32>
    %380 = tpu.matmul %355, %379, %cst_198 {dimension_numbers = #tpu.dot_dimension_numbers<[1], [0], [0], [1], [0, 0, 1, 1], [], []>} : vector<64x640xbf16>, vector<640x512xbf16>, vector<64x512xf32> -> vector<64x512xf32>
    %381 = vector.extract_strided_slice %380 {offsets = [0, 0], sizes = [64, 256], strides = [1, 1]} : vector<64x512xf32> to vector<64x256xf32>
    %382 = vector.extract_strided_slice %381 {offsets = [0, 0], sizes = [32, 256], strides = [1, 1]} : vector<64x256xf32> to vector<32x256xf32>
    %383 = vector.extract_strided_slice %381 {offsets = [32, 0], sizes = [32, 256], strides = [1, 1]} : vector<64x256xf32> to vector<32x256xf32>
    %384 = vector.extract_strided_slice %380 {offsets = [0, 256], sizes = [64, 256], strides = [1, 1]} : vector<64x512xf32> to vector<64x256xf32>
    %385 = vector.extract_strided_slice %384 {offsets = [0, 0], sizes = [32, 256], strides = [1, 1]} : vector<64x256xf32> to vector<32x256xf32>
    %386 = vector.extract_strided_slice %384 {offsets = [32, 0], sizes = [32, 256], strides = [1, 1]} : vector<64x256xf32> to vector<32x256xf32>
    %387 = vector.broadcast %20 : vector<1x256xf32> to vector<32x256xf32>
    %388 = arith.mulf %382, %387 : vector<32x256xf32>
    %cst_199 = arith.constant dense<0.000000e+00> : vector<32xf32>
    %389 = vector.multi_reduction <add>, %388, %cst_199 [1] : vector<32x256xf32> to vector<32xf32>
    %390 = vector.shape_cast %389 : vector<32xf32> to vector<32x1xf32>
    %391 = arith.mulf %388, %382 : vector<32x256xf32>
    %cst_200 = arith.constant dense<0.000000e+00> : vector<32xf32>
    %392 = vector.multi_reduction <add>, %391, %cst_200 [1] : vector<32x256xf32> to vector<32xf32>
    %393 = vector.shape_cast %392 : vector<32xf32> to vector<32x1xf32>
    %394 = vector.broadcast %20 : vector<1x256xf32> to vector<32x256xf32>
    %395 = arith.mulf %383, %394 : vector<32x256xf32>
    %cst_201 = arith.constant dense<0.000000e+00> : vector<32xf32>
    %396 = vector.multi_reduction <add>, %395, %cst_201 [1] : vector<32x256xf32> to vector<32xf32>
    %397 = vector.shape_cast %396 : vector<32xf32> to vector<32x1xf32>
    %398 = arith.mulf %395, %383 : vector<32x256xf32>
    %cst_202 = arith.constant dense<0.000000e+00> : vector<32xf32>
    %399 = vector.multi_reduction <add>, %398, %cst_202 [1] : vector<32x256xf32> to vector<32xf32>
    %400 = vector.shape_cast %399 : vector<32xf32> to vector<32x1xf32>
    %401 = arith.addf %390, %397 : vector<32x1xf32>
    %402 = arith.addf %393, %400 : vector<32x1xf32>
    %403 = vector.broadcast %20 : vector<1x256xf32> to vector<32x256xf32>
    %404 = arith.mulf %385, %403 : vector<32x256xf32>
    %cst_203 = arith.constant dense<0.000000e+00> : vector<32xf32>
    %405 = vector.multi_reduction <add>, %404, %cst_203 [1] : vector<32x256xf32> to vector<32xf32>
    %406 = vector.shape_cast %405 : vector<32xf32> to vector<32x1xf32>
    %407 = arith.mulf %404, %385 : vector<32x256xf32>
    %cst_204 = arith.constant dense<0.000000e+00> : vector<32xf32>
    %408 = vector.multi_reduction <add>, %407, %cst_204 [1] : vector<32x256xf32> to vector<32xf32>
    %409 = vector.shape_cast %408 : vector<32xf32> to vector<32x1xf32>
    %410 = arith.addf %401, %406 : vector<32x1xf32>
    %411 = arith.addf %402, %409 : vector<32x1xf32>
    %412 = vector.broadcast %20 : vector<1x256xf32> to vector<32x256xf32>
    %413 = arith.mulf %386, %412 : vector<32x256xf32>
    %cst_205 = arith.constant dense<0.000000e+00> : vector<32xf32>
    %414 = vector.multi_reduction <add>, %413, %cst_205 [1] : vector<32x256xf32> to vector<32xf32>
    %415 = vector.shape_cast %414 : vector<32xf32> to vector<32x1xf32>
    %416 = arith.mulf %413, %386 : vector<32x256xf32>
    %cst_206 = arith.constant dense<0.000000e+00> : vector<32xf32>
    %417 = vector.multi_reduction <add>, %416, %cst_206 [1] : vector<32x256xf32> to vector<32xf32>
    %418 = vector.shape_cast %417 : vector<32xf32> to vector<32x1xf32>
    %419 = arith.addf %410, %415 : vector<32x1xf32>
    %420 = arith.addf %411, %418 : vector<32x1xf32>
    %cst_207 = arith.constant 1.000000e+03 : f32
    %421 = vector.broadcast %cst_207 : f32 to vector<32x1xf32>
    %422 = arith.divf %419, %421 : vector<32x1xf32>
    %cst_208 = arith.constant 1.000000e+03 : f32
    %423 = vector.broadcast %cst_208 : f32 to vector<32x1xf32>
    %424 = arith.divf %420, %423 : vector<32x1xf32>
    %425 = arith.mulf %422, %422 : vector<32x1xf32>
    %426 = arith.subf %424, %425 : vector<32x1xf32>
    %cst_209 = arith.constant 9.99999974E-6 : f32
    %427 = vector.broadcast %cst_209 : f32 to vector<32x1xf32>
    %428 = arith.addf %426, %427 : vector<32x1xf32>
    %429 = math.rsqrt %428 : vector<32x1xf32>
    %c0_210 = arith.constant 0 : index
    %c0_211 = arith.constant 0 : index
    %430 = vector.load %arg9[%c0_210, %c0_211] : memref<32x1xf32, #tpu.memory_space<vmem>>, vector<32x1xf32>
    %431 = arith.mulf %429, %430 : vector<32x1xf32>
    %c0_212 = arith.constant 0 : index
    %c0_213 = arith.constant 0 : index
    %432 = vector.load %arg10[%c0_212, %c0_213] : memref<32x1xf32, #tpu.memory_space<vmem>>, vector<32x1xf32>
    %433 = arith.mulf %422, %431 : vector<32x1xf32>
    %434 = arith.subf %432, %433 : vector<32x1xf32>
    %435 = vector.broadcast %431 : vector<32x1xf32> to vector<32x256xf32>
    %436 = arith.mulf %382, %435 : vector<32x256xf32>
    %437 = vector.broadcast %434 : vector<32x1xf32> to vector<32x256xf32>
    %438 = arith.addf %436, %437 : vector<32x256xf32>
    %439 = vector.broadcast %431 : vector<32x1xf32> to vector<32x256xf32>
    %440 = arith.mulf %383, %439 : vector<32x256xf32>
    %441 = vector.broadcast %434 : vector<32x1xf32> to vector<32x256xf32>
    %442 = arith.addf %440, %441 : vector<32x256xf32>
    %443 = vector.broadcast %431 : vector<32x1xf32> to vector<32x256xf32>
    %444 = arith.mulf %385, %443 : vector<32x256xf32>
    %445 = vector.broadcast %434 : vector<32x1xf32> to vector<32x256xf32>
    %446 = arith.addf %444, %445 : vector<32x256xf32>
    %447 = vector.broadcast %431 : vector<32x1xf32> to vector<32x256xf32>
    %448 = arith.mulf %386, %447 : vector<32x256xf32>
    %449 = vector.broadcast %434 : vector<32x1xf32> to vector<32x256xf32>
    %450 = arith.addf %448, %449 : vector<32x256xf32>
    %cst_214 = arith.constant 0.000000e+00 : f32
    %451 = vector.broadcast %cst_214 : f32 to vector<32x256xf32>
    %452 = arith.cmpf ogt, %438, %451 : vector<32x256xf32>
    %cst_215 = arith.constant 2.000000e-01 : f32
    %453 = vector.broadcast %cst_215 : f32 to vector<32x256xf32>
    %454 = arith.mulf %453, %438 : vector<32x256xf32>
    %455 = arith.select %452, %438, %454 : vector<32x256xi1>, vector<32x256xf32>
    %cst_216 = arith.constant 0.000000e+00 : f32
    %456 = vector.broadcast %cst_216 : f32 to vector<32x256xf32>
    %457 = arith.cmpf ogt, %442, %456 : vector<32x256xf32>
    %cst_217 = arith.constant 2.000000e-01 : f32
    %458 = vector.broadcast %cst_217 : f32 to vector<32x256xf32>
    %459 = arith.mulf %458, %442 : vector<32x256xf32>
    %460 = arith.select %457, %442, %459 : vector<32x256xi1>, vector<32x256xf32>
    %cst_218 = arith.constant 0.000000e+00 : f32
    %461 = vector.broadcast %cst_218 : f32 to vector<32x256xf32>
    %462 = arith.cmpf ogt, %446, %461 : vector<32x256xf32>
    %cst_219 = arith.constant 2.000000e-01 : f32
    %463 = vector.broadcast %cst_219 : f32 to vector<32x256xf32>
    %464 = arith.mulf %463, %446 : vector<32x256xf32>
    %465 = arith.select %462, %446, %464 : vector<32x256xi1>, vector<32x256xf32>
    %cst_220 = arith.constant 0.000000e+00 : f32
    %466 = vector.broadcast %cst_220 : f32 to vector<32x256xf32>
    %467 = arith.cmpf ogt, %450, %466 : vector<32x256xf32>
    %cst_221 = arith.constant 2.000000e-01 : f32
    %468 = vector.broadcast %cst_221 : f32 to vector<32x256xf32>
    %469 = arith.mulf %468, %450 : vector<32x256xf32>
    %470 = arith.select %467, %450, %469 : vector<32x256xi1>, vector<32x256xf32>
    %c0_222 = arith.constant 0 : index
    %c0_223 = arith.constant 0 : index
    %471 = vector.load %arg11[%c0_222, %c0_223] : memref<16x160xbf16, #tpu.memory_space<vmem>>, vector<16x160xbf16>
    %c1_i32_224 = arith.constant 1 : i32
    %472 = tpu.dynamic_rotate %465 by %c1_i32_224 dim 1 : vector<32x256xf32>, i32 -> vector<32x256xf32>
    %473 = vector.broadcast %42 : vector<1x256xf32> to vector<32x256xf32>
    %474 = arith.mulf %472, %473 : vector<32x256xf32>
    %475 = arith.truncf %474 : vector<32x256xf32> to vector<32x256xbf16>
    %c1_i32_225 = arith.constant 1 : i32
    %476 = tpu.dynamic_rotate %470 by %c1_i32_225 dim 1 : vector<32x256xf32>, i32 -> vector<32x256xf32>
    %477 = vector.broadcast %42 : vector<1x256xf32> to vector<32x256xf32>
    %478 = arith.mulf %476, %477 : vector<32x256xf32>
    %479 = arith.truncf %478 : vector<32x256xf32> to vector<32x256xbf16>
    %480 = arith.truncf %455 : vector<32x256xf32> to vector<32x256xbf16>
    %481 = arith.truncf %460 : vector<32x256xf32> to vector<32x256xbf16>
    %482 = tpu.concatenate %475, %479, %480, %481 in 1 : vector<32x256xbf16>, vector<32x256xbf16>, vector<32x256xbf16>, vector<32x256xbf16> -> vector<32x1024xbf16>
    %483 = arith.truncf %465 : vector<32x256xf32> to vector<32x256xbf16>
    %484 = tpu.concatenate %479, %480, %481, %483 in 1 : vector<32x256xbf16>, vector<32x256xbf16>, vector<32x256xbf16>, vector<32x256xbf16> -> vector<32x1024xbf16>
    %485 = arith.truncf %470 : vector<32x256xf32> to vector<32x256xbf16>
    %486 = tpu.concatenate %480, %481, %483, %485 in 1 : vector<32x256xbf16>, vector<32x256xbf16>, vector<32x256xbf16>, vector<32x256xbf16> -> vector<32x1024xbf16>
    %c255_i32_226 = arith.constant 255 : i32
    %487 = tpu.dynamic_rotate %455 by %c255_i32_226 dim 1 : vector<32x256xf32>, i32 -> vector<32x256xf32>
    %488 = vector.broadcast %53 : vector<1x256xf32> to vector<32x256xf32>
    %489 = arith.mulf %487, %488 : vector<32x256xf32>
    %490 = arith.truncf %489 : vector<32x256xf32> to vector<32x256xbf16>
    %491 = tpu.concatenate %481, %483, %485, %490 in 1 : vector<32x256xbf16>, vector<32x256xbf16>, vector<32x256xbf16>, vector<32x256xbf16> -> vector<32x1024xbf16>
    %c255_i32_227 = arith.constant 255 : i32
    %492 = tpu.dynamic_rotate %460 by %c255_i32_227 dim 1 : vector<32x256xf32>, i32 -> vector<32x256xf32>
    %493 = vector.broadcast %53 : vector<1x256xf32> to vector<32x256xf32>
    %494 = arith.mulf %492, %493 : vector<32x256xf32>
    %495 = arith.truncf %494 : vector<32x256xf32> to vector<32x256xbf16>
    %496 = tpu.concatenate %483, %485, %490, %495 in 1 : vector<32x256xbf16>, vector<32x256xbf16>, vector<32x256xbf16>, vector<32x256xbf16> -> vector<32x1024xbf16>
    %497 = tpu.concatenate %482, %484, %486, %491, %496 in 0 : vector<32x1024xbf16>, vector<32x1024xbf16>, vector<32x1024xbf16>, vector<32x1024xbf16>, vector<32x1024xbf16> -> vector<160x1024xbf16>
    %cst_228 = arith.constant dense<0.000000e+00> : vector<16x1024xf32>
    %498 = tpu.matmul %471, %497, %cst_228 {dimension_numbers = #tpu.dot_dimension_numbers<[1], [0], [0], [1], [0, 0, 1, 1], [], []>} : vector<16x160xbf16>, vector<160x1024xbf16>, vector<16x1024xf32> -> vector<16x1024xf32>
    %499 = vector.extract_strided_slice %498 {offsets = [0, 0], sizes = [16, 256], strides = [1, 1]} : vector<16x1024xf32> to vector<16x256xf32>
    %500 = vector.extract_strided_slice %499 {offsets = [0, 0], sizes = [8, 256], strides = [1, 1]} : vector<16x256xf32> to vector<8x256xf32>
    %501 = vector.extract_strided_slice %499 {offsets = [8, 0], sizes = [8, 256], strides = [1, 1]} : vector<16x256xf32> to vector<8x256xf32>
    %502 = vector.extract_strided_slice %498 {offsets = [0, 256], sizes = [16, 256], strides = [1, 1]} : vector<16x1024xf32> to vector<16x256xf32>
    %503 = vector.extract_strided_slice %502 {offsets = [0, 0], sizes = [8, 256], strides = [1, 1]} : vector<16x256xf32> to vector<8x256xf32>
    %504 = vector.extract_strided_slice %502 {offsets = [8, 0], sizes = [8, 256], strides = [1, 1]} : vector<16x256xf32> to vector<8x256xf32>
    %505 = vector.extract_strided_slice %498 {offsets = [0, 512], sizes = [16, 256], strides = [1, 1]} : vector<16x1024xf32> to vector<16x256xf32>
    %506 = vector.extract_strided_slice %505 {offsets = [0, 0], sizes = [8, 256], strides = [1, 1]} : vector<16x256xf32> to vector<8x256xf32>
    %507 = vector.extract_strided_slice %505 {offsets = [8, 0], sizes = [8, 256], strides = [1, 1]} : vector<16x256xf32> to vector<8x256xf32>
    %508 = vector.extract_strided_slice %498 {offsets = [0, 768], sizes = [16, 256], strides = [1, 1]} : vector<16x1024xf32> to vector<16x256xf32>
    %509 = vector.extract_strided_slice %508 {offsets = [0, 0], sizes = [8, 256], strides = [1, 1]} : vector<16x256xf32> to vector<8x256xf32>
    %510 = vector.extract_strided_slice %508 {offsets = [8, 0], sizes = [8, 256], strides = [1, 1]} : vector<16x256xf32> to vector<8x256xf32>
    %511 = vector.broadcast %20 : vector<1x256xf32> to vector<8x256xf32>
    %512 = arith.mulf %500, %511 : vector<8x256xf32>
    %cst_229 = arith.constant dense<0.000000e+00> : vector<8xf32>
    %513 = vector.multi_reduction <add>, %512, %cst_229 [1] : vector<8x256xf32> to vector<8xf32>
    %514 = vector.shape_cast %513 : vector<8xf32> to vector<8x1xf32>
    %515 = arith.mulf %512, %500 : vector<8x256xf32>
    %cst_230 = arith.constant dense<0.000000e+00> : vector<8xf32>
    %516 = vector.multi_reduction <add>, %515, %cst_230 [1] : vector<8x256xf32> to vector<8xf32>
    %517 = vector.shape_cast %516 : vector<8xf32> to vector<8x1xf32>
    %518 = vector.broadcast %20 : vector<1x256xf32> to vector<8x256xf32>
    %519 = arith.mulf %501, %518 : vector<8x256xf32>
    %cst_231 = arith.constant dense<0.000000e+00> : vector<8xf32>
    %520 = vector.multi_reduction <add>, %519, %cst_231 [1] : vector<8x256xf32> to vector<8xf32>
    %521 = vector.shape_cast %520 : vector<8xf32> to vector<8x1xf32>
    %522 = arith.mulf %519, %501 : vector<8x256xf32>
    %cst_232 = arith.constant dense<0.000000e+00> : vector<8xf32>
    %523 = vector.multi_reduction <add>, %522, %cst_232 [1] : vector<8x256xf32> to vector<8xf32>
    %524 = vector.shape_cast %523 : vector<8xf32> to vector<8x1xf32>
    %525 = arith.addf %514, %521 : vector<8x1xf32>
    %526 = arith.addf %517, %524 : vector<8x1xf32>
    %527 = vector.broadcast %20 : vector<1x256xf32> to vector<8x256xf32>
    %528 = arith.mulf %503, %527 : vector<8x256xf32>
    %cst_233 = arith.constant dense<0.000000e+00> : vector<8xf32>
    %529 = vector.multi_reduction <add>, %528, %cst_233 [1] : vector<8x256xf32> to vector<8xf32>
    %530 = vector.shape_cast %529 : vector<8xf32> to vector<8x1xf32>
    %531 = arith.mulf %528, %503 : vector<8x256xf32>
    %cst_234 = arith.constant dense<0.000000e+00> : vector<8xf32>
    %532 = vector.multi_reduction <add>, %531, %cst_234 [1] : vector<8x256xf32> to vector<8xf32>
    %533 = vector.shape_cast %532 : vector<8xf32> to vector<8x1xf32>
    %534 = arith.addf %525, %530 : vector<8x1xf32>
    %535 = arith.addf %526, %533 : vector<8x1xf32>
    %536 = vector.broadcast %20 : vector<1x256xf32> to vector<8x256xf32>
    %537 = arith.mulf %504, %536 : vector<8x256xf32>
    %cst_235 = arith.constant dense<0.000000e+00> : vector<8xf32>
    %538 = vector.multi_reduction <add>, %537, %cst_235 [1] : vector<8x256xf32> to vector<8xf32>
    %539 = vector.shape_cast %538 : vector<8xf32> to vector<8x1xf32>
    %540 = arith.mulf %537, %504 : vector<8x256xf32>
    %cst_236 = arith.constant dense<0.000000e+00> : vector<8xf32>
    %541 = vector.multi_reduction <add>, %540, %cst_236 [1] : vector<8x256xf32> to vector<8xf32>
    %542 = vector.shape_cast %541 : vector<8xf32> to vector<8x1xf32>
    %543 = arith.addf %534, %539 : vector<8x1xf32>
    %544 = arith.addf %535, %542 : vector<8x1xf32>
    %545 = vector.broadcast %20 : vector<1x256xf32> to vector<8x256xf32>
    %546 = arith.mulf %506, %545 : vector<8x256xf32>
    %cst_237 = arith.constant dense<0.000000e+00> : vector<8xf32>
    %547 = vector.multi_reduction <add>, %546, %cst_237 [1] : vector<8x256xf32> to vector<8xf32>
    %548 = vector.shape_cast %547 : vector<8xf32> to vector<8x1xf32>
    %549 = arith.mulf %546, %506 : vector<8x256xf32>
    %cst_238 = arith.constant dense<0.000000e+00> : vector<8xf32>
    %550 = vector.multi_reduction <add>, %549, %cst_238 [1] : vector<8x256xf32> to vector<8xf32>
    %551 = vector.shape_cast %550 : vector<8xf32> to vector<8x1xf32>
    %552 = arith.addf %543, %548 : vector<8x1xf32>
    %553 = arith.addf %544, %551 : vector<8x1xf32>
    %554 = vector.broadcast %20 : vector<1x256xf32> to vector<8x256xf32>
    %555 = arith.mulf %507, %554 : vector<8x256xf32>
    %cst_239 = arith.constant dense<0.000000e+00> : vector<8xf32>
    %556 = vector.multi_reduction <add>, %555, %cst_239 [1] : vector<8x256xf32> to vector<8xf32>
    %557 = vector.shape_cast %556 : vector<8xf32> to vector<8x1xf32>
    %558 = arith.mulf %555, %507 : vector<8x256xf32>
    %cst_240 = arith.constant dense<0.000000e+00> : vector<8xf32>
    %559 = vector.multi_reduction <add>, %558, %cst_240 [1] : vector<8x256xf32> to vector<8xf32>
    %560 = vector.shape_cast %559 : vector<8xf32> to vector<8x1xf32>
    %561 = arith.addf %552, %557 : vector<8x1xf32>
    %562 = arith.addf %553, %560 : vector<8x1xf32>
    %563 = vector.broadcast %20 : vector<1x256xf32> to vector<8x256xf32>
    %564 = arith.mulf %509, %563 : vector<8x256xf32>
    %cst_241 = arith.constant dense<0.000000e+00> : vector<8xf32>
    %565 = vector.multi_reduction <add>, %564, %cst_241 [1] : vector<8x256xf32> to vector<8xf32>
    %566 = vector.shape_cast %565 : vector<8xf32> to vector<8x1xf32>
    %567 = arith.mulf %564, %509 : vector<8x256xf32>
    %cst_242 = arith.constant dense<0.000000e+00> : vector<8xf32>
    %568 = vector.multi_reduction <add>, %567, %cst_242 [1] : vector<8x256xf32> to vector<8xf32>
    %569 = vector.shape_cast %568 : vector<8xf32> to vector<8x1xf32>
    %570 = arith.addf %561, %566 : vector<8x1xf32>
    %571 = arith.addf %562, %569 : vector<8x1xf32>
    %572 = vector.broadcast %20 : vector<1x256xf32> to vector<8x256xf32>
    %573 = arith.mulf %510, %572 : vector<8x256xf32>
    %cst_243 = arith.constant dense<0.000000e+00> : vector<8xf32>
    %574 = vector.multi_reduction <add>, %573, %cst_243 [1] : vector<8x256xf32> to vector<8xf32>
    %575 = vector.shape_cast %574 : vector<8xf32> to vector<8x1xf32>
    %576 = arith.mulf %573, %510 : vector<8x256xf32>
    %cst_244 = arith.constant dense<0.000000e+00> : vector<8xf32>
    %577 = vector.multi_reduction <add>, %576, %cst_244 [1] : vector<8x256xf32> to vector<8xf32>
    %578 = vector.shape_cast %577 : vector<8xf32> to vector<8x1xf32>
    %579 = arith.addf %570, %575 : vector<8x1xf32>
    %580 = arith.addf %571, %578 : vector<8x1xf32>
    %cst_245 = arith.constant 2.000000e+03 : f32
    %581 = vector.broadcast %cst_245 : f32 to vector<8x1xf32>
    %582 = arith.divf %579, %581 : vector<8x1xf32>
    %cst_246 = arith.constant 2.000000e+03 : f32
    %583 = vector.broadcast %cst_246 : f32 to vector<8x1xf32>
    %584 = arith.divf %580, %583 : vector<8x1xf32>
    %585 = arith.mulf %582, %582 : vector<8x1xf32>
    %586 = arith.subf %584, %585 : vector<8x1xf32>
    %cst_247 = arith.constant 9.99999974E-6 : f32
    %587 = vector.broadcast %cst_247 : f32 to vector<8x1xf32>
    %588 = arith.addf %586, %587 : vector<8x1xf32>
    %589 = math.rsqrt %588 : vector<8x1xf32>
    %c0_248 = arith.constant 0 : index
    %c0_249 = arith.constant 0 : index
    %590 = vector.load %arg12[%c0_248, %c0_249] : memref<8x1xf32, #tpu.memory_space<vmem>>, vector<8x1xf32>
    %591 = arith.mulf %589, %590 : vector<8x1xf32>
    %c0_250 = arith.constant 0 : index
    %c0_251 = arith.constant 0 : index
    %592 = vector.load %arg13[%c0_250, %c0_251] : memref<8x1xf32, #tpu.memory_space<vmem>>, vector<8x1xf32>
    %593 = arith.mulf %582, %591 : vector<8x1xf32>
    %594 = arith.subf %592, %593 : vector<8x1xf32>
    %595 = vector.broadcast %591 : vector<8x1xf32> to vector<8x256xf32>
    %596 = arith.mulf %500, %595 : vector<8x256xf32>
    %597 = vector.broadcast %594 : vector<8x1xf32> to vector<8x256xf32>
    %598 = arith.addf %596, %597 : vector<8x256xf32>
    %599 = vector.broadcast %591 : vector<8x1xf32> to vector<8x256xf32>
    %600 = arith.mulf %501, %599 : vector<8x256xf32>
    %601 = vector.broadcast %594 : vector<8x1xf32> to vector<8x256xf32>
    %602 = arith.addf %600, %601 : vector<8x256xf32>
    %603 = vector.broadcast %591 : vector<8x1xf32> to vector<8x256xf32>
    %604 = arith.mulf %503, %603 : vector<8x256xf32>
    %605 = vector.broadcast %594 : vector<8x1xf32> to vector<8x256xf32>
    %606 = arith.addf %604, %605 : vector<8x256xf32>
    %607 = vector.broadcast %591 : vector<8x1xf32> to vector<8x256xf32>
    %608 = arith.mulf %504, %607 : vector<8x256xf32>
    %609 = vector.broadcast %594 : vector<8x1xf32> to vector<8x256xf32>
    %610 = arith.addf %608, %609 : vector<8x256xf32>
    %611 = vector.broadcast %591 : vector<8x1xf32> to vector<8x256xf32>
    %612 = arith.mulf %506, %611 : vector<8x256xf32>
    %613 = vector.broadcast %594 : vector<8x1xf32> to vector<8x256xf32>
    %614 = arith.addf %612, %613 : vector<8x256xf32>
    %615 = vector.broadcast %591 : vector<8x1xf32> to vector<8x256xf32>
    %616 = arith.mulf %507, %615 : vector<8x256xf32>
    %617 = vector.broadcast %594 : vector<8x1xf32> to vector<8x256xf32>
    %618 = arith.addf %616, %617 : vector<8x256xf32>
    %619 = vector.broadcast %591 : vector<8x1xf32> to vector<8x256xf32>
    %620 = arith.mulf %509, %619 : vector<8x256xf32>
    %621 = vector.broadcast %594 : vector<8x1xf32> to vector<8x256xf32>
    %622 = arith.addf %620, %621 : vector<8x256xf32>
    %623 = vector.broadcast %591 : vector<8x1xf32> to vector<8x256xf32>
    %624 = arith.mulf %510, %623 : vector<8x256xf32>
    %625 = vector.broadcast %594 : vector<8x1xf32> to vector<8x256xf32>
    %626 = arith.addf %624, %625 : vector<8x256xf32>
    %cst_252 = arith.constant 0.000000e+00 : f32
    %627 = vector.broadcast %cst_252 : f32 to vector<8x256xf32>
    %628 = arith.cmpf ogt, %598, %627 : vector<8x256xf32>
    %cst_253 = arith.constant 2.000000e-01 : f32
    %629 = vector.broadcast %cst_253 : f32 to vector<8x256xf32>
    %630 = arith.mulf %629, %598 : vector<8x256xf32>
    %631 = arith.select %628, %598, %630 : vector<8x256xi1>, vector<8x256xf32>
    %cst_254 = arith.constant 0.000000e+00 : f32
    %632 = vector.broadcast %cst_254 : f32 to vector<8x256xf32>
    %633 = arith.cmpf ogt, %602, %632 : vector<8x256xf32>
    %cst_255 = arith.constant 2.000000e-01 : f32
    %634 = vector.broadcast %cst_255 : f32 to vector<8x256xf32>
    %635 = arith.mulf %634, %602 : vector<8x256xf32>
    %636 = arith.select %633, %602, %635 : vector<8x256xi1>, vector<8x256xf32>
    %cst_256 = arith.constant 0.000000e+00 : f32
    %637 = vector.broadcast %cst_256 : f32 to vector<8x256xf32>
    %638 = arith.cmpf ogt, %606, %637 : vector<8x256xf32>
    %cst_257 = arith.constant 2.000000e-01 : f32
    %639 = vector.broadcast %cst_257 : f32 to vector<8x256xf32>
    %640 = arith.mulf %639, %606 : vector<8x256xf32>
    %641 = arith.select %638, %606, %640 : vector<8x256xi1>, vector<8x256xf32>
    %cst_258 = arith.constant 0.000000e+00 : f32
    %642 = vector.broadcast %cst_258 : f32 to vector<8x256xf32>
    %643 = arith.cmpf ogt, %610, %642 : vector<8x256xf32>
    %cst_259 = arith.constant 2.000000e-01 : f32
    %644 = vector.broadcast %cst_259 : f32 to vector<8x256xf32>
    %645 = arith.mulf %644, %610 : vector<8x256xf32>
    %646 = arith.select %643, %610, %645 : vector<8x256xi1>, vector<8x256xf32>
    %cst_260 = arith.constant 0.000000e+00 : f32
    %647 = vector.broadcast %cst_260 : f32 to vector<8x256xf32>
    %648 = arith.cmpf ogt, %614, %647 : vector<8x256xf32>
    %cst_261 = arith.constant 2.000000e-01 : f32
    %649 = vector.broadcast %cst_261 : f32 to vector<8x256xf32>
    %650 = arith.mulf %649, %614 : vector<8x256xf32>
    %651 = arith.select %648, %614, %650 : vector<8x256xi1>, vector<8x256xf32>
    %cst_262 = arith.constant 0.000000e+00 : f32
    %652 = vector.broadcast %cst_262 : f32 to vector<8x256xf32>
    %653 = arith.cmpf ogt, %618, %652 : vector<8x256xf32>
    %cst_263 = arith.constant 2.000000e-01 : f32
    %654 = vector.broadcast %cst_263 : f32 to vector<8x256xf32>
    %655 = arith.mulf %654, %618 : vector<8x256xf32>
    %656 = arith.select %653, %618, %655 : vector<8x256xi1>, vector<8x256xf32>
    %cst_264 = arith.constant 0.000000e+00 : f32
    %657 = vector.broadcast %cst_264 : f32 to vector<8x256xf32>
    %658 = arith.cmpf ogt, %622, %657 : vector<8x256xf32>
    %cst_265 = arith.constant 2.000000e-01 : f32
    %659 = vector.broadcast %cst_265 : f32 to vector<8x256xf32>
    %660 = arith.mulf %659, %622 : vector<8x256xf32>
    %661 = arith.select %658, %622, %660 : vector<8x256xi1>, vector<8x256xf32>
    %cst_266 = arith.constant 0.000000e+00 : f32
    %662 = vector.broadcast %cst_266 : f32 to vector<8x256xf32>
    %663 = arith.cmpf ogt, %626, %662 : vector<8x256xf32>
    %cst_267 = arith.constant 2.000000e-01 : f32
    %664 = vector.broadcast %cst_267 : f32 to vector<8x256xf32>
    %665 = arith.mulf %664, %626 : vector<8x256xf32>
    %666 = arith.select %663, %626, %665 : vector<8x256xi1>, vector<8x256xf32>
    %c0_268 = arith.constant 0 : index
    %c0_269 = arith.constant 0 : index
    %667 = vector.load %arg14[%c0_268, %c0_269] : memref<2x40xbf16, #tpu.memory_space<vmem>>, vector<2x40xbf16>
    %c1_i32_270 = arith.constant 1 : i32
    %668 = tpu.dynamic_rotate %661 by %c1_i32_270 dim 1 : vector<8x256xf32>, i32 -> vector<8x256xf32>
    %669 = vector.broadcast %42 : vector<1x256xf32> to vector<8x256xf32>
    %670 = arith.mulf %668, %669 : vector<8x256xf32>
    %671 = arith.truncf %670 : vector<8x256xf32> to vector<8x256xbf16>
    %c1_i32_271 = arith.constant 1 : i32
    %672 = tpu.dynamic_rotate %666 by %c1_i32_271 dim 1 : vector<8x256xf32>, i32 -> vector<8x256xf32>
    %673 = vector.broadcast %42 : vector<1x256xf32> to vector<8x256xf32>
    %674 = arith.mulf %672, %673 : vector<8x256xf32>
    %675 = arith.truncf %674 : vector<8x256xf32> to vector<8x256xbf16>
    %676 = arith.truncf %631 : vector<8x256xf32> to vector<8x256xbf16>
    %677 = arith.truncf %636 : vector<8x256xf32> to vector<8x256xbf16>
    %678 = arith.truncf %641 : vector<8x256xf32> to vector<8x256xbf16>
    %679 = arith.truncf %646 : vector<8x256xf32> to vector<8x256xbf16>
    %680 = arith.truncf %651 : vector<8x256xf32> to vector<8x256xbf16>
    %681 = arith.truncf %656 : vector<8x256xf32> to vector<8x256xbf16>
    %682 = tpu.concatenate %671, %675, %676, %677, %678, %679, %680, %681 in 1 : vector<8x256xbf16>, vector<8x256xbf16>, vector<8x256xbf16>, vector<8x256xbf16>, vector<8x256xbf16>, vector<8x256xbf16>, vector<8x256xbf16>, vector<8x256xbf16> -> vector<8x2048xbf16>
    %683 = arith.truncf %661 : vector<8x256xf32> to vector<8x256xbf16>
    %684 = tpu.concatenate %675, %676, %677, %678, %679, %680, %681, %683 in 1 : vector<8x256xbf16>, vector<8x256xbf16>, vector<8x256xbf16>, vector<8x256xbf16>, vector<8x256xbf16>, vector<8x256xbf16>, vector<8x256xbf16>, vector<8x256xbf16> -> vector<8x2048xbf16>
    %685 = arith.truncf %666 : vector<8x256xf32> to vector<8x256xbf16>
    %686 = tpu.concatenate %676, %677, %678, %679, %680, %681, %683, %685 in 1 : vector<8x256xbf16>, vector<8x256xbf16>, vector<8x256xbf16>, vector<8x256xbf16>, vector<8x256xbf16>, vector<8x256xbf16>, vector<8x256xbf16>, vector<8x256xbf16> -> vector<8x2048xbf16>
    %c255_i32_272 = arith.constant 255 : i32
    %687 = tpu.dynamic_rotate %631 by %c255_i32_272 dim 1 : vector<8x256xf32>, i32 -> vector<8x256xf32>
    %688 = vector.broadcast %53 : vector<1x256xf32> to vector<8x256xf32>
    %689 = arith.mulf %687, %688 : vector<8x256xf32>
    %690 = arith.truncf %689 : vector<8x256xf32> to vector<8x256xbf16>
    %691 = tpu.concatenate %677, %678, %679, %680, %681, %683, %685, %690 in 1 : vector<8x256xbf16>, vector<8x256xbf16>, vector<8x256xbf16>, vector<8x256xbf16>, vector<8x256xbf16>, vector<8x256xbf16>, vector<8x256xbf16>, vector<8x256xbf16> -> vector<8x2048xbf16>
    %c255_i32_273 = arith.constant 255 : i32
    %692 = tpu.dynamic_rotate %636 by %c255_i32_273 dim 1 : vector<8x256xf32>, i32 -> vector<8x256xf32>
    %693 = vector.broadcast %53 : vector<1x256xf32> to vector<8x256xf32>
    %694 = arith.mulf %692, %693 : vector<8x256xf32>
    %695 = arith.truncf %694 : vector<8x256xf32> to vector<8x256xbf16>
    %696 = tpu.concatenate %678, %679, %680, %681, %683, %685, %690, %695 in 1 : vector<8x256xbf16>, vector<8x256xbf16>, vector<8x256xbf16>, vector<8x256xbf16>, vector<8x256xbf16>, vector<8x256xbf16>, vector<8x256xbf16>, vector<8x256xbf16> -> vector<8x2048xbf16>
    %697 = tpu.concatenate %682, %684, %686, %691, %696 in 0 : vector<8x2048xbf16>, vector<8x2048xbf16>, vector<8x2048xbf16>, vector<8x2048xbf16>, vector<8x2048xbf16> -> vector<40x2048xbf16>
    %cst_274 = arith.constant dense<0.000000e+00> : vector<2x2048xf32>
    %698 = tpu.matmul %667, %697, %cst_274 {dimension_numbers = #tpu.dot_dimension_numbers<[1], [0], [0], [1], [0, 0, 1, 1], [], []>} : vector<2x40xbf16>, vector<40x2048xbf16>, vector<2x2048xf32> -> vector<2x2048xf32>
    %699 = vector.extract_strided_slice %698 {offsets = [0, 0], sizes = [2, 256], strides = [1, 1]} : vector<2x2048xf32> to vector<2x256xf32>
    %700 = vector.extract_strided_slice %699 {offsets = [0, 0], sizes = [1, 256], strides = [1, 1]} : vector<2x256xf32> to vector<1x256xf32>
    %701 = vector.extract_strided_slice %699 {offsets = [1, 0], sizes = [1, 256], strides = [1, 1]} : vector<2x256xf32> to vector<1x256xf32>
    %702 = vector.extract_strided_slice %698 {offsets = [0, 256], sizes = [2, 256], strides = [1, 1]} : vector<2x2048xf32> to vector<2x256xf32>
    %703 = vector.extract_strided_slice %702 {offsets = [0, 0], sizes = [1, 256], strides = [1, 1]} : vector<2x256xf32> to vector<1x256xf32>
    %704 = vector.extract_strided_slice %702 {offsets = [1, 0], sizes = [1, 256], strides = [1, 1]} : vector<2x256xf32> to vector<1x256xf32>
    %705 = vector.extract_strided_slice %698 {offsets = [0, 512], sizes = [2, 256], strides = [1, 1]} : vector<2x2048xf32> to vector<2x256xf32>
    %706 = vector.extract_strided_slice %705 {offsets = [0, 0], sizes = [1, 256], strides = [1, 1]} : vector<2x256xf32> to vector<1x256xf32>
    %707 = vector.extract_strided_slice %705 {offsets = [1, 0], sizes = [1, 256], strides = [1, 1]} : vector<2x256xf32> to vector<1x256xf32>
    %708 = vector.extract_strided_slice %698 {offsets = [0, 768], sizes = [2, 256], strides = [1, 1]} : vector<2x2048xf32> to vector<2x256xf32>
    %709 = vector.extract_strided_slice %708 {offsets = [0, 0], sizes = [1, 256], strides = [1, 1]} : vector<2x256xf32> to vector<1x256xf32>
    %710 = vector.extract_strided_slice %708 {offsets = [1, 0], sizes = [1, 256], strides = [1, 1]} : vector<2x256xf32> to vector<1x256xf32>
    %711 = vector.extract_strided_slice %698 {offsets = [0, 1024], sizes = [2, 256], strides = [1, 1]} : vector<2x2048xf32> to vector<2x256xf32>
    %712 = vector.extract_strided_slice %711 {offsets = [0, 0], sizes = [1, 256], strides = [1, 1]} : vector<2x256xf32> to vector<1x256xf32>
    %713 = vector.extract_strided_slice %711 {offsets = [1, 0], sizes = [1, 256], strides = [1, 1]} : vector<2x256xf32> to vector<1x256xf32>
    %714 = vector.extract_strided_slice %698 {offsets = [0, 1280], sizes = [2, 256], strides = [1, 1]} : vector<2x2048xf32> to vector<2x256xf32>
    %715 = vector.extract_strided_slice %714 {offsets = [0, 0], sizes = [1, 256], strides = [1, 1]} : vector<2x256xf32> to vector<1x256xf32>
    %716 = vector.extract_strided_slice %714 {offsets = [1, 0], sizes = [1, 256], strides = [1, 1]} : vector<2x256xf32> to vector<1x256xf32>
    %717 = vector.extract_strided_slice %698 {offsets = [0, 1536], sizes = [2, 256], strides = [1, 1]} : vector<2x2048xf32> to vector<2x256xf32>
    %718 = vector.extract_strided_slice %717 {offsets = [0, 0], sizes = [1, 256], strides = [1, 1]} : vector<2x256xf32> to vector<1x256xf32>
    %719 = vector.extract_strided_slice %717 {offsets = [1, 0], sizes = [1, 256], strides = [1, 1]} : vector<2x256xf32> to vector<1x256xf32>
    %720 = vector.extract_strided_slice %698 {offsets = [0, 1792], sizes = [2, 256], strides = [1, 1]} : vector<2x2048xf32> to vector<2x256xf32>
    %721 = vector.extract_strided_slice %720 {offsets = [0, 0], sizes = [1, 256], strides = [1, 1]} : vector<2x256xf32> to vector<1x256xf32>
    %722 = vector.extract_strided_slice %720 {offsets = [1, 0], sizes = [1, 256], strides = [1, 1]} : vector<2x256xf32> to vector<1x256xf32>
    %723 = tpu.concatenate %700, %701, %703, %704, %706, %707, %709, %710, %712, %713, %715, %716, %718, %719, %721, %722 in 0 : vector<1x256xf32>, vector<1x256xf32>, vector<1x256xf32>, vector<1x256xf32>, vector<1x256xf32>, vector<1x256xf32>, vector<1x256xf32>, vector<1x256xf32>, vector<1x256xf32>, vector<1x256xf32>, vector<1x256xf32>, vector<1x256xf32>, vector<1x256xf32>, vector<1x256xf32>, vector<1x256xf32>, vector<1x256xf32> -> vector<16x256xf32>
    %724 = vector.broadcast %20 : vector<1x256xf32> to vector<16x256xf32>
    %725 = arith.mulf %723, %724 : vector<16x256xf32>
    %cst_275 = arith.constant dense<0.000000e+00> : vector<16xf32>
    %726 = vector.multi_reduction <add>, %725, %cst_275 [1] : vector<16x256xf32> to vector<16xf32>
    %727 = vector.shape_cast %726 : vector<16xf32> to vector<16x1xf32>
    %cst_276 = arith.constant dense<0.000000e+00> : vector<1xf32>
    %728 = vector.multi_reduction <add>, %727, %cst_276 [0] : vector<16x1xf32> to vector<1xf32>
    %729 = vector.shape_cast %728 : vector<1xf32> to vector<1x1xf32>
    %730 = arith.mulf %725, %723 : vector<16x256xf32>
    %cst_277 = arith.constant dense<0.000000e+00> : vector<16xf32>
    %731 = vector.multi_reduction <add>, %730, %cst_277 [1] : vector<16x256xf32> to vector<16xf32>
    %732 = vector.shape_cast %731 : vector<16xf32> to vector<16x1xf32>
    %cst_278 = arith.constant dense<0.000000e+00> : vector<1xf32>
    %733 = vector.multi_reduction <add>, %732, %cst_278 [0] : vector<16x1xf32> to vector<1xf32>
    %734 = vector.shape_cast %733 : vector<1xf32> to vector<1x1xf32>
    %cst_279 = arith.constant 4.000000e+03 : f32
    %735 = vector.broadcast %cst_279 : f32 to vector<1x1xf32>
    %736 = arith.divf %729, %735 : vector<1x1xf32>
    %cst_280 = arith.constant 4.000000e+03 : f32
    %737 = vector.broadcast %cst_280 : f32 to vector<1x1xf32>
    %738 = arith.divf %734, %737 : vector<1x1xf32>
    %739 = arith.mulf %736, %736 : vector<1x1xf32>
    %740 = arith.subf %738, %739 : vector<1x1xf32>
    %cst_281 = arith.constant 9.99999974E-6 : f32
    %741 = vector.broadcast %cst_281 : f32 to vector<1x1xf32>
    %742 = arith.addf %740, %741 : vector<1x1xf32>
    %743 = math.rsqrt %742 : vector<1x1xf32>
    %c0_282 = arith.constant 0 : index
    %c0_283 = arith.constant 0 : index
    %744 = vector.load %arg15[%c0_282, %c0_283] : memref<1x1xf32, #tpu.memory_space<vmem>>, vector<1x1xf32>
    %745 = arith.mulf %743, %744 : vector<1x1xf32>
    %746 = vector.broadcast %736 : vector<1x1xf32> to vector<16x256xf32>
    %747 = arith.subf %723, %746 : vector<16x256xf32>
    %748 = vector.broadcast %745 : vector<1x1xf32> to vector<16x256xf32>
    %749 = arith.mulf %747, %748 : vector<16x256xf32>
    %c0_284 = arith.constant 0 : index
    %c0_285 = arith.constant 0 : index
    %750 = vector.load %arg16[%c0_284, %c0_285] : memref<1x1xf32, #tpu.memory_space<vmem>>, vector<1x1xf32>
    %751 = vector.broadcast %750 : vector<1x1xf32> to vector<16x256xf32>
    %752 = arith.addf %749, %751 : vector<16x256xf32>
    %753 = math.tanh %752 : vector<16x256xf32>
    %c0_286 = arith.constant 0 : index
    %c0_287 = arith.constant 0 : index
    %754 = vector.load %arg17[%c0_286, %c0_287] : memref<16x256xf32, #tpu.memory_space<vmem>>, vector<16x256xf32>
    tpu.vector_store %arg17[%c0_286, %c0_287], %753 {strides = array<i32>} : memref<16x256xf32, #tpu.memory_space<vmem>>, vector<16x256xf32>,
    return
  }
}

</mosaic_0001>

<llo_original>
// kernel: generator_forward.1
$region0: #{generator_forward.1}
  #allocation0 [shape = 'u32[]', space=smem, size = 0x4, offset = 0x4, fixed_abs, tag = 'smem constant byte address 0x4 - core index']
  #allocation1 [shape = 'u32[144,128]{1,0:T(1,128)}', space=vmem, size = 0x12000, scoped, tag = 'internal scratch']
  #allocation2 [shape = 'f32[1,1]{1,0:T(1,128)S(1)}', space=vmem, size = 0x200, scoped, tag = 'scoped memory for generator_forward.1']
  #allocation3 [shape = 'f32[1,1]{1,0:T(1,128)S(1)}', space=vmem, size = 0x200, scoped, tag = 'scoped memory for generator_forward.1']
  %s0 = inlined_call_operand.vmem [shape: f32[2,16], index: 0, kind: input, shape index: {}]
  %s1 = inlined_call_operand.vmem [shape: f32[16,256,128], index: 1, kind: input, shape index: {}]
  %s2 = inlined_call_operand.vmem [shape: f32[256,128], index: 2, kind: input, shape index: {}]
  %s3 = inlined_call_operand.vmem [shape: f32[256,1], index: 3, kind: input, shape index: {}]
  %s4 = inlined_call_operand.vmem [shape: f32[256,1], index: 4, kind: input, shape index: {}]
  %s5 = inlined_call_operand.vmem [shape: bf16[256,1280], index: 5, kind: input, shape index: {}]
  %s6 = inlined_call_operand.vmem [shape: f32[128,1], index: 6, kind: input, shape index: {}]
  %s7 = inlined_call_operand.vmem [shape: f32[128,1], index: 7, kind: input, shape index: {}]
  %s8 = inlined_call_operand.vmem [shape: bf16[64,640], index: 8, kind: input, shape index: {}]
  %s9 = inlined_call_operand.vmem [shape: f32[32,1], index: 9, kind: input, shape index: {}]
  %s10 = inlined_call_operand.vmem [shape: f32[32,1], index: 10, kind: input, shape index: {}]
  %s11 = inlined_call_operand.vmem [shape: bf16[16,160], index: 11, kind: input, shape index: {}]
  %s12 = inlined_call_operand.vmem [shape: f32[8,1], index: 12, kind: input, shape index: {}]
  %s13 = inlined_call_operand.vmem [shape: f32[8,1], index: 13, kind: input, shape index: {}]
  %s14 = inlined_call_operand.vmem [shape: bf16[2,40], index: 14, kind: input, shape index: {}]
  %s15 = inlined_call_operand.<no memory space> [shape: f32[1,1], index: 15, kind: input, shape index: {}]
  %s16 = inlined_call_operand.<no memory space> [shape: f32[1,1], index: 16, kind: input, shape index: {}]
  %s17 = inlined_call_operand.vmem [shape: f32[16,256], index: 17, kind: output, shape index: {}]
  %s18 = sld [smem:[#allocation0]]
  $region78: #{generator_forward.1} parent=0
    _
  %s20 = ssub.s32 1, %s18
  %s21 = scalar_select 0, %s20, %s18
  %v22 = vstv %s15
  %23 = vst [vmem:[#allocation2] sm:$0x1] %v22
  %v24 = vstv %s16
  %25 = vst [vmem:[#allocation3] sm:$0x1] %v24
  // Predicated region
  $region2: #{generator_forward.1} parent=0 // pred_check
    _
  $region3: #{generator_forward.1} parent=0 // pred_check_branch
    %27 = sbr.rel (0) target = $region5
  $region4: #{generator_forward.1} parent=0 // pred_region
    _
  $region5: #{generator_forward.1} parent=0 // pred_fallthru
    _
  // Predicated region
  $region6: #{generator_forward.1} parent=0 // pred_check
    _
  $region7: #{generator_forward.1} parent=0 // pred_check_branch
    %29 = sbr.rel (0) target = $region9
  $region8: #{generator_forward.1} parent=0 // pred_region
    _
  $region9: #{generator_forward.1} parent=0 // pred_fallthru
    _
  // Predicated region
  $region10: #{generator_forward.1} parent=0 // pred_check
    _
  $region11: #{generator_forward.1} parent=0 // pred_check_branch
    %31 = sbr.rel (0) target = $region13
  $region12: #{generator_forward.1} parent=0 // pred_region
    _
  $region13: #{generator_forward.1} parent=0 // pred_fallthru
    _
  // Predicated region
  $region14: #{generator_forward.1} parent=0 // pred_check
    _
  $region15: #{generator_forward.1} parent=0 // pred_check_branch
    %33 = sbr.rel (0) target = $region17
  $region16: #{generator_forward.1} parent=0 // pred_region
    _
  $region17: #{generator_forward.1} parent=0 // pred_fallthru
    _
  // Predicated region
  $region18: #{generator_forward.1} parent=0 // pred_check
    _
  $region19: #{generator_forward.1} parent=0 // pred_check_branch
    %35 = sbr.rel (0) target = $region21
  $region20: #{generator_forward.1} parent=0 // pred_region
    _
  $region21: #{generator_forward.1} parent=0 // pred_fallthru
    _
  // Predicated region
  $region22: #{generator_forward.1} parent=0 // pred_check
    _
  $region23: #{generator_forward.1} parent=0 // pred_check_branch
    %37 = sbr.rel (0) target = $region25
  $region24: #{generator_forward.1} parent=0 // pred_region
    _
  $region25: #{generator_forward.1} parent=0 // pred_fallthru
    _
  // Predicated region
  $region26: #{generator_forward.1} parent=0 // pred_check
    _
  $region27: #{generator_forward.1} parent=0 // pred_check_branch
    %39 = sbr.rel (0) target = $region29
  $region28: #{generator_forward.1} parent=0 // pred_region
    _
  $region29: #{generator_forward.1} parent=0 // pred_fallthru
    _
  // Predicated region
  $region30: #{generator_forward.1} parent=0 // pred_check
    _
  $region31: #{generator_forward.1} parent=0 // pred_check_branch
    %41 = sbr.rel (0) target = $region33
  $region32: #{generator_forward.1} parent=0 // pred_region
    _
  $region33: #{generator_forward.1} parent=0 // pred_fallthru
    _
  // Predicated region
  $region34: #{generator_forward.1} parent=0 // pred_check
    _
  $region35: #{generator_forward.1} parent=0 // pred_check_branch
    %43 = sbr.rel (0) target = $region37
  $region36: #{generator_forward.1} parent=0 // pred_region
    _
  $region37: #{generator_forward.1} parent=0 // pred_fallthru
    _
  // Predicated region
  $region38: #{generator_forward.1} parent=0 // pred_check
    _
  $region39: #{generator_forward.1} parent=0 // pred_check_branch
    %45 = sbr.rel (0) target = $region41
  $region40: #{generator_forward.1} parent=0 // pred_region
    _
  $region41: #{generator_forward.1} parent=0 // pred_fallthru
    _
  // Predicated region
  $region42: #{generator_forward.1} parent=0 // pred_check
    _
  $region43: #{generator_forward.1} parent=0 // pred_check_branch
    %47 = sbr.rel (0) target = $region45
  $region44: #{generator_forward.1} parent=0 // pred_region
    _
  $region45: #{generator_forward.1} parent=0 // pred_fallthru
    _
  // Predicated region
  $region46: #{generator_forward.1} parent=0 // pred_check
    _
  $region47: #{generator_forward.1} parent=0 // pred_check_branch
    %49 = sbr.rel (0) target = $region49
  $region48: #{generator_forward.1} parent=0 // pred_region
    _
  $region49: #{generator_forward.1} parent=0 // pred_fallthru
    _
  // Predicated region
  $region50: #{generator_forward.1} parent=0 // pred_check
    _
  $region51: #{generator_forward.1} parent=0 // pred_check_branch
    %51 = sbr.rel (0) target = $region53
  $region52: #{generator_forward.1} parent=0 // pred_region
    _
  $region53: #{generator_forward.1} parent=0 // pred_fallthru
    _
  // Predicated region
  $region54: #{generator_forward.1} parent=0 // pred_check
    _
  $region55: #{generator_forward.1} parent=0 // pred_check_branch
    %53 = sbr.rel (0) target = $region57
  $region56: #{generator_forward.1} parent=0 // pred_region
    _
  $region57: #{generator_forward.1} parent=0 // pred_fallthru
    _
  // Predicated region
  $region58: #{generator_forward.1} parent=0 // pred_check
    _
  $region59: #{generator_forward.1} parent=0 // pred_check_branch
    %55 = sbr.rel (0) target = $region61
  $region60: #{generator_forward.1} parent=0 // pred_region
    _
  $region61: #{generator_forward.1} parent=0 // pred_fallthru
    _
  // Predicated region
  $region62: #{generator_forward.1} parent=0 // pred_check
    _
  $region63: #{generator_forward.1} parent=0 // pred_check_branch
    %57 = sbr.rel (0) target = $region65
  $region64: #{generator_forward.1} parent=0 // pred_region
    _
  $region65: #{generator_forward.1} parent=0 // pred_fallthru
    _
  // Predicated region
  $region66: #{generator_forward.1} parent=0 // pred_check
    _
  $region67: #{generator_forward.1} parent=0 // pred_check_branch
    %59 = sbr.rel (0) target = $region69
  $region68: #{generator_forward.1} parent=0 // pred_region
    _
  $region69: #{generator_forward.1} parent=0 // pred_fallthru
    _
  %v61 = vlaneseq
  %v62 = vand.u32 %v61, 127
  %v63 = vadd.s32 %v62, 128
  %vm64 = vcmp.lt.s32.totalorder %v62, 0
  %v65 = vsub.s32 0, %v62
  %v66 = vsel %vm64, %v65, %v62
  %v67 = vshrl.u32 %v66, 7
  %v68 = vand.u32 %v66, 127
  %v69 = vsub.s32 0, %v68
  %v70 = vsel %vm64, %v69, %v68
  %vm71 = vcmp.lt.s32.totalorder %v63, 0
  %v72 = vsub.s32 0, %v63
  %v73 = vsel %vm71, %v72, %v63
  %v74 = vshrl.u32 %v73, 7
  %v75 = vand.u32 %v73, 127
  %v76 = vsub.s32 0, %v75
  %v77 = vsel %vm71, %v76, %v75
  %vm78 = vcmp.ne.s32.totalorder %v70, 0
  %vm79 = vcmp.ne.s32.totalorder %v77, 0
  %vm80 = vcmp.lt.s32.totalorder %v70, 0
  %vm81 = vcmp.lt.s32.totalorder %v77, 0
  %vm82 = vmand %vm80, %vm78
  %vm83 = vmand %vm81, %vm79
  %v84 = vadd.s32 %v70, 128
  %v85 = vadd.s32 %v77, 128
  %v86 = vsel %vm82, %v84, %v70
  %v87 = vsel %vm83, %v85, %v77
  %vm88 = vcmp.lt.s32.totalorder %v86, 125
  %vm89 = vcmp.lt.s32.totalorder %v87, 125
  %v90 = vsel %vm88, 1, 0
  %v91 = vsel %vm89, 1, 0
  %v92 = vcvt.s32.f32 %v90
  %v93 = vcvt.s32.f32 %v91
  %v94 = vadd.s32 %v86, 4294967294
  %v95 = vadd.s32 %v87, 4294967294
  %vm96 = vcmp.ge.s32.totalorder %v94, 0
  %vm97 = vcmp.ge.s32.totalorder %v95, 0
  %vm98 = vcmp.lt.s32.totalorder %v94, 125
  %vm99 = vcmp.lt.s32.totalorder %v95, 125
  %vm100 = vmand %vm96, %vm98
  %vm101 = vmand %vm97, %vm99
  %v102 = vsel %vm100, 1, 0
  %v103 = vsel %vm101, 1, 0
  %v104 = vcvt.s32.f32 %v102
  %v105 = vcvt.s32.f32 %v103
  %v106 = vadd.s32 %v86, 4294967295
  %v107 = vadd.s32 %v87, 4294967295
  %vm108 = vcmp.ge.s32.totalorder %v106, 0
  %vm109 = vcmp.ge.s32.totalorder %v107, 0
  %vm110 = vcmp.lt.s32.totalorder %v106, 125
  %vm111 = vcmp.lt.s32.totalorder %v107, 125
  %vm112 = vmand %vm108, %vm110
  %vm113 = vmand %vm109, %vm111
  %v114 = vsel %vm112, 1, 0
  %v115 = vsel %vm113, 1, 0
  %v116 = vcvt.s32.f32 %v114
  %v117 = vcvt.s32.f32 %v115
  %v118 = vadd.s32 %v86, 1
  %v119 = vadd.s32 %v87, 1
  %vm120 = vcmp.ge.s32.totalorder %v118, 0
  %vm121 = vcmp.ge.s32.totalorder %v119, 0
  %vm122 = vcmp.lt.s32.totalorder %v118, 125
  %vm123 = vcmp.lt.s32.totalorder %v119, 125
  %vm124 = vmand %vm120, %vm122
  %vm125 = vmand %vm121, %vm123
  %v126 = vsel %vm124, 1, 0
  %v127 = vsel %vm125, 1, 0
  %v128 = vcvt.s32.f32 %v126
  %v129 = vcvt.s32.f32 %v127
  %v130 = vadd.s32 %v86, 2
  %v131 = vadd.s32 %v87, 2
  %vm132 = vcmp.ge.s32.totalorder %v130, 0
  %vm133 = vcmp.ge.s32.totalorder %v131, 0
  %vm134 = vcmp.lt.s32.totalorder %v130, 125
  %vm135 = vcmp.lt.s32.totalorder %v131, 125
  %vm136 = vmand %vm132, %vm134
  %vm137 = vmand %vm133, %vm135
  %v138 = vsel %vm136, 1, 0
  %v139 = vsel %vm137, 1, 0
  %v140 = vcvt.s32.f32 %v138
  %v141 = vcvt.s32.f32 %v139
  %v142 = vld [vmem:[%s2] sm:$0xff]
  %v143 = vld [vmem:[%s2 + $0x8] sm:$0xff]
  %v144 = vld [vmem:[%s2 + $0x10] sm:$0xff]
  %v145 = vld [vmem:[%s2 + $0x18] sm:$0xff]
  %v146 = vld [vmem:[%s2 + $0x20] sm:$0xff]
  %v147 = vld [vmem:[%s2 + $0x28] sm:$0xff]
  %v148 = vld [vmem:[%s2 + $0x30] sm:$0xff]
  %v149 = vld [vmem:[%s2 + $0x38] sm:$0xff]
  %v150 = vld [vmem:[%s2 + $0x40] sm:$0xff]
  %v151 = vld [vmem:[%s2 + $0x48] sm:$0xff]
  %v152 = vld [vmem:[%s2 + $0x50] sm:$0xff]
  %v153 = vld [vmem:[%s2 + $0x58] sm:$0xff]
  %v154 = vld [vmem:[%s2 + $0x60] sm:$0xff]
  %v155 = vld [vmem:[%s2 + $0x68] sm:$0xff]
  %v156 = vld [vmem:[%s2 + $0x70] sm:$0xff]
  %v157 = vld [vmem:[%s2 + $0x78] sm:$0xff]
  %v158 = vld [vmem:[%s2 + $0x80] sm:$0xff]
  %v159 = vld [vmem:[%s2 + $0x88] sm:$0xff]
  %v160 = vld [vmem:[%s2 + $0x90] sm:$0xff]
  %v161 = vld [vmem:[%s2 + $0x98] sm:$0xff]
  %v162 = vld [vmem:[%s2 + $0xa0] sm:$0xff]
  %v163 = vld [vmem:[%s2 + $0xa8] sm:$0xff]
  %v164 = vld [vmem:[%s2 + $0xb0] sm:$0xff]
  %v165 = vld [vmem:[%s2 + $0xb8] sm:$0xff]
  %v166 = vld [vmem:[%s2 + $0xc0] sm:$0xff]
  %v167 = vld [vmem:[%s2 + $0xc8] sm:$0xff]
  %v168 = vld [vmem:[%s2 + $0xd0] sm:$0xff]
  %v169 = vld [vmem:[%s2 + $0xd8] sm:$0xff]
  %v170 = vld [vmem:[%s2 + $0xe0] sm:$0xff]
  %v171 = vld [vmem:[%s2 + $0xe8] sm:$0xff]
  %v172 = vld [vmem:[%s2 + $0xf0] sm:$0xff]
  %v173 = vld [vmem:[%s2 + $0xf8] sm:$0xff]
  %v174 = vld [vmem:[%s0] sm:$0x1]
  %v175 = vld [vmem:[%s1] sm:$0xff]
  %v176 = vld [vmem:[%s1 + $0x8] sm:$0xff]
  %v177 = vld [vmem:[%s1 + $0x10] sm:$0xff]
  %v178 = vld [vmem:[%s1 + $0x18] sm:$0xff]
  %v179 = vld [vmem:[%s1 + $0x20] sm:$0xff]
  %v180 = vld [vmem:[%s1 + $0x28] sm:$0xff]
  %v181 = vld [vmem:[%s1 + $0x30] sm:$0xff]
  %v182 = vld [vmem:[%s1 + $0x38] sm:$0xff]
  %v183 = vld [vmem:[%s1 + $0x40] sm:$0xff]
  %v184 = vld [vmem:[%s1 + $0x48] sm:$0xff]
  %v185 = vld [vmem:[%s1 + $0x50] sm:$0xff]
  %v186 = vld [vmem:[%s1 + $0x58] sm:$0xff]
  %v187 = vld [vmem:[%s1 + $0x60] sm:$0xff]
  %v188 = vld [vmem:[%s1 + $0x68] sm:$0xff]
  %v189 = vld [vmem:[%s1 + $0x70] sm:$0xff]
  %v190 = vld [vmem:[%s1 + $0x78] sm:$0xff]
  %v191 = vld [vmem:[%s1 + $0x80] sm:$0xff]
  %v192 = vld [vmem:[%s1 + $0x88] sm:$0xff]
  %v193 = vld [vmem:[%s1 + $0x90] sm:$0xff]
  %v194 = vld [vmem:[%s1 + $0x98] sm:$0xff]
  %v195 = vld [vmem:[%s1 + $0xa0] sm:$0xff]
  %v196 = vld [vmem:[%s1 + $0xa8] sm:$0xff]
  %v197 = vld [vmem:[%s1 + $0xb0] sm:$0xff]
  %v198 = vld [vmem:[%s1 + $0xb8] sm:$0xff]
  %v199 = vld [vmem:[%s1 + $0xc0] sm:$0xff]
  %v200 = vld [vmem:[%s1 + $0xc8] sm:$0xff]
  %v201 = vld [vmem:[%s1 + $0xd0] sm:$0xff]
  %v202 = vld [vmem:[%s1 + $0xd8] sm:$0xff]
  %v203 = vld [vmem:[%s1 + $0xe0] sm:$0xff]
  %v204 = vld [vmem:[%s1 + $0xe8] sm:$0xff]
  %v205 = vld [vmem:[%s1 + $0xf0] sm:$0xff]
  %v206 = vld [vmem:[%s1 + $0xf8] sm:$0xff]
  %s208 = vtos %v174
  %v209 = vstv %s208
  %v211 = vmul.f32 %v209, %v175
  %v212 = vmul.f32 %v209, %v176
  %v213 = vmul.f32 %v209, %v177
  %v214 = vmul.f32 %v209, %v178
  %v215 = vmul.f32 %v209, %v179
  %v216 = vmul.f32 %v209, %v180
  %v217 = vmul.f32 %v209, %v181
  %v218 = vmul.f32 %v209, %v182
  %v219 = vmul.f32 %v209, %v183
  %v220 = vmul.f32 %v209, %v184
  %v221 = vmul.f32 %v209, %v185
  %v222 = vmul.f32 %v209, %v186
  %v223 = vmul.f32 %v209, %v187
  %v224 = vmul.f32 %v209, %v188
  %v225 = vmul.f32 %v209, %v189
  %v226 = vmul.f32 %v209, %v190
  %v227 = vmul.f32 %v209, %v191
  %v228 = vmul.f32 %v209, %v192
  %v229 = vmul.f32 %v209, %v193
  %v230 = vmul.f32 %v209, %v194
  %v231 = vmul.f32 %v209, %v195
  %v232 = vmul.f32 %v209, %v196
  %v233 = vmul.f32 %v209, %v197
  %v234 = vmul.f32 %v209, %v198
  %v235 = vmul.f32 %v209, %v199
  %v236 = vmul.f32 %v209, %v200
  %v237 = vmul.f32 %v209, %v201
  %v238 = vmul.f32 %v209, %v202
  %v239 = vmul.f32 %v209, %v203
  %v240 = vmul.f32 %v209, %v204
  %v241 = vmul.f32 %v209, %v205
  %v242 = vmul.f32 %v209, %v206
  %v243 = vadd.f32 %v142, %v211
  %v244 = vadd.f32 %v143, %v212
  %v245 = vadd.f32 %v144, %v213
  %v246 = vadd.f32 %v145, %v214
  %v247 = vadd.f32 %v146, %v215
  %v248 = vadd.f32 %v147, %v216
  %v249 = vadd.f32 %v148, %v217
  %v250 = vadd.f32 %v149, %v218
  %v251 = vadd.f32 %v150, %v219
  %v252 = vadd.f32 %v151, %v220
  %v253 = vadd.f32 %v152, %v221
  %v254 = vadd.f32 %v153, %v222
  %v255 = vadd.f32 %v154, %v223
  %v256 = vadd.f32 %v155, %v224
  %v257 = vadd.f32 %v156, %v225
  %v258 = vadd.f32 %v157, %v226
  %v259 = vadd.f32 %v158, %v227
  %v260 = vadd.f32 %v159, %v228
  %v261 = vadd.f32 %v160, %v229
  %v262 = vadd.f32 %v161, %v230
  %v263 = vadd.f32 %v162, %v231
  %v264 = vadd.f32 %v163, %v232
  %v265 = vadd.f32 %v164, %v233
  %v266 = vadd.f32 %v165, %v234
  %v267 = vadd.f32 %v166, %v235
  %v268 = vadd.f32 %v167, %v236
  %v269 = vadd.f32 %v168, %v237
  %v270 = vadd.f32 %v169, %v238
  %v271 = vadd.f32 %v170, %v239
  %v272 = vadd.f32 %v171, %v240
  %v273 = vadd.f32 %v172, %v241
  %v274 = vadd.f32 %v173, %v242
  %s275 = scalar_lea.vmem %s1, 256
  %v276 = vld [vmem:[%s275] sm:$0xff]
  %v277 = vld [vmem:[%s275 + $0x8] sm:$0xff]
  %v278 = vld [vmem:[%s275 + $0x10] sm:$0xff]
  %v279 = vld [vmem:[%s275 + $0x18] sm:$0xff]
  %v280 = vld [vmem:[%s275 + $0x20] sm:$0xff]
  %v281 = vld [vmem:[%s275 + $0x28] sm:$0xff]
  %v282 = vld [vmem:[%s275 + $0x30] sm:$0xff]
  %v283 = vld [vmem:[%s275 + $0x38] sm:$0xff]
  %v284 = vld [vmem:[%s275 + $0x40] sm:$0xff]
  %v285 = vld [vmem:[%s275 + $0x48] sm:$0xff]
  %v286 = vld [vmem:[%s275 + $0x50] sm:$0xff]
  %v287 = vld [vmem:[%s275 + $0x58] sm:$0xff]
  %v288 = vld [vmem:[%s275 + $0x60] sm:$0xff]
  %v289 = vld [vmem:[%s275 + $0x68] sm:$0xff]
  %v290 = vld [vmem:[%s275 + $0x70] sm:$0xff]
  %v291 = vld [vmem:[%s275 + $0x78] sm:$0xff]
  %v292 = vld [vmem:[%s275 + $0x80] sm:$0xff]
  %v293 = vld [vmem:[%s275 + $0x88] sm:$0xff]
  %v294 = vld [vmem:[%s275 + $0x90] sm:$0xff]
  %v295 = vld [vmem:[%s275 + $0x98] sm:$0xff]
  %v296 = vld [vmem:[%s275 + $0xa0] sm:$0xff]
  %v297 = vld [vmem:[%s275 + $0xa8] sm:$0xff]
  %v298 = vld [vmem:[%s275 + $0xb0] sm:$0xff]
  %v299 = vld [vmem:[%s275 + $0xb8] sm:$0xff]
  %v300 = vld [vmem:[%s275 + $0xc0] sm:$0xff]
  %v301 = vld [vmem:[%s275 + $0xc8] sm:$0xff]
  %v302 = vld [vmem:[%s275 + $0xd0] sm:$0xff]
  %v303 = vld [vmem:[%s275 + $0xd8] sm:$0xff]
  %v304 = vld [vmem:[%s275 + $0xe0] sm:$0xff]
  %v305 = vld [vmem:[%s275 + $0xe8] sm:$0xff]
  %v306 = vld [vmem:[%s275 + $0xf0] sm:$0xff]
  %v307 = vld [vmem:[%s275 + $0xf8] sm:$0xff]
  %308 = vrot.lane.b32.xlu0 %v174, 127
  %v309 = vpop.permute.xlu0 %308
  %s310 = vtos %v309
  %v311 = vstv %s310
  %v313 = vmul.f32 %v311, %v276
  %v314 = vmul.f32 %v311, %v277
  %v315 = vmul.f32 %v311, %v278
  %v316 = vmul.f32 %v311, %v279
  %v317 = vmul.f32 %v311, %v280
  %v318 = vmul.f32 %v311, %v281
  %v319 = vmul.f32 %v311, %v282
  %v320 = vmul.f32 %v311, %v283
  %v321 = vmul.f32 %v311, %v284
  %v322 = vmul.f32 %v311, %v285
  %v323 = vmul.f32 %v311, %v286
  %v324 = vmul.f32 %v311, %v287
  %v325 = vmul.f32 %v311, %v288
  %v326 = vmul.f32 %v311, %v289
  %v327 = vmul.f32 %v311, %v290
  %v328 = vmul.f32 %v311, %v291
  %v329 = vmul.f32 %v311, %v292
  %v330 = vmul.f32 %v311, %v293
  %v331 = vmul.f32 %v311, %v294
  %v332 = vmul.f32 %v311, %v295
  %v333 = vmul.f32 %v311, %v296
  %v334 = vmul.f32 %v311, %v297
  %v335 = vmul.f32 %v311, %v298
  %v336 = vmul.f32 %v311, %v299
  %v337 = vmul.f32 %v311, %v300
  %v338 = vmul.f32 %v311, %v301
  %v339 = vmul.f32 %v311, %v302
  %v340 = vmul.f32 %v311, %v303
  %v341 = vmul.f32 %v311, %v304
  %v342 = vmul.f32 %v311, %v305
  %v343 = vmul.f32 %v311, %v306
  %v344 = vmul.f32 %v311, %v307
  %v345 = vadd.f32 %v243, %v313
  %v346 = vadd.f32 %v244, %v314
  %v347 = vadd.f32 %v245, %v315
  %v348 = vadd.f32 %v246, %v316
  %v349 = vadd.f32 %v247, %v317
  %v350 = vadd.f32 %v248, %v318
  %v351 = vadd.f32 %v249, %v319
  %v352 = vadd.f32 %v250, %v320
  %v353 = vadd.f32 %v251, %v321
  %v354 = vadd.f32 %v252, %v322
  %v355 = vadd.f32 %v253, %v323
  %v356 = vadd.f32 %v254, %v324
  %v357 = vadd.f32 %v255, %v325
  %v358 = vadd.f32 %v256, %v326
  %v359 = vadd.f32 %v257, %v327
  %v360 = vadd.f32 %v258, %v328
  %v361 = vadd.f32 %v259, %v329
  %v362 = vadd.f32 %v260, %v330
  %v363 = vadd.f32 %v261, %v331
  %v364 = vadd.f32 %v262, %v332
  %v365 = vadd.f32 %v263, %v333
  %v366 = vadd.f32 %v264, %v334
  %v367 = vadd.f32 %v265, %v335
  %v368 = vadd.f32 %v266, %v336
  %v369 = vadd.f32 %v267, %v337
  %v370 = vadd.f32 %v268, %v338
  %v371 = vadd.f32 %v269, %v339
  %v372 = vadd.f32 %v270, %v340
  %v373 = vadd.f32 %v271, %v341
  %v374 = vadd.f32 %v272, %v342
  %v375 = vadd.f32 %v273, %v343
  %v376 = vadd.f32 %v274, %v344
  %s377 = scalar_lea.vmem %s1, 512
  %v378 = vld [vmem:[%s377] sm:$0xff]
  %v379 = vld [vmem:[%s377 + $0x8] sm:$0xff]
  %v380 = vld [vmem:[%s377 + $0x10] sm:$0xff]
  %v381 = vld [vmem:[%s377 + $0x18] sm:$0xff]
  %v382 = vld [vmem:[%s377 + $0x20] sm:$0xff]
  %v383 = vld [vmem:[%s377 + $0x28] sm:$0xff]
  %v384 = vld [vmem:[%s377 + $0x30] sm:$0xff]
  %v385 = vld [vmem:[%s377 + $0x38] sm:$0xff]
  %v386 = vld [vmem:[%s377 + $0x40] sm:$0xff]
  %v387 = vld [vmem:[%s377 + $0x48] sm:$0xff]
  %v388 = vld [vmem:[%s377 + $0x50] sm:$0xff]
  %v389 = vld [vmem:[%s377 + $0x58] sm:$0xff]
  %v390 = vld [vmem:[%s377 + $0x60] sm:$0xff]
  %v391 = vld [vmem:[%s377 + $0x68] sm:$0xff]
  %v392 = vld [vmem:[%s377 + $0x70] sm:$0xff]
  %v393 = vld [vmem:[%s377 + $0x78] sm:$0xff]
  %v394 = vld [vmem:[%s377 + $0x80] sm:$0xff]
  %v395 = vld [vmem:[%s377 + $0x88] sm:$0xff]
  %v396 = vld [vmem:[%s377 + $0x90] sm:$0xff]
  %v397 = vld [vmem:[%s377 + $0x98] sm:$0xff]
  %v398 = vld [vmem:[%s377 + $0xa0] sm:$0xff]
  %v399 = vld [vmem:[%s377 + $0xa8] sm:$0xff]
  %v400 = vld [vmem:[%s377 + $0xb0] sm:$0xff]
  %v401 = vld [vmem:[%s377 + $0xb8] sm:$0xff]
  %v402 = vld [vmem:[%s377 + $0xc0] sm:$0xff]
  %v403 = vld [vmem:[%s377 + $0xc8] sm:$0xff]
  %v404 = vld [vmem:[%s377 + $0xd0] sm:$0xff]
  %v405 = vld [vmem:[%s377 + $0xd8] sm:$0xff]
  %v406 = vld [vmem:[%s377 + $0xe0] sm:$0xff]
  %v407 = vld [vmem:[%s377 + $0xe8] sm:$0xff]
  %v408 = vld [vmem:[%s377 + $0xf0] sm:$0xff]
  %v409 = vld [vmem:[%s377 + $0xf8] sm:$0xff]
  %410 = vrot.lane.b32.xlu0 %v174, 126
  %v411 = vpop.permute.xlu0 %410
  %s412 = vtos %v411
  %v413 = vstv %s412
  %v415 = vmul.f32 %v413, %v378
  %v416 = vmul.f32 %v413, %v379
  %v417 = vmul.f32 %v413, %v380
  %v418 = vmul.f32 %v413, %v381
  %v419 = vmul.f32 %v413, %v382
  %v420 = vmul.f32 %v413, %v383
  %v421 = vmul.f32 %v413, %v384
  %v422 = vmul.f32 %v413, %v385
  %v423 = vmul.f32 %v413, %v386
  %v424 = vmul.f32 %v413, %v387
  %v425 = vmul.f32 %v413, %v388
  %v426 = vmul.f32 %v413, %v389
  %v427 = vmul.f32 %v413, %v390
  %v428 = vmul.f32 %v413, %v391
  %v429 = vmul.f32 %v413, %v392
  %v430 = vmul.f32 %v413, %v393
  %v431 = vmul.f32 %v413, %v394
  %v432 = vmul.f32 %v413, %v395
  %v433 = vmul.f32 %v413, %v396
  %v434 = vmul.f32 %v413, %v397
  %v435 = vmul.f32 %v413, %v398
  %v436 = vmul.f32 %v413, %v399
  %v437 = vmul.f32 %v413, %v400
  %v438 = vmul.f32 %v413, %v401
  %v439 = vmul.f32 %v413, %v402
  %v440 = vmul.f32 %v413, %v403
  %v441 = vmul.f32 %v413, %v404
  %v442 = vmul.f32 %v413, %v405
  %v443 = vmul.f32 %v413, %v406
  %v444 = vmul.f32 %v413, %v407
  %v445 = vmul.f32 %v413, %v408
  %v446 = vmul.f32 %v413, %v409
  %v447 = vadd.f32 %v345, %v415
  %v448 = vadd.f32 %v346, %v416
  %v449 = vadd.f32 %v347, %v417
  %v450 = vadd.f32 %v348, %v418
  %v451 = vadd.f32 %v349, %v419
  %v452 = vadd.f32 %v350, %v420
  %v453 = vadd.f32 %v351, %v421
  %v454 = vadd.f32 %v352, %v422
  %v455 = vadd.f32 %v353, %v423
  %v456 = vadd.f32 %v354, %v424
  %v457 = vadd.f32 %v355, %v425
  %v458 = vadd.f32 %v356, %v426
  %v459 = vadd.f32 %v357, %v427
  %v460 = vadd.f32 %v358, %v428
  %v461 = vadd.f32 %v359, %v429
  %v462 = vadd.f32 %v360, %v430
  %v463 = vadd.f32 %v361, %v431
  %v464 = vadd.f32 %v362, %v432
  %v465 = vadd.f32 %v363, %v433
  %v466 = vadd.f32 %v364, %v434
  %v467 = vadd.f32 %v365, %v435
  %v468 = vadd.f32 %v366, %v436
  %v469 = vadd.f32 %v367, %v437
  %v470 = vadd.f32 %v368, %v438
  %v471 = vadd.f32 %v369, %v439
  %v472 = vadd.f32 %v370, %v440
  %v473 = vadd.f32 %v371, %v441
  %v474 = vadd.f32 %v372, %v442
  %v475 = vadd.f32 %v373, %v443
  %v476 = vadd.f32 %v374, %v444
  %v477 = vadd.f32 %v375, %v445
  %v478 = vadd.f32 %v376, %v446
  %s479 = scalar_lea.vmem %s1, 768
  %v480 = vld [vmem:[%s479] sm:$0xff]
  %v481 = vld [vmem:[%s479 + $0x8] sm:$0xff]
  %v482 = vld [vmem:[%s479 + $0x10] sm:$0xff]
  %v483 = vld [vmem:[%s479 + $0x18] sm:$0xff]
  %v484 = vld [vmem:[%s479 + $0x20] sm:$0xff]
  %v485 = vld [vmem:[%s479 + $0x28] sm:$0xff]
  %v486 = vld [vmem:[%s479 + $0x30] sm:$0xff]
  %v487 = vld [vmem:[%s479 + $0x38] sm:$0xff]
  %v488 = vld [vmem:[%s479 + $0x40] sm:$0xff]
  %v489 = vld [vmem:[%s479 + $0x48] sm:$0xff]
  %v490 = vld [vmem:[%s479 + $0x50] sm:$0xff]
  %v491 = vld [vmem:[%s479 + $0x58] sm:$0xff]
  %v492 = vld [vmem:[%s479 + $0x60] sm:$0xff]
  %v493 = vld [vmem:[%s479 + $0x68] sm:$0xff]
  %v494 = vld [vmem:[%s479 + $0x70] sm:$0xff]
  %v495 = vld [vmem:[%s479 + $0x78] sm:$0xff]
  %v496 = vld [vmem:[%s479 + $0x80] sm:$0xff]
  %v497 = vld [vmem:[%s479 + $0x88] sm:$0xff]
  %v498 = vld [vmem:[%s479 + $0x90] sm:$0xff]
  %v499 = vld [vmem:[%s479 + $0x98] sm:$0xff]
  %v500 = vld [vmem:[%s479 + $0xa0] sm:$0xff]
  %v501 = vld [vmem:[%s479 + $0xa8] sm:$0xff]
  %v502 = vld [vmem:[%s479 + $0xb0] sm:$0xff]
  %v503 = vld [vmem:[%s479 + $0xb8] sm:$0xff]
  %v504 = vld [vmem:[%s479 + $0xc0] sm:$0xff]
  %v505 = vld [vmem:[%s479 + $0xc8] sm:$0xff]
  %v506 = vld [vmem:[%s479 + $0xd0] sm:$0xff]
  %v507 = vld [vmem:[%s479 + $0xd8] sm:$0xff]
  %v508 = vld [vmem:[%s479 + $0xe0] sm:$0xff]
  %v509 = vld [vmem:[%s479 + $0xe8] sm:$0xff]
  %v510 = vld [vmem:[%s479 + $0xf0] sm:$0xff]
  %v511 = vld [vmem:[%s479 + $0xf8] sm:$0xff]
  %512 = vrot.lane.b32.xlu0 %v174, 125
  %v513 = vpop.permute.xlu0 %512
  %s514 = vtos %v513
  %v515 = vstv %s514
  %v517 = vmul.f32 %v515, %v480
  %v518 = vmul.f32 %v515, %v481
  %v519 = vmul.f32 %v515, %v482
  %v520 = vmul.f32 %v515, %v483
  %v521 = vmul.f32 %v515, %v484
  %v522 = vmul.f32 %v515, %v485
  %v523 = vmul.f32 %v515, %v486
  %v524 = vmul.f32 %v515, %v487
  %v525 = vmul.f32 %v515, %v488
  %v526 = vmul.f32 %v515, %v489
  %v527 = vmul.f32 %v515, %v490
  %v528 = vmul.f32 %v515, %v491
  %v529 = vmul.f32 %v515, %v492
  %v530 = vmul.f32 %v515, %v493
  %v531 = vmul.f32 %v515, %v494
  %v532 = vmul.f32 %v515, %v495
  %v533 = vmul.f32 %v515, %v496
  %v534 = vmul.f32 %v515, %v497
  %v535 = vmul.f32 %v515, %v498
  %v536 = vmul.f32 %v515, %v499
  %v537 = vmul.f32 %v515, %v500
  %v538 = vmul.f32 %v515, %v501
  %v539 = vmul.f32 %v515, %v502
  %v540 = vmul.f32 %v515, %v503
  %v541 = vmul.f32 %v515, %v504
  %v542 = vmul.f32 %v515, %v505
  %v543 = vmul.f32 %v515, %v506
  %v544 = vmul.f32 %v515, %v507
  %v545 = vmul.f32 %v515, %v508
  %v546 = vmul.f32 %v515, %v509
  %v547 = vmul.f32 %v515, %v510
  %v548 = vmul.f32 %v515, %v511
  %v549 = vadd.f32 %v447, %v517
  %v550 = vadd.f32 %v448, %v518
  %v551 = vadd.f32 %v449, %v519
  %v552 = vadd.f32 %v450, %v520
  %v553 = vadd.f32 %v451, %v521
  %v554 = vadd.f32 %v452, %v522
  %v555 = vadd.f32 %v453, %v523
  %v556 = vadd.f32 %v454, %v524
  %v557 = vadd.f32 %v455, %v525
  %v558 = vadd.f32 %v456, %v526
  %v559 = vadd.f32 %v457, %v527
  %v560 = vadd.f32 %v458, %v528
  %v561 = vadd.f32 %v459, %v529
  %v562 = vadd.f32 %v460, %v530
  %v563 = vadd.f32 %v461, %v531
  %v564 = vadd.f32 %v462, %v532
  %v565 = vadd.f32 %v463, %v533
  %v566 = vadd.f32 %v464, %v534
  %v567 = vadd.f32 %v465, %v535
  %v568 = vadd.f32 %v466, %v536
  %v569 = vadd.f32 %v467, %v537
  %v570 = vadd.f32 %v468, %v538
  %v571 = vadd.f32 %v469, %v539
  %v572 = vadd.f32 %v470, %v540
  %v573 = vadd.f32 %v471, %v541
  %v574 = vadd.f32 %v472, %v542
  %v575 = vadd.f32 %v473, %v543
  %v576 = vadd.f32 %v474, %v544
  %v577 = vadd.f32 %v475, %v545
  %v578 = vadd.f32 %v476, %v546
  %v579 = vadd.f32 %v477, %v547
  %v580 = vadd.f32 %v478, %v548
  %s581 = scalar_lea.vmem %s1, 1024
  %v582 = vld [vmem:[%s581] sm:$0xff]
  %v583 = vld [vmem:[%s581 + $0x8] sm:$0xff]
  %v584 = vld [vmem:[%s581 + $0x10] sm:$0xff]
  %v585 = vld [vmem:[%s581 + $0x18] sm:$0xff]
  %v586 = vld [vmem:[%s581 + $0x20] sm:$0xff]
  %v587 = vld [vmem:[%s581 + $0x28] sm:$0xff]
  %v588 = vld [vmem:[%s581 + $0x30] sm:$0xff]
  %v589 = vld [vmem:[%s581 + $0x38] sm:$0xff]
  %v590 = vld [vmem:[%s581 + $0x40] sm:$0xff]
  %v591 = vld [vmem:[%s581 + $0x48] sm:$0xff]
  %v592 = vld [vmem:[%s581 + $0x50] sm:$0xff]
  %v593 = vld [vmem:[%s581 + $0x58] sm:$0xff]
  %v594 = vld [vmem:[%s581 + $0x60] sm:$0xff]
  %v595 = vld [vmem:[%s581 + $0x68] sm:$0xff]
  %v596 = vld [vmem:[%s581 + $0x70] sm:$0xff]
  %v597 = vld [vmem:[%s581 + $0x78] sm:$0xff]
  %v598 = vld [vmem:[%s581 + $0x80] sm:$0xff]
  %v599 = vld [vmem:[%s581 + $0x88] sm:$0xff]
  %v600 = vld [vmem:[%s581 + $0x90] sm:$0xff]
  %v601 = vld [vmem:[%s581 + $0x98] sm:$0xff]
  %v602 = vld [vmem:[%s581 + $0xa0] sm:$0xff]
  %v603 = vld [vmem:[%s581 + $0xa8] sm:$0xff]
  %v604 = vld [vmem:[%s581 + $0xb0] sm:$0xff]
  %v605 = vld [vmem:[%s581 + $0xb8] sm:$0xff]
  %v606 = vld [vmem:[%s581 + $0xc0] sm:$0xff]
  %v607 = vld [vmem:[%s581 + $0xc8] sm:$0xff]
  %v608 = vld [vmem:[%s581 + $0xd0] sm:$0xff]
  %v609 = vld [vmem:[%s581 + $0xd8] sm:$0xff]
  %v610 = vld [vmem:[%s581 + $0xe0] sm:$0xff]
  %v611 = vld [vmem:[%s581 + $0xe8] sm:$0xff]
  %v612 = vld [vmem:[%s581 + $0xf0] sm:$0xff]
  %v613 = vld [vmem:[%s581 + $0xf8] sm:$0xff]
  %614 = vrot.lane.b32.xlu0 %v174, 124
  %v615 = vpop.permute.xlu0 %614
  %s616 = vtos %v615
  %v617 = vstv %s616
  %v619 = vmul.f32 %v617, %v582
  %v620 = vmul.f32 %v617, %v583
  %v621 = vmul.f32 %v617, %v584
  %v622 = vmul.f32 %v617, %v585
  %v623 = vmul.f32 %v617, %v586
  %v624 = vmul.f32 %v617, %v587
  %v625 = vmul.f32 %v617, %v588
  %v626 = vmul.f32 %v617, %v589
  %v627 = vmul.f32 %v617, %v590
  %v628 = vmul.f32 %v617, %v591
  %v629 = vmul.f32 %v617, %v592
  %v630 = vmul.f32 %v617, %v593
  %v631 = vmul.f32 %v617, %v594
  %v632 = vmul.f32 %v617, %v595
  %v633 = vmul.f32 %v617, %v596
  %v634 = vmul.f32 %v617, %v597
  %v635 = vmul.f32 %v617, %v598
  %v636 = vmul.f32 %v617, %v599
  %v637 = vmul.f32 %v617, %v600
  %v638 = vmul.f32 %v617, %v601
  %v639 = vmul.f32 %v617, %v602
  %v640 = vmul.f32 %v617, %v603
  %v641 = vmul.f32 %v617, %v604
  %v642 = vmul.f32 %v617, %v605
  %v643 = vmul.f32 %v617, %v606
  %v644 = vmul.f32 %v617, %v607
  %v645 = vmul.f32 %v617, %v608
  %v646 = vmul.f32 %v617, %v609
  %v647 = vmul.f32 %v617, %v610
  %v648 = vmul.f32 %v617, %v611
  %v649 = vmul.f32 %v617, %v612
  %v650 = vmul.f32 %v617, %v613
  %v651 = vadd.f32 %v549, %v619
  %v652 = vadd.f32 %v550, %v620
  %v653 = vadd.f32 %v551, %v621
  %v654 = vadd.f32 %v552, %v622
  %v655 = vadd.f32 %v553, %v623
  %v656 = vadd.f32 %v554, %v624
  %v657 = vadd.f32 %v555, %v625
  %v658 = vadd.f32 %v556, %v626
  %v659 = vadd.f32 %v557, %v627
  %v660 = vadd.f32 %v558, %v628
  %v661 = vadd.f32 %v559, %v629
  %v662 = vadd.f32 %v560, %v630
  %v663 = vadd.f32 %v561, %v631
  %v664 = vadd.f32 %v562, %v632
  %v665 = vadd.f32 %v563, %v633
  %v666 = vadd.f32 %v564, %v634
  %v667 = vadd.f32 %v565, %v635
  %v668 = vadd.f32 %v566, %v636
  %v669 = vadd.f32 %v567, %v637
  %v670 = vadd.f32 %v568, %v638
  %v671 = vadd.f32 %v569, %v639
  %v672 = vadd.f32 %v570, %v640
  %v673 = vadd.f32 %v571, %v641
  %v674 = vadd.f32 %v572, %v642
  %v675 = vadd.f32 %v573, %v643
  %v676 = vadd.f32 %v574, %v644
  %v677 = vadd.f32 %v575, %v645
  %v678 = vadd.f32 %v576, %v646
  %v679 = vadd.f32 %v577, %v647
  %v680 = vadd.f32 %v578, %v648
  %v681 = vadd.f32 %v579, %v649
  %v682 = vadd.f32 %v580, %v650
  %s683 = scalar_lea.vmem %s1, 1280
  %v684 = vld [vmem:[%s683] sm:$0xff]
  %v685 = vld [vmem:[%s683 + $0x8] sm:$0xff]
  %v686 = vld [vmem:[%s683 + $0x10] sm:$0xff]
  %v687 = vld [vmem:[%s683 + $0x18] sm:$0xff]
  %v688 = vld [vmem:[%s683 + $0x20] sm:$0xff]
  %v689 = vld [vmem:[%s683 + $0x28] sm:$0xff]
  %v690 = vld [vmem:[%s683 + $0x30] sm:$0xff]
  %v691 = vld [vmem:[%s683 + $0x38] sm:$0xff]
  %v692 = vld [vmem:[%s683 + $0x40] sm:$0xff]
  %v693 = vld [vmem:[%s683 + $0x48] sm:$0xff]
  %v694 = vld [vmem:[%s683 + $0x50] sm:$0xff]
  %v695 = vld [vmem:[%s683 + $0x58] sm:$0xff]
  %v696 = vld [vmem:[%s683 + $0x60] sm:$0xff]
  %v697 = vld [vmem:[%s683 + $0x68] sm:$0xff]
  %v698 = vld [vmem:[%s683 + $0x70] sm:$0xff]
  %v699 = vld [vmem:[%s683 + $0x78] sm:$0xff]
  %v700 = vld [vmem:[%s683 + $0x80] sm:$0xff]
  %v701 = vld [vmem:[%s683 + $0x88] sm:$0xff]
  %v702 = vld [vmem:[%s683 + $0x90] sm:$0xff]
  %v703 = vld [vmem:[%s683 + $0x98] sm:$0xff]
  %v704 = vld [vmem:[%s683 + $0xa0] sm:$0xff]
  %v705 = vld [vmem:[%s683 + $0xa8] sm:$0xff]
  %v706 = vld [vmem:[%s683 + $0xb0] sm:$0xff]
  %v707 = vld [vmem:[%s683 + $0xb8] sm:$0xff]
  %v708 = vld [vmem:[%s683 + $0xc0] sm:$0xff]
  %v709 = vld [vmem:[%s683 + $0xc8] sm:$0xff]
  %v710 = vld [vmem:[%s683 + $0xd0] sm:$0xff]
  %v711 = vld [vmem:[%s683 + $0xd8] sm:$0xff]
  %v712 = vld [vmem:[%s683 + $0xe0] sm:$0xff]
  %v713 = vld [vmem:[%s683 + $0xe8] sm:$0xff]
  %v714 = vld [vmem:[%s683 + $0xf0] sm:$0xff]
  %v715 = vld [vmem:[%s683 + $0xf8] sm:$0xff]
  %716 = vrot.lane.b32.xlu0 %v174, 123
  %v717 = vpop.permute.xlu0 %716
  %s718 = vtos %v717
  %v719 = vstv %s718
  %v721 = vmul.f32 %v719, %v684
  %v722 = vmul.f32 %v719, %v685
  %v723 = vmul.f32 %v719, %v686
  %v724 = vmul.f32 %v719, %v687
  %v725 = vmul.f32 %v719, %v688
  %v726 = vmul.f32 %v719, %v689
  %v727 = vmul.f32 %v719, %v690
  %v728 = vmul.f32 %v719, %v691
  %v729 = vmul.f32 %v719, %v692
  %v730 = vmul.f32 %v719, %v693
  %v731 = vmul.f32 %v719, %v694
  %v732 = vmul.f32 %v719, %v695
  %v733 = vmul.f32 %v719, %v696
  %v734 = vmul.f32 %v719, %v697
  %v735 = vmul.f32 %v719, %v698
  %v736 = vmul.f32 %v719, %v699
  %v737 = vmul.f32 %v719, %v700
  %v738 = vmul.f32 %v719, %v701
  %v739 = vmul.f32 %v719, %v702
  %v740 = vmul.f32 %v719, %v703
  %v741 = vmul.f32 %v719, %v704
  %v742 = vmul.f32 %v719, %v705
  %v743 = vmul.f32 %v719, %v706
  %v744 = vmul.f32 %v719, %v707
  %v745 = vmul.f32 %v719, %v708
  %v746 = vmul.f32 %v719, %v709
  %v747 = vmul.f32 %v719, %v710
  %v748 = vmul.f32 %v719, %v711
  %v749 = vmul.f32 %v719, %v712
  %v750 = vmul.f32 %v719, %v713
  %v751 = vmul.f32 %v719, %v714
  %v752 = vmul.f32 %v719, %v715
  %v753 = vadd.f32 %v651, %v721
  %v754 = vadd.f32 %v652, %v722
  %v755 = vadd.f32 %v653, %v723
  %v756 = vadd.f32 %v654, %v724
  %v757 = vadd.f32 %v655, %v725
  %v758 = vadd.f32 %v656, %v726
  %v759 = vadd.f32 %v657, %v727
  %v760 = vadd.f32 %v658, %v728
  %v761 = vadd.f32 %v659, %v729
  %v762 = vadd.f32 %v660, %v730
  %v763 = vadd.f32 %v661, %v731
  %v764 = vadd.f32 %v662, %v732
  %v765 = vadd.f32 %v663, %v733
  %v766 = vadd.f32 %v664, %v734
  %v767 = vadd.f32 %v665, %v735
  %v768 = vadd.f32 %v666, %v736
  %v769 = vadd.f32 %v667, %v737
  %v770 = vadd.f32 %v668, %v738
  %v771 = vadd.f32 %v669, %v739
  %v772 = vadd.f32 %v670, %v740
  %v773 = vadd.f32 %v671, %v741
  %v774 = vadd.f32 %v672, %v742
  %v775 = vadd.f32 %v673, %v743
  %v776 = vadd.f32 %v674, %v744
  %v777 = vadd.f32 %v675, %v745
  %v778 = vadd.f32 %v676, %v746
  %v779 = vadd.f32 %v677, %v747
  %v780 = vadd.f32 %v678, %v748
  %v781 = vadd.f32 %v679, %v749
  %v782 = vadd.f32 %v680, %v750
  %v783 = vadd.f32 %v681, %v751
  %v784 = vadd.f32 %v682, %v752
  %s785 = scalar_lea.vmem %s1, 1536
  %v786 = vld [vmem:[%s785] sm:$0xff]
  %v787 = vld [vmem:[%s785 + $0x8] sm:$0xff]
  %v788 = vld [vmem:[%s785 + $0x10] sm:$0xff]
  %v789 = vld [vmem:[%s785 + $0x18] sm:$0xff]
  %v790 = vld [vmem:[%s785 + $0x20] sm:$0xff]
  %v791 = vld [vmem:[%s785 + $0x28] sm:$0xff]
  %v792 = vld [vmem:[%s785 + $0x30] sm:$0xff]
  %v793 = vld [vmem:[%s785 + $0x38] sm:$0xff]
  %v794 = vld [vmem:[%s785 + $0x40] sm:$0xff]
  %v795 = vld [vmem:[%s785 + $0x48] sm:$0xff]
  %v796 = vld [vmem:[%s785 + $0x50] sm:$0xff]
  %v797 = vld [vmem:[%s785 + $0x58] sm:$0xff]
  %v798 = vld [vmem:[%s785 + $0x60] sm:$0xff]
  %v799 = vld [vmem:[%s785 + $0x68] sm:$0xff]
  %v800 = vld [vmem:[%s785 + $0x70] sm:$0xff]
  %v801 = vld [vmem:[%s785 + $0x78] sm:$0xff]
  %v802 = vld [vmem:[%s785 + $0x80] sm:$0xff]
  %v803 = vld [vmem:[%s785 + $0x88] sm:$0xff]
  %v804 = vld [vmem:[%s785 + $0x90] sm:$0xff]
  %v805 = vld [vmem:[%s785 + $0x98] sm:$0xff]
  %v806 = vld [vmem:[%s785 + $0xa0] sm:$0xff]
  %v807 = vld [vmem:[%s785 + $0xa8] sm:$0xff]
  %v808 = vld [vmem:[%s785 + $0xb0] sm:$0xff]
  %v809 = vld [vmem:[%s785 + $0xb8] sm:$0xff]
  %v810 = vld [vmem:[%s785 + $0xc0] sm:$0xff]
  %v811 = vld [vmem:[%s785 + $0xc8] sm:$0xff]
  %v812 = vld [vmem:[%s785 + $0xd0] sm:$0xff]
  %v813 = vld [vmem:[%s785 + $0xd8] sm:$0xff]
  %v814 = vld [vmem:[%s785 + $0xe0] sm:$0xff]
  %v815 = vld [vmem:[%s785 + $0xe8] sm:$0xff]
  %v816 = vld [vmem:[%s785 + $0xf0] sm:$0xff]
  %v817 = vld [vmem:[%s785 + $0xf8] sm:$0xff]
  %818 = vrot.lane.b32.xlu0 %v174, 122
  %v819 = vpop.permute.xlu0 %818
  %s820 = vtos %v819
  %v821 = vstv %s820
  %v823 = vmul.f32 %v821, %v786
  %v824 = vmul.f32 %v821, %v787
  %v825 = vmul.f32 %v821, %v788
  %v826 = vmul.f32 %v821, %v789
  %v827 = vmul.f32 %v821, %v790
  %v828 = vmul.f32 %v821, %v791
  %v829 = vmul.f32 %v821, %v792
  %v830 = vmul.f32 %v821, %v793
  %v831 = vmul.f32 %v821, %v794
  %v832 = vmul.f32 %v821, %v795
  %v833 = vmul.f32 %v821, %v796
  %v834 = vmul.f32 %v821, %v797
  %v835 = vmul.f32 %v821, %v798
  %v836 = vmul.f32 %v821, %v799
  %v837 = vmul.f32 %v821, %v800
  %v838 = vmul.f32 %v821, %v801
  %v839 = vmul.f32 %v821, %v802
  %v840 = vmul.f32 %v821, %v803
  %v841 = vmul.f32 %v821, %v804
  %v842 = vmul.f32 %v821, %v805
  %v843 = vmul.f32 %v821, %v806
  %v844 = vmul.f32 %v821, %v807
  %v845 = vmul.f32 %v821, %v808
  %v846 = vmul.f32 %v821, %v809
  %v847 = vmul.f32 %v821, %v810
  %v848 = vmul.f32 %v821, %v811
  %v849 = vmul.f32 %v821, %v812
  %v850 = vmul.f32 %v821, %v813
  %v851 = vmul.f32 %v821, %v814
  %v852 = vmul.f32 %v821, %v815
  %v853 = vmul.f32 %v821, %v816
  %v854 = vmul.f32 %v821, %v817
  %v855 = vadd.f32 %v753, %v823
  %v856 = vadd.f32 %v754, %v824
  %v857 = vadd.f32 %v755, %v825
  %v858 = vadd.f32 %v756, %v826
  %v859 = vadd.f32 %v757, %v827
  %v860 = vadd.f32 %v758, %v828
  %v861 = vadd.f32 %v759, %v829
  %v862 = vadd.f32 %v760, %v830
  %v863 = vadd.f32 %v761, %v831
  %v864 = vadd.f32 %v762, %v832
  %v865 = vadd.f32 %v763, %v833
  %v866 = vadd.f32 %v764, %v834
  %v867 = vadd.f32 %v765, %v835
  %v868 = vadd.f32 %v766, %v836
  %v869 = vadd.f32 %v767, %v837
  %v870 = vadd.f32 %v768, %v838
  %v871 = vadd.f32 %v769, %v839
  %v872 = vadd.f32 %v770, %v840
  %v873 = vadd.f32 %v771, %v841
  %v874 = vadd.f32 %v772, %v842
  %v875 = vadd.f32 %v773, %v843
  %v876 = vadd.f32 %v774, %v844
  %v877 = vadd.f32 %v775, %v845
  %v878 = vadd.f32 %v776, %v846
  %v879 = vadd.f32 %v777, %v847
  %v880 = vadd.f32 %v778, %v848
  %v881 = vadd.f32 %v779, %v849
  %v882 = vadd.f32 %v780, %v850
  %v883 = vadd.f32 %v781, %v851
  %v884 = vadd.f32 %v782, %v852
  %v885 = vadd.f32 %v783, %v853
  %v886 = vadd.f32 %v784, %v854
  %s887 = scalar_lea.vmem %s1, 1792
  %v888 = vld [vmem:[%s887] sm:$0xff]
  %v889 = vld [vmem:[%s887 + $0x8] sm:$0xff]
  %v890 = vld [vmem:[%s887 + $0x10] sm:$0xff]
  %v891 = vld [vmem:[%s887 + $0x18] sm:$0xff]
  %v892 = vld [vmem:[%s887 + $0x20] sm:$0xff]
  %v893 = vld [vmem:[%s887 + $0x28] sm:$0xff]
  %v894 = vld [vmem:[%s887 + $0x30] sm:$0xff]
  %v895 = vld [vmem:[%s887 + $0x38] sm:$0xff]
  %v896 = vld [vmem:[%s887 + $0x40] sm:$0xff]
  %v897 = vld [vmem:[%s887 + $0x48] sm:$0xff]
  %v898 = vld [vmem:[%s887 + $0x50] sm:$0xff]
  %v899 = vld [vmem:[%s887 + $0x58] sm:$0xff]
  %v900 = vld [vmem:[%s887 + $0x60] sm:$0xff]
  %v901 = vld [vmem:[%s887 + $0x68] sm:$0xff]
  %v902 = vld [vmem:[%s887 + $0x70] sm:$0xff]
  %v903 = vld [vmem:[%s887 + $0x78] sm:$0xff]
  %v904 = vld [vmem:[%s887 + $0x80] sm:$0xff]
  %v905 = vld [vmem:[%s887 + $0x88] sm:$0xff]
  %v906 = vld [vmem:[%s887 + $0x90] sm:$0xff]
  %v907 = vld [vmem:[%s887 + $0x98] sm:$0xff]
  %v908 = vld [vmem:[%s887 + $0xa0] sm:$0xff]
  %v909 = vld [vmem:[%s887 + $0xa8] sm:$0xff]
  %v910 = vld [vmem:[%s887 + $0xb0] sm:$0xff]
  %v911 = vld [vmem:[%s887 + $0xb8] sm:$0xff]
  %v912 = vld [vmem:[%s887 + $0xc0] sm:$0xff]
  %v913 = vld [vmem:[%s887 + $0xc8] sm:$0xff]
  %v914 = vld [vmem:[%s887 + $0xd0] sm:$0xff]
  %v915 = vld [vmem:[%s887 + $0xd8] sm:$0xff]
  %v916 = vld [vmem:[%s887 + $0xe0] sm:$0xff]
  %v917 = vld [vmem:[%s887 + $0xe8] sm:$0xff]
  %v918 = vld [vmem:[%s887 + $0xf0] sm:$0xff]
  %v919 = vld [vmem:[%s887 + $0xf8] sm:$0xff]
  %920 = vrot.lane.b32.xlu0 %v174, 121
  %v921 = vpop.permute.xlu0 %920
  %s922 = vtos %v921
  %v923 = vstv %s922
  %v925 = vmul.f32 %v923, %v888
  %v926 = vmul.f32 %v923, %v889
  %v927 = vmul.f32 %v923, %v890
  %v928 = vmul.f32 %v923, %v891
  %v929 = vmul.f32 %v923, %v892
  %v930 = vmul.f32 %v923, %v893
  %v931 = vmul.f32 %v923, %v894
  %v932 = vmul.f32 %v923, %v895
  %v933 = vmul.f32 %v923, %v896
  %v934 = vmul.f32 %v923, %v897
  %v935 = vmul.f32 %v923, %v898
  %v936 = vmul.f32 %v923, %v899
  %v937 = vmul.f32 %v923, %v900
  %v938 = vmul.f32 %v923, %v901
  %v939 = vmul.f32 %v923, %v902
  %v940 = vmul.f32 %v923, %v903
  %v941 = vmul.f32 %v923, %v904
  %v942 = vmul.f32 %v923, %v905
  %v943 = vmul.f32 %v923, %v906
  %v944 = vmul.f32 %v923, %v907
  %v945 = vmul.f32 %v923, %v908
  %v946 = vmul.f32 %v923, %v909
  %v947 = vmul.f32 %v923, %v910
  %v948 = vmul.f32 %v923, %v911
  %v949 = vmul.f32 %v923, %v912
  %v950 = vmul.f32 %v923, %v913
  %v951 = vmul.f32 %v923, %v914
  %v952 = vmul.f32 %v923, %v915
  %v953 = vmul.f32 %v923, %v916
  %v954 = vmul.f32 %v923, %v917
  %v955 = vmul.f32 %v923, %v918
  %v956 = vmul.f32 %v923, %v919
  %v957 = vadd.f32 %v855, %v925
  %v958 = vadd.f32 %v856, %v926
  %v959 = vadd.f32 %v857, %v927
  %v960 = vadd.f32 %v858, %v928
  %v961 = vadd.f32 %v859, %v929
  %v962 = vadd.f32 %v860, %v930
  %v963 = vadd.f32 %v861, %v931
  %v964 = vadd.f32 %v862, %v932
  %v965 = vadd.f32 %v863, %v933
  %v966 = vadd.f32 %v864, %v934
  %v967 = vadd.f32 %v865, %v935
  %v968 = vadd.f32 %v866, %v936
  %v969 = vadd.f32 %v867, %v937
  %v970 = vadd.f32 %v868, %v938
  %v971 = vadd.f32 %v869, %v939
  %v972 = vadd.f32 %v870, %v940
  %v973 = vadd.f32 %v871, %v941
  %v974 = vadd.f32 %v872, %v942
  %v975 = vadd.f32 %v873, %v943
  %v976 = vadd.f32 %v874, %v944
  %v977 = vadd.f32 %v875, %v945
  %v978 = vadd.f32 %v876, %v946
  %v979 = vadd.f32 %v877, %v947
  %v980 = vadd.f32 %v878, %v948
  %v981 = vadd.f32 %v879, %v949
  %v982 = vadd.f32 %v880, %v950
  %v983 = vadd.f32 %v881, %v951
  %v984 = vadd.f32 %v882, %v952
  %v985 = vadd.f32 %v883, %v953
  %v986 = vadd.f32 %v884, %v954
  %v987 = vadd.f32 %v885, %v955
  %v988 = vadd.f32 %v886, %v956
  %s989 = scalar_lea.vmem %s1, 2048
  %v990 = vld [vmem:[%s989] sm:$0xff]
  %v991 = vld [vmem:[%s989 + $0x8] sm:$0xff]
  %v992 = vld [vmem:[%s989 + $0x10] sm:$0xff]
  %v993 = vld [vmem:[%s989 + $0x18] sm:$0xff]
  %v994 = vld [vmem:[%s989 + $0x20] sm:$0xff]
  %v995 = vld [vmem:[%s989 + $0x28] sm:$0xff]
  %v996 = vld [vmem:[%s989 + $0x30] sm:$0xff]
  %v997 = vld [vmem:[%s989 + $0x38] sm:$0xff]
  %v998 = vld [vmem:[%s989 + $0x40] sm:$0xff]
  %v999 = vld [vmem:[%s989 + $0x48] sm:$0xff]
  %v1000 = vld [vmem:[%s989 + $0x50] sm:$0xff]
  %v1001 = vld [vmem:[%s989 + $0x58] sm:$0xff]
  %v1002 = vld [vmem:[%s989 + $0x60] sm:$0xff]
  %v1003 = vld [vmem:[%s989 + $0x68] sm:$0xff]
  %v1004 = vld [vmem:[%s989 + $0x70] sm:$0xff]
  %v1005 = vld [vmem:[%s989 + $0x78] sm:$0xff]
  %v1006 = vld [vmem:[%s989 + $0x80] sm:$0xff]
  %v1007 = vld [vmem:[%s989 + $0x88] sm:$0xff]
  %v1008 = vld [vmem:[%s989 + $0x90] sm:$0xff]
  %v1009 = vld [vmem:[%s989 + $0x98] sm:$0xff]
  %v1010 = vld [vmem:[%s989 + $0xa0] sm:$0xff]
  %v1011 = vld [vmem:[%s989 + $0xa8] sm:$0xff]
  %v1012 = vld [vmem:[%s989 + $0xb0] sm:$0xff]
  %v1013 = vld [vmem:[%s989 + $0xb8] sm:$0xff]
  %v1014 = vld [vmem:[%s989 + $0xc0] sm:$0xff]
  %v1015 = vld [vmem:[%s989 + $0xc8] sm:$0xff]
  %v1016 = vld [vmem:[%s989 + $0xd0] sm:$0xff]
  %v1017 = vld [vmem:[%s989 + $0xd8] sm:$0xff]
  %v1018 = vld [vmem:[%s989 + $0xe0] sm:$0xff]
  %v1019 = vld [vmem:[%s989 + $0xe8] sm:$0xff]
  %v1020 = vld [vmem:[%s989 + $0xf0] sm:$0xff]
  %v1021 = vld [vmem:[%s989 + $0xf8] sm:$0xff]
  %1022 = vrot.lane.b32.xlu0 %v174, 120
  %v1023 = vpop.permute.xlu0 %1022
  %s1024 = vtos %v1023
  %v1025 = vstv %s1024
  %v1027 = vmul.f32 %v1025, %v990
  %v1028 = vmul.f32 %v1025, %v991
  %v1029 = vmul.f32 %v1025, %v992
  %v1030 = vmul.f32 %v1025, %v993
  %v1031 = vmul.f32 %v1025, %v994
  %v1032 = vmul.f32 %v1025, %v995
  %v1033 = vmul.f32 %v1025, %v996
  %v1034 = vmul.f32 %v1025, %v997
  %v1035 = vmul.f32 %v1025, %v998
  %v1036 = vmul.f32 %v1025, %v999
  %v1037 = vmul.f32 %v1025, %v1000
  %v1038 = vmul.f32 %v1025, %v1001
  %v1039 = vmul.f32 %v1025, %v1002
  %v1040 = vmul.f32 %v1025, %v1003
  %v1041 = vmul.f32 %v1025, %v1004
  %v1042 = vmul.f32 %v1025, %v1005
  %v1043 = vmul.f32 %v1025, %v1006
  %v1044 = vmul.f32 %v1025, %v1007
  %v1045 = vmul.f32 %v1025, %v1008
  %v1046 = vmul.f32 %v1025, %v1009
  %v1047 = vmul.f32 %v1025, %v1010
  %v1048 = vmul.f32 %v1025, %v1011
  %v1049 = vmul.f32 %v1025, %v1012
  %v1050 = vmul.f32 %v1025, %v1013
  %v1051 = vmul.f32 %v1025, %v1014
  %v1052 = vmul.f32 %v1025, %v1015
  %v1053 = vmul.f32 %v1025, %v1016
  %v1054 = vmul.f32 %v1025, %v1017
  %v1055 = vmul.f32 %v1025, %v1018
  %v1056 = vmul.f32 %v1025, %v1019
  %v1057 = vmul.f32 %v1025, %v1020
  %v1058 = vmul.f32 %v1025, %v1021
  %v1059 = vadd.f32 %v957, %v1027
  %v1060 = vadd.f32 %v958, %v1028
  %v1061 = vadd.f32 %v959, %v1029
  %v1062 = vadd.f32 %v960, %v1030
  %v1063 = vadd.f32 %v961, %v1031
  %v1064 = vadd.f32 %v962, %v1032
  %v1065 = vadd.f32 %v963, %v1033
  %v1066 = vadd.f32 %v964, %v1034
  %v1067 = vadd.f32 %v965, %v1035
  %v1068 = vadd.f32 %v966, %v1036
  %v1069 = vadd.f32 %v967, %v1037
  %v1070 = vadd.f32 %v968, %v1038
  %v1071 = vadd.f32 %v969, %v1039
  %v1072 = vadd.f32 %v970, %v1040
  %v1073 = vadd.f32 %v971, %v1041
  %v1074 = vadd.f32 %v972, %v1042
  %v1075 = vadd.f32 %v973, %v1043
  %v1076 = vadd.f32 %v974, %v1044
  %v1077 = vadd.f32 %v975, %v1045
  %v1078 = vadd.f32 %v976, %v1046
  %v1079 = vadd.f32 %v977, %v1047
  %v1080 = vadd.f32 %v978, %v1048
  %v1081 = vadd.f32 %v979, %v1049
  %v1082 = vadd.f32 %v980, %v1050
  %v1083 = vadd.f32 %v981, %v1051
  %v1084 = vadd.f32 %v982, %v1052
  %v1085 = vadd.f32 %v983, %v1053
  %v1086 = vadd.f32 %v984, %v1054
  %v1087 = vadd.f32 %v985, %v1055
  %v1088 = vadd.f32 %v986, %v1056
  %v1089 = vadd.f32 %v987, %v1057
  %v1090 = vadd.f32 %v988, %v1058
  %s1091 = scalar_lea.vmem %s1, 2304
  %v1092 = vld [vmem:[%s1091] sm:$0xff]
  %v1093 = vld [vmem:[%s1091 + $0x8] sm:$0xff]
  %v1094 = vld [vmem:[%s1091 + $0x10] sm:$0xff]
  %v1095 = vld [vmem:[%s1091 + $0x18] sm:$0xff]
  %v1096 = vld [vmem:[%s1091 + $0x20] sm:$0xff]
  %v1097 = vld [vmem:[%s1091 + $0x28] sm:$0xff]
  %v1098 = vld [vmem:[%s1091 + $0x30] sm:$0xff]
  %v1099 = vld [vmem:[%s1091 + $0x38] sm:$0xff]
  %v1100 = vld [vmem:[%s1091 + $0x40] sm:$0xff]
  %v1101 = vld [vmem:[%s1091 + $0x48] sm:$0xff]
  %v1102 = vld [vmem:[%s1091 + $0x50] sm:$0xff]
  %v1103 = vld [vmem:[%s1091 + $0x58] sm:$0xff]
  %v1104 = vld [vmem:[%s1091 + $0x60] sm:$0xff]
  %v1105 = vld [vmem:[%s1091 + $0x68] sm:$0xff]
  %v1106 = vld [vmem:[%s1091 + $0x70] sm:$0xff]
  %v1107 = vld [vmem:[%s1091 + $0x78] sm:$0xff]
  %v1108 = vld [vmem:[%s1091 + $0x80] sm:$0xff]
  %v1109 = vld [vmem:[%s1091 + $0x88] sm:$0xff]
  %v1110 = vld [vmem:[%s1091 + $0x90] sm:$0xff]
  %v1111 = vld [vmem:[%s1091 + $0x98] sm:$0xff]
  %v1112 = vld [vmem:[%s1091 + $0xa0] sm:$0xff]
  %v1113 = vld [vmem:[%s1091 + $0xa8] sm:$0xff]
  %v1114 = vld [vmem:[%s1091 + $0xb0] sm:$0xff]
  %v1115 = vld [vmem:[%s1091 + $0xb8] sm:$0xff]
  %v1116 = vld [vmem:[%s1091 + $0xc0] sm:$0xff]
  %v1117 = vld [vmem:[%s1091 + $0xc8] sm:$0xff]
  %v1118 = vld [vmem:[%s1091 + $0xd0] sm:$0xff]
  %v1119 = vld [vmem:[%s1091 + $0xd8] sm:$0xff]
  %v1120 = vld [vmem:[%s1091 + $0xe0] sm:$0xff]
  %v1121 = vld [vmem:[%s1091 + $0xe8] sm:$0xff]
  %v1122 = vld [vmem:[%s1091 + $0xf0] sm:$0xff]
  %v1123 = vld [vmem:[%s1091 + $0xf8] sm:$0xff]
  %1124 = vrot.lane.b32.xlu0 %v174, 119
  %v1125 = vpop.permute.xlu0 %1124
  %s1126 = vtos %v1125
  %v1127 = vstv %s1126
  %v1129 = vmul.f32 %v1127, %v1092
  %v1130 = vmul.f32 %v1127, %v1093
  %v1131 = vmul.f32 %v1127, %v1094
  %v1132 = vmul.f32 %v1127, %v1095
  %v1133 = vmul.f32 %v1127, %v1096
  %v1134 = vmul.f32 %v1127, %v1097
  %v1135 = vmul.f32 %v1127, %v1098
  %v1136 = vmul.f32 %v1127, %v1099
  %v1137 = vmul.f32 %v1127, %v1100
  %v1138 = vmul.f32 %v1127, %v1101
  %v1139 = vmul.f32 %v1127, %v1102
  %v1140 = vmul.f32 %v1127, %v1103
  %v1141 = vmul.f32 %v1127, %v1104
  %v1142 = vmul.f32 %v1127, %v1105
  %v1143 = vmul.f32 %v1127, %v1106
  %v1144 = vmul.f32 %v1127, %v1107
  %v1145 = vmul.f32 %v1127, %v1108
  %v1146 = vmul.f32 %v1127, %v1109
  %v1147 = vmul.f32 %v1127, %v1110
  %v1148 = vmul.f32 %v1127, %v1111
  %v1149 = vmul.f32 %v1127, %v1112
  %v1150 = vmul.f32 %v1127, %v1113
  %v1151 = vmul.f32 %v1127, %v1114
  %v1152 = vmul.f32 %v1127, %v1115
  %v1153 = vmul.f32 %v1127, %v1116
  %v1154 = vmul.f32 %v1127, %v1117
  %v1155 = vmul.f32 %v1127, %v1118
  %v1156 = vmul.f32 %v1127, %v1119
  %v1157 = vmul.f32 %v1127, %v1120
  %v1158 = vmul.f32 %v1127, %v1121
  %v1159 = vmul.f32 %v1127, %v1122
  %v1160 = vmul.f32 %v1127, %v1123
  %v1161 = vadd.f32 %v1059, %v1129
  %v1162 = vadd.f32 %v1060, %v1130
  %v1163 = vadd.f32 %v1061, %v1131
  %v1164 = vadd.f32 %v1062, %v1132
  %v1165 = vadd.f32 %v1063, %v1133
  %v1166 = vadd.f32 %v1064, %v1134
  %v1167 = vadd.f32 %v1065, %v1135
  %v1168 = vadd.f32 %v1066, %v1136
  %v1169 = vadd.f32 %v1067, %v1137
  %v1170 = vadd.f32 %v1068, %v1138
  %v1171 = vadd.f32 %v1069, %v1139
  %v1172 = vadd.f32 %v1070, %v1140
  %v1173 = vadd.f32 %v1071, %v1141
  %v1174 = vadd.f32 %v1072, %v1142
  %v1175 = vadd.f32 %v1073, %v1143
  %v1176 = vadd.f32 %v1074, %v1144
  %v1177 = vadd.f32 %v1075, %v1145
  %v1178 = vadd.f32 %v1076, %v1146
  %v1179 = vadd.f32 %v1077, %v1147
  %v1180 = vadd.f32 %v1078, %v1148
  %v1181 = vadd.f32 %v1079, %v1149
  %v1182 = vadd.f32 %v1080, %v1150
  %v1183 = vadd.f32 %v1081, %v1151
  %v1184 = vadd.f32 %v1082, %v1152
  %v1185 = vadd.f32 %v1083, %v1153
  %v1186 = vadd.f32 %v1084, %v1154
  %v1187 = vadd.f32 %v1085, %v1155
  %v1188 = vadd.f32 %v1086, %v1156
  %v1189 = vadd.f32 %v1087, %v1157
  %v1190 = vadd.f32 %v1088, %v1158
  %v1191 = vadd.f32 %v1089, %v1159
  %v1192 = vadd.f32 %v1090, %v1160
  %s1193 = scalar_lea.vmem %s1, 2560
  %v1194 = vld [vmem:[%s1193] sm:$0xff]
  %v1195 = vld [vmem:[%s1193 + $0x8] sm:$0xff]
  %v1196 = vld [vmem:[%s1193 + $0x10] sm:$0xff]
  %v1197 = vld [vmem:[%s1193 + $0x18] sm:$0xff]
  %v1198 = vld [vmem:[%s1193 + $0x20] sm:$0xff]
  %v1199 = vld [vmem:[%s1193 + $0x28] sm:$0xff]
  %v1200 = vld [vmem:[%s1193 + $0x30] sm:$0xff]
  %v1201 = vld [vmem:[%s1193 + $0x38] sm:$0xff]
  %v1202 = vld [vmem:[%s1193 + $0x40] sm:$0xff]
  %v1203 = vld [vmem:[%s1193 + $0x48] sm:$0xff]
  %v1204 = vld [vmem:[%s1193 + $0x50] sm:$0xff]
  %v1205 = vld [vmem:[%s1193 + $0x58] sm:$0xff]
  %v1206 = vld [vmem:[%s1193 + $0x60] sm:$0xff]
  %v1207 = vld [vmem:[%s1193 + $0x68] sm:$0xff]
  %v1208 = vld [vmem:[%s1193 + $0x70] sm:$0xff]
  %v1209 = vld [vmem:[%s1193 + $0x78] sm:$0xff]
  %v1210 = vld [vmem:[%s1193 + $0x80] sm:$0xff]
  %v1211 = vld [vmem:[%s1193 + $0x88] sm:$0xff]
  %v1212 = vld [vmem:[%s1193 + $0x90] sm:$0xff]
  %v1213 = vld [vmem:[%s1193 + $0x98] sm:$0xff]
  %v1214 = vld [vmem:[%s1193 + $0xa0] sm:$0xff]
  %v1215 = vld [vmem:[%s1193 + $0xa8] sm:$0xff]
  %v1216 = vld [vmem:[%s1193 + $0xb0] sm:$0xff]
  %v1217 = vld [vmem:[%s1193 + $0xb8] sm:$0xff]
  %v1218 = vld [vmem:[%s1193 + $0xc0] sm:$0xff]
  %v1219 = vld [vmem:[%s1193 + $0xc8] sm:$0xff]
  %v1220 = vld [vmem:[%s1193 + $0xd0] sm:$0xff]
  %v1221 = vld [vmem:[%s1193 + $0xd8] sm:$0xff]
  %v1222 = vld [vmem:[%s1193 + $0xe0] sm:$0xff]
  %v1223 = vld [vmem:[%s1193 + $0xe8] sm:$0xff]
  %v1224 = vld [vmem:[%s1193 + $0xf0] sm:$0xff]
  %v1225 = vld [vmem:[%s1193 + $0xf8] sm:$0xff]
  %1226 = vrot.lane.b32.xlu0 %v174, 118
  %v1227 = vpop.permute.xlu0 %1226
  %s1228 = vtos %v1227
  %v1229 = vstv %s1228
  %v1231 = vmul.f32 %v1229, %v1194
  %v1232 = vmul.f32 %v1229, %v1195
  %v1233 = vmul.f32 %v1229, %v1196
  %v1234 = vmul.f32 %v1229, %v1197
  %v1235 = vmul.f32 %v1229, %v1198
  %v1236 = vmul.f32 %v1229, %v1199
  %v1237 = vmul.f32 %v1229, %v1200
  %v1238 = vmul.f32 %v1229, %v1201
  %v1239 = vmul.f32 %v1229, %v1202
  %v1240 = vmul.f32 %v1229, %v1203
  %v1241 = vmul.f32 %v1229, %v1204
  %v1242 = vmul.f32 %v1229, %v1205
  %v1243 = vmul.f32 %v1229, %v1206
  %v1244 = vmul.f32 %v1229, %v1207
  %v1245 = vmul.f32 %v1229, %v1208
  %v1246 = vmul.f32 %v1229, %v1209
  %v1247 = vmul.f32 %v1229, %v1210
  %v1248 = vmul.f32 %v1229, %v1211
  %v1249 = vmul.f32 %v1229, %v1212
  %v1250 = vmul.f32 %v1229, %v1213
  %v1251 = vmul.f32 %v1229, %v1214
  %v1252 = vmul.f32 %v1229, %v1215
  %v1253 = vmul.f32 %v1229, %v1216
  %v1254 = vmul.f32 %v1229, %v1217
  %v1255 = vmul.f32 %v1229, %v1218
  %v1256 = vmul.f32 %v1229, %v1219
  %v1257 = vmul.f32 %v1229, %v1220
  %v1258 = vmul.f32 %v1229, %v1221
  %v1259 = vmul.f32 %v1229, %v1222
  %v1260 = vmul.f32 %v1229, %v1223
  %v1261 = vmul.f32 %v1229, %v1224
  %v1262 = vmul.f32 %v1229, %v1225
  %v1263 = vadd.f32 %v1161, %v1231
  %v1264 = vadd.f32 %v1162, %v1232
  %v1265 = vadd.f32 %v1163, %v1233
  %v1266 = vadd.f32 %v1164, %v1234
  %v1267 = vadd.f32 %v1165, %v1235
  %v1268 = vadd.f32 %v1166, %v1236
  %v1269 = vadd.f32 %v1167, %v1237
  %v1270 = vadd.f32 %v1168, %v1238
  %v1271 = vadd.f32 %v1169, %v1239
  %v1272 = vadd.f32 %v1170, %v1240
  %v1273 = vadd.f32 %v1171, %v1241
  %v1274 = vadd.f32 %v1172, %v1242
  %v1275 = vadd.f32 %v1173, %v1243
  %v1276 = vadd.f32 %v1174, %v1244
  %v1277 = vadd.f32 %v1175, %v1245
  %v1278 = vadd.f32 %v1176, %v1246
  %v1279 = vadd.f32 %v1177, %v1247
  %v1280 = vadd.f32 %v1178, %v1248
  %v1281 = vadd.f32 %v1179, %v1249
  %v1282 = vadd.f32 %v1180, %v1250
  %v1283 = vadd.f32 %v1181, %v1251
  %v1284 = vadd.f32 %v1182, %v1252
  %v1285 = vadd.f32 %v1183, %v1253
  %v1286 = vadd.f32 %v1184, %v1254
  %v1287 = vadd.f32 %v1185, %v1255
  %v1288 = vadd.f32 %v1186, %v1256
  %v1289 = vadd.f32 %v1187, %v1257
  %v1290 = vadd.f32 %v1188, %v1258
  %v1291 = vadd.f32 %v1189, %v1259
  %v1292 = vadd.f32 %v1190, %v1260
  %v1293 = vadd.f32 %v1191, %v1261
  %v1294 = vadd.f32 %v1192, %v1262
  %s1295 = scalar_lea.vmem %s1, 2816
  %v1296 = vld [vmem:[%s1295] sm:$0xff]
  %v1297 = vld [vmem:[%s1295 + $0x8] sm:$0xff]
  %v1298 = vld [vmem:[%s1295 + $0x10] sm:$0xff]
  %v1299 = vld [vmem:[%s1295 + $0x18] sm:$0xff]
  %v1300 = vld [vmem:[%s1295 + $0x20] sm:$0xff]
  %v1301 = vld [vmem:[%s1295 + $0x28] sm:$0xff]
  %v1302 = vld [vmem:[%s1295 + $0x30] sm:$0xff]
  %v1303 = vld [vmem:[%s1295 + $0x38] sm:$0xff]
  %v1304 = vld [vmem:[%s1295 + $0x40] sm:$0xff]
  %v1305 = vld [vmem:[%s1295 + $0x48] sm:$0xff]
  %v1306 = vld [vmem:[%s1295 + $0x50] sm:$0xff]
  %v1307 = vld [vmem:[%s1295 + $0x58] sm:$0xff]
  %v1308 = vld [vmem:[%s1295 + $0x60] sm:$0xff]
  %v1309 = vld [vmem:[%s1295 + $0x68] sm:$0xff]
  %v1310 = vld [vmem:[%s1295 + $0x70] sm:$0xff]
  %v1311 = vld [vmem:[%s1295 + $0x78] sm:$0xff]
  %v1312 = vld [vmem:[%s1295 + $0x80] sm:$0xff]
  %v1313 = vld [vmem:[%s1295 + $0x88] sm:$0xff]
  %v1314 = vld [vmem:[%s1295 + $0x90] sm:$0xff]
  %v1315 = vld [vmem:[%s1295 + $0x98] sm:$0xff]
  %v1316 = vld [vmem:[%s1295 + $0xa0] sm:$0xff]
  %v1317 = vld [vmem:[%s1295 + $0xa8] sm:$0xff]
  %v1318 = vld [vmem:[%s1295 + $0xb0] sm:$0xff]
  %v1319 = vld [vmem:[%s1295 + $0xb8] sm:$0xff]
  %v1320 = vld [vmem:[%s1295 + $0xc0] sm:$0xff]
  %v1321 = vld [vmem:[%s1295 + $0xc8] sm:$0xff]
  %v1322 = vld [vmem:[%s1295 + $0xd0] sm:$0xff]
  %v1323 = vld [vmem:[%s1295 + $0xd8] sm:$0xff]
  %v1324 = vld [vmem:[%s1295 + $0xe0] sm:$0xff]
  %v1325 = vld [vmem:[%s1295 + $0xe8] sm:$0xff]
  %v1326 = vld [vmem:[%s1295 + $0xf0] sm:$0xff]
  %v1327 = vld [vmem:[%s1295 + $0xf8] sm:$0xff]
  %1328 = vrot.lane.b32.xlu0 %v174, 117
  %v1329 = vpop.permute.xlu0 %1328
  %s1330 = vtos %v1329
  %v1331 = vstv %s1330
  %v1333 = vmul.f32 %v1331, %v1296
  %v1334 = vmul.f32 %v1331, %v1297
  %v1335 = vmul.f32 %v1331, %v1298
  %v1336 = vmul.f32 %v1331, %v1299
  %v1337 = vmul.f32 %v1331, %v1300
  %v1338 = vmul.f32 %v1331, %v1301
  %v1339 = vmul.f32 %v1331, %v1302
  %v1340 = vmul.f32 %v1331, %v1303
  %v1341 = vmul.f32 %v1331, %v1304
  %v1342 = vmul.f32 %v1331, %v1305
  %v1343 = vmul.f32 %v1331, %v1306
  %v1344 = vmul.f32 %v1331, %v1307
  %v1345 = vmul.f32 %v1331, %v1308
  %v1346 = vmul.f32 %v1331, %v1309
  %v1347 = vmul.f32 %v1331, %v1310
  %v1348 = vmul.f32 %v1331, %v1311
  %v1349 = vmul.f32 %v1331, %v1312
  %v1350 = vmul.f32 %v1331, %v1313
  %v1351 = vmul.f32 %v1331, %v1314
  %v1352 = vmul.f32 %v1331, %v1315
  %v1353 = vmul.f32 %v1331, %v1316
  %v1354 = vmul.f32 %v1331, %v1317
  %v1355 = vmul.f32 %v1331, %v1318
  %v1356 = vmul.f32 %v1331, %v1319
  %v1357 = vmul.f32 %v1331, %v1320
  %v1358 = vmul.f32 %v1331, %v1321
  %v1359 = vmul.f32 %v1331, %v1322
  %v1360 = vmul.f32 %v1331, %v1323
  %v1361 = vmul.f32 %v1331, %v1324
  %v1362 = vmul.f32 %v1331, %v1325
  %v1363 = vmul.f32 %v1331, %v1326
  %v1364 = vmul.f32 %v1331, %v1327
  %v1365 = vadd.f32 %v1263, %v1333
  %v1366 = vadd.f32 %v1264, %v1334
  %v1367 = vadd.f32 %v1265, %v1335
  %v1368 = vadd.f32 %v1266, %v1336
  %v1369 = vadd.f32 %v1267, %v1337
  %v1370 = vadd.f32 %v1268, %v1338
  %v1371 = vadd.f32 %v1269, %v1339
  %v1372 = vadd.f32 %v1270, %v1340
  %v1373 = vadd.f32 %v1271, %v1341
  %v1374 = vadd.f32 %v1272, %v1342
  %v1375 = vadd.f32 %v1273, %v1343
  %v1376 = vadd.f32 %v1274, %v1344
  %v1377 = vadd.f32 %v1275, %v1345
  %v1378 = vadd.f32 %v1276, %v1346
  %v1379 = vadd.f32 %v1277, %v1347
  %v1380 = vadd.f32 %v1278, %v1348
  %v1381 = vadd.f32 %v1279, %v1349
  %v1382 = vadd.f32 %v1280, %v1350
  %v1383 = vadd.f32 %v1281, %v1351
  %v1384 = vadd.f32 %v1282, %v1352
  %v1385 = vadd.f32 %v1283, %v1353
  %v1386 = vadd.f32 %v1284, %v1354
  %v1387 = vadd.f32 %v1285, %v1355
  %v1388 = vadd.f32 %v1286, %v1356
  %v1389 = vadd.f32 %v1287, %v1357
  %v1390 = vadd.f32 %v1288, %v1358
  %v1391 = vadd.f32 %v1289, %v1359
  %v1392 = vadd.f32 %v1290, %v1360
  %v1393 = vadd.f32 %v1291, %v1361
  %v1394 = vadd.f32 %v1292, %v1362
  %v1395 = vadd.f32 %v1293, %v1363
  %v1396 = vadd.f32 %v1294, %v1364
  %s1397 = scalar_lea.vmem %s1, 3072
  %v1398 = vld [vmem:[%s1397] sm:$0xff]
  %v1399 = vld [vmem:[%s1397 + $0x8] sm:$0xff]
  %v1400 = vld [vmem:[%s1397 + $0x10] sm:$0xff]
  %v1401 = vld [vmem:[%s1397 + $0x18] sm:$0xff]
  %v1402 = vld [vmem:[%s1397 + $0x20] sm:$0xff]
  %v1403 = vld [vmem:[%s1397 + $0x28] sm:$0xff]
  %v1404 = vld [vmem:[%s1397 + $0x30] sm:$0xff]
  %v1405 = vld [vmem:[%s1397 + $0x38] sm:$0xff]
  %v1406 = vld [vmem:[%s1397 + $0x40] sm:$0xff]
  %v1407 = vld [vmem:[%s1397 + $0x48] sm:$0xff]
  %v1408 = vld [vmem:[%s1397 + $0x50] sm:$0xff]
  %v1409 = vld [vmem:[%s1397 + $0x58] sm:$0xff]
  %v1410 = vld [vmem:[%s1397 + $0x60] sm:$0xff]
  %v1411 = vld [vmem:[%s1397 + $0x68] sm:$0xff]
  %v1412 = vld [vmem:[%s1397 + $0x70] sm:$0xff]
  %v1413 = vld [vmem:[%s1397 + $0x78] sm:$0xff]
  %v1414 = vld [vmem:[%s1397 + $0x80] sm:$0xff]
  %v1415 = vld [vmem:[%s1397 + $0x88] sm:$0xff]
  %v1416 = vld [vmem:[%s1397 + $0x90] sm:$0xff]
  %v1417 = vld [vmem:[%s1397 + $0x98] sm:$0xff]
  %v1418 = vld [vmem:[%s1397 + $0xa0] sm:$0xff]
  %v1419 = vld [vmem:[%s1397 + $0xa8] sm:$0xff]
  %v1420 = vld [vmem:[%s1397 + $0xb0] sm:$0xff]
  %v1421 = vld [vmem:[%s1397 + $0xb8] sm:$0xff]
  %v1422 = vld [vmem:[%s1397 + $0xc0] sm:$0xff]
  %v1423 = vld [vmem:[%s1397 + $0xc8] sm:$0xff]
  %v1424 = vld [vmem:[%s1397 + $0xd0] sm:$0xff]
  %v1425 = vld [vmem:[%s1397 + $0xd8] sm:$0xff]
  %v1426 = vld [vmem:[%s1397 + $0xe0] sm:$0xff]
  %v1427 = vld [vmem:[%s1397 + $0xe8] sm:$0xff]
  %v1428 = vld [vmem:[%s1397 + $0xf0] sm:$0xff]
  %v1429 = vld [vmem:[%s1397 + $0xf8] sm:$0xff]
  %1430 = vrot.lane.b32.xlu0 %v174, 116
  %v1431 = vpop.permute.xlu0 %1430
  %s1432 = vtos %v1431
  %v1433 = vstv %s1432
  %v1435 = vmul.f32 %v1433, %v1398
  %v1436 = vmul.f32 %v1433, %v1399
  %v1437 = vmul.f32 %v1433, %v1400
  %v1438 = vmul.f32 %v1433, %v1401
  %v1439 = vmul.f32 %v1433, %v1402
  %v1440 = vmul.f32 %v1433, %v1403
  %v1441 = vmul.f32 %v1433, %v1404
  %v1442 = vmul.f32 %v1433, %v1405
  %v1443 = vmul.f32 %v1433, %v1406
  %v1444 = vmul.f32 %v1433, %v1407
  %v1445 = vmul.f32 %v1433, %v1408
  %v1446 = vmul.f32 %v1433, %v1409
  %v1447 = vmul.f32 %v1433, %v1410
  %v1448 = vmul.f32 %v1433, %v1411
  %v1449 = vmul.f32 %v1433, %v1412
  %v1450 = vmul.f32 %v1433, %v1413
  %v1451 = vmul.f32 %v1433, %v1414
  %v1452 = vmul.f32 %v1433, %v1415
  %v1453 = vmul.f32 %v1433, %v1416
  %v1454 = vmul.f32 %v1433, %v1417
  %v1455 = vmul.f32 %v1433, %v1418
  %v1456 = vmul.f32 %v1433, %v1419
  %v1457 = vmul.f32 %v1433, %v1420
  %v1458 = vmul.f32 %v1433, %v1421
  %v1459 = vmul.f32 %v1433, %v1422
  %v1460 = vmul.f32 %v1433, %v1423
  %v1461 = vmul.f32 %v1433, %v1424
  %v1462 = vmul.f32 %v1433, %v1425
  %v1463 = vmul.f32 %v1433, %v1426
  %v1464 = vmul.f32 %v1433, %v1427
  %v1465 = vmul.f32 %v1433, %v1428
  %v1466 = vmul.f32 %v1433, %v1429
  %v1467 = vadd.f32 %v1365, %v1435
  %v1468 = vadd.f32 %v1366, %v1436
  %v1469 = vadd.f32 %v1367, %v1437
  %v1470 = vadd.f32 %v1368, %v1438
  %v1471 = vadd.f32 %v1369, %v1439
  %v1472 = vadd.f32 %v1370, %v1440
  %v1473 = vadd.f32 %v1371, %v1441
  %v1474 = vadd.f32 %v1372, %v1442
  %v1475 = vadd.f32 %v1373, %v1443
  %v1476 = vadd.f32 %v1374, %v1444
  %v1477 = vadd.f32 %v1375, %v1445
  %v1478 = vadd.f32 %v1376, %v1446
  %v1479 = vadd.f32 %v1377, %v1447
  %v1480 = vadd.f32 %v1378, %v1448
  %v1481 = vadd.f32 %v1379, %v1449
  %v1482 = vadd.f32 %v1380, %v1450
  %v1483 = vadd.f32 %v1381, %v1451
  %v1484 = vadd.f32 %v1382, %v1452
  %v1485 = vadd.f32 %v1383, %v1453
  %v1486 = vadd.f32 %v1384, %v1454
  %v1487 = vadd.f32 %v1385, %v1455
  %v1488 = vadd.f32 %v1386, %v1456
  %v1489 = vadd.f32 %v1387, %v1457
  %v1490 = vadd.f32 %v1388, %v1458
  %v1491 = vadd.f32 %v1389, %v1459
  %v1492 = vadd.f32 %v1390, %v1460
  %v1493 = vadd.f32 %v1391, %v1461
  %v1494 = vadd.f32 %v1392, %v1462
  %v1495 = vadd.f32 %v1393, %v1463
  %v1496 = vadd.f32 %v1394, %v1464
  %v1497 = vadd.f32 %v1395, %v1465
  %v1498 = vadd.f32 %v1396, %v1466
  %s1499 = scalar_lea.vmem %s1, 3328
  %v1500 = vld [vmem:[%s1499] sm:$0xff]
  %v1501 = vld [vmem:[%s1499 + $0x8] sm:$0xff]
  %v1502 = vld [vmem:[%s1499 + $0x10] sm:$0xff]
  %v1503 = vld [vmem:[%s1499 + $0x18] sm:$0xff]
  %v1504 = vld [vmem:[%s1499 + $0x20] sm:$0xff]
  %v1505 = vld [vmem:[%s1499 + $0x28] sm:$0xff]
  %v1506 = vld [vmem:[%s1499 + $0x30] sm:$0xff]
  %v1507 = vld [vmem:[%s1499 + $0x38] sm:$0xff]
  %v1508 = vld [vmem:[%s1499 + $0x40] sm:$0xff]
  %v1509 = vld [vmem:[%s1499 + $0x48] sm:$0xff]
  %v1510 = vld [vmem:[%s1499 + $0x50] sm:$0xff]
  %v1511 = vld [vmem:[%s1499 + $0x58] sm:$0xff]
  %v1512 = vld [vmem:[%s1499 + $0x60] sm:$0xff]
  %v1513 = vld [vmem:[%s1499 + $0x68] sm:$0xff]
  %v1514 = vld [vmem:[%s1499 + $0x70] sm:$0xff]
  %v1515 = vld [vmem:[%s1499 + $0x78] sm:$0xff]
  %v1516 = vld [vmem:[%s1499 + $0x80] sm:$0xff]
  %v1517 = vld [vmem:[%s1499 + $0x88] sm:$0xff]
  %v1518 = vld [vmem:[%s1499 + $0x90] sm:$0xff]
  %v1519 = vld [vmem:[%s1499 + $0x98] sm:$0xff]
  %v1520 = vld [vmem:[%s1499 + $0xa0] sm:$0xff]
  %v1521 = vld [vmem:[%s1499 + $0xa8] sm:$0xff]
  %v1522 = vld [vmem:[%s1499 + $0xb0] sm:$0xff]
  %v1523 = vld [vmem:[%s1499 + $0xb8] sm:$0xff]
  %v1524 = vld [vmem:[%s1499 + $0xc0] sm:$0xff]
  %v1525 = vld [vmem:[%s1499 + $0xc8] sm:$0xff]
  %v1526 = vld [vmem:[%s1499 + $0xd0] sm:$0xff]
  %v1527 = vld [vmem:[%s1499 + $0xd8] sm:$0xff]
  %v1528 = vld [vmem:[%s1499 + $0xe0] sm:$0xff]
  %v1529 = vld [vmem:[%s1499 + $0xe8] sm:$0xff]
  %v1530 = vld [vmem:[%s1499 + $0xf0] sm:$0xff]
  %v1531 = vld [vmem:[%s1499 + $0xf8] sm:$0xff]
  %1532 = vrot.lane.b32.xlu0 %v174, 115
  %v1533 = vpop.permute.xlu0 %1532
  %s1534 = vtos %v1533
  %v1535 = vstv %s1534
  %v1537 = vmul.f32 %v1535, %v1500
  %v1538 = vmul.f32 %v1535, %v1501
  %v1539 = vmul.f32 %v1535, %v1502
  %v1540 = vmul.f32 %v1535, %v1503
  %v1541 = vmul.f32 %v1535, %v1504
  %v1542 = vmul.f32 %v1535, %v1505
  %v1543 = vmul.f32 %v1535, %v1506
  %v1544 = vmul.f32 %v1535, %v1507
  %v1545 = vmul.f32 %v1535, %v1508
  %v1546 = vmul.f32 %v1535, %v1509
  %v1547 = vmul.f32 %v1535, %v1510
  %v1548 = vmul.f32 %v1535, %v1511
  %v1549 = vmul.f32 %v1535, %v1512
  %v1550 = vmul.f32 %v1535, %v1513
  %v1551 = vmul.f32 %v1535, %v1514
  %v1552 = vmul.f32 %v1535, %v1515
  %v1553 = vmul.f32 %v1535, %v1516
  %v1554 = vmul.f32 %v1535, %v1517
  %v1555 = vmul.f32 %v1535, %v1518
  %v1556 = vmul.f32 %v1535, %v1519
  %v1557 = vmul.f32 %v1535, %v1520
  %v1558 = vmul.f32 %v1535, %v1521
  %v1559 = vmul.f32 %v1535, %v1522
  %v1560 = vmul.f32 %v1535, %v1523
  %v1561 = vmul.f32 %v1535, %v1524
  %v1562 = vmul.f32 %v1535, %v1525
  %v1563 = vmul.f32 %v1535, %v1526
  %v1564 = vmul.f32 %v1535, %v1527
  %v1565 = vmul.f32 %v1535, %v1528
  %v1566 = vmul.f32 %v1535, %v1529
  %v1567 = vmul.f32 %v1535, %v1530
  %v1568 = vmul.f32 %v1535, %v1531
  %v1569 = vadd.f32 %v1467, %v1537
  %v1570 = vadd.f32 %v1468, %v1538
  %v1571 = vadd.f32 %v1469, %v1539
  %v1572 = vadd.f32 %v1470, %v1540
  %v1573 = vadd.f32 %v1471, %v1541
  %v1574 = vadd.f32 %v1472, %v1542
  %v1575 = vadd.f32 %v1473, %v1543
  %v1576 = vadd.f32 %v1474, %v1544
  %v1577 = vadd.f32 %v1475, %v1545
  %v1578 = vadd.f32 %v1476, %v1546
  %v1579 = vadd.f32 %v1477, %v1547
  %v1580 = vadd.f32 %v1478, %v1548
  %v1581 = vadd.f32 %v1479, %v1549
  %v1582 = vadd.f32 %v1480, %v1550
  %v1583 = vadd.f32 %v1481, %v1551
  %v1584 = vadd.f32 %v1482, %v1552
  %v1585 = vadd.f32 %v1483, %v1553
  %v1586 = vadd.f32 %v1484, %v1554
  %v1587 = vadd.f32 %v1485, %v1555
  %v1588 = vadd.f32 %v1486, %v1556
  %v1589 = vadd.f32 %v1487, %v1557
  %v1590 = vadd.f32 %v1488, %v1558
  %v1591 = vadd.f32 %v1489, %v1559
  %v1592 = vadd.f32 %v1490, %v1560
  %v1593 = vadd.f32 %v1491, %v1561
  %v1594 = vadd.f32 %v1492, %v1562
  %v1595 = vadd.f32 %v1493, %v1563
  %v1596 = vadd.f32 %v1494, %v1564
  %v1597 = vadd.f32 %v1495, %v1565
  %v1598 = vadd.f32 %v1496, %v1566
  %v1599 = vadd.f32 %v1497, %v1567
  %v1600 = vadd.f32 %v1498, %v1568
  %s1601 = scalar_lea.vmem %s1, 3584
  %v1602 = vld [vmem:[%s1601] sm:$0xff]
  %v1603 = vld [vmem:[%s1601 + $0x8] sm:$0xff]
  %v1604 = vld [vmem:[%s1601 + $0x10] sm:$0xff]
  %v1605 = vld [vmem:[%s1601 + $0x18] sm:$0xff]
  %v1606 = vld [vmem:[%s1601 + $0x20] sm:$0xff]
  %v1607 = vld [vmem:[%s1601 + $0x28] sm:$0xff]
  %v1608 = vld [vmem:[%s1601 + $0x30] sm:$0xff]
  %v1609 = vld [vmem:[%s1601 + $0x38] sm:$0xff]
  %v1610 = vld [vmem:[%s1601 + $0x40] sm:$0xff]
  %v1611 = vld [vmem:[%s1601 + $0x48] sm:$0xff]
  %v1612 = vld [vmem:[%s1601 + $0x50] sm:$0xff]
  %v1613 = vld [vmem:[%s1601 + $0x58] sm:$0xff]
  %v1614 = vld [vmem:[%s1601 + $0x60] sm:$0xff]
  %v1615 = vld [vmem:[%s1601 + $0x68] sm:$0xff]
  %v1616 = vld [vmem:[%s1601 + $0x70] sm:$0xff]
  %v1617 = vld [vmem:[%s1601 + $0x78] sm:$0xff]
  %v1618 = vld [vmem:[%s1601 + $0x80] sm:$0xff]
  %v1619 = vld [vmem:[%s1601 + $0x88] sm:$0xff]
  %v1620 = vld [vmem:[%s1601 + $0x90] sm:$0xff]
  %v1621 = vld [vmem:[%s1601 + $0x98] sm:$0xff]
  %v1622 = vld [vmem:[%s1601 + $0xa0] sm:$0xff]
  %v1623 = vld [vmem:[%s1601 + $0xa8] sm:$0xff]
  %v1624 = vld [vmem:[%s1601 + $0xb0] sm:$0xff]
  %v1625 = vld [vmem:[%s1601 + $0xb8] sm:$0xff]
  %v1626 = vld [vmem:[%s1601 + $0xc0] sm:$0xff]
  %v1627 = vld [vmem:[%s1601 + $0xc8] sm:$0xff]
  %v1628 = vld [vmem:[%s1601 + $0xd0] sm:$0xff]
  %v1629 = vld [vmem:[%s1601 + $0xd8] sm:$0xff]
  %v1630 = vld [vmem:[%s1601 + $0xe0] sm:$0xff]
  %v1631 = vld [vmem:[%s1601 + $0xe8] sm:$0xff]
  %v1632 = vld [vmem:[%s1601 + $0xf0] sm:$0xff]
  %v1633 = vld [vmem:[%s1601 + $0xf8] sm:$0xff]
  %1634 = vrot.lane.b32.xlu0 %v174, 114
  %v1635 = vpop.permute.xlu0 %1634
  %s1636 = vtos %v1635
  %v1637 = vstv %s1636
  %v1639 = vmul.f32 %v1637, %v1602
  %v1640 = vmul.f32 %v1637, %v1603
  %v1641 = vmul.f32 %v1637, %v1604
  %v1642 = vmul.f32 %v1637, %v1605
  %v1643 = vmul.f32 %v1637, %v1606
  %v1644 = vmul.f32 %v1637, %v1607
  %v1645 = vmul.f32 %v1637, %v1608
  %v1646 = vmul.f32 %v1637, %v1609
  %v1647 = vmul.f32 %v1637, %v1610
  %v1648 = vmul.f32 %v1637, %v1611
  %v1649 = vmul.f32 %v1637, %v1612
  %v1650 = vmul.f32 %v1637, %v1613
  %v1651 = vmul.f32 %v1637, %v1614
  %v1652 = vmul.f32 %v1637, %v1615
  %v1653 = vmul.f32 %v1637, %v1616
  %v1654 = vmul.f32 %v1637, %v1617
  %v1655 = vmul.f32 %v1637, %v1618
  %v1656 = vmul.f32 %v1637, %v1619
  %v1657 = vmul.f32 %v1637, %v1620
  %v1658 = vmul.f32 %v1637, %v1621
  %v1659 = vmul.f32 %v1637, %v1622
  %v1660 = vmul.f32 %v1637, %v1623
  %v1661 = vmul.f32 %v1637, %v1624
  %v1662 = vmul.f32 %v1637, %v1625
  %v1663 = vmul.f32 %v1637, %v1626
  %v1664 = vmul.f32 %v1637, %v1627
  %v1665 = vmul.f32 %v1637, %v1628
  %v1666 = vmul.f32 %v1637, %v1629
  %v1667 = vmul.f32 %v1637, %v1630
  %v1668 = vmul.f32 %v1637, %v1631
  %v1669 = vmul.f32 %v1637, %v1632
  %v1670 = vmul.f32 %v1637, %v1633
  %v1671 = vadd.f32 %v1569, %v1639
  %v1672 = vadd.f32 %v1570, %v1640
  %v1673 = vadd.f32 %v1571, %v1641
  %v1674 = vadd.f32 %v1572, %v1642
  %v1675 = vadd.f32 %v1573, %v1643
  %v1676 = vadd.f32 %v1574, %v1644
  %v1677 = vadd.f32 %v1575, %v1645
  %v1678 = vadd.f32 %v1576, %v1646
  %v1679 = vadd.f32 %v1577, %v1647
  %v1680 = vadd.f32 %v1578, %v1648
  %v1681 = vadd.f32 %v1579, %v1649
  %v1682 = vadd.f32 %v1580, %v1650
  %v1683 = vadd.f32 %v1581, %v1651
  %v1684 = vadd.f32 %v1582, %v1652
  %v1685 = vadd.f32 %v1583, %v1653
  %v1686 = vadd.f32 %v1584, %v1654
  %v1687 = vadd.f32 %v1585, %v1655
  %v1688 = vadd.f32 %v1586, %v1656
  %v1689 = vadd.f32 %v1587, %v1657
  %v1690 = vadd.f32 %v1588, %v1658
  %v1691 = vadd.f32 %v1589, %v1659
  %v1692 = vadd.f32 %v1590, %v1660
  %v1693 = vadd.f32 %v1591, %v1661
  %v1694 = vadd.f32 %v1592, %v1662
  %v1695 = vadd.f32 %v1593, %v1663
  %v1696 = vadd.f32 %v1594, %v1664
  %v1697 = vadd.f32 %v1595, %v1665
  %v1698 = vadd.f32 %v1596, %v1666
  %v1699 = vadd.f32 %v1597, %v1667
  %v1700 = vadd.f32 %v1598, %v1668
  %v1701 = vadd.f32 %v1599, %v1669
  %v1702 = vadd.f32 %v1600, %v1670
  %s1703 = scalar_lea.vmem %s1, 3840
  %v1704 = vld [vmem:[%s1703] sm:$0xff]
  %v1705 = vld [vmem:[%s1703 + $0x8] sm:$0xff]
  %v1706 = vld [vmem:[%s1703 + $0x10] sm:$0xff]
  %v1707 = vld [vmem:[%s1703 + $0x18] sm:$0xff]
  %v1708 = vld [vmem:[%s1703 + $0x20] sm:$0xff]
  %v1709 = vld [vmem:[%s1703 + $0x28] sm:$0xff]
  %v1710 = vld [vmem:[%s1703 + $0x30] sm:$0xff]
  %v1711 = vld [vmem:[%s1703 + $0x38] sm:$0xff]
  %v1712 = vld [vmem:[%s1703 + $0x40] sm:$0xff]
  %v1713 = vld [vmem:[%s1703 + $0x48] sm:$0xff]
  %v1714 = vld [vmem:[%s1703 + $0x50] sm:$0xff]
  %v1715 = vld [vmem:[%s1703 + $0x58] sm:$0xff]
  %v1716 = vld [vmem:[%s1703 + $0x60] sm:$0xff]
  %v1717 = vld [vmem:[%s1703 + $0x68] sm:$0xff]
  %v1718 = vld [vmem:[%s1703 + $0x70] sm:$0xff]
  %v1719 = vld [vmem:[%s1703 + $0x78] sm:$0xff]
  %v1720 = vld [vmem:[%s1703 + $0x80] sm:$0xff]
  %v1721 = vld [vmem:[%s1703 + $0x88] sm:$0xff]
  %v1722 = vld [vmem:[%s1703 + $0x90] sm:$0xff]
  %v1723 = vld [vmem:[%s1703 + $0x98] sm:$0xff]
  %v1724 = vld [vmem:[%s1703 + $0xa0] sm:$0xff]
  %v1725 = vld [vmem:[%s1703 + $0xa8] sm:$0xff]
  %v1726 = vld [vmem:[%s1703 + $0xb0] sm:$0xff]
  %v1727 = vld [vmem:[%s1703 + $0xb8] sm:$0xff]
  %v1728 = vld [vmem:[%s1703 + $0xc0] sm:$0xff]
  %v1729 = vld [vmem:[%s1703 + $0xc8] sm:$0xff]
  %v1730 = vld [vmem:[%s1703 + $0xd0] sm:$0xff]
  %v1731 = vld [vmem:[%s1703 + $0xd8] sm:$0xff]
  %v1732 = vld [vmem:[%s1703 + $0xe0] sm:$0xff]
  %v1733 = vld [vmem:[%s1703 + $0xe8] sm:$0xff]
  %v1734 = vld [vmem:[%s1703 + $0xf0] sm:$0xff]
  %v1735 = vld [vmem:[%s1703 + $0xf8] sm:$0xff]
  %1736 = vrot.lane.b32.xlu0 %v174, 113
  %v1737 = vpop.permute.xlu0 %1736
  %s1738 = vtos %v1737
  %v1739 = vstv %s1738
  %v1741 = vmul.f32 %v1739, %v1704
  %v1742 = vmul.f32 %v1739, %v1705
  %v1743 = vmul.f32 %v1739, %v1706
  %v1744 = vmul.f32 %v1739, %v1707
  %v1745 = vmul.f32 %v1739, %v1708
  %v1746 = vmul.f32 %v1739, %v1709
  %v1747 = vmul.f32 %v1739, %v1710
  %v1748 = vmul.f32 %v1739, %v1711
  %v1749 = vmul.f32 %v1739, %v1712
  %v1750 = vmul.f32 %v1739, %v1713
  %v1751 = vmul.f32 %v1739, %v1714
  %v1752 = vmul.f32 %v1739, %v1715
  %v1753 = vmul.f32 %v1739, %v1716
  %v1754 = vmul.f32 %v1739, %v1717
  %v1755 = vmul.f32 %v1739, %v1718
  %v1756 = vmul.f32 %v1739, %v1719
  %v1757 = vmul.f32 %v1739, %v1720
  %v1758 = vmul.f32 %v1739, %v1721
  %v1759 = vmul.f32 %v1739, %v1722
  %v1760 = vmul.f32 %v1739, %v1723
  %v1761 = vmul.f32 %v1739, %v1724
  %v1762 = vmul.f32 %v1739, %v1725
  %v1763 = vmul.f32 %v1739, %v1726
  %v1764 = vmul.f32 %v1739, %v1727
  %v1765 = vmul.f32 %v1739, %v1728
  %v1766 = vmul.f32 %v1739, %v1729
  %v1767 = vmul.f32 %v1739, %v1730
  %v1768 = vmul.f32 %v1739, %v1731
  %v1769 = vmul.f32 %v1739, %v1732
  %v1770 = vmul.f32 %v1739, %v1733
  %v1771 = vmul.f32 %v1739, %v1734
  %v1772 = vmul.f32 %v1739, %v1735
  %v1773 = vadd.f32 %v1671, %v1741
  %v1774 = vadd.f32 %v1672, %v1742
  %v1775 = vadd.f32 %v1673, %v1743
  %v1776 = vadd.f32 %v1674, %v1744
  %v1777 = vadd.f32 %v1675, %v1745
  %v1778 = vadd.f32 %v1676, %v1746
  %v1779 = vadd.f32 %v1677, %v1747
  %v1780 = vadd.f32 %v1678, %v1748
  %v1781 = vadd.f32 %v1679, %v1749
  %v1782 = vadd.f32 %v1680, %v1750
  %v1783 = vadd.f32 %v1681, %v1751
  %v1784 = vadd.f32 %v1682, %v1752
  %v1785 = vadd.f32 %v1683, %v1753
  %v1786 = vadd.f32 %v1684, %v1754
  %v1787 = vadd.f32 %v1685, %v1755
  %v1788 = vadd.f32 %v1686, %v1756
  %v1789 = vadd.f32 %v1687, %v1757
  %v1790 = vadd.f32 %v1688, %v1758
  %v1791 = vadd.f32 %v1689, %v1759
  %v1792 = vadd.f32 %v1690, %v1760
  %v1793 = vadd.f32 %v1691, %v1761
  %v1794 = vadd.f32 %v1692, %v1762
  %v1795 = vadd.f32 %v1693, %v1763
  %v1796 = vadd.f32 %v1694, %v1764
  %v1797 = vadd.f32 %v1695, %v1765
  %v1798 = vadd.f32 %v1696, %v1766
  %v1799 = vadd.f32 %v1697, %v1767
  %v1800 = vadd.f32 %v1698, %v1768
  %v1801 = vadd.f32 %v1699, %v1769
  %v1802 = vadd.f32 %v1700, %v1770
  %v1803 = vadd.f32 %v1701, %v1771
  %v1804 = vadd.f32 %v1702, %v1772
  %v1805 = vld [vmem:[%s0 + $0x1] sm:$0x1]
  %s1807 = vtos %v1805
  %v1808 = vstv %s1807
  %v1810 = vmul.f32 %v1808, %v175
  %v1811 = vmul.f32 %v1808, %v176
  %v1812 = vmul.f32 %v1808, %v177
  %v1813 = vmul.f32 %v1808, %v178
  %v1814 = vmul.f32 %v1808, %v179
  %v1815 = vmul.f32 %v1808, %v180
  %v1816 = vmul.f32 %v1808, %v181
  %v1817 = vmul.f32 %v1808, %v182
  %v1818 = vmul.f32 %v1808, %v183
  %v1819 = vmul.f32 %v1808, %v184
  %v1820 = vmul.f32 %v1808, %v185
  %v1821 = vmul.f32 %v1808, %v186
  %v1822 = vmul.f32 %v1808, %v187
  %v1823 = vmul.f32 %v1808, %v188
  %v1824 = vmul.f32 %v1808, %v189
  %v1825 = vmul.f32 %v1808, %v190
  %v1826 = vmul.f32 %v1808, %v191
  %v1827 = vmul.f32 %v1808, %v192
  %v1828 = vmul.f32 %v1808, %v193
  %v1829 = vmul.f32 %v1808, %v194
  %v1830 = vmul.f32 %v1808, %v195
  %v1831 = vmul.f32 %v1808, %v196
  %v1832 = vmul.f32 %v1808, %v197
  %v1833 = vmul.f32 %v1808, %v198
  %v1834 = vmul.f32 %v1808, %v199
  %v1835 = vmul.f32 %v1808, %v200
  %v1836 = vmul.f32 %v1808, %v201
  %v1837 = vmul.f32 %v1808, %v202
  %v1838 = vmul.f32 %v1808, %v203
  %v1839 = vmul.f32 %v1808, %v204
  %v1840 = vmul.f32 %v1808, %v205
  %v1841 = vmul.f32 %v1808, %v206
  %v1842 = vadd.f32 %v142, %v1810
  %v1843 = vadd.f32 %v143, %v1811
  %v1844 = vadd.f32 %v144, %v1812
  %v1845 = vadd.f32 %v145, %v1813
  %v1846 = vadd.f32 %v146, %v1814
  %v1847 = vadd.f32 %v147, %v1815
  %v1848 = vadd.f32 %v148, %v1816
  %v1849 = vadd.f32 %v149, %v1817
  %v1850 = vadd.f32 %v150, %v1818
  %v1851 = vadd.f32 %v151, %v1819
  %v1852 = vadd.f32 %v152, %v1820
  %v1853 = vadd.f32 %v153, %v1821
  %v1854 = vadd.f32 %v154, %v1822
  %v1855 = vadd.f32 %v155, %v1823
  %v1856 = vadd.f32 %v156, %v1824
  %v1857 = vadd.f32 %v157, %v1825
  %v1858 = vadd.f32 %v158, %v1826
  %v1859 = vadd.f32 %v159, %v1827
  %v1860 = vadd.f32 %v160, %v1828
  %v1861 = vadd.f32 %v161, %v1829
  %v1862 = vadd.f32 %v162, %v1830
  %v1863 = vadd.f32 %v163, %v1831
  %v1864 = vadd.f32 %v164, %v1832
  %v1865 = vadd.f32 %v165, %v1833
  %v1866 = vadd.f32 %v166, %v1834
  %v1867 = vadd.f32 %v167, %v1835
  %v1868 = vadd.f32 %v168, %v1836
  %v1869 = vadd.f32 %v169, %v1837
  %v1870 = vadd.f32 %v170, %v1838
  %v1871 = vadd.f32 %v171, %v1839
  %v1872 = vadd.f32 %v172, %v1840
  %v1873 = vadd.f32 %v173, %v1841
  %1874 = vrot.lane.b32.xlu0 %v1805, 127
  %v1875 = vpop.permute.xlu0 %1874
  %s1876 = vtos %v1875
  %v1877 = vstv %s1876
  %v1879 = vmul.f32 %v1877, %v276
  %v1880 = vmul.f32 %v1877, %v277
  %v1881 = vmul.f32 %v1877, %v278
  %v1882 = vmul.f32 %v1877, %v279
  %v1883 = vmul.f32 %v1877, %v280
  %v1884 = vmul.f32 %v1877, %v281
  %v1885 = vmul.f32 %v1877, %v282
  %v1886 = vmul.f32 %v1877, %v283
  %v1887 = vmul.f32 %v1877, %v284
  %v1888 = vmul.f32 %v1877, %v285
  %v1889 = vmul.f32 %v1877, %v286
  %v1890 = vmul.f32 %v1877, %v287
  %v1891 = vmul.f32 %v1877, %v288
  %v1892 = vmul.f32 %v1877, %v289
  %v1893 = vmul.f32 %v1877, %v290
  %v1894 = vmul.f32 %v1877, %v291
  %v1895 = vmul.f32 %v1877, %v292
  %v1896 = vmul.f32 %v1877, %v293
  %v1897 = vmul.f32 %v1877, %v294
  %v1898 = vmul.f32 %v1877, %v295
  %v1899 = vmul.f32 %v1877, %v296
  %v1900 = vmul.f32 %v1877, %v297
  %v1901 = vmul.f32 %v1877, %v298
  %v1902 = vmul.f32 %v1877, %v299
  %v1903 = vmul.f32 %v1877, %v300
  %v1904 = vmul.f32 %v1877, %v301
  %v1905 = vmul.f32 %v1877, %v302
  %v1906 = vmul.f32 %v1877, %v303
  %v1907 = vmul.f32 %v1877, %v304
  %v1908 = vmul.f32 %v1877, %v305
  %v1909 = vmul.f32 %v1877, %v306
  %v1910 = vmul.f32 %v1877, %v307
  %v1911 = vadd.f32 %v1842, %v1879
  %v1912 = vadd.f32 %v1843, %v1880
  %v1913 = vadd.f32 %v1844, %v1881
  %v1914 = vadd.f32 %v1845, %v1882
  %v1915 = vadd.f32 %v1846, %v1883
  %v1916 = vadd.f32 %v1847, %v1884
  %v1917 = vadd.f32 %v1848, %v1885
  %v1918 = vadd.f32 %v1849, %v1886
  %v1919 = vadd.f32 %v1850, %v1887
  %v1920 = vadd.f32 %v1851, %v1888
  %v1921 = vadd.f32 %v1852, %v1889
  %v1922 = vadd.f32 %v1853, %v1890
  %v1923 = vadd.f32 %v1854, %v1891
  %v1924 = vadd.f32 %v1855, %v1892
  %v1925 = vadd.f32 %v1856, %v1893
  %v1926 = vadd.f32 %v1857, %v1894
  %v1927 = vadd.f32 %v1858, %v1895
  %v1928 = vadd.f32 %v1859, %v1896
  %v1929 = vadd.f32 %v1860, %v1897
  %v1930 = vadd.f32 %v1861, %v1898
  %v1931 = vadd.f32 %v1862, %v1899
  %v1932 = vadd.f32 %v1863, %v1900
  %v1933 = vadd.f32 %v1864, %v1901
  %v1934 = vadd.f32 %v1865, %v1902
  %v1935 = vadd.f32 %v1866, %v1903
  %v1936 = vadd.f32 %v1867, %v1904
  %v1937 = vadd.f32 %v1868, %v1905
  %v1938 = vadd.f32 %v1869, %v1906
  %v1939 = vadd.f32 %v1870, %v1907
  %v1940 = vadd.f32 %v1871, %v1908
  %v1941 = vadd.f32 %v1872, %v1909
  %v1942 = vadd.f32 %v1873, %v1910
  %1943 = vrot.lane.b32.xlu0 %v1805, 126
  %v1944 = vpop.permute.xlu0 %1943
  %s1945 = vtos %v1944
  %v1946 = vstv %s1945
  %v1948 = vmul.f32 %v1946, %v378
  %v1949 = vmul.f32 %v1946, %v379
  %v1950 = vmul.f32 %v1946, %v380
  %v1951 = vmul.f32 %v1946, %v381
  %v1952 = vmul.f32 %v1946, %v382
  %v1953 = vmul.f32 %v1946, %v383
  %v1954 = vmul.f32 %v1946, %v384
  %v1955 = vmul.f32 %v1946, %v385
  %v1956 = vmul.f32 %v1946, %v386
  %v1957 = vmul.f32 %v1946, %v387
  %v1958 = vmul.f32 %v1946, %v388
  %v1959 = vmul.f32 %v1946, %v389
  %v1960 = vmul.f32 %v1946, %v390
  %v1961 = vmul.f32 %v1946, %v391
  %v1962 = vmul.f32 %v1946, %v392
  %v1963 = vmul.f32 %v1946, %v393
  %v1964 = vmul.f32 %v1946, %v394
  %v1965 = vmul.f32 %v1946, %v395
  %v1966 = vmul.f32 %v1946, %v396
  %v1967 = vmul.f32 %v1946, %v397
  %v1968 = vmul.f32 %v1946, %v398
  %v1969 = vmul.f32 %v1946, %v399
  %v1970 = vmul.f32 %v1946, %v400
  %v1971 = vmul.f32 %v1946, %v401
  %v1972 = vmul.f32 %v1946, %v402
  %v1973 = vmul.f32 %v1946, %v403
  %v1974 = vmul.f32 %v1946, %v404
  %v1975 = vmul.f32 %v1946, %v405
  %v1976 = vmul.f32 %v1946, %v406
  %v1977 = vmul.f32 %v1946, %v407
  %v1978 = vmul.f32 %v1946, %v408
  %v1979 = vmul.f32 %v1946, %v409
  %v1980 = vadd.f32 %v1911, %v1948
  %v1981 = vadd.f32 %v1912, %v1949
  %v1982 = vadd.f32 %v1913, %v1950
  %v1983 = vadd.f32 %v1914, %v1951
  %v1984 = vadd.f32 %v1915, %v1952
  %v1985 = vadd.f32 %v1916, %v1953
  %v1986 = vadd.f32 %v1917, %v1954
  %v1987 = vadd.f32 %v1918, %v1955
  %v1988 = vadd.f32 %v1919, %v1956
  %v1989 = vadd.f32 %v1920, %v1957
  %v1990 = vadd.f32 %v1921, %v1958
  %v1991 = vadd.f32 %v1922, %v1959
  %v1992 = vadd.f32 %v1923, %v1960
  %v1993 = vadd.f32 %v1924, %v1961
  %v1994 = vadd.f32 %v1925, %v1962
  %v1995 = vadd.f32 %v1926, %v1963
  %v1996 = vadd.f32 %v1927, %v1964
  %v1997 = vadd.f32 %v1928, %v1965
  %v1998 = vadd.f32 %v1929, %v1966
  %v1999 = vadd.f32 %v1930, %v1967
  %v2000 = vadd.f32 %v1931, %v1968
  %v2001 = vadd.f32 %v1932, %v1969
  %v2002 = vadd.f32 %v1933, %v1970
  %v2003 = vadd.f32 %v1934, %v1971
  %v2004 = vadd.f32 %v1935, %v1972
  %v2005 = vadd.f32 %v1936, %v1973
  %v2006 = vadd.f32 %v1937, %v1974
  %v2007 = vadd.f32 %v1938, %v1975
  %v2008 = vadd.f32 %v1939, %v1976
  %v2009 = vadd.f32 %v1940, %v1977
  %v2010 = vadd.f32 %v1941, %v1978
  %v2011 = vadd.f32 %v1942, %v1979
  %2012 = vrot.lane.b32.xlu0 %v1805, 125
  %v2013 = vpop.permute.xlu0 %2012
  %s2014 = vtos %v2013
  %v2015 = vstv %s2014
  %v2017 = vmul.f32 %v2015, %v480
  %v2018 = vmul.f32 %v2015, %v481
  %v2019 = vmul.f32 %v2015, %v482
  %v2020 = vmul.f32 %v2015, %v483
  %v2021 = vmul.f32 %v2015, %v484
  %v2022 = vmul.f32 %v2015, %v485
  %v2023 = vmul.f32 %v2015, %v486
  %v2024 = vmul.f32 %v2015, %v487
  %v2025 = vmul.f32 %v2015, %v488
  %v2026 = vmul.f32 %v2015, %v489
  %v2027 = vmul.f32 %v2015, %v490
  %v2028 = vmul.f32 %v2015, %v491
  %v2029 = vmul.f32 %v2015, %v492
  %v2030 = vmul.f32 %v2015, %v493
  %v2031 = vmul.f32 %v2015, %v494
  %v2032 = vmul.f32 %v2015, %v495
  %v2033 = vmul.f32 %v2015, %v496
  %v2034 = vmul.f32 %v2015, %v497
  %v2035 = vmul.f32 %v2015, %v498
  %v2036 = vmul.f32 %v2015, %v499
  %v2037 = vmul.f32 %v2015, %v500
  %v2038 = vmul.f32 %v2015, %v501
  %v2039 = vmul.f32 %v2015, %v502
  %v2040 = vmul.f32 %v2015, %v503
  %v2041 = vmul.f32 %v2015, %v504
  %v2042 = vmul.f32 %v2015, %v505
  %v2043 = vmul.f32 %v2015, %v506
  %v2044 = vmul.f32 %v2015, %v507
  %v2045 = vmul.f32 %v2015, %v508
  %v2046 = vmul.f32 %v2015, %v509
  %v2047 = vmul.f32 %v2015, %v510
  %v2048 = vmul.f32 %v2015, %v511
  %v2049 = vadd.f32 %v1980, %v2017
  %v2050 = vadd.f32 %v1981, %v2018
  %v2051 = vadd.f32 %v1982, %v2019
  %v2052 = vadd.f32 %v1983, %v2020
  %v2053 = vadd.f32 %v1984, %v2021
  %v2054 = vadd.f32 %v1985, %v2022
  %v2055 = vadd.f32 %v1986, %v2023
  %v2056 = vadd.f32 %v1987, %v2024
  %v2057 = vadd.f32 %v1988, %v2025
  %v2058 = vadd.f32 %v1989, %v2026
  %v2059 = vadd.f32 %v1990, %v2027
  %v2060 = vadd.f32 %v1991, %v2028
  %v2061 = vadd.f32 %v1992, %v2029
  %v2062 = vadd.f32 %v1993, %v2030
  %v2063 = vadd.f32 %v1994, %v2031
  %v2064 = vadd.f32 %v1995, %v2032
  %v2065 = vadd.f32 %v1996, %v2033
  %v2066 = vadd.f32 %v1997, %v2034
  %v2067 = vadd.f32 %v1998, %v2035
  %v2068 = vadd.f32 %v1999, %v2036
  %v2069 = vadd.f32 %v2000, %v2037
  %v2070 = vadd.f32 %v2001, %v2038
  %v2071 = vadd.f32 %v2002, %v2039
  %v2072 = vadd.f32 %v2003, %v2040
  %v2073 = vadd.f32 %v2004, %v2041
  %v2074 = vadd.f32 %v2005, %v2042
  %v2075 = vadd.f32 %v2006, %v2043
  %v2076 = vadd.f32 %v2007, %v2044
  %v2077 = vadd.f32 %v2008, %v2045
  %v2078 = vadd.f32 %v2009, %v2046
  %v2079 = vadd.f32 %v2010, %v2047
  %v2080 = vadd.f32 %v2011, %v2048
  %2081 = vrot.lane.b32.xlu0 %v1805, 124
  %v2082 = vpop.permute.xlu0 %2081
  %s2083 = vtos %v2082
  %v2084 = vstv %s2083
  %v2086 = vmul.f32 %v2084, %v582
  %v2087 = vmul.f32 %v2084, %v583
  %v2088 = vmul.f32 %v2084, %v584
  %v2089 = vmul.f32 %v2084, %v585
  %v2090 = vmul.f32 %v2084, %v586
  %v2091 = vmul.f32 %v2084, %v587
  %v2092 = vmul.f32 %v2084, %v588
  %v2093 = vmul.f32 %v2084, %v589
  %v2094 = vmul.f32 %v2084, %v590
  %v2095 = vmul.f32 %v2084, %v591
  %v2096 = vmul.f32 %v2084, %v592
  %v2097 = vmul.f32 %v2084, %v593
  %v2098 = vmul.f32 %v2084, %v594
  %v2099 = vmul.f32 %v2084, %v595
  %v2100 = vmul.f32 %v2084, %v596
  %v2101 = vmul.f32 %v2084, %v597
  %v2102 = vmul.f32 %v2084, %v598
  %v2103 = vmul.f32 %v2084, %v599
  %v2104 = vmul.f32 %v2084, %v600
  %v2105 = vmul.f32 %v2084, %v601
  %v2106 = vmul.f32 %v2084, %v602
  %v2107 = vmul.f32 %v2084, %v603
  %v2108 = vmul.f32 %v2084, %v604
  %v2109 = vmul.f32 %v2084, %v605
  %v2110 = vmul.f32 %v2084, %v606
  %v2111 = vmul.f32 %v2084, %v607
  %v2112 = vmul.f32 %v2084, %v608
  %v2113 = vmul.f32 %v2084, %v609
  %v2114 = vmul.f32 %v2084, %v610
  %v2115 = vmul.f32 %v2084, %v611
  %v2116 = vmul.f32 %v2084, %v612
  %v2117 = vmul.f32 %v2084, %v613
  %v2118 = vadd.f32 %v2049, %v2086
  %v2119 = vadd.f32 %v2050, %v2087
  %v2120 = vadd.f32 %v2051, %v2088
  %v2121 = vadd.f32 %v2052, %v2089
  %v2122 = vadd.f32 %v2053, %v2090
  %v2123 = vadd.f32 %v2054, %v2091
  %v2124 = vadd.f32 %v2055, %v2092
  %v2125 = vadd.f32 %v2056, %v2093
  %v2126 = vadd.f32 %v2057, %v2094
  %v2127 = vadd.f32 %v2058, %v2095
  %v2128 = vadd.f32 %v2059, %v2096
  %v2129 = vadd.f32 %v2060, %v2097
  %v2130 = vadd.f32 %v2061, %v2098
  %v2131 = vadd.f32 %v2062, %v2099
  %v2132 = vadd.f32 %v2063, %v2100
  %v2133 = vadd.f32 %v2064, %v2101
  %v2134 = vadd.f32 %v2065, %v2102
  %v2135 = vadd.f32 %v2066, %v2103
  %v2136 = vadd.f32 %v2067, %v2104
  %v2137 = vadd.f32 %v2068, %v2105
  %v2138 = vadd.f32 %v2069, %v2106
  %v2139 = vadd.f32 %v2070, %v2107
  %v2140 = vadd.f32 %v2071, %v2108
  %v2141 = vadd.f32 %v2072, %v2109
  %v2142 = vadd.f32 %v2073, %v2110
  %v2143 = vadd.f32 %v2074, %v2111
  %v2144 = vadd.f32 %v2075, %v2112
  %v2145 = vadd.f32 %v2076, %v2113
  %v2146 = vadd.f32 %v2077, %v2114
  %v2147 = vadd.f32 %v2078, %v2115
  %v2148 = vadd.f32 %v2079, %v2116
  %v2149 = vadd.f32 %v2080, %v2117
  %2150 = vrot.lane.b32.xlu0 %v1805, 123
  %v2151 = vpop.permute.xlu0 %2150
  %s2152 = vtos %v2151
  %v2153 = vstv %s2152
  %v2155 = vmul.f32 %v2153, %v684
  %v2156 = vmul.f32 %v2153, %v685
  %v2157 = vmul.f32 %v2153, %v686
  %v2158 = vmul.f32 %v2153, %v687
  %v2159 = vmul.f32 %v2153, %v688
  %v2160 = vmul.f32 %v2153, %v689
  %v2161 = vmul.f32 %v2153, %v690
  %v2162 = vmul.f32 %v2153, %v691
  %v2163 = vmul.f32 %v2153, %v692
  %v2164 = vmul.f32 %v2153, %v693
  %v2165 = vmul.f32 %v2153, %v694
  %v2166 = vmul.f32 %v2153, %v695
  %v2167 = vmul.f32 %v2153, %v696
  %v2168 = vmul.f32 %v2153, %v697
  %v2169 = vmul.f32 %v2153, %v698
  %v2170 = vmul.f32 %v2153, %v699
  %v2171 = vmul.f32 %v2153, %v700
  %v2172 = vmul.f32 %v2153, %v701
  %v2173 = vmul.f32 %v2153, %v702
  %v2174 = vmul.f32 %v2153, %v703
  %v2175 = vmul.f32 %v2153, %v704
  %v2176 = vmul.f32 %v2153, %v705
  %v2177 = vmul.f32 %v2153, %v706
  %v2178 = vmul.f32 %v2153, %v707
  %v2179 = vmul.f32 %v2153, %v708
  %v2180 = vmul.f32 %v2153, %v709
  %v2181 = vmul.f32 %v2153, %v710
  %v2182 = vmul.f32 %v2153, %v711
  %v2183 = vmul.f32 %v2153, %v712
  %v2184 = vmul.f32 %v2153, %v713
  %v2185 = vmul.f32 %v2153, %v714
  %v2186 = vmul.f32 %v2153, %v715
  %v2187 = vadd.f32 %v2118, %v2155
  %v2188 = vadd.f32 %v2119, %v2156
  %v2189 = vadd.f32 %v2120, %v2157
  %v2190 = vadd.f32 %v2121, %v2158
  %v2191 = vadd.f32 %v2122, %v2159
  %v2192 = vadd.f32 %v2123, %v2160
  %v2193 = vadd.f32 %v2124, %v2161
  %v2194 = vadd.f32 %v2125, %v2162
  %v2195 = vadd.f32 %v2126, %v2163
  %v2196 = vadd.f32 %v2127, %v2164
  %v2197 = vadd.f32 %v2128, %v2165
  %v2198 = vadd.f32 %v2129, %v2166
  %v2199 = vadd.f32 %v2130, %v2167
  %v2200 = vadd.f32 %v2131, %v2168
  %v2201 = vadd.f32 %v2132, %v2169
  %v2202 = vadd.f32 %v2133, %v2170
  %v2203 = vadd.f32 %v2134, %v2171
  %v2204 = vadd.f32 %v2135, %v2172
  %v2205 = vadd.f32 %v2136, %v2173
  %v2206 = vadd.f32 %v2137, %v2174
  %v2207 = vadd.f32 %v2138, %v2175
  %v2208 = vadd.f32 %v2139, %v2176
  %v2209 = vadd.f32 %v2140, %v2177
  %v2210 = vadd.f32 %v2141, %v2178
  %v2211 = vadd.f32 %v2142, %v2179
  %v2212 = vadd.f32 %v2143, %v2180
  %v2213 = vadd.f32 %v2144, %v2181
  %v2214 = vadd.f32 %v2145, %v2182
  %v2215 = vadd.f32 %v2146, %v2183
  %v2216 = vadd.f32 %v2147, %v2184
  %v2217 = vadd.f32 %v2148, %v2185
  %v2218 = vadd.f32 %v2149, %v2186
  %2219 = vrot.lane.b32.xlu0 %v1805, 122
  %v2220 = vpop.permute.xlu0 %2219
  %s2221 = vtos %v2220
  %v2222 = vstv %s2221
  %v2224 = vmul.f32 %v2222, %v786
  %v2225 = vmul.f32 %v2222, %v787
  %v2226 = vmul.f32 %v2222, %v788
  %v2227 = vmul.f32 %v2222, %v789
  %v2228 = vmul.f32 %v2222, %v790
  %v2229 = vmul.f32 %v2222, %v791
  %v2230 = vmul.f32 %v2222, %v792
  %v2231 = vmul.f32 %v2222, %v793
  %v2232 = vmul.f32 %v2222, %v794
  %v2233 = vmul.f32 %v2222, %v795
  %v2234 = vmul.f32 %v2222, %v796
  %v2235 = vmul.f32 %v2222, %v797
  %v2236 = vmul.f32 %v2222, %v798
  %v2237 = vmul.f32 %v2222, %v799
  %v2238 = vmul.f32 %v2222, %v800
  %v2239 = vmul.f32 %v2222, %v801
  %v2240 = vmul.f32 %v2222, %v802
  %v2241 = vmul.f32 %v2222, %v803
  %v2242 = vmul.f32 %v2222, %v804
  %v2243 = vmul.f32 %v2222, %v805
  %v2244 = vmul.f32 %v2222, %v806
  %v2245 = vmul.f32 %v2222, %v807
  %v2246 = vmul.f32 %v2222, %v808
  %v2247 = vmul.f32 %v2222, %v809
  %v2248 = vmul.f32 %v2222, %v810
  %v2249 = vmul.f32 %v2222, %v811
  %v2250 = vmul.f32 %v2222, %v812
  %v2251 = vmul.f32 %v2222, %v813
  %v2252 = vmul.f32 %v2222, %v814
  %v2253 = vmul.f32 %v2222, %v815
  %v2254 = vmul.f32 %v2222, %v816
  %v2255 = vmul.f32 %v2222, %v817
  %v2256 = vadd.f32 %v2187, %v2224
  %v2257 = vadd.f32 %v2188, %v2225
  %v2258 = vadd.f32 %v2189, %v2226
  %v2259 = vadd.f32 %v2190, %v2227
  %v2260 = vadd.f32 %v2191, %v2228
  %v2261 = vadd.f32 %v2192, %v2229
  %v2262 = vadd.f32 %v2193, %v2230
  %v2263 = vadd.f32 %v2194, %v2231
  %v2264 = vadd.f32 %v2195, %v2232
  %v2265 = vadd.f32 %v2196, %v2233
  %v2266 = vadd.f32 %v2197, %v2234
  %v2267 = vadd.f32 %v2198, %v2235
  %v2268 = vadd.f32 %v2199, %v2236
  %v2269 = vadd.f32 %v2200, %v2237
  %v2270 = vadd.f32 %v2201, %v2238
  %v2271 = vadd.f32 %v2202, %v2239
  %v2272 = vadd.f32 %v2203, %v2240
  %v2273 = vadd.f32 %v2204, %v2241
  %v2274 = vadd.f32 %v2205, %v2242
  %v2275 = vadd.f32 %v2206, %v2243
  %v2276 = vadd.f32 %v2207, %v2244
  %v2277 = vadd.f32 %v2208, %v2245
  %v2278 = vadd.f32 %v2209, %v2246
  %v2279 = vadd.f32 %v2210, %v2247
  %v2280 = vadd.f32 %v2211, %v2248
  %v2281 = vadd.f32 %v2212, %v2249
  %v2282 = vadd.f32 %v2213, %v2250
  %v2283 = vadd.f32 %v2214, %v2251
  %v2284 = vadd.f32 %v2215, %v2252
  %v2285 = vadd.f32 %v2216, %v2253
  %v2286 = vadd.f32 %v2217, %v2254
  %v2287 = vadd.f32 %v2218, %v2255
  %2288 = vrot.lane.b32.xlu0 %v1805, 121
  %v2289 = vpop.permute.xlu0 %2288
  %s2290 = vtos %v2289
  %v2291 = vstv %s2290
  %v2293 = vmul.f32 %v2291, %v888
  %v2294 = vmul.f32 %v2291, %v889
  %v2295 = vmul.f32 %v2291, %v890
  %v2296 = vmul.f32 %v2291, %v891
  %v2297 = vmul.f32 %v2291, %v892
  %v2298 = vmul.f32 %v2291, %v893
  %v2299 = vmul.f32 %v2291, %v894
  %v2300 = vmul.f32 %v2291, %v895
  %v2301 = vmul.f32 %v2291, %v896
  %v2302 = vmul.f32 %v2291, %v897
  %v2303 = vmul.f32 %v2291, %v898
  %v2304 = vmul.f32 %v2291, %v899
  %v2305 = vmul.f32 %v2291, %v900
  %v2306 = vmul.f32 %v2291, %v901
  %v2307 = vmul.f32 %v2291, %v902
  %v2308 = vmul.f32 %v2291, %v903
  %v2309 = vmul.f32 %v2291, %v904
  %v2310 = vmul.f32 %v2291, %v905
  %v2311 = vmul.f32 %v2291, %v906
  %v2312 = vmul.f32 %v2291, %v907
  %v2313 = vmul.f32 %v2291, %v908
  %v2314 = vmul.f32 %v2291, %v909
  %v2315 = vmul.f32 %v2291, %v910
  %v2316 = vmul.f32 %v2291, %v911
  %v2317 = vmul.f32 %v2291, %v912
  %v2318 = vmul.f32 %v2291, %v913
  %v2319 = vmul.f32 %v2291, %v914
  %v2320 = vmul.f32 %v2291, %v915
  %v2321 = vmul.f32 %v2291, %v916
  %v2322 = vmul.f32 %v2291, %v917
  %v2323 = vmul.f32 %v2291, %v918
  %v2324 = vmul.f32 %v2291, %v919
  %v2325 = vadd.f32 %v2256, %v2293
  %v2326 = vadd.f32 %v2257, %v2294
  %v2327 = vadd.f32 %v2258, %v2295
  %v2328 = vadd.f32 %v2259, %v2296
  %v2329 = vadd.f32 %v2260, %v2297
  %v2330 = vadd.f32 %v2261, %v2298
  %v2331 = vadd.f32 %v2262, %v2299
  %v2332 = vadd.f32 %v2263, %v2300
  %v2333 = vadd.f32 %v2264, %v2301
  %v2334 = vadd.f32 %v2265, %v2302
  %v2335 = vadd.f32 %v2266, %v2303
  %v2336 = vadd.f32 %v2267, %v2304
  %v2337 = vadd.f32 %v2268, %v2305
  %v2338 = vadd.f32 %v2269, %v2306
  %v2339 = vadd.f32 %v2270, %v2307
  %v2340 = vadd.f32 %v2271, %v2308
  %v2341 = vadd.f32 %v2272, %v2309
  %v2342 = vadd.f32 %v2273, %v2310
  %v2343 = vadd.f32 %v2274, %v2311
  %v2344 = vadd.f32 %v2275, %v2312
  %v2345 = vadd.f32 %v2276, %v2313
  %v2346 = vadd.f32 %v2277, %v2314
  %v2347 = vadd.f32 %v2278, %v2315
  %v2348 = vadd.f32 %v2279, %v2316
  %v2349 = vadd.f32 %v2280, %v2317
  %v2350 = vadd.f32 %v2281, %v2318
  %v2351 = vadd.f32 %v2282, %v2319
  %v2352 = vadd.f32 %v2283, %v2320
  %v2353 = vadd.f32 %v2284, %v2321
  %v2354 = vadd.f32 %v2285, %v2322
  %v2355 = vadd.f32 %v2286, %v2323
  %v2356 = vadd.f32 %v2287, %v2324
  %2357 = vrot.lane.b32.xlu0 %v1805, 120
  %v2358 = vpop.permute.xlu0 %2357
  %s2359 = vtos %v2358
  %v2360 = vstv %s2359
  %v2362 = vmul.f32 %v2360, %v990
  %v2363 = vmul.f32 %v2360, %v991
  %v2364 = vmul.f32 %v2360, %v992
  %v2365 = vmul.f32 %v2360, %v993
  %v2366 = vmul.f32 %v2360, %v994
  %v2367 = vmul.f32 %v2360, %v995
  %v2368 = vmul.f32 %v2360, %v996
  %v2369 = vmul.f32 %v2360, %v997
  %v2370 = vmul.f32 %v2360, %v998
  %v2371 = vmul.f32 %v2360, %v999
  %v2372 = vmul.f32 %v2360, %v1000
  %v2373 = vmul.f32 %v2360, %v1001
  %v2374 = vmul.f32 %v2360, %v1002
  %v2375 = vmul.f32 %v2360, %v1003
  %v2376 = vmul.f32 %v2360, %v1004
  %v2377 = vmul.f32 %v2360, %v1005
  %v2378 = vmul.f32 %v2360, %v1006
  %v2379 = vmul.f32 %v2360, %v1007
  %v2380 = vmul.f32 %v2360, %v1008
  %v2381 = vmul.f32 %v2360, %v1009
  %v2382 = vmul.f32 %v2360, %v1010
  %v2383 = vmul.f32 %v2360, %v1011
  %v2384 = vmul.f32 %v2360, %v1012
  %v2385 = vmul.f32 %v2360, %v1013
  %v2386 = vmul.f32 %v2360, %v1014
  %v2387 = vmul.f32 %v2360, %v1015
  %v2388 = vmul.f32 %v2360, %v1016
  %v2389 = vmul.f32 %v2360, %v1017
  %v2390 = vmul.f32 %v2360, %v1018
  %v2391 = vmul.f32 %v2360, %v1019
  %v2392 = vmul.f32 %v2360, %v1020
  %v2393 = vmul.f32 %v2360, %v1021
  %v2394 = vadd.f32 %v2325, %v2362
  %v2395 = vadd.f32 %v2326, %v2363
  %v2396 = vadd.f32 %v2327, %v2364
  %v2397 = vadd.f32 %v2328, %v2365
  %v2398 = vadd.f32 %v2329, %v2366
  %v2399 = vadd.f32 %v2330, %v2367
  %v2400 = vadd.f32 %v2331, %v2368
  %v2401 = vadd.f32 %v2332, %v2369
  %v2402 = vadd.f32 %v2333, %v2370
  %v2403 = vadd.f32 %v2334, %v2371
  %v2404 = vadd.f32 %v2335, %v2372
  %v2405 = vadd.f32 %v2336, %v2373
  %v2406 = vadd.f32 %v2337, %v2374
  %v2407 = vadd.f32 %v2338, %v2375
  %v2408 = vadd.f32 %v2339, %v2376
  %v2409 = vadd.f32 %v2340, %v2377
  %v2410 = vadd.f32 %v2341, %v2378
  %v2411 = vadd.f32 %v2342, %v2379
  %v2412 = vadd.f32 %v2343, %v2380
  %v2413 = vadd.f32 %v2344, %v2381
  %v2414 = vadd.f32 %v2345, %v2382
  %v2415 = vadd.f32 %v2346, %v2383
  %v2416 = vadd.f32 %v2347, %v2384
  %v2417 = vadd.f32 %v2348, %v2385
  %v2418 = vadd.f32 %v2349, %v2386
  %v2419 = vadd.f32 %v2350, %v2387
  %v2420 = vadd.f32 %v2351, %v2388
  %v2421 = vadd.f32 %v2352, %v2389
  %v2422 = vadd.f32 %v2353, %v2390
  %v2423 = vadd.f32 %v2354, %v2391
  %v2424 = vadd.f32 %v2355, %v2392
  %v2425 = vadd.f32 %v2356, %v2393
  %2426 = vrot.lane.b32.xlu0 %v1805, 119
  %v2427 = vpop.permute.xlu0 %2426
  %s2428 = vtos %v2427
  %v2429 = vstv %s2428
  %v2431 = vmul.f32 %v2429, %v1092
  %v2432 = vmul.f32 %v2429, %v1093
  %v2433 = vmul.f32 %v2429, %v1094
  %v2434 = vmul.f32 %v2429, %v1095
  %v2435 = vmul.f32 %v2429, %v1096
  %v2436 = vmul.f32 %v2429, %v1097
  %v2437 = vmul.f32 %v2429, %v1098
  %v2438 = vmul.f32 %v2429, %v1099
  %v2439 = vmul.f32 %v2429, %v1100
  %v2440 = vmul.f32 %v2429, %v1101
  %v2441 = vmul.f32 %v2429, %v1102
  %v2442 = vmul.f32 %v2429, %v1103
  %v2443 = vmul.f32 %v2429, %v1104
  %v2444 = vmul.f32 %v2429, %v1105
  %v2445 = vmul.f32 %v2429, %v1106
  %v2446 = vmul.f32 %v2429, %v1107
  %v2447 = vmul.f32 %v2429, %v1108
  %v2448 = vmul.f32 %v2429, %v1109
  %v2449 = vmul.f32 %v2429, %v1110
  %v2450 = vmul.f32 %v2429, %v1111
  %v2451 = vmul.f32 %v2429, %v1112
  %v2452 = vmul.f32 %v2429, %v1113
  %v2453 = vmul.f32 %v2429, %v1114
  %v2454 = vmul.f32 %v2429, %v1115
  %v2455 = vmul.f32 %v2429, %v1116
  %v2456 = vmul.f32 %v2429, %v1117
  %v2457 = vmul.f32 %v2429, %v1118
  %v2458 = vmul.f32 %v2429, %v1119
  %v2459 = vmul.f32 %v2429, %v1120
  %v2460 = vmul.f32 %v2429, %v1121
  %v2461 = vmul.f32 %v2429, %v1122
  %v2462 = vmul.f32 %v2429, %v1123
  %v2463 = vadd.f32 %v2394, %v2431
  %v2464 = vadd.f32 %v2395, %v2432
  %v2465 = vadd.f32 %v2396, %v2433
  %v2466 = vadd.f32 %v2397, %v2434
  %v2467 = vadd.f32 %v2398, %v2435
  %v2468 = vadd.f32 %v2399, %v2436
  %v2469 = vadd.f32 %v2400, %v2437
  %v2470 = vadd.f32 %v2401, %v2438
  %v2471 = vadd.f32 %v2402, %v2439
  %v2472 = vadd.f32 %v2403, %v2440
  %v2473 = vadd.f32 %v2404, %v2441
  %v2474 = vadd.f32 %v2405, %v2442
  %v2475 = vadd.f32 %v2406, %v2443
  %v2476 = vadd.f32 %v2407, %v2444
  %v2477 = vadd.f32 %v2408, %v2445
  %v2478 = vadd.f32 %v2409, %v2446
  %v2479 = vadd.f32 %v2410, %v2447
  %v2480 = vadd.f32 %v2411, %v2448
  %v2481 = vadd.f32 %v2412, %v2449
  %v2482 = vadd.f32 %v2413, %v2450
  %v2483 = vadd.f32 %v2414, %v2451
  %v2484 = vadd.f32 %v2415, %v2452
  %v2485 = vadd.f32 %v2416, %v2453
  %v2486 = vadd.f32 %v2417, %v2454
  %v2487 = vadd.f32 %v2418, %v2455
  %v2488 = vadd.f32 %v2419, %v2456
  %v2489 = vadd.f32 %v2420, %v2457
  %v2490 = vadd.f32 %v2421, %v2458
  %v2491 = vadd.f32 %v2422, %v2459
  %v2492 = vadd.f32 %v2423, %v2460
  %v2493 = vadd.f32 %v2424, %v2461
  %v2494 = vadd.f32 %v2425, %v2462
  %2495 = vrot.lane.b32.xlu0 %v1805, 118
  %v2496 = vpop.permute.xlu0 %2495
  %s2497 = vtos %v2496
  %v2498 = vstv %s2497
  %v2500 = vmul.f32 %v2498, %v1194
  %v2501 = vmul.f32 %v2498, %v1195
  %v2502 = vmul.f32 %v2498, %v1196
  %v2503 = vmul.f32 %v2498, %v1197
  %v2504 = vmul.f32 %v2498, %v1198
  %v2505 = vmul.f32 %v2498, %v1199
  %v2506 = vmul.f32 %v2498, %v1200
  %v2507 = vmul.f32 %v2498, %v1201
  %v2508 = vmul.f32 %v2498, %v1202
  %v2509 = vmul.f32 %v2498, %v1203
  %v2510 = vmul.f32 %v2498, %v1204
  %v2511 = vmul.f32 %v2498, %v1205
  %v2512 = vmul.f32 %v2498, %v1206
  %v2513 = vmul.f32 %v2498, %v1207
  %v2514 = vmul.f32 %v2498, %v1208
  %v2515 = vmul.f32 %v2498, %v1209
  %v2516 = vmul.f32 %v2498, %v1210
  %v2517 = vmul.f32 %v2498, %v1211
  %v2518 = vmul.f32 %v2498, %v1212
  %v2519 = vmul.f32 %v2498, %v1213
  %v2520 = vmul.f32 %v2498, %v1214
  %v2521 = vmul.f32 %v2498, %v1215
  %v2522 = vmul.f32 %v2498, %v1216
  %v2523 = vmul.f32 %v2498, %v1217
  %v2524 = vmul.f32 %v2498, %v1218
  %v2525 = vmul.f32 %v2498, %v1219
  %v2526 = vmul.f32 %v2498, %v1220
  %v2527 = vmul.f32 %v2498, %v1221
  %v2528 = vmul.f32 %v2498, %v1222
  %v2529 = vmul.f32 %v2498, %v1223
  %v2530 = vmul.f32 %v2498, %v1224
  %v2531 = vmul.f32 %v2498, %v1225
  %v2532 = vadd.f32 %v2463, %v2500
  %v2533 = vadd.f32 %v2464, %v2501
  %v2534 = vadd.f32 %v2465, %v2502
  %v2535 = vadd.f32 %v2466, %v2503
  %v2536 = vadd.f32 %v2467, %v2504
  %v2537 = vadd.f32 %v2468, %v2505
  %v2538 = vadd.f32 %v2469, %v2506
  %v2539 = vadd.f32 %v2470, %v2507
  %v2540 = vadd.f32 %v2471, %v2508
  %v2541 = vadd.f32 %v2472, %v2509
  %v2542 = vadd.f32 %v2473, %v2510
  %v2543 = vadd.f32 %v2474, %v2511
  %v2544 = vadd.f32 %v2475, %v2512
  %v2545 = vadd.f32 %v2476, %v2513
  %v2546 = vadd.f32 %v2477, %v2514
  %v2547 = vadd.f32 %v2478, %v2515
  %v2548 = vadd.f32 %v2479, %v2516
  %v2549 = vadd.f32 %v2480, %v2517
  %v2550 = vadd.f32 %v2481, %v2518
  %v2551 = vadd.f32 %v2482, %v2519
  %v2552 = vadd.f32 %v2483, %v2520
  %v2553 = vadd.f32 %v2484, %v2521
  %v2554 = vadd.f32 %v2485, %v2522
  %v2555 = vadd.f32 %v2486, %v2523
  %v2556 = vadd.f32 %v2487, %v2524
  %v2557 = vadd.f32 %v2488, %v2525
  %v2558 = vadd.f32 %v2489, %v2526
  %v2559 = vadd.f32 %v2490, %v2527
  %v2560 = vadd.f32 %v2491, %v2528
  %v2561 = vadd.f32 %v2492, %v2529
  %v2562 = vadd.f32 %v2493, %v2530
  %v2563 = vadd.f32 %v2494, %v2531
  %2564 = vrot.lane.b32.xlu0 %v1805, 117
  %v2565 = vpop.permute.xlu0 %2564
  %s2566 = vtos %v2565
  %v2567 = vstv %s2566
  %v2569 = vmul.f32 %v2567, %v1296
  %v2570 = vmul.f32 %v2567, %v1297
  %v2571 = vmul.f32 %v2567, %v1298
  %v2572 = vmul.f32 %v2567, %v1299
  %v2573 = vmul.f32 %v2567, %v1300
  %v2574 = vmul.f32 %v2567, %v1301
  %v2575 = vmul.f32 %v2567, %v1302
  %v2576 = vmul.f32 %v2567, %v1303
  %v2577 = vmul.f32 %v2567, %v1304
  %v2578 = vmul.f32 %v2567, %v1305
  %v2579 = vmul.f32 %v2567, %v1306
  %v2580 = vmul.f32 %v2567, %v1307
  %v2581 = vmul.f32 %v2567, %v1308
  %v2582 = vmul.f32 %v2567, %v1309
  %v2583 = vmul.f32 %v2567, %v1310
  %v2584 = vmul.f32 %v2567, %v1311
  %v2585 = vmul.f32 %v2567, %v1312
  %v2586 = vmul.f32 %v2567, %v1313
  %v2587 = vmul.f32 %v2567, %v1314
  %v2588 = vmul.f32 %v2567, %v1315
  %v2589 = vmul.f32 %v2567, %v1316
  %v2590 = vmul.f32 %v2567, %v1317
  %v2591 = vmul.f32 %v2567, %v1318
  %v2592 = vmul.f32 %v2567, %v1319
  %v2593 = vmul.f32 %v2567, %v1320
  %v2594 = vmul.f32 %v2567, %v1321
  %v2595 = vmul.f32 %v2567, %v1322
  %v2596 = vmul.f32 %v2567, %v1323
  %v2597 = vmul.f32 %v2567, %v1324
  %v2598 = vmul.f32 %v2567, %v1325
  %v2599 = vmul.f32 %v2567, %v1326
  %v2600 = vmul.f32 %v2567, %v1327
  %v2601 = vadd.f32 %v2532, %v2569
  %v2602 = vadd.f32 %v2533, %v2570
  %v2603 = vadd.f32 %v2534, %v2571
  %v2604 = vadd.f32 %v2535, %v2572
  %v2605 = vadd.f32 %v2536, %v2573
  %v2606 = vadd.f32 %v2537, %v2574
  %v2607 = vadd.f32 %v2538, %v2575
  %v2608 = vadd.f32 %v2539, %v2576
  %v2609 = vadd.f32 %v2540, %v2577
  %v2610 = vadd.f32 %v2541, %v2578
  %v2611 = vadd.f32 %v2542, %v2579
  %v2612 = vadd.f32 %v2543, %v2580
  %v2613 = vadd.f32 %v2544, %v2581
  %v2614 = vadd.f32 %v2545, %v2582
  %v2615 = vadd.f32 %v2546, %v2583
  %v2616 = vadd.f32 %v2547, %v2584
  %v2617 = vadd.f32 %v2548, %v2585
  %v2618 = vadd.f32 %v2549, %v2586
  %v2619 = vadd.f32 %v2550, %v2587
  %v2620 = vadd.f32 %v2551, %v2588
  %v2621 = vadd.f32 %v2552, %v2589
  %v2622 = vadd.f32 %v2553, %v2590
  %v2623 = vadd.f32 %v2554, %v2591
  %v2624 = vadd.f32 %v2555, %v2592
  %v2625 = vadd.f32 %v2556, %v2593
  %v2626 = vadd.f32 %v2557, %v2594
  %v2627 = vadd.f32 %v2558, %v2595
  %v2628 = vadd.f32 %v2559, %v2596
  %v2629 = vadd.f32 %v2560, %v2597
  %v2630 = vadd.f32 %v2561, %v2598
  %v2631 = vadd.f32 %v2562, %v2599
  %v2632 = vadd.f32 %v2563, %v2600
  %2633 = vrot.lane.b32.xlu0 %v1805, 116
  %v2634 = vpop.permute.xlu0 %2633
  %s2635 = vtos %v2634
  %v2636 = vstv %s2635
  %v2638 = vmul.f32 %v2636, %v1398
  %v2639 = vmul.f32 %v2636, %v1399
  %v2640 = vmul.f32 %v2636, %v1400
  %v2641 = vmul.f32 %v2636, %v1401
  %v2642 = vmul.f32 %v2636, %v1402
  %v2643 = vmul.f32 %v2636, %v1403
  %v2644 = vmul.f32 %v2636, %v1404
  %v2645 = vmul.f32 %v2636, %v1405
  %v2646 = vmul.f32 %v2636, %v1406
  %v2647 = vmul.f32 %v2636, %v1407
  %v2648 = vmul.f32 %v2636, %v1408
  %v2649 = vmul.f32 %v2636, %v1409
  %v2650 = vmul.f32 %v2636, %v1410
  %v2651 = vmul.f32 %v2636, %v1411
  %v2652 = vmul.f32 %v2636, %v1412
  %v2653 = vmul.f32 %v2636, %v1413
  %v2654 = vmul.f32 %v2636, %v1414
  %v2655 = vmul.f32 %v2636, %v1415
  %v2656 = vmul.f32 %v2636, %v1416
  %v2657 = vmul.f32 %v2636, %v1417
  %v2658 = vmul.f32 %v2636, %v1418
  %v2659 = vmul.f32 %v2636, %v1419
  %v2660 = vmul.f32 %v2636, %v1420
  %v2661 = vmul.f32 %v2636, %v1421
  %v2662 = vmul.f32 %v2636, %v1422
  %v2663 = vmul.f32 %v2636, %v1423
  %v2664 = vmul.f32 %v2636, %v1424
  %v2665 = vmul.f32 %v2636, %v1425
  %v2666 = vmul.f32 %v2636, %v1426
  %v2667 = vmul.f32 %v2636, %v1427
  %v2668 = vmul.f32 %v2636, %v1428
  %v2669 = vmul.f32 %v2636, %v1429
  %v2670 = vadd.f32 %v2601, %v2638
  %v2671 = vadd.f32 %v2602, %v2639
  %v2672 = vadd.f32 %v2603, %v2640
  %v2673 = vadd.f32 %v2604, %v2641
  %v2674 = vadd.f32 %v2605, %v2642
  %v2675 = vadd.f32 %v2606, %v2643
  %v2676 = vadd.f32 %v2607, %v2644
  %v2677 = vadd.f32 %v2608, %v2645
  %v2678 = vadd.f32 %v2609, %v2646
  %v2679 = vadd.f32 %v2610, %v2647
  %v2680 = vadd.f32 %v2611, %v2648
  %v2681 = vadd.f32 %v2612, %v2649
  %v2682 = vadd.f32 %v2613, %v2650
  %v2683 = vadd.f32 %v2614, %v2651
  %v2684 = vadd.f32 %v2615, %v2652
  %v2685 = vadd.f32 %v2616, %v2653
  %v2686 = vadd.f32 %v2617, %v2654
  %v2687 = vadd.f32 %v2618, %v2655
  %v2688 = vadd.f32 %v2619, %v2656
  %v2689 = vadd.f32 %v2620, %v2657
  %v2690 = vadd.f32 %v2621, %v2658
  %v2691 = vadd.f32 %v2622, %v2659
  %v2692 = vadd.f32 %v2623, %v2660
  %v2693 = vadd.f32 %v2624, %v2661
  %v2694 = vadd.f32 %v2625, %v2662
  %v2695 = vadd.f32 %v2626, %v2663
  %v2696 = vadd.f32 %v2627, %v2664
  %v2697 = vadd.f32 %v2628, %v2665
  %v2698 = vadd.f32 %v2629, %v2666
  %v2699 = vadd.f32 %v2630, %v2667
  %v2700 = vadd.f32 %v2631, %v2668
  %v2701 = vadd.f32 %v2632, %v2669
  %2702 = vrot.lane.b32.xlu0 %v1805, 115
  %v2703 = vpop.permute.xlu0 %2702
  %s2704 = vtos %v2703
  %v2705 = vstv %s2704
  %v2707 = vmul.f32 %v2705, %v1500
  %v2708 = vmul.f32 %v2705, %v1501
  %v2709 = vmul.f32 %v2705, %v1502
  %v2710 = vmul.f32 %v2705, %v1503
  %v2711 = vmul.f32 %v2705, %v1504
  %v2712 = vmul.f32 %v2705, %v1505
  %v2713 = vmul.f32 %v2705, %v1506
  %v2714 = vmul.f32 %v2705, %v1507
  %v2715 = vmul.f32 %v2705, %v1508
  %v2716 = vmul.f32 %v2705, %v1509
  %v2717 = vmul.f32 %v2705, %v1510
  %v2718 = vmul.f32 %v2705, %v1511
  %v2719 = vmul.f32 %v2705, %v1512
  %v2720 = vmul.f32 %v2705, %v1513
  %v2721 = vmul.f32 %v2705, %v1514
  %v2722 = vmul.f32 %v2705, %v1515
  %v2723 = vmul.f32 %v2705, %v1516
  %v2724 = vmul.f32 %v2705, %v1517
  %v2725 = vmul.f32 %v2705, %v1518
  %v2726 = vmul.f32 %v2705, %v1519
  %v2727 = vmul.f32 %v2705, %v1520
  %v2728 = vmul.f32 %v2705, %v1521
  %v2729 = vmul.f32 %v2705, %v1522
  %v2730 = vmul.f32 %v2705, %v1523
  %v2731 = vmul.f32 %v2705, %v1524
  %v2732 = vmul.f32 %v2705, %v1525
  %v2733 = vmul.f32 %v2705, %v1526
  %v2734 = vmul.f32 %v2705, %v1527
  %v2735 = vmul.f32 %v2705, %v1528
  %v2736 = vmul.f32 %v2705, %v1529
  %v2737 = vmul.f32 %v2705, %v1530
  %v2738 = vmul.f32 %v2705, %v1531
  %v2739 = vadd.f32 %v2670, %v2707
  %v2740 = vadd.f32 %v2671, %v2708
  %v2741 = vadd.f32 %v2672, %v2709
  %v2742 = vadd.f32 %v2673, %v2710
  %v2743 = vadd.f32 %v2674, %v2711
  %v2744 = vadd.f32 %v2675, %v2712
  %v2745 = vadd.f32 %v2676, %v2713
  %v2746 = vadd.f32 %v2677, %v2714
  %v2747 = vadd.f32 %v2678, %v2715
  %v2748 = vadd.f32 %v2679, %v2716
  %v2749 = vadd.f32 %v2680, %v2717
  %v2750 = vadd.f32 %v2681, %v2718
  %v2751 = vadd.f32 %v2682, %v2719
  %v2752 = vadd.f32 %v2683, %v2720
  %v2753 = vadd.f32 %v2684, %v2721
  %v2754 = vadd.f32 %v2685, %v2722
  %v2755 = vadd.f32 %v2686, %v2723
  %v2756 = vadd.f32 %v2687, %v2724
  %v2757 = vadd.f32 %v2688, %v2725
  %v2758 = vadd.f32 %v2689, %v2726
  %v2759 = vadd.f32 %v2690, %v2727
  %v2760 = vadd.f32 %v2691, %v2728
  %v2761 = vadd.f32 %v2692, %v2729
  %v2762 = vadd.f32 %v2693, %v2730
  %v2763 = vadd.f32 %v2694, %v2731
  %v2764 = vadd.f32 %v2695, %v2732
  %v2765 = vadd.f32 %v2696, %v2733
  %v2766 = vadd.f32 %v2697, %v2734
  %v2767 = vadd.f32 %v2698, %v2735
  %v2768 = vadd.f32 %v2699, %v2736
  %v2769 = vadd.f32 %v2700, %v2737
  %v2770 = vadd.f32 %v2701, %v2738
  %2771 = vrot.lane.b32.xlu0 %v1805, 114
  %v2772 = vpop.permute.xlu0 %2771
  %s2773 = vtos %v2772
  %v2774 = vstv %s2773
  %v2776 = vmul.f32 %v2774, %v1602
  %v2777 = vmul.f32 %v2774, %v1603
  %v2778 = vmul.f32 %v2774, %v1604
  %v2779 = vmul.f32 %v2774, %v1605
  %v2780 = vmul.f32 %v2774, %v1606
  %v2781 = vmul.f32 %v2774, %v1607
  %v2782 = vmul.f32 %v2774, %v1608
  %v2783 = vmul.f32 %v2774, %v1609
  %v2784 = vmul.f32 %v2774, %v1610
  %v2785 = vmul.f32 %v2774, %v1611
  %v2786 = vmul.f32 %v2774, %v1612
  %v2787 = vmul.f32 %v2774, %v1613
  %v2788 = vmul.f32 %v2774, %v1614
  %v2789 = vmul.f32 %v2774, %v1615
  %v2790 = vmul.f32 %v2774, %v1616
  %v2791 = vmul.f32 %v2774, %v1617
  %v2792 = vmul.f32 %v2774, %v1618
  %v2793 = vmul.f32 %v2774, %v1619
  %v2794 = vmul.f32 %v2774, %v1620
  %v2795 = vmul.f32 %v2774, %v1621
  %v2796 = vmul.f32 %v2774, %v1622
  %v2797 = vmul.f32 %v2774, %v1623
  %v2798 = vmul.f32 %v2774, %v1624
  %v2799 = vmul.f32 %v2774, %v1625
  %v2800 = vmul.f32 %v2774, %v1626
  %v2801 = vmul.f32 %v2774, %v1627
  %v2802 = vmul.f32 %v2774, %v1628
  %v2803 = vmul.f32 %v2774, %v1629
  %v2804 = vmul.f32 %v2774, %v1630
  %v2805 = vmul.f32 %v2774, %v1631
  %v2806 = vmul.f32 %v2774, %v1632
  %v2807 = vmul.f32 %v2774, %v1633
  %v2808 = vadd.f32 %v2739, %v2776
  %v2809 = vadd.f32 %v2740, %v2777
  %v2810 = vadd.f32 %v2741, %v2778
  %v2811 = vadd.f32 %v2742, %v2779
  %v2812 = vadd.f32 %v2743, %v2780
  %v2813 = vadd.f32 %v2744, %v2781
  %v2814 = vadd.f32 %v2745, %v2782
  %v2815 = vadd.f32 %v2746, %v2783
  %v2816 = vadd.f32 %v2747, %v2784
  %v2817 = vadd.f32 %v2748, %v2785
  %v2818 = vadd.f32 %v2749, %v2786
  %v2819 = vadd.f32 %v2750, %v2787
  %v2820 = vadd.f32 %v2751, %v2788
  %v2821 = vadd.f32 %v2752, %v2789
  %v2822 = vadd.f32 %v2753, %v2790
  %v2823 = vadd.f32 %v2754, %v2791
  %v2824 = vadd.f32 %v2755, %v2792
  %v2825 = vadd.f32 %v2756, %v2793
  %v2826 = vadd.f32 %v2757, %v2794
  %v2827 = vadd.f32 %v2758, %v2795
  %v2828 = vadd.f32 %v2759, %v2796
  %v2829 = vadd.f32 %v2760, %v2797
  %v2830 = vadd.f32 %v2761, %v2798
  %v2831 = vadd.f32 %v2762, %v2799
  %v2832 = vadd.f32 %v2763, %v2800
  %v2833 = vadd.f32 %v2764, %v2801
  %v2834 = vadd.f32 %v2765, %v2802
  %v2835 = vadd.f32 %v2766, %v2803
  %v2836 = vadd.f32 %v2767, %v2804
  %v2837 = vadd.f32 %v2768, %v2805
  %v2838 = vadd.f32 %v2769, %v2806
  %v2839 = vadd.f32 %v2770, %v2807
  %2840 = vrot.lane.b32.xlu0 %v1805, 113
  %v2841 = vpop.permute.xlu0 %2840
  %s2842 = vtos %v2841
  %v2843 = vstv %s2842
  %v2845 = vmul.f32 %v2843, %v1704
  %v2846 = vmul.f32 %v2843, %v1705
  %v2847 = vmul.f32 %v2843, %v1706
  %v2848 = vmul.f32 %v2843, %v1707
  %v2849 = vmul.f32 %v2843, %v1708
  %v2850 = vmul.f32 %v2843, %v1709
  %v2851 = vmul.f32 %v2843, %v1710
  %v2852 = vmul.f32 %v2843, %v1711
  %v2853 = vmul.f32 %v2843, %v1712
  %v2854 = vmul.f32 %v2843, %v1713
  %v2855 = vmul.f32 %v2843, %v1714
  %v2856 = vmul.f32 %v2843, %v1715
  %v2857 = vmul.f32 %v2843, %v1716
  %v2858 = vmul.f32 %v2843, %v1717
  %v2859 = vmul.f32 %v2843, %v1718
  %v2860 = vmul.f32 %v2843, %v1719
  %v2861 = vmul.f32 %v2843, %v1720
  %v2862 = vmul.f32 %v2843, %v1721
  %v2863 = vmul.f32 %v2843, %v1722
  %v2864 = vmul.f32 %v2843, %v1723
  %v2865 = vmul.f32 %v2843, %v1724
  %v2866 = vmul.f32 %v2843, %v1725
  %v2867 = vmul.f32 %v2843, %v1726
  %v2868 = vmul.f32 %v2843, %v1727
  %v2869 = vmul.f32 %v2843, %v1728
  %v2870 = vmul.f32 %v2843, %v1729
  %v2871 = vmul.f32 %v2843, %v1730
  %v2872 = vmul.f32 %v2843, %v1731
  %v2873 = vmul.f32 %v2843, %v1732
  %v2874 = vmul.f32 %v2843, %v1733
  %v2875 = vmul.f32 %v2843, %v1734
  %v2876 = vmul.f32 %v2843, %v1735
  %v2877 = vadd.f32 %v2808, %v2845
  %v2878 = vadd.f32 %v2809, %v2846
  %v2879 = vadd.f32 %v2810, %v2847
  %v2880 = vadd.f32 %v2811, %v2848
  %v2881 = vadd.f32 %v2812, %v2849
  %v2882 = vadd.f32 %v2813, %v2850
  %v2883 = vadd.f32 %v2814, %v2851
  %v2884 = vadd.f32 %v2815, %v2852
  %v2885 = vadd.f32 %v2816, %v2853
  %v2886 = vadd.f32 %v2817, %v2854
  %v2887 = vadd.f32 %v2818, %v2855
  %v2888 = vadd.f32 %v2819, %v2856
  %v2889 = vadd.f32 %v2820, %v2857
  %v2890 = vadd.f32 %v2821, %v2858
  %v2891 = vadd.f32 %v2822, %v2859
  %v2892 = vadd.f32 %v2823, %v2860
  %v2893 = vadd.f32 %v2824, %v2861
  %v2894 = vadd.f32 %v2825, %v2862
  %v2895 = vadd.f32 %v2826, %v2863
  %v2896 = vadd.f32 %v2827, %v2864
  %v2897 = vadd.f32 %v2828, %v2865
  %v2898 = vadd.f32 %v2829, %v2866
  %v2899 = vadd.f32 %v2830, %v2867
  %v2900 = vadd.f32 %v2831, %v2868
  %v2901 = vadd.f32 %v2832, %v2869
  %v2902 = vadd.f32 %v2833, %v2870
  %v2903 = vadd.f32 %v2834, %v2871
  %v2904 = vadd.f32 %v2835, %v2872
  %v2905 = vadd.f32 %v2836, %v2873
  %v2906 = vadd.f32 %v2837, %v2874
  %v2907 = vadd.f32 %v2838, %v2875
  %v2908 = vadd.f32 %v2839, %v2876
  %v2909 = vmul.f32 %v1773, %v92
  %v2910 = vmul.f32 %v2877, %v93
  %v2911 = vmul.f32 %v1774, %v92
  %v2912 = vmul.f32 %v2878, %v93
  %v2913 = vmul.f32 %v1775, %v92
  %v2914 = vmul.f32 %v2879, %v93
  %v2915 = vmul.f32 %v1776, %v92
  %v2916 = vmul.f32 %v2880, %v93
  %v2917 = vmul.f32 %v1777, %v92
  %v2918 = vmul.f32 %v2881, %v93
  %v2919 = vmul.f32 %v1778, %v92
  %v2920 = vmul.f32 %v2882, %v93
  %v2921 = vmul.f32 %v1779, %v92
  %v2922 = vmul.f32 %v2883, %v93
  %v2923 = vmul.f32 %v1780, %v92
  %v2924 = vmul.f32 %v2884, %v93
  %v2925 = vmul.f32 %v1781, %v92
  %v2926 = vmul.f32 %v2885, %v93
  %v2927 = vmul.f32 %v1782, %v92
  %v2928 = vmul.f32 %v2886, %v93
  %v2929 = vmul.f32 %v1783, %v92
  %v2930 = vmul.f32 %v2887, %v93
  %v2931 = vmul.f32 %v1784, %v92
  %v2932 = vmul.f32 %v2888, %v93
  %v2933 = vmul.f32 %v1785, %v92
  %v2934 = vmul.f32 %v2889, %v93
  %v2935 = vmul.f32 %v1786, %v92
  %v2936 = vmul.f32 %v2890, %v93
  %v2937 = vmul.f32 %v1787, %v92
  %v2938 = vmul.f32 %v2891, %v93
  %v2939 = vmul.f32 %v1788, %v92
  %v2940 = vmul.f32 %v2892, %v93
  %v2941 = vmul.f32 %v1789, %v92
  %v2942 = vmul.f32 %v2893, %v93
  %v2943 = vmul.f32 %v1790, %v92
  %v2944 = vmul.f32 %v2894, %v93
  %v2945 = vmul.f32 %v1791, %v92
  %v2946 = vmul.f32 %v2895, %v93
  %v2947 = vmul.f32 %v1792, %v92
  %v2948 = vmul.f32 %v2896, %v93
  %v2949 = vmul.f32 %v1793, %v92
  %v2950 = vmul.f32 %v2897, %v93
  %v2951 = vmul.f32 %v1794, %v92
  %v2952 = vmul.f32 %v2898, %v93
  %v2953 = vmul.f32 %v1795, %v92
  %v2954 = vmul.f32 %v2899, %v93
  %v2955 = vmul.f32 %v1796, %v92
  %v2956 = vmul.f32 %v2900, %v93
  %v2957 = vmul.f32 %v1797, %v92
  %v2958 = vmul.f32 %v2901, %v93
  %v2959 = vmul.f32 %v1798, %v92
  %v2960 = vmul.f32 %v2902, %v93
  %v2961 = vmul.f32 %v1799, %v92
  %v2962 = vmul.f32 %v2903, %v93
  %v2963 = vmul.f32 %v1800, %v92
  %v2964 = vmul.f32 %v2904, %v93
  %v2965 = vmul.f32 %v1801, %v92
  %v2966 = vmul.f32 %v2905, %v93
  %v2967 = vmul.f32 %v1802, %v92
  %v2968 = vmul.f32 %v2906, %v93
  %v2969 = vmul.f32 %v1803, %v92
  %v2970 = vmul.f32 %v2907, %v93
  %v2971 = vmul.f32 %v1804, %v92
  %v2972 = vmul.f32 %v2908, %v93
  %v2973 = vadd.f32 %v2909, %v2910
  %2974 = vadd.xlane.f32.xlu0 %v2973
  %v2975 = vpop.xlane.xlu0 %2974
  %v2976 = vadd.f32 %v2911, %v2912
  %2977 = vadd.xlane.f32.xlu0 %v2976
  %v2978 = vpop.xlane.xlu0 %2977
  %v2979 = vadd.f32 %v2913, %v2914
  %2980 = vadd.xlane.f32.xlu0 %v2979
  %v2981 = vpop.xlane.xlu0 %2980
  %v2982 = vadd.f32 %v2915, %v2916
  %2983 = vadd.xlane.f32.xlu0 %v2982
  %v2984 = vpop.xlane.xlu0 %2983
  %v2985 = vadd.f32 %v2917, %v2918
  %2986 = vadd.xlane.f32.xlu0 %v2985
  %v2987 = vpop.xlane.xlu0 %2986
  %v2988 = vadd.f32 %v2919, %v2920
  %2989 = vadd.xlane.f32.xlu0 %v2988
  %v2990 = vpop.xlane.xlu0 %2989
  %v2991 = vadd.f32 %v2921, %v2922
  %2992 = vadd.xlane.f32.xlu0 %v2991
  %v2993 = vpop.xlane.xlu0 %2992
  %v2994 = vadd.f32 %v2923, %v2924
  %2995 = vadd.xlane.f32.xlu0 %v2994
  %v2996 = vpop.xlane.xlu0 %2995
  %v2997 = vadd.f32 %v2925, %v2926
  %2998 = vadd.xlane.f32.xlu0 %v2997
  %v2999 = vpop.xlane.xlu0 %2998
  %v3000 = vadd.f32 %v2927, %v2928
  %3001 = vadd.xlane.f32.xlu0 %v3000
  %v3002 = vpop.xlane.xlu0 %3001
  %v3003 = vadd.f32 %v2929, %v2930
  %3004 = vadd.xlane.f32.xlu0 %v3003
  %v3005 = vpop.xlane.xlu0 %3004
  %v3006 = vadd.f32 %v2931, %v2932
  %3007 = vadd.xlane.f32.xlu0 %v3006
  %v3008 = vpop.xlane.xlu0 %3007
  %v3009 = vadd.f32 %v2933, %v2934
  %3010 = vadd.xlane.f32.xlu0 %v3009
  %v3011 = vpop.xlane.xlu0 %3010
  %v3012 = vadd.f32 %v2935, %v2936
  %3013 = vadd.xlane.f32.xlu0 %v3012
  %v3014 = vpop.xlane.xlu0 %3013
  %v3015 = vadd.f32 %v2937, %v2938
  %3016 = vadd.xlane.f32.xlu0 %v3015
  %v3017 = vpop.xlane.xlu0 %3016
  %v3018 = vadd.f32 %v2939, %v2940
  %3019 = vadd.xlane.f32.xlu0 %v3018
  %v3020 = vpop.xlane.xlu0 %3019
  %v3021 = vadd.f32 %v2941, %v2942
  %3022 = vadd.xlane.f32.xlu0 %v3021
  %v3023 = vpop.xlane.xlu0 %3022
  %v3024 = vadd.f32 %v2943, %v2944
  %3025 = vadd.xlane.f32.xlu0 %v3024
  %v3026 = vpop.xlane.xlu0 %3025
  %v3027 = vadd.f32 %v2945, %v2946
  %3028 = vadd.xlane.f32.xlu0 %v3027
  %v3029 = vpop.xlane.xlu0 %3028
  %v3030 = vadd.f32 %v2947, %v2948
  %3031 = vadd.xlane.f32.xlu0 %v3030
  %v3032 = vpop.xlane.xlu0 %3031
  %v3033 = vadd.f32 %v2949, %v2950
  %3034 = vadd.xlane.f32.xlu0 %v3033
  %v3035 = vpop.xlane.xlu0 %3034
  %v3036 = vadd.f32 %v2951, %v2952
  %3037 = vadd.xlane.f32.xlu0 %v3036
  %v3038 = vpop.xlane.xlu0 %3037
  %v3039 = vadd.f32 %v2953, %v2954
  %3040 = vadd.xlane.f32.xlu0 %v3039
  %v3041 = vpop.xlane.xlu0 %3040
  %v3042 = vadd.f32 %v2955, %v2956
  %3043 = vadd.xlane.f32.xlu0 %v3042
  %v3044 = vpop.xlane.xlu0 %3043
  %v3045 = vadd.f32 %v2957, %v2958
  %3046 = vadd.xlane.f32.xlu0 %v3045
  %v3047 = vpop.xlane.xlu0 %3046
  %v3048 = vadd.f32 %v2959, %v2960
  %3049 = vadd.xlane.f32.xlu0 %v3048
  %v3050 = vpop.xlane.xlu0 %3049
  %v3051 = vadd.f32 %v2961, %v2962
  %3052 = vadd.xlane.f32.xlu0 %v3051
  %v3053 = vpop.xlane.xlu0 %3052
  %v3054 = vadd.f32 %v2963, %v2964
  %3055 = vadd.xlane.f32.xlu0 %v3054
  %v3056 = vpop.xlane.xlu0 %3055
  %v3057 = vadd.f32 %v2965, %v2966
  %3058 = vadd.xlane.f32.xlu0 %v3057
  %v3059 = vpop.xlane.xlu0 %3058
  %v3060 = vadd.f32 %v2967, %v2968
  %3061 = vadd.xlane.f32.xlu0 %v3060
  %v3062 = vpop.xlane.xlu0 %3061
  %v3063 = vadd.f32 %v2969, %v2970
  %3064 = vadd.xlane.f32.xlu0 %v3063
  %v3065 = vpop.xlane.xlu0 %3064
  %v3066 = vadd.f32 %v2971, %v2972
  %3067 = vadd.xlane.f32.xlu0 %v3066
  %v3068 = vpop.xlane.xlu0 %3067
  %v3069 = vmul.f32 %v2909, %v1773
  %v3070 = vmul.f32 %v2910, %v2877
  %v3071 = vmul.f32 %v2911, %v1774
  %v3072 = vmul.f32 %v2912, %v2878
  %v3073 = vmul.f32 %v2913, %v1775
  %v3074 = vmul.f32 %v2914, %v2879
  %v3075 = vmul.f32 %v2915, %v1776
  %v3076 = vmul.f32 %v2916, %v2880
  %v3077 = vmul.f32 %v2917, %v1777
  %v3078 = vmul.f32 %v2918, %v2881
  %v3079 = vmul.f32 %v2919, %v1778
  %v3080 = vmul.f32 %v2920, %v2882
  %v3081 = vmul.f32 %v2921, %v1779
  %v3082 = vmul.f32 %v2922, %v2883
  %v3083 = vmul.f32 %v2923, %v1780
  %v3084 = vmul.f32 %v2924, %v2884
  %v3085 = vmul.f32 %v2925, %v1781
  %v3086 = vmul.f32 %v2926, %v2885
  %v3087 = vmul.f32 %v2927, %v1782
  %v3088 = vmul.f32 %v2928, %v2886
  %v3089 = vmul.f32 %v2929, %v1783
  %v3090 = vmul.f32 %v2930, %v2887
  %v3091 = vmul.f32 %v2931, %v1784
  %v3092 = vmul.f32 %v2932, %v2888
  %v3093 = vmul.f32 %v2933, %v1785
  %v3094 = vmul.f32 %v2934, %v2889
  %v3095 = vmul.f32 %v2935, %v1786
  %v3096 = vmul.f32 %v2936, %v2890
  %v3097 = vmul.f32 %v2937, %v1787
  %v3098 = vmul.f32 %v2938, %v2891
  %v3099 = vmul.f32 %v2939, %v1788
  %v3100 = vmul.f32 %v2940, %v2892
  %v3101 = vmul.f32 %v2941, %v1789
  %v3102 = vmul.f32 %v2942, %v2893
  %v3103 = vmul.f32 %v2943, %v1790
  %v3104 = vmul.f32 %v2944, %v2894
  %v3105 = vmul.f32 %v2945, %v1791
  %v3106 = vmul.f32 %v2946, %v2895
  %v3107 = vmul.f32 %v2947, %v1792
  %v3108 = vmul.f32 %v2948, %v2896
  %v3109 = vmul.f32 %v2949, %v1793
  %v3110 = vmul.f32 %v2950, %v2897
  %v3111 = vmul.f32 %v2951, %v1794
  %v3112 = vmul.f32 %v2952, %v2898
  %v3113 = vmul.f32 %v2953, %v1795
  %v3114 = vmul.f32 %v2954, %v2899
  %v3115 = vmul.f32 %v2955, %v1796
  %v3116 = vmul.f32 %v2956, %v2900
  %v3117 = vmul.f32 %v2957, %v1797
  %v3118 = vmul.f32 %v2958, %v2901
  %v3119 = vmul.f32 %v2959, %v1798
  %v3120 = vmul.f32 %v2960, %v2902
  %v3121 = vmul.f32 %v2961, %v1799
  %v3122 = vmul.f32 %v2962, %v2903
  %v3123 = vmul.f32 %v2963, %v1800
  %v3124 = vmul.f32 %v2964, %v2904
  %v3125 = vmul.f32 %v2965, %v1801
  %v3126 = vmul.f32 %v2966, %v2905
  %v3127 = vmul.f32 %v2967, %v1802
  %v3128 = vmul.f32 %v2968, %v2906
  %v3129 = vmul.f32 %v2969, %v1803
  %v3130 = vmul.f32 %v2970, %v2907
  %v3131 = vmul.f32 %v2971, %v1804
  %v3132 = vmul.f32 %v2972, %v2908
  %v3133 = vadd.f32 %v3069, %v3070
  %3134 = vadd.xlane.f32.xlu0 %v3133
  %v3135 = vpop.xlane.xlu0 %3134
  %v3136 = vadd.f32 %v3071, %v3072
  %3137 = vadd.xlane.f32.xlu0 %v3136
  %v3138 = vpop.xlane.xlu0 %3137
  %v3139 = vadd.f32 %v3073, %v3074
  %3140 = vadd.xlane.f32.xlu0 %v3139
  %v3141 = vpop.xlane.xlu0 %3140
  %v3142 = vadd.f32 %v3075, %v3076
  %3143 = vadd.xlane.f32.xlu0 %v3142
  %v3144 = vpop.xlane.xlu0 %3143
  %v3145 = vadd.f32 %v3077, %v3078
  %3146 = vadd.xlane.f32.xlu0 %v3145
  %v3147 = vpop.xlane.xlu0 %3146
  %v3148 = vadd.f32 %v3079, %v3080
  %3149 = vadd.xlane.f32.xlu0 %v3148
  %v3150 = vpop.xlane.xlu0 %3149
  %v3151 = vadd.f32 %v3081, %v3082
  %3152 = vadd.xlane.f32.xlu0 %v3151
  %v3153 = vpop.xlane.xlu0 %3152
  %v3154 = vadd.f32 %v3083, %v3084
  %3155 = vadd.xlane.f32.xlu0 %v3154
  %v3156 = vpop.xlane.xlu0 %3155
  %v3157 = vadd.f32 %v3085, %v3086
  %3158 = vadd.xlane.f32.xlu0 %v3157
  %v3159 = vpop.xlane.xlu0 %3158
  %v3160 = vadd.f32 %v3087, %v3088
  %3161 = vadd.xlane.f32.xlu0 %v3160
  %v3162 = vpop.xlane.xlu0 %3161
  %v3163 = vadd.f32 %v3089, %v3090
  %3164 = vadd.xlane.f32.xlu0 %v3163
  %v3165 = vpop.xlane.xlu0 %3164
  %v3166 = vadd.f32 %v3091, %v3092
  %3167 = vadd.xlane.f32.xlu0 %v3166
  %v3168 = vpop.xlane.xlu0 %3167
  %v3169 = vadd.f32 %v3093, %v3094
  %3170 = vadd.xlane.f32.xlu0 %v3169
  %v3171 = vpop.xlane.xlu0 %3170
  %v3172 = vadd.f32 %v3095, %v3096
  %3173 = vadd.xlane.f32.xlu0 %v3172
  %v3174 = vpop.xlane.xlu0 %3173
  %v3175 = vadd.f32 %v3097, %v3098
  %3176 = vadd.xlane.f32.xlu0 %v3175
  %v3177 = vpop.xlane.xlu0 %3176
  %v3178 = vadd.f32 %v3099, %v3100
  %3179 = vadd.xlane.f32.xlu0 %v3178
  %v3180 = vpop.xlane.xlu0 %3179
  %v3181 = vadd.f32 %v3101, %v3102
  %3182 = vadd.xlane.f32.xlu0 %v3181
  %v3183 = vpop.xlane.xlu0 %3182
  %v3184 = vadd.f32 %v3103, %v3104
  %3185 = vadd.xlane.f32.xlu0 %v3184
  %v3186 = vpop.xlane.xlu0 %3185
  %v3187 = vadd.f32 %v3105, %v3106
  %3188 = vadd.xlane.f32.xlu0 %v3187
  %v3189 = vpop.xlane.xlu0 %3188
  %v3190 = vadd.f32 %v3107, %v3108
  %3191 = vadd.xlane.f32.xlu0 %v3190
  %v3192 = vpop.xlane.xlu0 %3191
  %v3193 = vadd.f32 %v3109, %v3110
  %3194 = vadd.xlane.f32.xlu0 %v3193
  %v3195 = vpop.xlane.xlu0 %3194
  %v3196 = vadd.f32 %v3111, %v3112
  %3197 = vadd.xlane.f32.xlu0 %v3196
  %v3198 = vpop.xlane.xlu0 %3197
  %v3199 = vadd.f32 %v3113, %v3114
  %3200 = vadd.xlane.f32.xlu0 %v3199
  %v3201 = vpop.xlane.xlu0 %3200
  %v3202 = vadd.f32 %v3115, %v3116
  %3203 = vadd.xlane.f32.xlu0 %v3202
  %v3204 = vpop.xlane.xlu0 %3203
  %v3205 = vadd.f32 %v3117, %v3118
  %3206 = vadd.xlane.f32.xlu0 %v3205
  %v3207 = vpop.xlane.xlu0 %3206
  %v3208 = vadd.f32 %v3119, %v3120
  %3209 = vadd.xlane.f32.xlu0 %v3208
  %v3210 = vpop.xlane.xlu0 %3209
  %v3211 = vadd.f32 %v3121, %v3122
  %3212 = vadd.xlane.f32.xlu0 %v3211
  %v3213 = vpop.xlane.xlu0 %3212
  %v3214 = vadd.f32 %v3123, %v3124
  %3215 = vadd.xlane.f32.xlu0 %v3214
  %v3216 = vpop.xlane.xlu0 %3215
  %v3217 = vadd.f32 %v3125, %v3126
  %3218 = vadd.xlane.f32.xlu0 %v3217
  %v3219 = vpop.xlane.xlu0 %3218
  %v3220 = vadd.f32 %v3127, %v3128
  %3221 = vadd.xlane.f32.xlu0 %v3220
  %v3222 = vpop.xlane.xlu0 %3221
  %v3223 = vadd.f32 %v3129, %v3130
  %3224 = vadd.xlane.f32.xlu0 %v3223
  %v3225 = vpop.xlane.xlu0 %3224
  %v3226 = vadd.f32 %v3131, %v3132
  %3227 = vadd.xlane.f32.xlu0 %v3226
  %v3228 = vpop.xlane.xlu0 %3227
  %v3229 = vrcp.pop 250.0
  %v3230 = vmul.f32 %v2975, %v3229
  %v3231 = vmul.f32 %v2978, %v3229
  %v3232 = vmul.f32 %v2981, %v3229
  %v3233 = vmul.f32 %v2984, %v3229
  %v3234 = vmul.f32 %v2987, %v3229
  %v3235 = vmul.f32 %v2990, %v3229
  %v3236 = vmul.f32 %v2993, %v3229
  %v3237 = vmul.f32 %v2996, %v3229
  %v3238 = vmul.f32 %v2999, %v3229
  %v3239 = vmul.f32 %v3002, %v3229
  %v3240 = vmul.f32 %v3005, %v3229
  %v3241 = vmul.f32 %v3008, %v3229
  %v3242 = vmul.f32 %v3011, %v3229
  %v3243 = vmul.f32 %v3014, %v3229
  %v3244 = vmul.f32 %v3017, %v3229
  %v3245 = vmul.f32 %v3020, %v3229
  %v3246 = vmul.f32 %v3023, %v3229
  %v3247 = vmul.f32 %v3026, %v3229
  %v3248 = vmul.f32 %v3029, %v3229
  %v3249 = vmul.f32 %v3032, %v3229
  %v3250 = vmul.f32 %v3035, %v3229
  %v3251 = vmul.f32 %v3038, %v3229
  %v3252 = vmul.f32 %v3041, %v3229
  %v3253 = vmul.f32 %v3044, %v3229
  %v3254 = vmul.f32 %v3047, %v3229
  %v3255 = vmul.f32 %v3050, %v3229
  %v3256 = vmul.f32 %v3053, %v3229
  %v3257 = vmul.f32 %v3056, %v3229
  %v3258 = vmul.f32 %v3059, %v3229
  %v3259 = vmul.f32 %v3062, %v3229
  %v3260 = vmul.f32 %v3065, %v3229
  %v3261 = vmul.f32 %v3068, %v3229
  %v3262 = vmul.f32 %v3135, %v3229
  %v3263 = vmul.f32 %v3138, %v3229
  %v3264 = vmul.f32 %v3141, %v3229
  %v3265 = vmul.f32 %v3144, %v3229
  %v3266 = vmul.f32 %v3147, %v3229
  %v3267 = vmul.f32 %v3150, %v3229
  %v3268 = vmul.f32 %v3153, %v3229
  %v3269 = vmul.f32 %v3156, %v3229
  %v3270 = vmul.f32 %v3159, %v3229
  %v3271 = vmul.f32 %v3162, %v3229
  %v3272 = vmul.f32 %v3165, %v3229
  %v3273 = vmul.f32 %v3168, %v3229
  %v3274 = vmul.f32 %v3171, %v3229
  %v3275 = vmul.f32 %v3174, %v3229
  %v3276 = vmul.f32 %v3177, %v3229
  %v3277 = vmul.f32 %v3180, %v3229
  %v3278 = vmul.f32 %v3183, %v3229
  %v3279 = vmul.f32 %v3186, %v3229
  %v3280 = vmul.f32 %v3189, %v3229
  %v3281 = vmul.f32 %v3192, %v3229
  %v3282 = vmul.f32 %v3195, %v3229
  %v3283 = vmul.f32 %v3198, %v3229
  %v3284 = vmul.f32 %v3201, %v3229
  %v3285 = vmul.f32 %v3204, %v3229
  %v3286 = vmul.f32 %v3207, %v3229
  %v3287 = vmul.f32 %v3210, %v3229
  %v3288 = vmul.f32 %v3213, %v3229
  %v3289 = vmul.f32 %v3216, %v3229
  %v3290 = vmul.f32 %v3219, %v3229
  %v3291 = vmul.f32 %v3222, %v3229
  %v3292 = vmul.f32 %v3225, %v3229
  %v3293 = vmul.f32 %v3228, %v3229
  %v3294 = vmul.f32 %v3230, %v3230
  %v3295 = vmul.f32 %v3231, %v3231
  %v3296 = vmul.f32 %v3232, %v3232
  %v3297 = vmul.f32 %v3233, %v3233
  %v3298 = vmul.f32 %v3234, %v3234
  %v3299 = vmul.f32 %v3235, %v3235
  %v3300 = vmul.f32 %v3236, %v3236
  %v3301 = vmul.f32 %v3237, %v3237
  %v3302 = vmul.f32 %v3238, %v3238
  %v3303 = vmul.f32 %v3239, %v3239
  %v3304 = vmul.f32 %v3240, %v3240
  %v3305 = vmul.f32 %v3241, %v3241
  %v3306 = vmul.f32 %v3242, %v3242
  %v3307 = vmul.f32 %v3243, %v3243
  %v3308 = vmul.f32 %v3244, %v3244
  %v3309 = vmul.f32 %v3245, %v3245
  %v3310 = vmul.f32 %v3246, %v3246
  %v3311 = vmul.f32 %v3247, %v3247
  %v3312 = vmul.f32 %v3248, %v3248
  %v3313 = vmul.f32 %v3249, %v3249
  %v3314 = vmul.f32 %v3250, %v3250
  %v3315 = vmul.f32 %v3251, %v3251
  %v3316 = vmul.f32 %v3252, %v3252
  %v3317 = vmul.f32 %v3253, %v3253
  %v3318 = vmul.f32 %v3254, %v3254
  %v3319 = vmul.f32 %v3255, %v3255
  %v3320 = vmul.f32 %v3256, %v3256
  %v3321 = vmul.f32 %v3257, %v3257
  %v3322 = vmul.f32 %v3258, %v3258
  %v3323 = vmul.f32 %v3259, %v3259
  %v3324 = vmul.f32 %v3260, %v3260
  %v3325 = vmul.f32 %v3261, %v3261
  %v3326 = vsub.f32 %v3262, %v3294
  %v3327 = vsub.f32 %v3263, %v3295
  %v3328 = vsub.f32 %v3264, %v3296
  %v3329 = vsub.f32 %v3265, %v3297
  %v3330 = vsub.f32 %v3266, %v3298
  %v3331 = vsub.f32 %v3267, %v3299
  %v3332 = vsub.f32 %v3268, %v3300
  %v3333 = vsub.f32 %v3269, %v3301
  %v3334 = vsub.f32 %v3270, %v3302
  %v3335 = vsub.f32 %v3271, %v3303
  %v3336 = vsub.f32 %v3272, %v3304
  %v3337 = vsub.f32 %v3273, %v3305
  %v3338 = vsub.f32 %v3274, %v3306
  %v3339 = vsub.f32 %v3275, %v3307
  %v3340 = vsub.f32 %v3276, %v3308
  %v3341 = vsub.f32 %v3277, %v3309
  %v3342 = vsub.f32 %v3278, %v3310
  %v3343 = vsub.f32 %v3279, %v3311
  %v3344 = vsub.f32 %v3280, %v3312
  %v3345 = vsub.f32 %v3281, %v3313
  %v3346 = vsub.f32 %v3282, %v3314
  %v3347 = vsub.f32 %v3283, %v3315
  %v3348 = vsub.f32 %v3284, %v3316
  %v3349 = vsub.f32 %v3285, %v3317
  %v3350 = vsub.f32 %v3286, %v3318
  %v3351 = vsub.f32 %v3287, %v3319
  %v3352 = vsub.f32 %v3288, %v3320
  %v3353 = vsub.f32 %v3289, %v3321
  %v3354 = vsub.f32 %v3290, %v3322
  %v3355 = vsub.f32 %v3291, %v3323
  %v3356 = vsub.f32 %v3292, %v3324
  %v3357 = vsub.f32 %v3293, %v3325
  %v3358 = vadd.f32 %v3326, 1e-05
  %v3359 = vadd.f32 %v3327, 1e-05
  %v3360 = vadd.f32 %v3328, 1e-05
  %v3361 = vadd.f32 %v3329, 1e-05
  %v3362 = vadd.f32 %v3330, 1e-05
  %v3363 = vadd.f32 %v3331, 1e-05
  %v3364 = vadd.f32 %v3332, 1e-05
  %v3365 = vadd.f32 %v3333, 1e-05
  %v3366 = vadd.f32 %v3334, 1e-05
  %v3367 = vadd.f32 %v3335, 1e-05
  %v3368 = vadd.f32 %v3336, 1e-05
  %v3369 = vadd.f32 %v3337, 1e-05
  %v3370 = vadd.f32 %v3338, 1e-05
  %v3371 = vadd.f32 %v3339, 1e-05
  %v3372 = vadd.f32 %v3340, 1e-05
  %v3373 = vadd.f32 %v3341, 1e-05
  %v3374 = vadd.f32 %v3342, 1e-05
  %v3375 = vadd.f32 %v3343, 1e-05
  %v3376 = vadd.f32 %v3344, 1e-05
  %v3377 = vadd.f32 %v3345, 1e-05
  %v3378 = vadd.f32 %v3346, 1e-05
  %v3379 = vadd.f32 %v3347, 1e-05
  %v3380 = vadd.f32 %v3348, 1e-05
  %v3381 = vadd.f32 %v3349, 1e-05
  %v3382 = vadd.f32 %v3350, 1e-05
  %v3383 = vadd.f32 %v3351, 1e-05
  %v3384 = vadd.f32 %v3352, 1e-05
  %v3385 = vadd.f32 %v3353, 1e-05
  %v3386 = vadd.f32 %v3354, 1e-05
  %v3387 = vadd.f32 %v3355, 1e-05
  %v3388 = vadd.f32 %v3356, 1e-05
  %v3389 = vadd.f32 %v3357, 1e-05
  %v3390 = vrsqrt.pop %v3358
  %v3391 = vrsqrt.pop %v3359
  %v3392 = vrsqrt.pop %v3360
  %v3393 = vrsqrt.pop %v3361
  %v3394 = vrsqrt.pop %v3362
  %v3395 = vrsqrt.pop %v3363
  %v3396 = vrsqrt.pop %v3364
  %v3397 = vrsqrt.pop %v3365
  %v3398 = vrsqrt.pop %v3366
  %v3399 = vrsqrt.pop %v3367
  %v3400 = vrsqrt.pop %v3368
  %v3401 = vrsqrt.pop %v3369
  %v3402 = vrsqrt.pop %v3370
  %v3403 = vrsqrt.pop %v3371
  %v3404 = vrsqrt.pop %v3372
  %v3405 = vrsqrt.pop %v3373
  %v3406 = vrsqrt.pop %v3374
  %v3407 = vrsqrt.pop %v3375
  %v3408 = vrsqrt.pop %v3376
  %v3409 = vrsqrt.pop %v3377
  %v3410 = vrsqrt.pop %v3378
  %v3411 = vrsqrt.pop %v3379
  %v3412 = vrsqrt.pop %v3380
  %v3413 = vrsqrt.pop %v3381
  %v3414 = vrsqrt.pop %v3382
  %v3415 = vrsqrt.pop %v3383
  %v3416 = vrsqrt.pop %v3384
  %v3417 = vrsqrt.pop %v3385
  %v3418 = vrsqrt.pop %v3386
  %v3419 = vrsqrt.pop %v3387
  %v3420 = vrsqrt.pop %v3388
  %v3421 = vrsqrt.pop %v3389
  %v3422 = vld [vmem:[%s3] sm:$0xff]
  %v3423 = vld [vmem:[%s3 + $0x8] sm:$0xff]
  %v3424 = vld [vmem:[%s3 + $0x10] sm:$0xff]
  %v3425 = vld [vmem:[%s3 + $0x18] sm:$0xff]
  %v3426 = vld [vmem:[%s3 + $0x20] sm:$0xff]
  %v3427 = vld [vmem:[%s3 + $0x28] sm:$0xff]
  %v3428 = vld [vmem:[%s3 + $0x30] sm:$0xff]
  %v3429 = vld [vmem:[%s3 + $0x38] sm:$0xff]
  %v3430 = vld [vmem:[%s3 + $0x40] sm:$0xff]
  %v3431 = vld [vmem:[%s3 + $0x48] sm:$0xff]
  %v3432 = vld [vmem:[%s3 + $0x50] sm:$0xff]
  %v3433 = vld [vmem:[%s3 + $0x58] sm:$0xff]
  %v3434 = vld [vmem:[%s3 + $0x60] sm:$0xff]
  %v3435 = vld [vmem:[%s3 + $0x68] sm:$0xff]
  %v3436 = vld [vmem:[%s3 + $0x70] sm:$0xff]
  %v3437 = vld [vmem:[%s3 + $0x78] sm:$0xff]
  %v3438 = vld [vmem:[%s3 + $0x80] sm:$0xff]
  %v3439 = vld [vmem:[%s3 + $0x88] sm:$0xff]
  %v3440 = vld [vmem:[%s3 + $0x90] sm:$0xff]
  %v3441 = vld [vmem:[%s3 + $0x98] sm:$0xff]
  %v3442 = vld [vmem:[%s3 + $0xa0] sm:$0xff]
  %v3443 = vld [vmem:[%s3 + $0xa8] sm:$0xff]
  %v3444 = vld [vmem:[%s3 + $0xb0] sm:$0xff]
  %v3445 = vld [vmem:[%s3 + $0xb8] sm:$0xff]
  %v3446 = vld [vmem:[%s3 + $0xc0] sm:$0xff]
  %v3447 = vld [vmem:[%s3 + $0xc8] sm:$0xff]
  %v3448 = vld [vmem:[%s3 + $0xd0] sm:$0xff]
  %v3449 = vld [vmem:[%s3 + $0xd8] sm:$0xff]
  %v3450 = vld [vmem:[%s3 + $0xe0] sm:$0xff]
  %v3451 = vld [vmem:[%s3 + $0xe8] sm:$0xff]
  %v3452 = vld [vmem:[%s3 + $0xf0] sm:$0xff]
  %v3453 = vld [vmem:[%s3 + $0xf8] sm:$0xff]
  %v3454 = vmul.f32 %v3390, %v3422
  %v3455 = vmul.f32 %v3391, %v3423
  %v3456 = vmul.f32 %v3392, %v3424
  %v3457 = vmul.f32 %v3393, %v3425
  %v3458 = vmul.f32 %v3394, %v3426
  %v3459 = vmul.f32 %v3395, %v3427
  %v3460 = vmul.f32 %v3396, %v3428
  %v3461 = vmul.f32 %v3397, %v3429
  %v3462 = vmul.f32 %v3398, %v3430
  %v3463 = vmul.f32 %v3399, %v3431
  %v3464 = vmul.f32 %v3400, %v3432
  %v3465 = vmul.f32 %v3401, %v3433
  %v3466 = vmul.f32 %v3402, %v3434
  %v3467 = vmul.f32 %v3403, %v3435
  %v3468 = vmul.f32 %v3404, %v3436
  %v3469 = vmul.f32 %v3405, %v3437
  %v3470 = vmul.f32 %v3406, %v3438
  %v3471 = vmul.f32 %v3407, %v3439
  %v3472 = vmul.f32 %v3408, %v3440
  %v3473 = vmul.f32 %v3409, %v3441
  %v3474 = vmul.f32 %v3410, %v3442
  %v3475 = vmul.f32 %v3411, %v3443
  %v3476 = vmul.f32 %v3412, %v3444
  %v3477 = vmul.f32 %v3413, %v3445
  %v3478 = vmul.f32 %v3414, %v3446
  %v3479 = vmul.f32 %v3415, %v3447
  %v3480 = vmul.f32 %v3416, %v3448
  %v3481 = vmul.f32 %v3417, %v3449
  %v3482 = vmul.f32 %v3418, %v3450
  %v3483 = vmul.f32 %v3419, %v3451
  %v3484 = vmul.f32 %v3420, %v3452
  %v3485 = vmul.f32 %v3421, %v3453
  %v3486 = vld [vmem:[%s4] sm:$0xff]
  %v3487 = vld [vmem:[%s4 + $0x8] sm:$0xff]
  %v3488 = vld [vmem:[%s4 + $0x10] sm:$0xff]
  %v3489 = vld [vmem:[%s4 + $0x18] sm:$0xff]
  %v3490 = vld [vmem:[%s4 + $0x20] sm:$0xff]
  %v3491 = vld [vmem:[%s4 + $0x28] sm:$0xff]
  %v3492 = vld [vmem:[%s4 + $0x30] sm:$0xff]
  %v3493 = vld [vmem:[%s4 + $0x38] sm:$0xff]
  %v3494 = vld [vmem:[%s4 + $0x40] sm:$0xff]
  %v3495 = vld [vmem:[%s4 + $0x48] sm:$0xff]
  %v3496 = vld [vmem:[%s4 + $0x50] sm:$0xff]
  %v3497 = vld [vmem:[%s4 + $0x58] sm:$0xff]
  %v3498 = vld [vmem:[%s4 + $0x60] sm:$0xff]
  %v3499 = vld [vmem:[%s4 + $0x68] sm:$0xff]
  %v3500 = vld [vmem:[%s4 + $0x70] sm:$0xff]
  %v3501 = vld [vmem:[%s4 + $0x78] sm:$0xff]
  %v3502 = vld [vmem:[%s4 + $0x80] sm:$0xff]
  %v3503 = vld [vmem:[%s4 + $0x88] sm:$0xff]
  %v3504 = vld [vmem:[%s4 + $0x90] sm:$0xff]
  %v3505 = vld [vmem:[%s4 + $0x98] sm:$0xff]
  %v3506 = vld [vmem:[%s4 + $0xa0] sm:$0xff]
  %v3507 = vld [vmem:[%s4 + $0xa8] sm:$0xff]
  %v3508 = vld [vmem:[%s4 + $0xb0] sm:$0xff]
  %v3509 = vld [vmem:[%s4 + $0xb8] sm:$0xff]
  %v3510 = vld [vmem:[%s4 + $0xc0] sm:$0xff]
  %v3511 = vld [vmem:[%s4 + $0xc8] sm:$0xff]
  %v3512 = vld [vmem:[%s4 + $0xd0] sm:$0xff]
  %v3513 = vld [vmem:[%s4 + $0xd8] sm:$0xff]
  %v3514 = vld [vmem:[%s4 + $0xe0] sm:$0xff]
  %v3515 = vld [vmem:[%s4 + $0xe8] sm:$0xff]
  %v3516 = vld [vmem:[%s4 + $0xf0] sm:$0xff]
  %v3517 = vld [vmem:[%s4 + $0xf8] sm:$0xff]
  %v3518 = vmul.f32 %v3230, %v3454
  %v3519 = vmul.f32 %v3231, %v3455
  %v3520 = vmul.f32 %v3232, %v3456
  %v3521 = vmul.f32 %v3233, %v3457
  %v3522 = vmul.f32 %v3234, %v3458
  %v3523 = vmul.f32 %v3235, %v3459
  %v3524 = vmul.f32 %v3236, %v3460
  %v3525 = vmul.f32 %v3237, %v3461
  %v3526 = vmul.f32 %v3238, %v3462
  %v3527 = vmul.f32 %v3239, %v3463
  %v3528 = vmul.f32 %v3240, %v3464
  %v3529 = vmul.f32 %v3241, %v3465
  %v3530 = vmul.f32 %v3242, %v3466
  %v3531 = vmul.f32 %v3243, %v3467
  %v3532 = vmul.f32 %v3244, %v3468
  %v3533 = vmul.f32 %v3245, %v3469
  %v3534 = vmul.f32 %v3246, %v3470
  %v3535 = vmul.f32 %v3247, %v3471
  %v3536 = vmul.f32 %v3248, %v3472
  %v3537 = vmul.f32 %v3249, %v3473
  %v3538 = vmul.f32 %v3250, %v3474
  %v3539 = vmul.f32 %v3251, %v3475
  %v3540 = vmul.f32 %v3252, %v3476
  %v3541 = vmul.f32 %v3253, %v3477
  %v3542 = vmul.f32 %v3254, %v3478
  %v3543 = vmul.f32 %v3255, %v3479
  %v3544 = vmul.f32 %v3256, %v3480
  %v3545 = vmul.f32 %v3257, %v3481
  %v3546 = vmul.f32 %v3258, %v3482
  %v3547 = vmul.f32 %v3259, %v3483
  %v3548 = vmul.f32 %v3260, %v3484
  %v3549 = vmul.f32 %v3261, %v3485
  %v3550 = vsub.f32 %v3486, %v3518
  %v3551 = vsub.f32 %v3487, %v3519
  %v3552 = vsub.f32 %v3488, %v3520
  %v3553 = vsub.f32 %v3489, %v3521
  %v3554 = vsub.f32 %v3490, %v3522
  %v3555 = vsub.f32 %v3491, %v3523
  %v3556 = vsub.f32 %v3492, %v3524
  %v3557 = vsub.f32 %v3493, %v3525
  %v3558 = vsub.f32 %v3494, %v3526
  %v3559 = vsub.f32 %v3495, %v3527
  %v3560 = vsub.f32 %v3496, %v3528
  %v3561 = vsub.f32 %v3497, %v3529
  %v3562 = vsub.f32 %v3498, %v3530
  %v3563 = vsub.f32 %v3499, %v3531
  %v3564 = vsub.f32 %v3500, %v3532
  %v3565 = vsub.f32 %v3501, %v3533
  %v3566 = vsub.f32 %v3502, %v3534
  %v3567 = vsub.f32 %v3503, %v3535
  %v3568 = vsub.f32 %v3504, %v3536
  %v3569 = vsub.f32 %v3505, %v3537
  %v3570 = vsub.f32 %v3506, %v3538
  %v3571 = vsub.f32 %v3507, %v3539
  %v3572 = vsub.f32 %v3508, %v3540
  %v3573 = vsub.f32 %v3509, %v3541
  %v3574 = vsub.f32 %v3510, %v3542
  %v3575 = vsub.f32 %v3511, %v3543
  %v3576 = vsub.f32 %v3512, %v3544
  %v3577 = vsub.f32 %v3513, %v3545
  %v3578 = vsub.f32 %v3514, %v3546
  %v3579 = vsub.f32 %v3515, %v3547
  %v3580 = vsub.f32 %v3516, %v3548
  %v3581 = vsub.f32 %v3517, %v3549
  %3583 = vset.pattern.permute.xlu0 0
  %3584 = vperm.xlu0 %3583, %v3454
  %v3585 = vpop.permute.xlu0 %3584
  %3588 = vset.pattern.permute.xlu0 0
  %3589 = vperm.xlu0 %3588, %v3455
  %v3590 = vpop.permute.xlu0 %3589
  %3593 = vset.pattern.permute.xlu0 0
  %3594 = vperm.xlu0 %3593, %v3456
  %v3595 = vpop.permute.xlu0 %3594
  %3598 = vset.pattern.permute.xlu0 0
  %3599 = vperm.xlu0 %3598, %v3457
  %v3600 = vpop.permute.xlu0 %3599
  %3603 = vset.pattern.permute.xlu0 0
  %3604 = vperm.xlu0 %3603, %v3458
  %v3605 = vpop.permute.xlu0 %3604
  %3608 = vset.pattern.permute.xlu0 0
  %3609 = vperm.xlu0 %3608, %v3459
  %v3610 = vpop.permute.xlu0 %3609
  %3613 = vset.pattern.permute.xlu0 0
  %3614 = vperm.xlu0 %3613, %v3460
  %v3615 = vpop.permute.xlu0 %3614
  %3618 = vset.pattern.permute.xlu0 0
  %3619 = vperm.xlu0 %3618, %v3461
  %v3620 = vpop.permute.xlu0 %3619
  %3623 = vset.pattern.permute.xlu0 0
  %3624 = vperm.xlu0 %3623, %v3462
  %v3625 = vpop.permute.xlu0 %3624
  %3628 = vset.pattern.permute.xlu0 0
  %3629 = vperm.xlu0 %3628, %v3463
  %v3630 = vpop.permute.xlu0 %3629
  %3633 = vset.pattern.permute.xlu0 0
  %3634 = vperm.xlu0 %3633, %v3464
  %v3635 = vpop.permute.xlu0 %3634
  %3638 = vset.pattern.permute.xlu0 0
  %3639 = vperm.xlu0 %3638, %v3465
  %v3640 = vpop.permute.xlu0 %3639
  %3643 = vset.pattern.permute.xlu0 0
  %3644 = vperm.xlu0 %3643, %v3466
  %v3645 = vpop.permute.xlu0 %3644
  %3648 = vset.pattern.permute.xlu0 0
  %3649 = vperm.xlu0 %3648, %v3467
  %v3650 = vpop.permute.xlu0 %3649
  %3653 = vset.pattern.permute.xlu0 0
  %3654 = vperm.xlu0 %3653, %v3468
  %v3655 = vpop.permute.xlu0 %3654
  %3658 = vset.pattern.permute.xlu0 0
  %3659 = vperm.xlu0 %3658, %v3469
  %v3660 = vpop.permute.xlu0 %3659
  %3663 = vset.pattern.permute.xlu0 0
  %3664 = vperm.xlu0 %3663, %v3470
  %v3665 = vpop.permute.xlu0 %3664
  %3668 = vset.pattern.permute.xlu0 0
  %3669 = vperm.xlu0 %3668, %v3471
  %v3670 = vpop.permute.xlu0 %3669
  %3673 = vset.pattern.permute.xlu0 0
  %3674 = vperm.xlu0 %3673, %v3472
  %v3675 = vpop.permute.xlu0 %3674
  %3678 = vset.pattern.permute.xlu0 0
  %3679 = vperm.xlu0 %3678, %v3473
  %v3680 = vpop.permute.xlu0 %3679
  %3683 = vset.pattern.permute.xlu0 0
  %3684 = vperm.xlu0 %3683, %v3474
  %v3685 = vpop.permute.xlu0 %3684
  %3688 = vset.pattern.permute.xlu0 0
  %3689 = vperm.xlu0 %3688, %v3475
  %v3690 = vpop.permute.xlu0 %3689
  %3693 = vset.pattern.permute.xlu0 0
  %3694 = vperm.xlu0 %3693, %v3476
  %v3695 = vpop.permute.xlu0 %3694
  %3698 = vset.pattern.permute.xlu0 0
  %3699 = vperm.xlu0 %3698, %v3477
  %v3700 = vpop.permute.xlu0 %3699
  %3703 = vset.pattern.permute.xlu0 0
  %3704 = vperm.xlu0 %3703, %v3478
  %v3705 = vpop.permute.xlu0 %3704
  %3708 = vset.pattern.permute.xlu0 0
  %3709 = vperm.xlu0 %3708, %v3479
  %v3710 = vpop.permute.xlu0 %3709
  %3713 = vset.pattern.permute.xlu0 0
  %3714 = vperm.xlu0 %3713, %v3480
  %v3715 = vpop.permute.xlu0 %3714
  %3718 = vset.pattern.permute.xlu0 0
  %3719 = vperm.xlu0 %3718, %v3481
  %v3720 = vpop.permute.xlu0 %3719
  %3723 = vset.pattern.permute.xlu0 0
  %3724 = vperm.xlu0 %3723, %v3482
  %v3725 = vpop.permute.xlu0 %3724
  %3728 = vset.pattern.permute.xlu0 0
  %3729 = vperm.xlu0 %3728, %v3483
  %v3730 = vpop.permute.xlu0 %3729
  %3733 = vset.pattern.permute.xlu0 0
  %3734 = vperm.xlu0 %3733, %v3484
  %v3735 = vpop.permute.xlu0 %3734
  %3738 = vset.pattern.permute.xlu0 0
  %3739 = vperm.xlu0 %3738, %v3485
  %v3740 = vpop.permute.xlu0 %3739
  %v3742 = vmul.f32 %v1773, %v3585
  %v3743 = vmul.f32 %v2877, %v3585
  %v3744 = vmul.f32 %v1774, %v3590
  %v3745 = vmul.f32 %v2878, %v3590
  %v3746 = vmul.f32 %v1775, %v3595
  %v3747 = vmul.f32 %v2879, %v3595
  %v3748 = vmul.f32 %v1776, %v3600
  %v3749 = vmul.f32 %v2880, %v3600
  %v3750 = vmul.f32 %v1777, %v3605
  %v3751 = vmul.f32 %v2881, %v3605
  %v3752 = vmul.f32 %v1778, %v3610
  %v3753 = vmul.f32 %v2882, %v3610
  %v3754 = vmul.f32 %v1779, %v3615
  %v3755 = vmul.f32 %v2883, %v3615
  %v3756 = vmul.f32 %v1780, %v3620
  %v3757 = vmul.f32 %v2884, %v3620
  %v3758 = vmul.f32 %v1781, %v3625
  %v3759 = vmul.f32 %v2885, %v3625
  %v3760 = vmul.f32 %v1782, %v3630
  %v3761 = vmul.f32 %v2886, %v3630
  %v3762 = vmul.f32 %v1783, %v3635
  %v3763 = vmul.f32 %v2887, %v3635
  %v3764 = vmul.f32 %v1784, %v3640
  %v3765 = vmul.f32 %v2888, %v3640
  %v3766 = vmul.f32 %v1785, %v3645
  %v3767 = vmul.f32 %v2889, %v3645
  %v3768 = vmul.f32 %v1786, %v3650
  %v3769 = vmul.f32 %v2890, %v3650
  %v3770 = vmul.f32 %v1787, %v3655
  %v3771 = vmul.f32 %v2891, %v3655
  %v3772 = vmul.f32 %v1788, %v3660
  %v3773 = vmul.f32 %v2892, %v3660
  %v3774 = vmul.f32 %v1789, %v3665
  %v3775 = vmul.f32 %v2893, %v3665
  %v3776 = vmul.f32 %v1790, %v3670
  %v3777 = vmul.f32 %v2894, %v3670
  %v3778 = vmul.f32 %v1791, %v3675
  %v3779 = vmul.f32 %v2895, %v3675
  %v3780 = vmul.f32 %v1792, %v3680
  %v3781 = vmul.f32 %v2896, %v3680
  %v3782 = vmul.f32 %v1793, %v3685
  %v3783 = vmul.f32 %v2897, %v3685
  %v3784 = vmul.f32 %v1794, %v3690
  %v3785 = vmul.f32 %v2898, %v3690
  %v3786 = vmul.f32 %v1795, %v3695
  %v3787 = vmul.f32 %v2899, %v3695
  %v3788 = vmul.f32 %v1796, %v3700
  %v3789 = vmul.f32 %v2900, %v3700
  %v3790 = vmul.f32 %v1797, %v3705
  %v3791 = vmul.f32 %v2901, %v3705
  %v3792 = vmul.f32 %v1798, %v3710
  %v3793 = vmul.f32 %v2902, %v3710
  %v3794 = vmul.f32 %v1799, %v3715
  %v3795 = vmul.f32 %v2903, %v3715
  %v3796 = vmul.f32 %v1800, %v3720
  %v3797 = vmul.f32 %v2904, %v3720
  %v3798 = vmul.f32 %v1801, %v3725
  %v3799 = vmul.f32 %v2905, %v3725
  %v3800 = vmul.f32 %v1802, %v3730
  %v3801 = vmul.f32 %v2906, %v3730
  %v3802 = vmul.f32 %v1803, %v3735
  %v3803 = vmul.f32 %v2907, %v3735
  %v3804 = vmul.f32 %v1804, %v3740
  %v3805 = vmul.f32 %v2908, %v3740
  %3807 = vset.pattern.permute.xlu0 0
  %3808 = vperm.xlu0 %3807, %v3550
  %v3809 = vpop.permute.xlu0 %3808
  %3812 = vset.pattern.permute.xlu0 0
  %3813 = vperm.xlu0 %3812, %v3551
  %v3814 = vpop.permute.xlu0 %3813
  %3817 = vset.pattern.permute.xlu0 0
  %3818 = vperm.xlu0 %3817, %v3552
  %v3819 = vpop.permute.xlu0 %3818
  %3822 = vset.pattern.permute.xlu0 0
  %3823 = vperm.xlu0 %3822, %v3553
  %v3824 = vpop.permute.xlu0 %3823
  %3827 = vset.pattern.permute.xlu0 0
  %3828 = vperm.xlu0 %3827, %v3554
  %v3829 = vpop.permute.xlu0 %3828
  %3832 = vset.pattern.permute.xlu0 0
  %3833 = vperm.xlu0 %3832, %v3555
  %v3834 = vpop.permute.xlu0 %3833
  %3837 = vset.pattern.permute.xlu0 0
  %3838 = vperm.xlu0 %3837, %v3556
  %v3839 = vpop.permute.xlu0 %3838
  %3842 = vset.pattern.permute.xlu0 0
  %3843 = vperm.xlu0 %3842, %v3557
  %v3844 = vpop.permute.xlu0 %3843
  %3847 = vset.pattern.permute.xlu0 0
  %3848 = vperm.xlu0 %3847, %v3558
  %v3849 = vpop.permute.xlu0 %3848
  %3852 = vset.pattern.permute.xlu0 0
  %3853 = vperm.xlu0 %3852, %v3559
  %v3854 = vpop.permute.xlu0 %3853
  %3857 = vset.pattern.permute.xlu0 0
  %3858 = vperm.xlu0 %3857, %v3560
  %v3859 = vpop.permute.xlu0 %3858
  %3862 = vset.pattern.permute.xlu0 0
  %3863 = vperm.xlu0 %3862, %v3561
  %v3864 = vpop.permute.xlu0 %3863
  %3867 = vset.pattern.permute.xlu0 0
  %3868 = vperm.xlu0 %3867, %v3562
  %v3869 = vpop.permute.xlu0 %3868
  %3872 = vset.pattern.permute.xlu0 0
  %3873 = vperm.xlu0 %3872, %v3563
  %v3874 = vpop.permute.xlu0 %3873
  %3877 = vset.pattern.permute.xlu0 0
  %3878 = vperm.xlu0 %3877, %v3564
  %v3879 = vpop.permute.xlu0 %3878
  %3882 = vset.pattern.permute.xlu0 0
  %3883 = vperm.xlu0 %3882, %v3565
  %v3884 = vpop.permute.xlu0 %3883
  %3887 = vset.pattern.permute.xlu0 0
  %3888 = vperm.xlu0 %3887, %v3566
  %v3889 = vpop.permute.xlu0 %3888
  %3892 = vset.pattern.permute.xlu0 0
  %3893 = vperm.xlu0 %3892, %v3567
  %v3894 = vpop.permute.xlu0 %3893
  %3897 = vset.pattern.permute.xlu0 0
  %3898 = vperm.xlu0 %3897, %v3568
  %v3899 = vpop.permute.xlu0 %3898
  %3902 = vset.pattern.permute.xlu0 0
  %3903 = vperm.xlu0 %3902, %v3569
  %v3904 = vpop.permute.xlu0 %3903
  %3907 = vset.pattern.permute.xlu0 0
  %3908 = vperm.xlu0 %3907, %v3570
  %v3909 = vpop.permute.xlu0 %3908
  %3912 = vset.pattern.permute.xlu0 0
  %3913 = vperm.xlu0 %3912, %v3571
  %v3914 = vpop.permute.xlu0 %3913
  %3917 = vset.pattern.permute.xlu0 0
  %3918 = vperm.xlu0 %3917, %v3572
  %v3919 = vpop.permute.xlu0 %3918
  %3922 = vset.pattern.permute.xlu0 0
  %3923 = vperm.xlu0 %3922, %v3573
  %v3924 = vpop.permute.xlu0 %3923
  %3927 = vset.pattern.permute.xlu0 0
  %3928 = vperm.xlu0 %3927, %v3574
  %v3929 = vpop.permute.xlu0 %3928
  %3932 = vset.pattern.permute.xlu0 0
  %3933 = vperm.xlu0 %3932, %v3575
  %v3934 = vpop.permute.xlu0 %3933
  %3937 = vset.pattern.permute.xlu0 0
  %3938 = vperm.xlu0 %3937, %v3576
  %v3939 = vpop.permute.xlu0 %3938
  %3942 = vset.pattern.permute.xlu0 0
  %3943 = vperm.xlu0 %3942, %v3577
  %v3944 = vpop.permute.xlu0 %3943
  %3947 = vset.pattern.permute.xlu0 0
  %3948 = vperm.xlu0 %3947, %v3578
  %v3949 = vpop.permute.xlu0 %3948
  %3952 = vset.pattern.permute.xlu0 0
  %3953 = vperm.xlu0 %3952, %v3579
  %v3954 = vpop.permute.xlu0 %3953
  %3957 = vset.pattern.permute.xlu0 0
  %3958 = vperm.xlu0 %3957, %v3580
  %v3959 = vpop.permute.xlu0 %3958
  %3962 = vset.pattern.permute.xlu0 0
  %3963 = vperm.xlu0 %3962, %v3581
  %v3964 = vpop.permute.xlu0 %3963
  %v3966 = vadd.f32 %v3742, %v3809
  %v3967 = vadd.f32 %v3743, %v3809
  %v3968 = vadd.f32 %v3744, %v3814
  %v3969 = vadd.f32 %v3745, %v3814
  %v3970 = vadd.f32 %v3746, %v3819
  %v3971 = vadd.f32 %v3747, %v3819
  %v3972 = vadd.f32 %v3748, %v3824
  %v3973 = vadd.f32 %v3749, %v3824
  %v3974 = vadd.f32 %v3750, %v3829
  %v3975 = vadd.f32 %v3751, %v3829
  %v3976 = vadd.f32 %v3752, %v3834
  %v3977 = vadd.f32 %v3753, %v3834
  %v3978 = vadd.f32 %v3754, %v3839
  %v3979 = vadd.f32 %v3755, %v3839
  %v3980 = vadd.f32 %v3756, %v3844
  %v3981 = vadd.f32 %v3757, %v3844
  %v3982 = vadd.f32 %v3758, %v3849
  %v3983 = vadd.f32 %v3759, %v3849
  %v3984 = vadd.f32 %v3760, %v3854
  %v3985 = vadd.f32 %v3761, %v3854
  %v3986 = vadd.f32 %v3762, %v3859
  %v3987 = vadd.f32 %v3763, %v3859
  %v3988 = vadd.f32 %v3764, %v3864
  %v3989 = vadd.f32 %v3765, %v3864
  %v3990 = vadd.f32 %v3766, %v3869
  %v3991 = vadd.f32 %v3767, %v3869
  %v3992 = vadd.f32 %v3768, %v3874
  %v3993 = vadd.f32 %v3769, %v3874
  %v3994 = vadd.f32 %v3770, %v3879
  %v3995 = vadd.f32 %v3771, %v3879
  %v3996 = vadd.f32 %v3772, %v3884
  %v3997 = vadd.f32 %v3773, %v3884
  %v3998 = vadd.f32 %v3774, %v3889
  %v3999 = vadd.f32 %v3775, %v3889
  %v4000 = vadd.f32 %v3776, %v3894
  %v4001 = vadd.f32 %v3777, %v3894
  %v4002 = vadd.f32 %v3778, %v3899
  %v4003 = vadd.f32 %v3779, %v3899
  %v4004 = vadd.f32 %v3780, %v3904
  %v4005 = vadd.f32 %v3781, %v3904
  %v4006 = vadd.f32 %v3782, %v3909
  %v4007 = vadd.f32 %v3783, %v3909
  %v4008 = vadd.f32 %v3784, %v3914
  %v4009 = vadd.f32 %v3785, %v3914
  %v4010 = vadd.f32 %v3786, %v3919
  %v4011 = vadd.f32 %v3787, %v3919
  %v4012 = vadd.f32 %v3788, %v3924
  %v4013 = vadd.f32 %v3789, %v3924
  %v4014 = vadd.f32 %v3790, %v3929
  %v4015 = vadd.f32 %v3791, %v3929
  %v4016 = vadd.f32 %v3792, %v3934
  %v4017 = vadd.f32 %v3793, %v3934
  %v4018 = vadd.f32 %v3794, %v3939
  %v4019 = vadd.f32 %v3795, %v3939
  %v4020 = vadd.f32 %v3796, %v3944
  %v4021 = vadd.f32 %v3797, %v3944
  %v4022 = vadd.f32 %v3798, %v3949
  %v4023 = vadd.f32 %v3799, %v3949
  %v4024 = vadd.f32 %v3800, %v3954
  %v4025 = vadd.f32 %v3801, %v3954
  %v4026 = vadd.f32 %v3802, %v3959
  %v4027 = vadd.f32 %v3803, %v3959
  %v4028 = vadd.f32 %v3804, %v3964
  %v4029 = vadd.f32 %v3805, %v3964
  %v4030 = vld [vmem:[%s5] sm:$0xff]
  %v4031 = vld [vmem:[%s5 + $0x8] sm:$0xff]
  %v4032 = vld [vmem:[%s5 + $0x10] sm:$0xff]
  %v4033 = vld [vmem:[%s5 + $0x18] sm:$0xff]
  %v4034 = vld [vmem:[%s5 + $0x20] sm:$0xff]
  %v4035 = vld [vmem:[%s5 + $0x28] sm:$0xff]
  %v4036 = vld [vmem:[%s5 + $0x30] sm:$0xff]
  %v4037 = vld [vmem:[%s5 + $0x38] sm:$0xff]
  %v4038 = vld [vmem:[%s5 + $0x40] sm:$0xff]
  %v4039 = vld [vmem:[%s5 + $0x48] sm:$0xff]
  %v4040 = vld [vmem:[%s5 + $0x50] sm:$0xff]
  %v4041 = vld [vmem:[%s5 + $0x58] sm:$0xff]
  %v4042 = vld [vmem:[%s5 + $0x60] sm:$0xff]
  %v4043 = vld [vmem:[%s5 + $0x68] sm:$0xff]
  %v4044 = vld [vmem:[%s5 + $0x70] sm:$0xff]
  %v4045 = vld [vmem:[%s5 + $0x78] sm:$0xff]
  %v4046 = vld [vmem:[%s5 + $0x80] sm:$0xff]
  %v4047 = vld [vmem:[%s5 + $0x88] sm:$0xff]
  %v4048 = vld [vmem:[%s5 + $0x90] sm:$0xff]
  %v4049 = vld [vmem:[%s5 + $0x98] sm:$0xff]
  %v4050 = vld [vmem:[%s5 + $0xa0] sm:$0xff]
  %v4051 = vld [vmem:[%s5 + $0xa8] sm:$0xff]
  %v4052 = vld [vmem:[%s5 + $0xb0] sm:$0xff]
  %v4053 = vld [vmem:[%s5 + $0xb8] sm:$0xff]
  %v4054 = vld [vmem:[%s5 + $0xc0] sm:$0xff]
  %v4055 = vld [vmem:[%s5 + $0xc8] sm:$0xff]
  %v4056 = vld [vmem:[%s5 + $0xd0] sm:$0xff]
  %v4057 = vld [vmem:[%s5 + $0xd8] sm:$0xff]
  %v4058 = vld [vmem:[%s5 + $0xe0] sm:$0xff]
  %v4059 = vld [vmem:[%s5 + $0xe8] sm:$0xff]
  %v4060 = vld [vmem:[%s5 + $0xf0] sm:$0xff]
  %v4061 = vld [vmem:[%s5 + $0xf8] sm:$0xff]
  %v4062 = vld [vmem:[%s5 + $0x100] sm:$0xff]
  %v4063 = vld [vmem:[%s5 + $0x108] sm:$0xff]
  %v4064 = vld [vmem:[%s5 + $0x110] sm:$0xff]
  %v4065 = vld [vmem:[%s5 + $0x118] sm:$0xff]
  %v4066 = vld [vmem:[%s5 + $0x120] sm:$0xff]
  %v4067 = vld [vmem:[%s5 + $0x128] sm:$0xff]
  %v4068 = vld [vmem:[%s5 + $0x130] sm:$0xff]
  %v4069 = vld [vmem:[%s5 + $0x138] sm:$0xff]
  %v4070 = vld [vmem:[%s5 + $0x140] sm:$0xff]
  %v4071 = vld [vmem:[%s5 + $0x148] sm:$0xff]
  %v4072 = vld [vmem:[%s5 + $0x150] sm:$0xff]
  %v4073 = vld [vmem:[%s5 + $0x158] sm:$0xff]
  %v4074 = vld [vmem:[%s5 + $0x160] sm:$0xff]
  %v4075 = vld [vmem:[%s5 + $0x168] sm:$0xff]
  %v4076 = vld [vmem:[%s5 + $0x170] sm:$0xff]
  %v4077 = vld [vmem:[%s5 + $0x178] sm:$0xff]
  %v4078 = vld [vmem:[%s5 + $0x180] sm:$0xff]
  %v4079 = vld [vmem:[%s5 + $0x188] sm:$0xff]
  %v4080 = vld [vmem:[%s5 + $0x190] sm:$0xff]
  %v4081 = vld [vmem:[%s5 + $0x198] sm:$0xff]
  %v4082 = vld [vmem:[%s5 + $0x1a0] sm:$0xff]
  %v4083 = vld [vmem:[%s5 + $0x1a8] sm:$0xff]
  %v4084 = vld [vmem:[%s5 + $0x1b0] sm:$0xff]
  %v4085 = vld [vmem:[%s5 + $0x1b8] sm:$0xff]
  %v4086 = vld [vmem:[%s5 + $0x1c0] sm:$0xff]
  %v4087 = vld [vmem:[%s5 + $0x1c8] sm:$0xff]
  %v4088 = vld [vmem:[%s5 + $0x1d0] sm:$0xff]
  %v4089 = vld [vmem:[%s5 + $0x1d8] sm:$0xff]
  %v4090 = vld [vmem:[%s5 + $0x1e0] sm:$0xff]
  %v4091 = vld [vmem:[%s5 + $0x1e8] sm:$0xff]
  %v4092 = vld [vmem:[%s5 + $0x1f0] sm:$0xff]
  %v4093 = vld [vmem:[%s5 + $0x1f8] sm:$0xff]
  %v4094 = vld [vmem:[%s5 + $0x200] sm:$0xff]
  %v4095 = vld [vmem:[%s5 + $0x208] sm:$0xff]
  %v4096 = vld [vmem:[%s5 + $0x210] sm:$0xff]
  %v4097 = vld [vmem:[%s5 + $0x218] sm:$0xff]
  %v4098 = vld [vmem:[%s5 + $0x220] sm:$0xff]
  %v4099 = vld [vmem:[%s5 + $0x228] sm:$0xff]
  %v4100 = vld [vmem:[%s5 + $0x230] sm:$0xff]
  %v4101 = vld [vmem:[%s5 + $0x238] sm:$0xff]
  %v4102 = vld [vmem:[%s5 + $0x240] sm:$0xff]
  %v4103 = vld [vmem:[%s5 + $0x248] sm:$0xff]
  %v4104 = vld [vmem:[%s5 + $0x250] sm:$0xff]
  %v4105 = vld [vmem:[%s5 + $0x258] sm:$0xff]
  %v4106 = vld [vmem:[%s5 + $0x260] sm:$0xff]
  %v4107 = vld [vmem:[%s5 + $0x268] sm:$0xff]
  %v4108 = vld [vmem:[%s5 + $0x270] sm:$0xff]
  %v4109 = vld [vmem:[%s5 + $0x278] sm:$0xff]
  %v4110 = vld [vmem:[%s5 + $0x280] sm:$0xff]
  %v4111 = vld [vmem:[%s5 + $0x288] sm:$0xff]
  %v4112 = vld [vmem:[%s5 + $0x290] sm:$0xff]
  %v4113 = vld [vmem:[%s5 + $0x298] sm:$0xff]
  %v4114 = vld [vmem:[%s5 + $0x2a0] sm:$0xff]
  %v4115 = vld [vmem:[%s5 + $0x2a8] sm:$0xff]
  %v4116 = vld [vmem:[%s5 + $0x2b0] sm:$0xff]
  %v4117 = vld [vmem:[%s5 + $0x2b8] sm:$0xff]
  %v4118 = vld [vmem:[%s5 + $0x2c0] sm:$0xff]
  %v4119 = vld [vmem:[%s5 + $0x2c8] sm:$0xff]
  %v4120 = vld [vmem:[%s5 + $0x2d0] sm:$0xff]
  %v4121 = vld [vmem:[%s5 + $0x2d8] sm:$0xff]
  %v4122 = vld [vmem:[%s5 + $0x2e0] sm:$0xff]
  %v4123 = vld [vmem:[%s5 + $0x2e8] sm:$0xff]
  %v4124 = vld [vmem:[%s5 + $0x2f0] sm:$0xff]
  %v4125 = vld [vmem:[%s5 + $0x2f8] sm:$0xff]
  %v4126 = vld [vmem:[%s5 + $0x300] sm:$0xff]
  %v4127 = vld [vmem:[%s5 + $0x308] sm:$0xff]
  %v4128 = vld [vmem:[%s5 + $0x310] sm:$0xff]
  %v4129 = vld [vmem:[%s5 + $0x318] sm:$0xff]
  %v4130 = vld [vmem:[%s5 + $0x320] sm:$0xff]
  %v4131 = vld [vmem:[%s5 + $0x328] sm:$0xff]
  %v4132 = vld [vmem:[%s5 + $0x330] sm:$0xff]
  %v4133 = vld [vmem:[%s5 + $0x338] sm:$0xff]
  %v4134 = vld [vmem:[%s5 + $0x340] sm:$0xff]
  %v4135 = vld [vmem:[%s5 + $0x348] sm:$0xff]
  %v4136 = vld [vmem:[%s5 + $0x350] sm:$0xff]
  %v4137 = vld [vmem:[%s5 + $0x358] sm:$0xff]
  %v4138 = vld [vmem:[%s5 + $0x360] sm:$0xff]
  %v4139 = vld [vmem:[%s5 + $0x368] sm:$0xff]
  %v4140 = vld [vmem:[%s5 + $0x370] sm:$0xff]
  %v4141 = vld [vmem:[%s5 + $0x378] sm:$0xff]
  %v4142 = vld [vmem:[%s5 + $0x380] sm:$0xff]
  %v4143 = vld [vmem:[%s5 + $0x388] sm:$0xff]
  %v4144 = vld [vmem:[%s5 + $0x390] sm:$0xff]
  %v4145 = vld [vmem:[%s5 + $0x398] sm:$0xff]
  %v4146 = vld [vmem:[%s5 + $0x3a0] sm:$0xff]
  %v4147 = vld [vmem:[%s5 + $0x3a8] sm:$0xff]
  %v4148 = vld [vmem:[%s5 + $0x3b0] sm:$0xff]
  %v4149 = vld [vmem:[%s5 + $0x3b8] sm:$0xff]
  %v4150 = vld [vmem:[%s5 + $0x3c0] sm:$0xff]
  %v4151 = vld [vmem:[%s5 + $0x3c8] sm:$0xff]
  %v4152 = vld [vmem:[%s5 + $0x3d0] sm:$0xff]
  %v4153 = vld [vmem:[%s5 + $0x3d8] sm:$0xff]
  %v4154 = vld [vmem:[%s5 + $0x3e0] sm:$0xff]
  %v4155 = vld [vmem:[%s5 + $0x3e8] sm:$0xff]
  %v4156 = vld [vmem:[%s5 + $0x3f0] sm:$0xff]
  %v4157 = vld [vmem:[%s5 + $0x3f8] sm:$0xff]
  %v4158 = vld [vmem:[%s5 + $0x400] sm:$0xff]
  %v4159 = vld [vmem:[%s5 + $0x408] sm:$0xff]
  %v4160 = vld [vmem:[%s5 + $0x410] sm:$0xff]
  %v4161 = vld [vmem:[%s5 + $0x418] sm:$0xff]
  %v4162 = vld [vmem:[%s5 + $0x420] sm:$0xff]
  %v4163 = vld [vmem:[%s5 + $0x428] sm:$0xff]
  %v4164 = vld [vmem:[%s5 + $0x430] sm:$0xff]
  %v4165 = vld [vmem:[%s5 + $0x438] sm:$0xff]
  %v4166 = vld [vmem:[%s5 + $0x440] sm:$0xff]
  %v4167 = vld [vmem:[%s5 + $0x448] sm:$0xff]
  %v4168 = vld [vmem:[%s5 + $0x450] sm:$0xff]
  %v4169 = vld [vmem:[%s5 + $0x458] sm:$0xff]
  %v4170 = vld [vmem:[%s5 + $0x460] sm:$0xff]
  %v4171 = vld [vmem:[%s5 + $0x468] sm:$0xff]
  %v4172 = vld [vmem:[%s5 + $0x470] sm:$0xff]
  %v4173 = vld [vmem:[%s5 + $0x478] sm:$0xff]
  %v4174 = vld [vmem:[%s5 + $0x480] sm:$0xff]
  %v4175 = vld [vmem:[%s5 + $0x488] sm:$0xff]
  %v4176 = vld [vmem:[%s5 + $0x490] sm:$0xff]
  %v4177 = vld [vmem:[%s5 + $0x498] sm:$0xff]
  %v4178 = vld [vmem:[%s5 + $0x4a0] sm:$0xff]
  %v4179 = vld [vmem:[%s5 + $0x4a8] sm:$0xff]
  %v4180 = vld [vmem:[%s5 + $0x4b0] sm:$0xff]
  %v4181 = vld [vmem:[%s5 + $0x4b8] sm:$0xff]
  %v4182 = vld [vmem:[%s5 + $0x4c0] sm:$0xff]
  %v4183 = vld [vmem:[%s5 + $0x4c8] sm:$0xff]
  %v4184 = vld [vmem:[%s5 + $0x4d0] sm:$0xff]
  %v4185 = vld [vmem:[%s5 + $0x4d8] sm:$0xff]
  %v4186 = vld [vmem:[%s5 + $0x4e0] sm:$0xff]
  %v4187 = vld [vmem:[%s5 + $0x4e8] sm:$0xff]
  %v4188 = vld [vmem:[%s5 + $0x4f0] sm:$0xff]
  %v4189 = vld [vmem:[%s5 + $0x4f8] sm:$0xff]
  %4190 = vrot.lane.b32.xlu0 %v3966, 2
  %v4191 = vpop.permute.xlu0 %4190
  %4192 = vrot.lane.b32.xlu0 %v3968, 2
  %v4193 = vpop.permute.xlu0 %4192
  %4194 = vrot.lane.b32.xlu0 %v3970, 2
  %v4195 = vpop.permute.xlu0 %4194
  %4196 = vrot.lane.b32.xlu0 %v3972, 2
  %v4197 = vpop.permute.xlu0 %4196
  %4198 = vrot.lane.b32.xlu0 %v3974, 2
  %v4199 = vpop.permute.xlu0 %4198
  %4200 = vrot.lane.b32.xlu0 %v3976, 2
  %v4201 = vpop.permute.xlu0 %4200
  %4202 = vrot.lane.b32.xlu0 %v3978, 2
  %v4203 = vpop.permute.xlu0 %4202
  %4204 = vrot.lane.b32.xlu0 %v3980, 2
  %v4205 = vpop.permute.xlu0 %4204
  %4206 = vrot.lane.b32.xlu0 %v3982, 2
  %v4207 = vpop.permute.xlu0 %4206
  %4208 = vrot.lane.b32.xlu0 %v3984, 2
  %v4209 = vpop.permute.xlu0 %4208
  %4210 = vrot.lane.b32.xlu0 %v3986, 2
  %v4211 = vpop.permute.xlu0 %4210
  %4212 = vrot.lane.b32.xlu0 %v3988, 2
  %v4213 = vpop.permute.xlu0 %4212
  %4214 = vrot.lane.b32.xlu0 %v3990, 2
  %v4215 = vpop.permute.xlu0 %4214
  %4216 = vrot.lane.b32.xlu0 %v3992, 2
  %v4217 = vpop.permute.xlu0 %4216
  %4218 = vrot.lane.b32.xlu0 %v3994, 2
  %v4219 = vpop.permute.xlu0 %4218
  %4220 = vrot.lane.b32.xlu0 %v3996, 2
  %v4221 = vpop.permute.xlu0 %4220
  %4222 = vrot.lane.b32.xlu0 %v3998, 2
  %v4223 = vpop.permute.xlu0 %4222
  %4224 = vrot.lane.b32.xlu0 %v4000, 2
  %v4225 = vpop.permute.xlu0 %4224
  %4226 = vrot.lane.b32.xlu0 %v4002, 2
  %v4227 = vpop.permute.xlu0 %4226
  %4228 = vrot.lane.b32.xlu0 %v4004, 2
  %v4229 = vpop.permute.xlu0 %4228
  %4230 = vrot.lane.b32.xlu0 %v4006, 2
  %v4231 = vpop.permute.xlu0 %4230
  %4232 = vrot.lane.b32.xlu0 %v4008, 2
  %v4233 = vpop.permute.xlu0 %4232
  %4234 = vrot.lane.b32.xlu0 %v4010, 2
  %v4235 = vpop.permute.xlu0 %4234
  %4236 = vrot.lane.b32.xlu0 %v4012, 2
  %v4237 = vpop.permute.xlu0 %4236
  %4238 = vrot.lane.b32.xlu0 %v4014, 2
  %v4239 = vpop.permute.xlu0 %4238
  %4240 = vrot.lane.b32.xlu0 %v4016, 2
  %v4241 = vpop.permute.xlu0 %4240
  %4242 = vrot.lane.b32.xlu0 %v4018, 2
  %v4243 = vpop.permute.xlu0 %4242
  %4244 = vrot.lane.b32.xlu0 %v4020, 2
  %v4245 = vpop.permute.xlu0 %4244
  %4246 = vrot.lane.b32.xlu0 %v4022, 2
  %v4247 = vpop.permute.xlu0 %4246
  %4248 = vrot.lane.b32.xlu0 %v4024, 2
  %v4249 = vpop.permute.xlu0 %4248
  %4250 = vrot.lane.b32.xlu0 %v4026, 2
  %v4251 = vpop.permute.xlu0 %4250
  %4252 = vrot.lane.b32.xlu0 %v4028, 2
  %v4253 = vpop.permute.xlu0 %4252
  %4254 = vrot.lane.b32.xlu0 %v3967, 2
  %v4255 = vpop.permute.xlu0 %4254
  %4256 = vrot.lane.b32.xlu0 %v3969, 2
  %v4257 = vpop.permute.xlu0 %4256
  %4258 = vrot.lane.b32.xlu0 %v3971, 2
  %v4259 = vpop.permute.xlu0 %4258
  %4260 = vrot.lane.b32.xlu0 %v3973, 2
  %v4261 = vpop.permute.xlu0 %4260
  %4262 = vrot.lane.b32.xlu0 %v3975, 2
  %v4263 = vpop.permute.xlu0 %4262
  %4264 = vrot.lane.b32.xlu0 %v3977, 2
  %v4265 = vpop.permute.xlu0 %4264
  %4266 = vrot.lane.b32.xlu0 %v3979, 2
  %v4267 = vpop.permute.xlu0 %4266
  %4268 = vrot.lane.b32.xlu0 %v3981, 2
  %v4269 = vpop.permute.xlu0 %4268
  %4270 = vrot.lane.b32.xlu0 %v3983, 2
  %v4271 = vpop.permute.xlu0 %4270
  %4272 = vrot.lane.b32.xlu0 %v3985, 2
  %v4273 = vpop.permute.xlu0 %4272
  %4274 = vrot.lane.b32.xlu0 %v3987, 2
  %v4275 = vpop.permute.xlu0 %4274
  %4276 = vrot.lane.b32.xlu0 %v3989, 2
  %v4277 = vpop.permute.xlu0 %4276
  %4278 = vrot.lane.b32.xlu0 %v3991, 2
  %v4279 = vpop.permute.xlu0 %4278
  %4280 = vrot.lane.b32.xlu0 %v3993, 2
  %v4281 = vpop.permute.xlu0 %4280
  %4282 = vrot.lane.b32.xlu0 %v3995, 2
  %v4283 = vpop.permute.xlu0 %4282
  %4284 = vrot.lane.b32.xlu0 %v3997, 2
  %v4285 = vpop.permute.xlu0 %4284
  %4286 = vrot.lane.b32.xlu0 %v3999, 2
  %v4287 = vpop.permute.xlu0 %4286
  %4288 = vrot.lane.b32.xlu0 %v4001, 2
  %v4289 = vpop.permute.xlu0 %4288
  %4290 = vrot.lane.b32.xlu0 %v4003, 2
  %v4291 = vpop.permute.xlu0 %4290
  %4292 = vrot.lane.b32.xlu0 %v4005, 2
  %v4293 = vpop.permute.xlu0 %4292
  %4294 = vrot.lane.b32.xlu0 %v4007, 2
  %v4295 = vpop.permute.xlu0 %4294
  %4296 = vrot.lane.b32.xlu0 %v4009, 2
  %v4297 = vpop.permute.xlu0 %4296
  %4298 = vrot.lane.b32.xlu0 %v4011, 2
  %v4299 = vpop.permute.xlu0 %4298
  %4300 = vrot.lane.b32.xlu0 %v4013, 2
  %v4301 = vpop.permute.xlu0 %4300
  %4302 = vrot.lane.b32.xlu0 %v4015, 2
  %v4303 = vpop.permute.xlu0 %4302
  %4304 = vrot.lane.b32.xlu0 %v4017, 2
  %v4305 = vpop.permute.xlu0 %4304
  %4306 = vrot.lane.b32.xlu0 %v4019, 2
  %v4307 = vpop.permute.xlu0 %4306
  %4308 = vrot.lane.b32.xlu0 %v4021, 2
  %v4309 = vpop.permute.xlu0 %4308
  %4310 = vrot.lane.b32.xlu0 %v4023, 2
  %v4311 = vpop.permute.xlu0 %4310
  %4312 = vrot.lane.b32.xlu0 %v4025, 2
  %v4313 = vpop.permute.xlu0 %4312
  %4314 = vrot.lane.b32.xlu0 %v4027, 2
  %v4315 = vpop.permute.xlu0 %4314
  %4316 = vrot.lane.b32.xlu0 %v4029, 2
  %v4317 = vpop.permute.xlu0 %4316
  %vm4318 = vcmp.lt.s32.totalorder %v62, 2
  %v4319 = vsel %vm4318, %v4191, %v4255
  %v4320 = vsel %vm4318, %v4193, %v4257
  %v4321 = vsel %vm4318, %v4195, %v4259
  %v4322 = vsel %vm4318, %v4197, %v4261
  %v4323 = vsel %vm4318, %v4199, %v4263
  %v4324 = vsel %vm4318, %v4201, %v4265
  %v4325 = vsel %vm4318, %v4203, %v4267
  %v4326 = vsel %vm4318, %v4205, %v4269
  %v4327 = vsel %vm4318, %v4207, %v4271
  %v4328 = vsel %vm4318, %v4209, %v4273
  %v4329 = vsel %vm4318, %v4211, %v4275
  %v4330 = vsel %vm4318, %v4213, %v4277
  %v4331 = vsel %vm4318, %v4215, %v4279
  %v4332 = vsel %vm4318, %v4217, %v4281
  %v4333 = vsel %vm4318, %v4219, %v4283
  %v4334 = vsel %vm4318, %v4221, %v4285
  %v4335 = vsel %vm4318, %v4223, %v4287
  %v4336 = vsel %vm4318, %v4225, %v4289
  %v4337 = vsel %vm4318, %v4227, %v4291
  %v4338 = vsel %vm4318, %v4229, %v4293
  %v4339 = vsel %vm4318, %v4231, %v4295
  %v4340 = vsel %vm4318, %v4233, %v4297
  %v4341 = vsel %vm4318, %v4235, %v4299
  %v4342 = vsel %vm4318, %v4237, %v4301
  %v4343 = vsel %vm4318, %v4239, %v4303
  %v4344 = vsel %vm4318, %v4241, %v4305
  %v4345 = vsel %vm4318, %v4243, %v4307
  %v4346 = vsel %vm4318, %v4245, %v4309
  %v4347 = vsel %vm4318, %v4247, %v4311
  %v4348 = vsel %vm4318, %v4249, %v4313
  %v4349 = vsel %vm4318, %v4251, %v4315
  %v4350 = vsel %vm4318, %v4253, %v4317
  %v4351 = vsel %vm4318, %v4255, %v4191
  %v4352 = vsel %vm4318, %v4257, %v4193
  %v4353 = vsel %vm4318, %v4259, %v4195
  %v4354 = vsel %vm4318, %v4261, %v4197
  %v4355 = vsel %vm4318, %v4263, %v4199
  %v4356 = vsel %vm4318, %v4265, %v4201
  %v4357 = vsel %vm4318, %v4267, %v4203
  %v4358 = vsel %vm4318, %v4269, %v4205
  %v4359 = vsel %vm4318, %v4271, %v4207
  %v4360 = vsel %vm4318, %v4273, %v4209
  %v4361 = vsel %vm4318, %v4275, %v4211
  %v4362 = vsel %vm4318, %v4277, %v4213
  %v4363 = vsel %vm4318, %v4279, %v4215
  %v4364 = vsel %vm4318, %v4281, %v4217
  %v4365 = vsel %vm4318, %v4283, %v4219
  %v4366 = vsel %vm4318, %v4285, %v4221
  %v4367 = vsel %vm4318, %v4287, %v4223
  %v4368 = vsel %vm4318, %v4289, %v4225
  %v4369 = vsel %vm4318, %v4291, %v4227
  %v4370 = vsel %vm4318, %v4293, %v4229
  %v4371 = vsel %vm4318, %v4295, %v4231
  %v4372 = vsel %vm4318, %v4297, %v4233
  %v4373 = vsel %vm4318, %v4299, %v4235
  %v4374 = vsel %vm4318, %v4301, %v4237
  %v4375 = vsel %vm4318, %v4303, %v4239
  %v4376 = vsel %vm4318, %v4305, %v4241
  %v4377 = vsel %vm4318, %v4307, %v4243
  %v4378 = vsel %vm4318, %v4309, %v4245
  %v4379 = vsel %vm4318, %v4311, %v4247
  %v4380 = vsel %vm4318, %v4313, %v4249
  %v4381 = vsel %vm4318, %v4315, %v4251
  %v4382 = vsel %vm4318, %v4317, %v4253
  %v4383 = vmul.f32 %v4351, %v104
  %v4384 = vmul.f32 %v4319, %v105
  %v4385 = vmul.f32 %v4352, %v104
  %v4386 = vmul.f32 %v4320, %v105
  %v4387 = vmul.f32 %v4353, %v104
  %v4388 = vmul.f32 %v4321, %v105
  %v4389 = vmul.f32 %v4354, %v104
  %v4390 = vmul.f32 %v4322, %v105
  %v4391 = vmul.f32 %v4355, %v104
  %v4392 = vmul.f32 %v4323, %v105
  %v4393 = vmul.f32 %v4356, %v104
  %v4394 = vmul.f32 %v4324, %v105
  %v4395 = vmul.f32 %v4357, %v104
  %v4396 = vmul.f32 %v4325, %v105
  %v4397 = vmul.f32 %v4358, %v104
  %v4398 = vmul.f32 %v4326, %v105
  %v4399 = vmul.f32 %v4359, %v104
  %v4400 = vmul.f32 %v4327, %v105
  %v4401 = vmul.f32 %v4360, %v104
  %v4402 = vmul.f32 %v4328, %v105
  %v4403 = vmul.f32 %v4361, %v104
  %v4404 = vmul.f32 %v4329, %v105
  %v4405 = vmul.f32 %v4362, %v104
  %v4406 = vmul.f32 %v4330, %v105
  %v4407 = vmul.f32 %v4363, %v104
  %v4408 = vmul.f32 %v4331, %v105
  %v4409 = vmul.f32 %v4364, %v104
  %v4410 = vmul.f32 %v4332, %v105
  %v4411 = vmul.f32 %v4365, %v104
  %v4412 = vmul.f32 %v4333, %v105
  %v4413 = vmul.f32 %v4366, %v104
  %v4414 = vmul.f32 %v4334, %v105
  %v4415 = vmul.f32 %v4367, %v104
  %v4416 = vmul.f32 %v4335, %v105
  %v4417 = vmul.f32 %v4368, %v104
  %v4418 = vmul.f32 %v4336, %v105
  %v4419 = vmul.f32 %v4369, %v104
  %v4420 = vmul.f32 %v4337, %v105
  %v4421 = vmul.f32 %v4370, %v104
  %v4422 = vmul.f32 %v4338, %v105
  %v4423 = vmul.f32 %v4371, %v104
  %v4424 = vmul.f32 %v4339, %v105
  %v4425 = vmul.f32 %v4372, %v104
  %v4426 = vmul.f32 %v4340, %v105
  %v4427 = vmul.f32 %v4373, %v104
  %v4428 = vmul.f32 %v4341, %v105
  %v4429 = vmul.f32 %v4374, %v104
  %v4430 = vmul.f32 %v4342, %v105
  %v4431 = vmul.f32 %v4375, %v104
  %v4432 = vmul.f32 %v4343, %v105
  %v4433 = vmul.f32 %v4376, %v104
  %v4434 = vmul.f32 %v4344, %v105
  %v4435 = vmul.f32 %v4377, %v104
  %v4436 = vmul.f32 %v4345, %v105
  %v4437 = vmul.f32 %v4378, %v104
  %v4438 = vmul.f32 %v4346, %v105
  %v4439 = vmul.f32 %v4379, %v104
  %v4440 = vmul.f32 %v4347, %v105
  %v4441 = vmul.f32 %v4380, %v104
  %v4442 = vmul.f32 %v4348, %v105
  %v4443 = vmul.f32 %v4381, %v104
  %v4444 = vmul.f32 %v4349, %v105
  %v4445 = vmul.f32 %v4382, %v104
  %v4446 = vmul.f32 %v4350, %v105
  %v4447 = vpack.c.bf16 %v4385, %v4383
  %v4448 = vpack.c.bf16 %v4386, %v4384
  %v4449 = vpack.c.bf16 %v4389, %v4387
  %v4450 = vpack.c.bf16 %v4390, %v4388
  %v4451 = vpack.c.bf16 %v4393, %v4391
  %v4452 = vpack.c.bf16 %v4394, %v4392
  %v4453 = vpack.c.bf16 %v4397, %v4395
  %v4454 = vpack.c.bf16 %v4398, %v4396
  %v4455 = vpack.c.bf16 %v4401, %v4399
  %v4456 = vpack.c.bf16 %v4402, %v4400
  %v4457 = vpack.c.bf16 %v4405, %v4403
  %v4458 = vpack.c.bf16 %v4406, %v4404
  %v4459 = vpack.c.bf16 %v4409, %v4407
  %v4460 = vpack.c.bf16 %v4410, %v4408
  %v4461 = vpack.c.bf16 %v4413, %v4411
  %v4462 = vpack.c.bf16 %v4414, %v4412
  %v4463 = vpack.c.bf16 %v4417, %v4415
  %v4464 = vpack.c.bf16 %v4418, %v4416
  %v4465 = vpack.c.bf16 %v4421, %v4419
  %v4466 = vpack.c.bf16 %v4422, %v4420
  %v4467 = vpack.c.bf16 %v4425, %v4423
  %v4468 = vpack.c.bf16 %v4426, %v4424
  %v4469 = vpack.c.bf16 %v4429, %v4427
  %v4470 = vpack.c.bf16 %v4430, %v4428
  %v4471 = vpack.c.bf16 %v4433, %v4431
  %v4472 = vpack.c.bf16 %v4434, %v4432
  %v4473 = vpack.c.bf16 %v4437, %v4435
  %v4474 = vpack.c.bf16 %v4438, %v4436
  %v4475 = vpack.c.bf16 %v4441, %v4439
  %v4476 = vpack.c.bf16 %v4442, %v4440
  %v4477 = vpack.c.bf16 %v4445, %v4443
  %v4478 = vpack.c.bf16 %v4446, %v4444
  %4479 = vrot.lane.b32.xlu0 %v3966, 1
  %v4480 = vpop.permute.xlu0 %4479
  %4481 = vrot.lane.b32.xlu0 %v3968, 1
  %v4482 = vpop.permute.xlu0 %4481
  %4483 = vrot.lane.b32.xlu0 %v3970, 1
  %v4484 = vpop.permute.xlu0 %4483
  %4485 = vrot.lane.b32.xlu0 %v3972, 1
  %v4486 = vpop.permute.xlu0 %4485
  %4487 = vrot.lane.b32.xlu0 %v3974, 1
  %v4488 = vpop.permute.xlu0 %4487
  %4489 = vrot.lane.b32.xlu0 %v3976, 1
  %v4490 = vpop.permute.xlu0 %4489
  %4491 = vrot.lane.b32.xlu0 %v3978, 1
  %v4492 = vpop.permute.xlu0 %4491
  %4493 = vrot.lane.b32.xlu0 %v3980, 1
  %v4494 = vpop.permute.xlu0 %4493
  %4495 = vrot.lane.b32.xlu0 %v3982, 1
  %v4496 = vpop.permute.xlu0 %4495
  %4497 = vrot.lane.b32.xlu0 %v3984, 1
  %v4498 = vpop.permute.xlu0 %4497
  %4499 = vrot.lane.b32.xlu0 %v3986, 1
  %v4500 = vpop.permute.xlu0 %4499
  %4501 = vrot.lane.b32.xlu0 %v3988, 1
  %v4502 = vpop.permute.xlu0 %4501
  %4503 = vrot.lane.b32.xlu0 %v3990, 1
  %v4504 = vpop.permute.xlu0 %4503
  %4505 = vrot.lane.b32.xlu0 %v3992, 1
  %v4506 = vpop.permute.xlu0 %4505
  %4507 = vrot.lane.b32.xlu0 %v3994, 1
  %v4508 = vpop.permute.xlu0 %4507
  %4509 = vrot.lane.b32.xlu0 %v3996, 1
  %v4510 = vpop.permute.xlu0 %4509
  %4511 = vrot.lane.b32.xlu0 %v3998, 1
  %v4512 = vpop.permute.xlu0 %4511
  %4513 = vrot.lane.b32.xlu0 %v4000, 1
  %v4514 = vpop.permute.xlu0 %4513
  %4515 = vrot.lane.b32.xlu0 %v4002, 1
  %v4516 = vpop.permute.xlu0 %4515
  %4517 = vrot.lane.b32.xlu0 %v4004, 1
  %v4518 = vpop.permute.xlu0 %4517
  %4519 = vrot.lane.b32.xlu0 %v4006, 1
  %v4520 = vpop.permute.xlu0 %4519
  %4521 = vrot.lane.b32.xlu0 %v4008, 1
  %v4522 = vpop.permute.xlu0 %4521
  %4523 = vrot.lane.b32.xlu0 %v4010, 1
  %v4524 = vpop.permute.xlu0 %4523
  %4525 = vrot.lane.b32.xlu0 %v4012, 1
  %v4526 = vpop.permute.xlu0 %4525
  %4527 = vrot.lane.b32.xlu0 %v4014, 1
  %v4528 = vpop.permute.xlu0 %4527
  %4529 = vrot.lane.b32.xlu0 %v4016, 1
  %v4530 = vpop.permute.xlu0 %4529
  %4531 = vrot.lane.b32.xlu0 %v4018, 1
  %v4532 = vpop.permute.xlu0 %4531
  %4533 = vrot.lane.b32.xlu0 %v4020, 1
  %v4534 = vpop.permute.xlu0 %4533
  %4535 = vrot.lane.b32.xlu0 %v4022, 1
  %v4536 = vpop.permute.xlu0 %4535
  %4537 = vrot.lane.b32.xlu0 %v4024, 1
  %v4538 = vpop.permute.xlu0 %4537
  %4539 = vrot.lane.b32.xlu0 %v4026, 1
  %v4540 = vpop.permute.xlu0 %4539
  %4541 = vrot.lane.b32.xlu0 %v4028, 1
  %v4542 = vpop.permute.xlu0 %4541
  %4543 = vrot.lane.b32.xlu0 %v3967, 1
  %v4544 = vpop.permute.xlu0 %4543
  %4545 = vrot.lane.b32.xlu0 %v3969, 1
  %v4546 = vpop.permute.xlu0 %4545
  %4547 = vrot.lane.b32.xlu0 %v3971, 1
  %v4548 = vpop.permute.xlu0 %4547
  %4549 = vrot.lane.b32.xlu0 %v3973, 1
  %v4550 = vpop.permute.xlu0 %4549
  %4551 = vrot.lane.b32.xlu0 %v3975, 1
  %v4552 = vpop.permute.xlu0 %4551
  %4553 = vrot.lane.b32.xlu0 %v3977, 1
  %v4554 = vpop.permute.xlu0 %4553
  %4555 = vrot.lane.b32.xlu0 %v3979, 1
  %v4556 = vpop.permute.xlu0 %4555
  %4557 = vrot.lane.b32.xlu0 %v3981, 1
  %v4558 = vpop.permute.xlu0 %4557
  %4559 = vrot.lane.b32.xlu0 %v3983, 1
  %v4560 = vpop.permute.xlu0 %4559
  %4561 = vrot.lane.b32.xlu0 %v3985, 1
  %v4562 = vpop.permute.xlu0 %4561
  %4563 = vrot.lane.b32.xlu0 %v3987, 1
  %v4564 = vpop.permute.xlu0 %4563
  %4565 = vrot.lane.b32.xlu0 %v3989, 1
  %v4566 = vpop.permute.xlu0 %4565
  %4567 = vrot.lane.b32.xlu0 %v3991, 1
  %v4568 = vpop.permute.xlu0 %4567
  %4569 = vrot.lane.b32.xlu0 %v3993, 1
  %v4570 = vpop.permute.xlu0 %4569
  %4571 = vrot.lane.b32.xlu0 %v3995, 1
  %v4572 = vpop.permute.xlu0 %4571
  %4573 = vrot.lane.b32.xlu0 %v3997, 1
  %v4574 = vpop.permute.xlu0 %4573
  %4575 = vrot.lane.b32.xlu0 %v3999, 1
  %v4576 = vpop.permute.xlu0 %4575
  %4577 = vrot.lane.b32.xlu0 %v4001, 1
  %v4578 = vpop.permute.xlu0 %4577
  %4579 = vrot.lane.b32.xlu0 %v4003, 1
  %v4580 = vpop.permute.xlu0 %4579
  %4581 = vrot.lane.b32.xlu0 %v4005, 1
  %v4582 = vpop.permute.xlu0 %4581
  %4583 = vrot.lane.b32.xlu0 %v4007, 1
  %v4584 = vpop.permute.xlu0 %4583
  %4585 = vrot.lane.b32.xlu0 %v4009, 1
  %v4586 = vpop.permute.xlu0 %4585
  %4587 = vrot.lane.b32.xlu0 %v4011, 1
  %v4588 = vpop.permute.xlu0 %4587
  %4589 = vrot.lane.b32.xlu0 %v4013, 1
  %v4590 = vpop.permute.xlu0 %4589
  %4591 = vrot.lane.b32.xlu0 %v4015, 1
  %v4592 = vpop.permute.xlu0 %4591
  %4593 = vrot.lane.b32.xlu0 %v4017, 1
  %v4594 = vpop.permute.xlu0 %4593
  %4595 = vrot.lane.b32.xlu0 %v4019, 1
  %v4596 = vpop.permute.xlu0 %4595
  %4597 = vrot.lane.b32.xlu0 %v4021, 1
  %v4598 = vpop.permute.xlu0 %4597
  %4599 = vrot.lane.b32.xlu0 %v4023, 1
  %v4600 = vpop.permute.xlu0 %4599
  %4601 = vrot.lane.b32.xlu0 %v4025, 1
  %v4602 = vpop.permute.xlu0 %4601
  %4603 = vrot.lane.b32.xlu0 %v4027, 1
  %v4604 = vpop.permute.xlu0 %4603
  %4605 = vrot.lane.b32.xlu0 %v4029, 1
  %v4606 = vpop.permute.xlu0 %4605
  %vm4607 = vcmp.lt.s32.totalorder %v62, 1
  %v4608 = vsel %vm4607, %v4480, %v4544
  %v4609 = vsel %vm4607, %v4482, %v4546
  %v4610 = vsel %vm4607, %v4484, %v4548
  %v4611 = vsel %vm4607, %v4486, %v4550
  %v4612 = vsel %vm4607, %v4488, %v4552
  %v4613 = vsel %vm4607, %v4490, %v4554
  %v4614 = vsel %vm4607, %v4492, %v4556
  %v4615 = vsel %vm4607, %v4494, %v4558
  %v4616 = vsel %vm4607, %v4496, %v4560
  %v4617 = vsel %vm4607, %v4498, %v4562
  %v4618 = vsel %vm4607, %v4500, %v4564
  %v4619 = vsel %vm4607, %v4502, %v4566
  %v4620 = vsel %vm4607, %v4504, %v4568
  %v4621 = vsel %vm4607, %v4506, %v4570
  %v4622 = vsel %vm4607, %v4508, %v4572
  %v4623 = vsel %vm4607, %v4510, %v4574
  %v4624 = vsel %vm4607, %v4512, %v4576
  %v4625 = vsel %vm4607, %v4514, %v4578
  %v4626 = vsel %vm4607, %v4516, %v4580
  %v4627 = vsel %vm4607, %v4518, %v4582
  %v4628 = vsel %vm4607, %v4520, %v4584
  %v4629 = vsel %vm4607, %v4522, %v4586
  %v4630 = vsel %vm4607, %v4524, %v4588
  %v4631 = vsel %vm4607, %v4526, %v4590
  %v4632 = vsel %vm4607, %v4528, %v4592
  %v4633 = vsel %vm4607, %v4530, %v4594
  %v4634 = vsel %vm4607, %v4532, %v4596
  %v4635 = vsel %vm4607, %v4534, %v4598
  %v4636 = vsel %vm4607, %v4536, %v4600
  %v4637 = vsel %vm4607, %v4538, %v4602
  %v4638 = vsel %vm4607, %v4540, %v4604
  %v4639 = vsel %vm4607, %v4542, %v4606
  %v4640 = vsel %vm4607, %v4544, %v4480
  %v4641 = vsel %vm4607, %v4546, %v4482
  %v4642 = vsel %vm4607, %v4548, %v4484
  %v4643 = vsel %vm4607, %v4550, %v4486
  %v4644 = vsel %vm4607, %v4552, %v4488
  %v4645 = vsel %vm4607, %v4554, %v4490
  %v4646 = vsel %vm4607, %v4556, %v4492
  %v4647 = vsel %vm4607, %v4558, %v4494
  %v4648 = vsel %vm4607, %v4560, %v4496
  %v4649 = vsel %vm4607, %v4562, %v4498
  %v4650 = vsel %vm4607, %v4564, %v4500
  %v4651 = vsel %vm4607, %v4566, %v4502
  %v4652 = vsel %vm4607, %v4568, %v4504
  %v4653 = vsel %vm4607, %v4570, %v4506
  %v4654 = vsel %vm4607, %v4572, %v4508
  %v4655 = vsel %vm4607, %v4574, %v4510
  %v4656 = vsel %vm4607, %v4576, %v4512
  %v4657 = vsel %vm4607, %v4578, %v4514
  %v4658 = vsel %vm4607, %v4580, %v4516
  %v4659 = vsel %vm4607, %v4582, %v4518
  %v4660 = vsel %vm4607, %v4584, %v4520
  %v4661 = vsel %vm4607, %v4586, %v4522
  %v4662 = vsel %vm4607, %v4588, %v4524
  %v4663 = vsel %vm4607, %v4590, %v4526
  %v4664 = vsel %vm4607, %v4592, %v4528
  %v4665 = vsel %vm4607, %v4594, %v4530
  %v4666 = vsel %vm4607, %v4596, %v4532
  %v4667 = vsel %vm4607, %v4598, %v4534
  %v4668 = vsel %vm4607, %v4600, %v4536
  %v4669 = vsel %vm4607, %v4602, %v4538
  %v4670 = vsel %vm4607, %v4604, %v4540
  %v4671 = vsel %vm4607, %v4606, %v4542
  %v4672 = vmul.f32 %v4640, %v116
  %v4673 = vmul.f32 %v4608, %v117
  %v4674 = vmul.f32 %v4641, %v116
  %v4675 = vmul.f32 %v4609, %v117
  %v4676 = vmul.f32 %v4642, %v116
  %v4677 = vmul.f32 %v4610, %v117
  %v4678 = vmul.f32 %v4643, %v116
  %v4679 = vmul.f32 %v4611, %v117
  %v4680 = vmul.f32 %v4644, %v116
  %v4681 = vmul.f32 %v4612, %v117
  %v4682 = vmul.f32 %v4645, %v116
  %v4683 = vmul.f32 %v4613, %v117
  %v4684 = vmul.f32 %v4646, %v116
  %v4685 = vmul.f32 %v4614, %v117
  %v4686 = vmul.f32 %v4647, %v116
  %v4687 = vmul.f32 %v4615, %v117
  %v4688 = vmul.f32 %v4648, %v116
  %v4689 = vmul.f32 %v4616, %v117
  %v4690 = vmul.f32 %v4649, %v116
  %v4691 = vmul.f32 %v4617, %v117
  %v4692 = vmul.f32 %v4650, %v116
  %v4693 = vmul.f32 %v4618, %v117
  %v4694 = vmul.f32 %v4651, %v116
  %v4695 = vmul.f32 %v4619, %v117
  %v4696 = vmul.f32 %v4652, %v116
  %v4697 = vmul.f32 %v4620, %v117
  %v4698 = vmul.f32 %v4653, %v116
  %v4699 = vmul.f32 %v4621, %v117
  %v4700 = vmul.f32 %v4654, %v116
  %v4701 = vmul.f32 %v4622, %v117
  %v4702 = vmul.f32 %v4655, %v116
  %v4703 = vmul.f32 %v4623, %v117
  %v4704 = vmul.f32 %v4656, %v116
  %v4705 = vmul.f32 %v4624, %v117
  %v4706 = vmul.f32 %v4657, %v116
  %v4707 = vmul.f32 %v4625, %v117
  %v4708 = vmul.f32 %v4658, %v116
  %v4709 = vmul.f32 %v4626, %v117
  %v4710 = vmul.f32 %v4659, %v116
  %v4711 = vmul.f32 %v4627, %v117
  %v4712 = vmul.f32 %v4660, %v116
  %v4713 = vmul.f32 %v4628, %v117
  %v4714 = vmul.f32 %v4661, %v116
  %v4715 = vmul.f32 %v4629, %v117
  %v4716 = vmul.f32 %v4662, %v116
  %v4717 = vmul.f32 %v4630, %v117
  %v4718 = vmul.f32 %v4663, %v116
  %v4719 = vmul.f32 %v4631, %v117
  %v4720 = vmul.f32 %v4664, %v116
  %v4721 = vmul.f32 %v4632, %v117
  %v4722 = vmul.f32 %v4665, %v116
  %v4723 = vmul.f32 %v4633, %v117
  %v4724 = vmul.f32 %v4666, %v116
  %v4725 = vmul.f32 %v4634, %v117
  %v4726 = vmul.f32 %v4667, %v116
  %v4727 = vmul.f32 %v4635, %v117
  %v4728 = vmul.f32 %v4668, %v116
  %v4729 = vmul.f32 %v4636, %v117
  %v4730 = vmul.f32 %v4669, %v116
  %v4731 = vmul.f32 %v4637, %v117
  %v4732 = vmul.f32 %v4670, %v116
  %v4733 = vmul.f32 %v4638, %v117
  %v4734 = vmul.f32 %v4671, %v116
  %v4735 = vmul.f32 %v4639, %v117
  %v4736 = vpack.c.bf16 %v4674, %v4672
  %v4737 = vpack.c.bf16 %v4675, %v4673
  %v4738 = vpack.c.bf16 %v4678, %v4676
  %v4739 = vpack.c.bf16 %v4679, %v4677
  %v4740 = vpack.c.bf16 %v4682, %v4680
  %v4741 = vpack.c.bf16 %v4683, %v4681
  %v4742 = vpack.c.bf16 %v4686, %v4684
  %v4743 = vpack.c.bf16 %v4687, %v4685
  %v4744 = vpack.c.bf16 %v4690, %v4688
  %v4745 = vpack.c.bf16 %v4691, %v4689
  %v4746 = vpack.c.bf16 %v4694, %v4692
  %v4747 = vpack.c.bf16 %v4695, %v4693
  %v4748 = vpack.c.bf16 %v4698, %v4696
  %v4749 = vpack.c.bf16 %v4699, %v4697
  %v4750 = vpack.c.bf16 %v4702, %v4700
  %v4751 = vpack.c.bf16 %v4703, %v4701
  %v4752 = vpack.c.bf16 %v4706, %v4704
  %v4753 = vpack.c.bf16 %v4707, %v4705
  %v4754 = vpack.c.bf16 %v4710, %v4708
  %v4755 = vpack.c.bf16 %v4711, %v4709
  %v4756 = vpack.c.bf16 %v4714, %v4712
  %v4757 = vpack.c.bf16 %v4715, %v4713
  %v4758 = vpack.c.bf16 %v4718, %v4716
  %v4759 = vpack.c.bf16 %v4719, %v4717
  %v4760 = vpack.c.bf16 %v4722, %v4720
  %v4761 = vpack.c.bf16 %v4723, %v4721
  %v4762 = vpack.c.bf16 %v4726, %v4724
  %v4763 = vpack.c.bf16 %v4727, %v4725
  %v4764 = vpack.c.bf16 %v4730, %v4728
  %v4765 = vpack.c.bf16 %v4731, %v4729
  %v4766 = vpack.c.bf16 %v4734, %v4732
  %v4767 = vpack.c.bf16 %v4735, %v4733
  %v4768 = vpack.c.bf16 %v3968, %v3966
  %v4769 = vpack.c.bf16 %v3969, %v3967
  %v4770 = vpack.c.bf16 %v3972, %v3970
  %v4771 = vpack.c.bf16 %v3973, %v3971
  %v4772 = vpack.c.bf16 %v3976, %v3974
  %v4773 = vpack.c.bf16 %v3977, %v3975
  %v4774 = vpack.c.bf16 %v3980, %v3978
  %v4775 = vpack.c.bf16 %v3981, %v3979
  %v4776 = vpack.c.bf16 %v3984, %v3982
  %v4777 = vpack.c.bf16 %v3985, %v3983
  %v4778 = vpack.c.bf16 %v3988, %v3986
  %v4779 = vpack.c.bf16 %v3989, %v3987
  %v4780 = vpack.c.bf16 %v3992, %v3990
  %v4781 = vpack.c.bf16 %v3993, %v3991
  %v4782 = vpack.c.bf16 %v3996, %v3994
  %v4783 = vpack.c.bf16 %v3997, %v3995
  %v4784 = vpack.c.bf16 %v4000, %v3998
  %v4785 = vpack.c.bf16 %v4001, %v3999
  %v4786 = vpack.c.bf16 %v4004, %v4002
  %v4787 = vpack.c.bf16 %v4005, %v4003
  %v4788 = vpack.c.bf16 %v4008, %v4006
  %v4789 = vpack.c.bf16 %v4009, %v4007
  %v4790 = vpack.c.bf16 %v4012, %v4010
  %v4791 = vpack.c.bf16 %v4013, %v4011
  %v4792 = vpack.c.bf16 %v4016, %v4014
  %v4793 = vpack.c.bf16 %v4017, %v4015
  %v4794 = vpack.c.bf16 %v4020, %v4018
  %v4795 = vpack.c.bf16 %v4021, %v4019
  %v4796 = vpack.c.bf16 %v4024, %v4022
  %v4797 = vpack.c.bf16 %v4025, %v4023
  %v4798 = vpack.c.bf16 %v4028, %v4026
  %v4799 = vpack.c.bf16 %v4029, %v4027
  %4800 = vrot.lane.b32.xlu0 %v3966, 127
  %v4801 = vpop.permute.xlu0 %4800
  %4802 = vrot.lane.b32.xlu0 %v3968, 127
  %v4803 = vpop.permute.xlu0 %4802
  %4804 = vrot.lane.b32.xlu0 %v3970, 127
  %v4805 = vpop.permute.xlu0 %4804
  %4806 = vrot.lane.b32.xlu0 %v3972, 127
  %v4807 = vpop.permute.xlu0 %4806
  %4808 = vrot.lane.b32.xlu0 %v3974, 127
  %v4809 = vpop.permute.xlu0 %4808
  %4810 = vrot.lane.b32.xlu0 %v3976, 127
  %v4811 = vpop.permute.xlu0 %4810
  %4812 = vrot.lane.b32.xlu0 %v3978, 127
  %v4813 = vpop.permute.xlu0 %4812
  %4814 = vrot.lane.b32.xlu0 %v3980, 127
  %v4815 = vpop.permute.xlu0 %4814
  %4816 = vrot.lane.b32.xlu0 %v3982, 127
  %v4817 = vpop.permute.xlu0 %4816
  %4818 = vrot.lane.b32.xlu0 %v3984, 127
  %v4819 = vpop.permute.xlu0 %4818
  %4820 = vrot.lane.b32.xlu0 %v3986, 127
  %v4821 = vpop.permute.xlu0 %4820
  %4822 = vrot.lane.b32.xlu0 %v3988, 127
  %v4823 = vpop.permute.xlu0 %4822
  %4824 = vrot.lane.b32.xlu0 %v3990, 127
  %v4825 = vpop.permute.xlu0 %4824
  %4826 = vrot.lane.b32.xlu0 %v3992, 127
  %v4827 = vpop.permute.xlu0 %4826
  %4828 = vrot.lane.b32.xlu0 %v3994, 127
  %v4829 = vpop.permute.xlu0 %4828
  %4830 = vrot.lane.b32.xlu0 %v3996, 127
  %v4831 = vpop.permute.xlu0 %4830
  %4832 = vrot.lane.b32.xlu0 %v3998, 127
  %v4833 = vpop.permute.xlu0 %4832
  %4834 = vrot.lane.b32.xlu0 %v4000, 127
  %v4835 = vpop.permute.xlu0 %4834
  %4836 = vrot.lane.b32.xlu0 %v4002, 127
  %v4837 = vpop.permute.xlu0 %4836
  %4838 = vrot.lane.b32.xlu0 %v4004, 127
  %v4839 = vpop.permute.xlu0 %4838
  %4840 = vrot.lane.b32.xlu0 %v4006, 127
  %v4841 = vpop.permute.xlu0 %4840
  %4842 = vrot.lane.b32.xlu0 %v4008, 127
  %v4843 = vpop.permute.xlu0 %4842
  %4844 = vrot.lane.b32.xlu0 %v4010, 127
  %v4845 = vpop.permute.xlu0 %4844
  %4846 = vrot.lane.b32.xlu0 %v4012, 127
  %v4847 = vpop.permute.xlu0 %4846
  %4848 = vrot.lane.b32.xlu0 %v4014, 127
  %v4849 = vpop.permute.xlu0 %4848
  %4850 = vrot.lane.b32.xlu0 %v4016, 127
  %v4851 = vpop.permute.xlu0 %4850
  %4852 = vrot.lane.b32.xlu0 %v4018, 127
  %v4853 = vpop.permute.xlu0 %4852
  %4854 = vrot.lane.b32.xlu0 %v4020, 127
  %v4855 = vpop.permute.xlu0 %4854
  %4856 = vrot.lane.b32.xlu0 %v4022, 127
  %v4857 = vpop.permute.xlu0 %4856
  %4858 = vrot.lane.b32.xlu0 %v4024, 127
  %v4859 = vpop.permute.xlu0 %4858
  %4860 = vrot.lane.b32.xlu0 %v4026, 127
  %v4861 = vpop.permute.xlu0 %4860
  %4862 = vrot.lane.b32.xlu0 %v4028, 127
  %v4863 = vpop.permute.xlu0 %4862
  %4864 = vrot.lane.b32.xlu0 %v3967, 127
  %v4865 = vpop.permute.xlu0 %4864
  %4866 = vrot.lane.b32.xlu0 %v3969, 127
  %v4867 = vpop.permute.xlu0 %4866
  %4868 = vrot.lane.b32.xlu0 %v3971, 127
  %v4869 = vpop.permute.xlu0 %4868
  %4870 = vrot.lane.b32.xlu0 %v3973, 127
  %v4871 = vpop.permute.xlu0 %4870
  %4872 = vrot.lane.b32.xlu0 %v3975, 127
  %v4873 = vpop.permute.xlu0 %4872
  %4874 = vrot.lane.b32.xlu0 %v3977, 127
  %v4875 = vpop.permute.xlu0 %4874
  %4876 = vrot.lane.b32.xlu0 %v3979, 127
  %v4877 = vpop.permute.xlu0 %4876
  %4878 = vrot.lane.b32.xlu0 %v3981, 127
  %v4879 = vpop.permute.xlu0 %4878
  %4880 = vrot.lane.b32.xlu0 %v3983, 127
  %v4881 = vpop.permute.xlu0 %4880
  %4882 = vrot.lane.b32.xlu0 %v3985, 127
  %v4883 = vpop.permute.xlu0 %4882
  %4884 = vrot.lane.b32.xlu0 %v3987, 127
  %v4885 = vpop.permute.xlu0 %4884
  %4886 = vrot.lane.b32.xlu0 %v3989, 127
  %v4887 = vpop.permute.xlu0 %4886
  %4888 = vrot.lane.b32.xlu0 %v3991, 127
  %v4889 = vpop.permute.xlu0 %4888
  %4890 = vrot.lane.b32.xlu0 %v3993, 127
  %v4891 = vpop.permute.xlu0 %4890
  %4892 = vrot.lane.b32.xlu0 %v3995, 127
  %v4893 = vpop.permute.xlu0 %4892
  %4894 = vrot.lane.b32.xlu0 %v3997, 127
  %v4895 = vpop.permute.xlu0 %4894
  %4896 = vrot.lane.b32.xlu0 %v3999, 127
  %v4897 = vpop.permute.xlu0 %4896
  %4898 = vrot.lane.b32.xlu0 %v4001, 127
  %v4899 = vpop.permute.xlu0 %4898
  %4900 = vrot.lane.b32.xlu0 %v4003, 127
  %v4901 = vpop.permute.xlu0 %4900
  %4902 = vrot.lane.b32.xlu0 %v4005, 127
  %v4903 = vpop.permute.xlu0 %4902
  %4904 = vrot.lane.b32.xlu0 %v4007, 127
  %v4905 = vpop.permute.xlu0 %4904
  %4906 = vrot.lane.b32.xlu0 %v4009, 127
  %v4907 = vpop.permute.xlu0 %4906
  %4908 = vrot.lane.b32.xlu0 %v4011, 127
  %v4909 = vpop.permute.xlu0 %4908
  %4910 = vrot.lane.b32.xlu0 %v4013, 127
  %v4911 = vpop.permute.xlu0 %4910
  %4912 = vrot.lane.b32.xlu0 %v4015, 127
  %v4913 = vpop.permute.xlu0 %4912
  %4914 = vrot.lane.b32.xlu0 %v4017, 127
  %v4915 = vpop.permute.xlu0 %4914
  %4916 = vrot.lane.b32.xlu0 %v4019, 127
  %v4917 = vpop.permute.xlu0 %4916
  %4918 = vrot.lane.b32.xlu0 %v4021, 127
  %v4919 = vpop.permute.xlu0 %4918
  %4920 = vrot.lane.b32.xlu0 %v4023, 127
  %v4921 = vpop.permute.xlu0 %4920
  %4922 = vrot.lane.b32.xlu0 %v4025, 127
  %v4923 = vpop.permute.xlu0 %4922
  %4924 = vrot.lane.b32.xlu0 %v4027, 127
  %v4925 = vpop.permute.xlu0 %4924
  %4926 = vrot.lane.b32.xlu0 %v4029, 127
  %v4927 = vpop.permute.xlu0 %4926
  %vm4928 = vcmp.lt.s32.totalorder %v62, 127
  %v4929 = vsel %vm4928, %v4801, %v4865
  %v4930 = vsel %vm4928, %v4803, %v4867
  %v4931 = vsel %vm4928, %v4805, %v4869
  %v4932 = vsel %vm4928, %v4807, %v4871
  %v4933 = vsel %vm4928, %v4809, %v4873
  %v4934 = vsel %vm4928, %v4811, %v4875
  %v4935 = vsel %vm4928, %v4813, %v4877
  %v4936 = vsel %vm4928, %v4815, %v4879
  %v4937 = vsel %vm4928, %v4817, %v4881
  %v4938 = vsel %vm4928, %v4819, %v4883
  %v4939 = vsel %vm4928, %v4821, %v4885
  %v4940 = vsel %vm4928, %v4823, %v4887
  %v4941 = vsel %vm4928, %v4825, %v4889
  %v4942 = vsel %vm4928, %v4827, %v4891
  %v4943 = vsel %vm4928, %v4829, %v4893
  %v4944 = vsel %vm4928, %v4831, %v4895
  %v4945 = vsel %vm4928, %v4833, %v4897
  %v4946 = vsel %vm4928, %v4835, %v4899
  %v4947 = vsel %vm4928, %v4837, %v4901
  %v4948 = vsel %vm4928, %v4839, %v4903
  %v4949 = vsel %vm4928, %v4841, %v4905
  %v4950 = vsel %vm4928, %v4843, %v4907
  %v4951 = vsel %vm4928, %v4845, %v4909
  %v4952 = vsel %vm4928, %v4847, %v4911
  %v4953 = vsel %vm4928, %v4849, %v4913
  %v4954 = vsel %vm4928, %v4851, %v4915
  %v4955 = vsel %vm4928, %v4853, %v4917
  %v4956 = vsel %vm4928, %v4855, %v4919
  %v4957 = vsel %vm4928, %v4857, %v4921
  %v4958 = vsel %vm4928, %v4859, %v4923
  %v4959 = vsel %vm4928, %v4861, %v4925
  %v4960 = vsel %vm4928, %v4863, %v4927
  %v4961 = vsel %vm4928, %v4865, %v4801
  %v4962 = vsel %vm4928, %v4867, %v4803
  %v4963 = vsel %vm4928, %v4869, %v4805
  %v4964 = vsel %vm4928, %v4871, %v4807
  %v4965 = vsel %vm4928, %v4873, %v4809
  %v4966 = vsel %vm4928, %v4875, %v4811
  %v4967 = vsel %vm4928, %v4877, %v4813
  %v4968 = vsel %vm4928, %v4879, %v4815
  %v4969 = vsel %vm4928, %v4881, %v4817
  %v4970 = vsel %vm4928, %v4883, %v4819
  %v4971 = vsel %vm4928, %v4885, %v4821
  %v4972 = vsel %vm4928, %v4887, %v4823
  %v4973 = vsel %vm4928, %v4889, %v4825
  %v4974 = vsel %vm4928, %v4891, %v4827
  %v4975 = vsel %vm4928, %v4893, %v4829
  %v4976 = vsel %vm4928, %v4895, %v4831
  %v4977 = vsel %vm4928, %v4897, %v4833
  %v4978 = vsel %vm4928, %v4899, %v4835
  %v4979 = vsel %vm4928, %v4901, %v4837
  %v4980 = vsel %vm4928, %v4903, %v4839
  %v4981 = vsel %vm4928, %v4905, %v4841
  %v4982 = vsel %vm4928, %v4907, %v4843
  %v4983 = vsel %vm4928, %v4909, %v4845
  %v4984 = vsel %vm4928, %v4911, %v4847
  %v4985 = vsel %vm4928, %v4913, %v4849
  %v4986 = vsel %vm4928, %v4915, %v4851
  %v4987 = vsel %vm4928, %v4917, %v4853
  %v4988 = vsel %vm4928, %v4919, %v4855
  %v4989 = vsel %vm4928, %v4921, %v4857
  %v4990 = vsel %vm4928, %v4923, %v4859
  %v4991 = vsel %vm4928, %v4925, %v4861
  %v4992 = vsel %vm4928, %v4927, %v4863
  %v4993 = vmul.f32 %v4929, %v128
  %v4994 = vmul.f32 %v4961, %v129
  %v4995 = vmul.f32 %v4930, %v128
  %v4996 = vmul.f32 %v4962, %v129
  %v4997 = vmul.f32 %v4931, %v128
  %v4998 = vmul.f32 %v4963, %v129
  %v4999 = vmul.f32 %v4932, %v128
  %v5000 = vmul.f32 %v4964, %v129
  %v5001 = vmul.f32 %v4933, %v128
  %v5002 = vmul.f32 %v4965, %v129
  %v5003 = vmul.f32 %v4934, %v128
  %v5004 = vmul.f32 %v4966, %v129
  %v5005 = vmul.f32 %v4935, %v128
  %v5006 = vmul.f32 %v4967, %v129
  %v5007 = vmul.f32 %v4936, %v128
  %v5008 = vmul.f32 %v4968, %v129
  %v5009 = vmul.f32 %v4937, %v128
  %v5010 = vmul.f32 %v4969, %v129
  %v5011 = vmul.f32 %v4938, %v128
  %v5012 = vmul.f32 %v4970, %v129
  %v5013 = vmul.f32 %v4939, %v128
  %v5014 = vmul.f32 %v4971, %v129
  %v5015 = vmul.f32 %v4940, %v128
  %v5016 = vmul.f32 %v4972, %v129
  %v5017 = vmul.f32 %v4941, %v128
  %v5018 = vmul.f32 %v4973, %v129
  %v5019 = vmul.f32 %v4942, %v128
  %v5020 = vmul.f32 %v4974, %v129
  %v5021 = vmul.f32 %v4943, %v128
  %v5022 = vmul.f32 %v4975, %v129
  %v5023 = vmul.f32 %v4944, %v128
  %v5024 = vmul.f32 %v4976, %v129
  %v5025 = vmul.f32 %v4945, %v128
  %v5026 = vmul.f32 %v4977, %v129
  %v5027 = vmul.f32 %v4946, %v128
  %v5028 = vmul.f32 %v4978, %v129
  %v5029 = vmul.f32 %v4947, %v128
  %v5030 = vmul.f32 %v4979, %v129
  %v5031 = vmul.f32 %v4948, %v128
  %v5032 = vmul.f32 %v4980, %v129
  %v5033 = vmul.f32 %v4949, %v128
  %v5034 = vmul.f32 %v4981, %v129
  %v5035 = vmul.f32 %v4950, %v128
  %v5036 = vmul.f32 %v4982, %v129
  %v5037 = vmul.f32 %v4951, %v128
  %v5038 = vmul.f32 %v4983, %v129
  %v5039 = vmul.f32 %v4952, %v128
  %v5040 = vmul.f32 %v4984, %v129
  %v5041 = vmul.f32 %v4953, %v128
  %v5042 = vmul.f32 %v4985, %v129
  %v5043 = vmul.f32 %v4954, %v128
  %v5044 = vmul.f32 %v4986, %v129
  %v5045 = vmul.f32 %v4955, %v128
  %v5046 = vmul.f32 %v4987, %v129
  %v5047 = vmul.f32 %v4956, %v128
  %v5048 = vmul.f32 %v4988, %v129
  %v5049 = vmul.f32 %v4957, %v128
  %v5050 = vmul.f32 %v4989, %v129
  %v5051 = vmul.f32 %v4958, %v128
  %v5052 = vmul.f32 %v4990, %v129
  %v5053 = vmul.f32 %v4959, %v128
  %v5054 = vmul.f32 %v4991, %v129
  %v5055 = vmul.f32 %v4960, %v128
  %v5056 = vmul.f32 %v4992, %v129
  %v5057 = vpack.c.bf16 %v4995, %v4993
  %v5058 = vpack.c.bf16 %v4996, %v4994
  %v5059 = vpack.c.bf16 %v4999, %v4997
  %v5060 = vpack.c.bf16 %v5000, %v4998
  %v5061 = vpack.c.bf16 %v5003, %v5001
  %v5062 = vpack.c.bf16 %v5004, %v5002
  %v5063 = vpack.c.bf16 %v5007, %v5005
  %v5064 = vpack.c.bf16 %v5008, %v5006
  %v5065 = vpack.c.bf16 %v5011, %v5009
  %v5066 = vpack.c.bf16 %v5012, %v5010
  %v5067 = vpack.c.bf16 %v5015, %v5013
  %v5068 = vpack.c.bf16 %v5016, %v5014
  %v5069 = vpack.c.bf16 %v5019, %v5017
  %v5070 = vpack.c.bf16 %v5020, %v5018
  %v5071 = vpack.c.bf16 %v5023, %v5021
  %v5072 = vpack.c.bf16 %v5024, %v5022
  %v5073 = vpack.c.bf16 %v5027, %v5025
  %v5074 = vpack.c.bf16 %v5028, %v5026
  %v5075 = vpack.c.bf16 %v5031, %v5029
  %v5076 = vpack.c.bf16 %v5032, %v5030
  %v5077 = vpack.c.bf16 %v5035, %v5033
  %v5078 = vpack.c.bf16 %v5036, %v5034
  %v5079 = vpack.c.bf16 %v5039, %v5037
  %v5080 = vpack.c.bf16 %v5040, %v5038
  %v5081 = vpack.c.bf16 %v5043, %v5041
  %v5082 = vpack.c.bf16 %v5044, %v5042
  %v5083 = vpack.c.bf16 %v5047, %v5045
  %v5084 = vpack.c.bf16 %v5048, %v5046
  %v5085 = vpack.c.bf16 %v5051, %v5049
  %v5086 = vpack.c.bf16 %v5052, %v5050
  %v5087 = vpack.c.bf16 %v5055, %v5053
  %v5088 = vpack.c.bf16 %v5056, %v5054
  %5089 = vrot.lane.b32.xlu0 %v3966, 126
  %v5090 = vpop.permute.xlu0 %5089
  %5091 = vrot.lane.b32.xlu0 %v3968, 126
  %v5092 = vpop.permute.xlu0 %5091
  %5093 = vrot.lane.b32.xlu0 %v3970, 126
  %v5094 = vpop.permute.xlu0 %5093
  %5095 = vrot.lane.b32.xlu0 %v3972, 126
  %v5096 = vpop.permute.xlu0 %5095
  %5097 = vrot.lane.b32.xlu0 %v3974, 126
  %v5098 = vpop.permute.xlu0 %5097
  %5099 = vrot.lane.b32.xlu0 %v3976, 126
  %v5100 = vpop.permute.xlu0 %5099
  %5101 = vrot.lane.b32.xlu0 %v3978, 126
  %v5102 = vpop.permute.xlu0 %5101
  %5103 = vrot.lane.b32.xlu0 %v3980, 126
  %v5104 = vpop.permute.xlu0 %5103
  %5105 = vrot.lane.b32.xlu0 %v3982, 126
  %v5106 = vpop.permute.xlu0 %5105
  %5107 = vrot.lane.b32.xlu0 %v3984, 126
  %v5108 = vpop.permute.xlu0 %5107
  %5109 = vrot.lane.b32.xlu0 %v3986, 126
  %v5110 = vpop.permute.xlu0 %5109
  %5111 = vrot.lane.b32.xlu0 %v3988, 126
  %v5112 = vpop.permute.xlu0 %5111
  %5113 = vrot.lane.b32.xlu0 %v3990, 126
  %v5114 = vpop.permute.xlu0 %5113
  %5115 = vrot.lane.b32.xlu0 %v3992, 126
  %v5116 = vpop.permute.xlu0 %5115
  %5117 = vrot.lane.b32.xlu0 %v3994, 126
  %v5118 = vpop.permute.xlu0 %5117
  %5119 = vrot.lane.b32.xlu0 %v3996, 126
  %v5120 = vpop.permute.xlu0 %5119
  %5121 = vrot.lane.b32.xlu0 %v3998, 126
  %v5122 = vpop.permute.xlu0 %5121
  %5123 = vrot.lane.b32.xlu0 %v4000, 126
  %v5124 = vpop.permute.xlu0 %5123
  %5125 = vrot.lane.b32.xlu0 %v4002, 126
  %v5126 = vpop.permute.xlu0 %5125
  %5127 = vrot.lane.b32.xlu0 %v4004, 126
  %v5128 = vpop.permute.xlu0 %5127
  %5129 = vrot.lane.b32.xlu0 %v4006, 126
  %v5130 = vpop.permute.xlu0 %5129
  %5131 = vrot.lane.b32.xlu0 %v4008, 126
  %v5132 = vpop.permute.xlu0 %5131
  %5133 = vrot.lane.b32.xlu0 %v4010, 126
  %v5134 = vpop.permute.xlu0 %5133
  %5135 = vrot.lane.b32.xlu0 %v4012, 126
  %v5136 = vpop.permute.xlu0 %5135
  %5137 = vrot.lane.b32.xlu0 %v4014, 126
  %v5138 = vpop.permute.xlu0 %5137
  %5139 = vrot.lane.b32.xlu0 %v4016, 126
  %v5140 = vpop.permute.xlu0 %5139
  %5141 = vrot.lane.b32.xlu0 %v4018, 126
  %v5142 = vpop.permute.xlu0 %5141
  %5143 = vrot.lane.b32.xlu0 %v4020, 126
  %v5144 = vpop.permute.xlu0 %5143
  %5145 = vrot.lane.b32.xlu0 %v4022, 126
  %v5146 = vpop.permute.xlu0 %5145
  %5147 = vrot.lane.b32.xlu0 %v4024, 126
  %v5148 = vpop.permute.xlu0 %5147
  %5149 = vrot.lane.b32.xlu0 %v4026, 126
  %v5150 = vpop.permute.xlu0 %5149
  %5151 = vrot.lane.b32.xlu0 %v4028, 126
  %v5152 = vpop.permute.xlu0 %5151
  %5153 = vrot.lane.b32.xlu0 %v3967, 126
  %v5154 = vpop.permute.xlu0 %5153
  %5155 = vrot.lane.b32.xlu0 %v3969, 126
  %v5156 = vpop.permute.xlu0 %5155
  %5157 = vrot.lane.b32.xlu0 %v3971, 126
  %v5158 = vpop.permute.xlu0 %5157
  %5159 = vrot.lane.b32.xlu0 %v3973, 126
  %v5160 = vpop.permute.xlu0 %5159
  %5161 = vrot.lane.b32.xlu0 %v3975, 126
  %v5162 = vpop.permute.xlu0 %5161
  %5163 = vrot.lane.b32.xlu0 %v3977, 126
  %v5164 = vpop.permute.xlu0 %5163
  %5165 = vrot.lane.b32.xlu0 %v3979, 126
  %v5166 = vpop.permute.xlu0 %5165
  %5167 = vrot.lane.b32.xlu0 %v3981, 126
  %v5168 = vpop.permute.xlu0 %5167
  %5169 = vrot.lane.b32.xlu0 %v3983, 126
  %v5170 = vpop.permute.xlu0 %5169
  %5171 = vrot.lane.b32.xlu0 %v3985, 126
  %v5172 = vpop.permute.xlu0 %5171
  %5173 = vrot.lane.b32.xlu0 %v3987, 126
  %v5174 = vpop.permute.xlu0 %5173
  %5175 = vrot.lane.b32.xlu0 %v3989, 126
  %v5176 = vpop.permute.xlu0 %5175
  %5177 = vrot.lane.b32.xlu0 %v3991, 126
  %v5178 = vpop.permute.xlu0 %5177
  %5179 = vrot.lane.b32.xlu0 %v3993, 126
  %v5180 = vpop.permute.xlu0 %5179
  %5181 = vrot.lane.b32.xlu0 %v3995, 126
  %v5182 = vpop.permute.xlu0 %5181
  %5183 = vrot.lane.b32.xlu0 %v3997, 126
  %v5184 = vpop.permute.xlu0 %5183
  %5185 = vrot.lane.b32.xlu0 %v3999, 126
  %v5186 = vpop.permute.xlu0 %5185
  %5187 = vrot.lane.b32.xlu0 %v4001, 126
  %v5188 = vpop.permute.xlu0 %5187
  %5189 = vrot.lane.b32.xlu0 %v4003, 126
  %v5190 = vpop.permute.xlu0 %5189
  %5191 = vrot.lane.b32.xlu0 %v4005, 126
  %v5192 = vpop.permute.xlu0 %5191
  %5193 = vrot.lane.b32.xlu0 %v4007, 126
  %v5194 = vpop.permute.xlu0 %5193
  %5195 = vrot.lane.b32.xlu0 %v4009, 126
  %v5196 = vpop.permute.xlu0 %5195
  %5197 = vrot.lane.b32.xlu0 %v4011, 126
  %v5198 = vpop.permute.xlu0 %5197
  %5199 = vrot.lane.b32.xlu0 %v4013, 126
  %v5200 = vpop.permute.xlu0 %5199
  %5201 = vrot.lane.b32.xlu0 %v4015, 126
  %v5202 = vpop.permute.xlu0 %5201
  %5203 = vrot.lane.b32.xlu0 %v4017, 126
  %v5204 = vpop.permute.xlu0 %5203
  %5205 = vrot.lane.b32.xlu0 %v4019, 126
  %v5206 = vpop.permute.xlu0 %5205
  %5207 = vrot.lane.b32.xlu0 %v4021, 126
  %v5208 = vpop.permute.xlu0 %5207
  %5209 = vrot.lane.b32.xlu0 %v4023, 126
  %v5210 = vpop.permute.xlu0 %5209
  %5211 = vrot.lane.b32.xlu0 %v4025, 126
  %v5212 = vpop.permute.xlu0 %5211
  %5213 = vrot.lane.b32.xlu0 %v4027, 126
  %v5214 = vpop.permute.xlu0 %5213
  %5215 = vrot.lane.b32.xlu0 %v4029, 126
  %v5216 = vpop.permute.xlu0 %5215
  %vm5217 = vcmp.lt.s32.totalorder %v62, 126
  %v5218 = vsel %vm5217, %v5090, %v5154
  %v5219 = vsel %vm5217, %v5092, %v5156
  %v5220 = vsel %vm5217, %v5094, %v5158
  %v5221 = vsel %vm5217, %v5096, %v5160
  %v5222 = vsel %vm5217, %v5098, %v5162
  %v5223 = vsel %vm5217, %v5100, %v5164
  %v5224 = vsel %vm5217, %v5102, %v5166
  %v5225 = vsel %vm5217, %v5104, %v5168
  %v5226 = vsel %vm5217, %v5106, %v5170
  %v5227 = vsel %vm5217, %v5108, %v5172
  %v5228 = vsel %vm5217, %v5110, %v5174
  %v5229 = vsel %vm5217, %v5112, %v5176
  %v5230 = vsel %vm5217, %v5114, %v5178
  %v5231 = vsel %vm5217, %v5116, %v5180
  %v5232 = vsel %vm5217, %v5118, %v5182
  %v5233 = vsel %vm5217, %v5120, %v5184
  %v5234 = vsel %vm5217, %v5122, %v5186
  %v5235 = vsel %vm5217, %v5124, %v5188
  %v5236 = vsel %vm5217, %v5126, %v5190
  %v5237 = vsel %vm5217, %v5128, %v5192
  %v5238 = vsel %vm5217, %v5130, %v5194
  %v5239 = vsel %vm5217, %v5132, %v5196
  %v5240 = vsel %vm5217, %v5134, %v5198
  %v5241 = vsel %vm5217, %v5136, %v5200
  %v5242 = vsel %vm5217, %v5138, %v5202
  %v5243 = vsel %vm5217, %v5140, %v5204
  %v5244 = vsel %vm5217, %v5142, %v5206
  %v5245 = vsel %vm5217, %v5144, %v5208
  %v5246 = vsel %vm5217, %v5146, %v5210
  %v5247 = vsel %vm5217, %v5148, %v5212
  %v5248 = vsel %vm5217, %v5150, %v5214
  %v5249 = vsel %vm5217, %v5152, %v5216
  %v5250 = vsel %vm5217, %v5154, %v5090
  %v5251 = vsel %vm5217, %v5156, %v5092
  %v5252 = vsel %vm5217, %v5158, %v5094
  %v5253 = vsel %vm5217, %v5160, %v5096
  %v5254 = vsel %vm5217, %v5162, %v5098
  %v5255 = vsel %vm5217, %v5164, %v5100
  %v5256 = vsel %vm5217, %v5166, %v5102
  %v5257 = vsel %vm5217, %v5168, %v5104
  %v5258 = vsel %vm5217, %v5170, %v5106
  %v5259 = vsel %vm5217, %v5172, %v5108
  %v5260 = vsel %vm5217, %v5174, %v5110
  %v5261 = vsel %vm5217, %v5176, %v5112
  %v5262 = vsel %vm5217, %v5178, %v5114
  %v5263 = vsel %vm5217, %v5180, %v5116
  %v5264 = vsel %vm5217, %v5182, %v5118
  %v5265 = vsel %vm5217, %v5184, %v5120
  %v5266 = vsel %vm5217, %v5186, %v5122
  %v5267 = vsel %vm5217, %v5188, %v5124
  %v5268 = vsel %vm5217, %v5190, %v5126
  %v5269 = vsel %vm5217, %v5192, %v5128
  %v5270 = vsel %vm5217, %v5194, %v5130
  %v5271 = vsel %vm5217, %v5196, %v5132
  %v5272 = vsel %vm5217, %v5198, %v5134
  %v5273 = vsel %vm5217, %v5200, %v5136
  %v5274 = vsel %vm5217, %v5202, %v5138
  %v5275 = vsel %vm5217, %v5204, %v5140
  %v5276 = vsel %vm5217, %v5206, %v5142
  %v5277 = vsel %vm5217, %v5208, %v5144
  %v5278 = vsel %vm5217, %v5210, %v5146
  %v5279 = vsel %vm5217, %v5212, %v5148
  %v5280 = vsel %vm5217, %v5214, %v5150
  %v5281 = vsel %vm5217, %v5216, %v5152
  %v5282 = vmul.f32 %v5218, %v140
  %v5283 = vmul.f32 %v5250, %v141
  %v5284 = vmul.f32 %v5219, %v140
  %v5285 = vmul.f32 %v5251, %v141
  %v5286 = vmul.f32 %v5220, %v140
  %v5287 = vmul.f32 %v5252, %v141
  %v5288 = vmul.f32 %v5221, %v140
  %v5289 = vmul.f32 %v5253, %v141
  %v5290 = vmul.f32 %v5222, %v140
  %v5291 = vmul.f32 %v5254, %v141
  %v5292 = vmul.f32 %v5223, %v140
  %v5293 = vmul.f32 %v5255, %v141
  %v5294 = vmul.f32 %v5224, %v140
  %v5295 = vmul.f32 %v5256, %v141
  %v5296 = vmul.f32 %v5225, %v140
  %v5297 = vmul.f32 %v5257, %v141
  %v5298 = vmul.f32 %v5226, %v140
  %v5299 = vmul.f32 %v5258, %v141
  %v5300 = vmul.f32 %v5227, %v140
  %v5301 = vmul.f32 %v5259, %v141
  %v5302 = vmul.f32 %v5228, %v140
  %v5303 = vmul.f32 %v5260, %v141
  %v5304 = vmul.f32 %v5229, %v140
  %v5305 = vmul.f32 %v5261, %v141
  %v5306 = vmul.f32 %v5230, %v140
  %v5307 = vmul.f32 %v5262, %v141
  %v5308 = vmul.f32 %v5231, %v140
  %v5309 = vmul.f32 %v5263, %v141
  %v5310 = vmul.f32 %v5232, %v140
  %v5311 = vmul.f32 %v5264, %v141
  %v5312 = vmul.f32 %v5233, %v140
  %v5313 = vmul.f32 %v5265, %v141
  %v5314 = vmul.f32 %v5234, %v140
  %v5315 = vmul.f32 %v5266, %v141
  %v5316 = vmul.f32 %v5235, %v140
  %v5317 = vmul.f32 %v5267, %v141
  %v5318 = vmul.f32 %v5236, %v140
  %v5319 = vmul.f32 %v5268, %v141
  %v5320 = vmul.f32 %v5237, %v140
  %v5321 = vmul.f32 %v5269, %v141
  %v5322 = vmul.f32 %v5238, %v140
  %v5323 = vmul.f32 %v5270, %v141
  %v5324 = vmul.f32 %v5239, %v140
  %v5325 = vmul.f32 %v5271, %v141
  %v5326 = vmul.f32 %v5240, %v140
  %v5327 = vmul.f32 %v5272, %v141
  %v5328 = vmul.f32 %v5241, %v140
  %v5329 = vmul.f32 %v5273, %v141
  %v5330 = vmul.f32 %v5242, %v140
  %v5331 = vmul.f32 %v5274, %v141
  %v5332 = vmul.f32 %v5243, %v140
  %v5333 = vmul.f32 %v5275, %v141
  %v5334 = vmul.f32 %v5244, %v140
  %v5335 = vmul.f32 %v5276, %v141
  %v5336 = vmul.f32 %v5245, %v140
  %v5337 = vmul.f32 %v5277, %v141
  %v5338 = vmul.f32 %v5246, %v140
  %v5339 = vmul.f32 %v5278, %v141
  %v5340 = vmul.f32 %v5247, %v140
  %v5341 = vmul.f32 %v5279, %v141
  %v5342 = vmul.f32 %v5248, %v140
  %v5343 = vmul.f32 %v5280, %v141
  %v5344 = vmul.f32 %v5249, %v140
  %v5345 = vmul.f32 %v5281, %v141
  %v5346 = vpack.c.bf16 %v5284, %v5282
  %v5347 = vpack.c.bf16 %v5285, %v5283
  %v5348 = vpack.c.bf16 %v5288, %v5286
  %v5349 = vpack.c.bf16 %v5289, %v5287
  %v5350 = vpack.c.bf16 %v5292, %v5290
  %v5351 = vpack.c.bf16 %v5293, %v5291
  %v5352 = vpack.c.bf16 %v5296, %v5294
  %v5353 = vpack.c.bf16 %v5297, %v5295
  %v5354 = vpack.c.bf16 %v5300, %v5298
  %v5355 = vpack.c.bf16 %v5301, %v5299
  %v5356 = vpack.c.bf16 %v5304, %v5302
  %v5357 = vpack.c.bf16 %v5305, %v5303
  %v5358 = vpack.c.bf16 %v5308, %v5306
  %v5359 = vpack.c.bf16 %v5309, %v5307
  %v5360 = vpack.c.bf16 %v5312, %v5310
  %v5361 = vpack.c.bf16 %v5313, %v5311
  %v5362 = vpack.c.bf16 %v5316, %v5314
  %v5363 = vpack.c.bf16 %v5317, %v5315
  %v5364 = vpack.c.bf16 %v5320, %v5318
  %v5365 = vpack.c.bf16 %v5321, %v5319
  %v5366 = vpack.c.bf16 %v5324, %v5322
  %v5367 = vpack.c.bf16 %v5325, %v5323
  %v5368 = vpack.c.bf16 %v5328, %v5326
  %v5369 = vpack.c.bf16 %v5329, %v5327
  %v5370 = vpack.c.bf16 %v5332, %v5330
  %v5371 = vpack.c.bf16 %v5333, %v5331
  %v5372 = vpack.c.bf16 %v5336, %v5334
  %v5373 = vpack.c.bf16 %v5337, %v5335
  %v5374 = vpack.c.bf16 %v5340, %v5338
  %v5375 = vpack.c.bf16 %v5341, %v5339
  %v5376 = vpack.c.bf16 %v5344, %v5342
  %v5377 = vpack.c.bf16 %v5345, %v5343
  %v5538 = vunpack.c.l.b16 %v4030
  %v5539 = vunpack.c.h.b16 %v4030
  %v5540 = vunpack.c.l.b16 %v4031
  %v5541 = vunpack.c.h.b16 %v4031
  %v5542 = vunpack.c.l.b16 %v4032
  %v5543 = vunpack.c.h.b16 %v4032
  %v5544 = vunpack.c.l.b16 %v4033
  %v5545 = vunpack.c.h.b16 %v4033
  %v5546 = vunpack.c.l.b16 %v4034
  %v5547 = vunpack.c.h.b16 %v4034
  %v5548 = vunpack.c.l.b16 %v4035
  %v5549 = vunpack.c.h.b16 %v4035
  %v5550 = vunpack.c.l.b16 %v4036
  %v5551 = vunpack.c.h.b16 %v4036
  %v5552 = vunpack.c.l.b16 %v4037
  %v5553 = vunpack.c.h.b16 %v4037
  %v5554 = vunpack.c.l.b16 %v4038
  %v5555 = vunpack.c.h.b16 %v4038
  %v5556 = vunpack.c.l.b16 %v4039
  %v5557 = vunpack.c.h.b16 %v4039
  %v5558 = vunpack.c.l.b16 %v4040
  %v5559 = vunpack.c.h.b16 %v4040
  %v5560 = vunpack.c.l.b16 %v4041
  %v5561 = vunpack.c.h.b16 %v4041
  %v5562 = vunpack.c.l.b16 %v4042
  %v5563 = vunpack.c.h.b16 %v4042
  %v5564 = vunpack.c.l.b16 %v4043
  %v5565 = vunpack.c.h.b16 %v4043
  %v5566 = vunpack.c.l.b16 %v4044
  %v5567 = vunpack.c.h.b16 %v4044
  %v5568 = vunpack.c.l.b16 %v4045
  %v5569 = vunpack.c.h.b16 %v4045
  %v5570 = vunpack.c.l.b16 %v4046
  %v5571 = vunpack.c.h.b16 %v4046
  %v5572 = vunpack.c.l.b16 %v4047
  %v5573 = vunpack.c.h.b16 %v4047
  %v5574 = vunpack.c.l.b16 %v4048
  %v5575 = vunpack.c.h.b16 %v4048
  %v5576 = vunpack.c.l.b16 %v4049
  %v5577 = vunpack.c.h.b16 %v4049
  %v5578 = vunpack.c.l.b16 %v4050
  %v5579 = vunpack.c.h.b16 %v4050
  %v5580 = vunpack.c.l.b16 %v4051
  %v5581 = vunpack.c.h.b16 %v4051
  %v5582 = vunpack.c.l.b16 %v4052
  %v5583 = vunpack.c.h.b16 %v4052
  %v5584 = vunpack.c.l.b16 %v4053
  %v5585 = vunpack.c.h.b16 %v4053
  %v5586 = vunpack.c.l.b16 %v4054
  %v5587 = vunpack.c.h.b16 %v4054
  %v5588 = vunpack.c.l.b16 %v4055
  %v5589 = vunpack.c.h.b16 %v4055
  %v5590 = vunpack.c.l.b16 %v4056
  %v5591 = vunpack.c.h.b16 %v4056
  %v5592 = vunpack.c.l.b16 %v4057
  %v5593 = vunpack.c.h.b16 %v4057
  %v5594 = vunpack.c.l.b16 %v4058
  %v5595 = vunpack.c.h.b16 %v4058
  %v5596 = vunpack.c.l.b16 %v4059
  %v5597 = vunpack.c.h.b16 %v4059
  %v5598 = vunpack.c.l.b16 %v4060
  %v5599 = vunpack.c.h.b16 %v4060
  %v5600 = vunpack.c.l.b16 %v4061
  %v5601 = vunpack.c.h.b16 %v4061
  %v5602 = vunpack.c.l.b16 %v4062
  %v5603 = vunpack.c.h.b16 %v4062
  %v5604 = vunpack.c.l.b16 %v4063
  %v5605 = vunpack.c.h.b16 %v4063
  %v5606 = vunpack.c.l.b16 %v4064
  %v5607 = vunpack.c.h.b16 %v4064
  %v5608 = vunpack.c.l.b16 %v4065
  %v5609 = vunpack.c.h.b16 %v4065
  %v5610 = vunpack.c.l.b16 %v4066
  %v5611 = vunpack.c.h.b16 %v4066
  %v5612 = vunpack.c.l.b16 %v4067
  %v5613 = vunpack.c.h.b16 %v4067
  %v5614 = vunpack.c.l.b16 %v4068
  %v5615 = vunpack.c.h.b16 %v4068
  %v5616 = vunpack.c.l.b16 %v4069
  %v5617 = vunpack.c.h.b16 %v4069
  %v5618 = vunpack.c.l.b16 %v4070
  %v5619 = vunpack.c.h.b16 %v4070
  %v5620 = vunpack.c.l.b16 %v4071
  %v5621 = vunpack.c.h.b16 %v4071
  %v5622 = vunpack.c.l.b16 %v4072
  %v5623 = vunpack.c.h.b16 %v4072
  %v5624 = vunpack.c.l.b16 %v4073
  %v5625 = vunpack.c.h.b16 %v4073
  %v5626 = vunpack.c.l.b16 %v4074
  %v5627 = vunpack.c.h.b16 %v4074
  %v5628 = vunpack.c.l.b16 %v4075
  %v5629 = vunpack.c.h.b16 %v4075
  %v5630 = vunpack.c.l.b16 %v4076
  %v5631 = vunpack.c.h.b16 %v4076
  %v5632 = vunpack.c.l.b16 %v4077
  %v5633 = vunpack.c.h.b16 %v4077
  %v5634 = vunpack.c.l.b16 %v4078
  %v5635 = vunpack.c.h.b16 %v4078
  %v5636 = vunpack.c.l.b16 %v4079
  %v5637 = vunpack.c.h.b16 %v4079
  %v5638 = vunpack.c.l.b16 %v4080
  %v5639 = vunpack.c.h.b16 %v4080
  %v5640 = vunpack.c.l.b16 %v4081
  %v5641 = vunpack.c.h.b16 %v4081
  %v5642 = vunpack.c.l.b16 %v4082
  %v5643 = vunpack.c.h.b16 %v4082
  %v5644 = vunpack.c.l.b16 %v4083
  %v5645 = vunpack.c.h.b16 %v4083
  %v5646 = vunpack.c.l.b16 %v4084
  %v5647 = vunpack.c.h.b16 %v4084
  %v5648 = vunpack.c.l.b16 %v4085
  %v5649 = vunpack.c.h.b16 %v4085
  %v5650 = vunpack.c.l.b16 %v4086
  %v5651 = vunpack.c.h.b16 %v4086
  %v5652 = vunpack.c.l.b16 %v4087
  %v5653 = vunpack.c.h.b16 %v4087
  %v5654 = vunpack.c.l.b16 %v4088
  %v5655 = vunpack.c.h.b16 %v4088
  %v5656 = vunpack.c.l.b16 %v4089
  %v5657 = vunpack.c.h.b16 %v4089
  %v5658 = vunpack.c.l.b16 %v4090
  %v5659 = vunpack.c.h.b16 %v4090
  %v5660 = vunpack.c.l.b16 %v4091
  %v5661 = vunpack.c.h.b16 %v4091
  %v5662 = vunpack.c.l.b16 %v4092
  %v5663 = vunpack.c.h.b16 %v4092
  %v5664 = vunpack.c.l.b16 %v4093
  %v5665 = vunpack.c.h.b16 %v4093
  %v5666 = vunpack.c.l.b16 %v4094
  %v5667 = vunpack.c.h.b16 %v4094
  %v5668 = vunpack.c.l.b16 %v4095
  %v5669 = vunpack.c.h.b16 %v4095
  %v5670 = vunpack.c.l.b16 %v4096
  %v5671 = vunpack.c.h.b16 %v4096
  %v5672 = vunpack.c.l.b16 %v4097
  %v5673 = vunpack.c.h.b16 %v4097
  %v5674 = vunpack.c.l.b16 %v4098
  %v5675 = vunpack.c.h.b16 %v4098
  %v5676 = vunpack.c.l.b16 %v4099
  %v5677 = vunpack.c.h.b16 %v4099
  %v5678 = vunpack.c.l.b16 %v4100
  %v5679 = vunpack.c.h.b16 %v4100
  %v5680 = vunpack.c.l.b16 %v4101
  %v5681 = vunpack.c.h.b16 %v4101
  %v5682 = vunpack.c.l.b16 %v4102
  %v5683 = vunpack.c.h.b16 %v4102
  %v5684 = vunpack.c.l.b16 %v4103
  %v5685 = vunpack.c.h.b16 %v4103
  %v5686 = vunpack.c.l.b16 %v4104
  %v5687 = vunpack.c.h.b16 %v4104
  %v5688 = vunpack.c.l.b16 %v4105
  %v5689 = vunpack.c.h.b16 %v4105
  %v5690 = vunpack.c.l.b16 %v4106
  %v5691 = vunpack.c.h.b16 %v4106
  %v5692 = vunpack.c.l.b16 %v4107
  %v5693 = vunpack.c.h.b16 %v4107
  %v5694 = vunpack.c.l.b16 %v4108
  %v5695 = vunpack.c.h.b16 %v4108
  %v5696 = vunpack.c.l.b16 %v4109
  %v5697 = vunpack.c.h.b16 %v4109
  %v5698 = vunpack.c.l.b16 %v4110
  %v5699 = vunpack.c.h.b16 %v4110
  %v5700 = vunpack.c.l.b16 %v4111
  %v5701 = vunpack.c.h.b16 %v4111
  %v5702 = vunpack.c.l.b16 %v4112
  %v5703 = vunpack.c.h.b16 %v4112
  %v5704 = vunpack.c.l.b16 %v4113
  %v5705 = vunpack.c.h.b16 %v4113
  %v5706 = vunpack.c.l.b16 %v4114
  %v5707 = vunpack.c.h.b16 %v4114
  %v5708 = vunpack.c.l.b16 %v4115
  %v5709 = vunpack.c.h.b16 %v4115
  %v5710 = vunpack.c.l.b16 %v4116
  %v5711 = vunpack.c.h.b16 %v4116
  %v5712 = vunpack.c.l.b16 %v4117
  %v5713 = vunpack.c.h.b16 %v4117
  %v5714 = vunpack.c.l.b16 %v4118
  %v5715 = vunpack.c.h.b16 %v4118
  %v5716 = vunpack.c.l.b16 %v4119
  %v5717 = vunpack.c.h.b16 %v4119
  %v5718 = vunpack.c.l.b16 %v4120
  %v5719 = vunpack.c.h.b16 %v4120
  %v5720 = vunpack.c.l.b16 %v4121
  %v5721 = vunpack.c.h.b16 %v4121
  %v5722 = vunpack.c.l.b16 %v4122
  %v5723 = vunpack.c.h.b16 %v4122
  %v5724 = vunpack.c.l.b16 %v4123
  %v5725 = vunpack.c.h.b16 %v4123
  %v5726 = vunpack.c.l.b16 %v4124
  %v5727 = vunpack.c.h.b16 %v4124
  %v5728 = vunpack.c.l.b16 %v4125
  %v5729 = vunpack.c.h.b16 %v4125
  %v5730 = vunpack.c.l.b16 %v4126
  %v5731 = vunpack.c.h.b16 %v4126
  %v5732 = vunpack.c.l.b16 %v4127
  %v5733 = vunpack.c.h.b16 %v4127
  %v5734 = vunpack.c.l.b16 %v4128
  %v5735 = vunpack.c.h.b16 %v4128
  %v5736 = vunpack.c.l.b16 %v4129
  %v5737 = vunpack.c.h.b16 %v4129
  %v5738 = vunpack.c.l.b16 %v4130
  %v5739 = vunpack.c.h.b16 %v4130
  %v5740 = vunpack.c.l.b16 %v4131
  %v5741 = vunpack.c.h.b16 %v4131
  %v5742 = vunpack.c.l.b16 %v4132
  %v5743 = vunpack.c.h.b16 %v4132
  %v5744 = vunpack.c.l.b16 %v4133
  %v5745 = vunpack.c.h.b16 %v4133
  %v5746 = vunpack.c.l.b16 %v4134
  %v5747 = vunpack.c.h.b16 %v4134
  %v5748 = vunpack.c.l.b16 %v4135
  %v5749 = vunpack.c.h.b16 %v4135
  %v5750 = vunpack.c.l.b16 %v4136
  %v5751 = vunpack.c.h.b16 %v4136
  %v5752 = vunpack.c.l.b16 %v4137
  %v5753 = vunpack.c.h.b16 %v4137
  %v5754 = vunpack.c.l.b16 %v4138
  %v5755 = vunpack.c.h.b16 %v4138
  %v5756 = vunpack.c.l.b16 %v4139
  %v5757 = vunpack.c.h.b16 %v4139
  %v5758 = vunpack.c.l.b16 %v4140
  %v5759 = vunpack.c.h.b16 %v4140
  %v5760 = vunpack.c.l.b16 %v4141
  %v5761 = vunpack.c.h.b16 %v4141
  %v5762 = vunpack.c.l.b16 %v4142
  %v5763 = vunpack.c.h.b16 %v4142
  %v5764 = vunpack.c.l.b16 %v4143
  %v5765 = vunpack.c.h.b16 %v4143
  %v5766 = vunpack.c.l.b16 %v4144
  %v5767 = vunpack.c.h.b16 %v4144
  %v5768 = vunpack.c.l.b16 %v4145
  %v5769 = vunpack.c.h.b16 %v4145
  %v5770 = vunpack.c.l.b16 %v4146
  %v5771 = vunpack.c.h.b16 %v4146
  %v5772 = vunpack.c.l.b16 %v4147
  %v5773 = vunpack.c.h.b16 %v4147
  %v5774 = vunpack.c.l.b16 %v4148
  %v5775 = vunpack.c.h.b16 %v4148
  %v5776 = vunpack.c.l.b16 %v4149
  %v5777 = vunpack.c.h.b16 %v4149
  %v5778 = vunpack.c.l.b16 %v4150
  %v5779 = vunpack.c.h.b16 %v4150
  %v5780 = vunpack.c.l.b16 %v4151
  %v5781 = vunpack.c.h.b16 %v4151
  %v5782 = vunpack.c.l.b16 %v4152
  %v5783 = vunpack.c.h.b16 %v4152
  %v5784 = vunpack.c.l.b16 %v4153
  %v5785 = vunpack.c.h.b16 %v4153
  %v5786 = vunpack.c.l.b16 %v4154
  %v5787 = vunpack.c.h.b16 %v4154
  %v5788 = vunpack.c.l.b16 %v4155
  %v5789 = vunpack.c.h.b16 %v4155
  %v5790 = vunpack.c.l.b16 %v4156
  %v5791 = vunpack.c.h.b16 %v4156
  %v5792 = vunpack.c.l.b16 %v4157
  %v5793 = vunpack.c.h.b16 %v4157
  %v5794 = vunpack.c.l.b16 %v4158
  %v5795 = vunpack.c.h.b16 %v4158
  %v5796 = vunpack.c.l.b16 %v4159
  %v5797 = vunpack.c.h.b16 %v4159
  %v5798 = vunpack.c.l.b16 %v4160
  %v5799 = vunpack.c.h.b16 %v4160
  %v5800 = vunpack.c.l.b16 %v4161
  %v5801 = vunpack.c.h.b16 %v4161
  %v5802 = vunpack.c.l.b16 %v4162
  %v5803 = vunpack.c.h.b16 %v4162
  %v5804 = vunpack.c.l.b16 %v4163
  %v5805 = vunpack.c.h.b16 %v4163
  %v5806 = vunpack.c.l.b16 %v4164
  %v5807 = vunpack.c.h.b16 %v4164
  %v5808 = vunpack.c.l.b16 %v4165
  %v5809 = vunpack.c.h.b16 %v4165
  %v5810 = vunpack.c.l.b16 %v4166
  %v5811 = vunpack.c.h.b16 %v4166
  %v5812 = vunpack.c.l.b16 %v4167
  %v5813 = vunpack.c.h.b16 %v4167
  %v5814 = vunpack.c.l.b16 %v4168
  %v5815 = vunpack.c.h.b16 %v4168
  %v5816 = vunpack.c.l.b16 %v4169
  %v5817 = vunpack.c.h.b16 %v4169
  %v5818 = vunpack.c.l.b16 %v4170
  %v5819 = vunpack.c.h.b16 %v4170
  %v5820 = vunpack.c.l.b16 %v4171
  %v5821 = vunpack.c.h.b16 %v4171
  %v5822 = vunpack.c.l.b16 %v4172
  %v5823 = vunpack.c.h.b16 %v4172
  %v5824 = vunpack.c.l.b16 %v4173
  %v5825 = vunpack.c.h.b16 %v4173
  %v5826 = vunpack.c.l.b16 %v4174
  %v5827 = vunpack.c.h.b16 %v4174
  %v5828 = vunpack.c.l.b16 %v4175
  %v5829 = vunpack.c.h.b16 %v4175
  %v5830 = vunpack.c.l.b16 %v4176
  %v5831 = vunpack.c.h.b16 %v4176
  %v5832 = vunpack.c.l.b16 %v4177
  %v5833 = vunpack.c.h.b16 %v4177
  %v5834 = vunpack.c.l.b16 %v4178
  %v5835 = vunpack.c.h.b16 %v4178
  %v5836 = vunpack.c.l.b16 %v4179
  %v5837 = vunpack.c.h.b16 %v4179
  %v5838 = vunpack.c.l.b16 %v4180
  %v5839 = vunpack.c.h.b16 %v4180
  %v5840 = vunpack.c.l.b16 %v4181
  %v5841 = vunpack.c.h.b16 %v4181
  %v5842 = vunpack.c.l.b16 %v4182
  %v5843 = vunpack.c.h.b16 %v4182
  %v5844 = vunpack.c.l.b16 %v4183
  %v5845 = vunpack.c.h.b16 %v4183
  %v5846 = vunpack.c.l.b16 %v4184
  %v5847 = vunpack.c.h.b16 %v4184
  %v5848 = vunpack.c.l.b16 %v4185
  %v5849 = vunpack.c.h.b16 %v4185
  %v5850 = vunpack.c.l.b16 %v4186
  %v5851 = vunpack.c.h.b16 %v4186
  %v5852 = vunpack.c.l.b16 %v4187
  %v5853 = vunpack.c.h.b16 %v4187
  %v5854 = vunpack.c.l.b16 %v4188
  %v5855 = vunpack.c.h.b16 %v4188
  %v5856 = vunpack.c.l.b16 %v4189
  %v5857 = vunpack.c.h.b16 %v4189
  %v5858 = vpack.c.b16 %v5548, %v5538
  %v5859 = vpack.c.b16 %v5549, %v5539
  %v5860 = vpack.c.b16 %v5550, %v5540
  %v5861 = vpack.c.b16 %v5551, %v5541
  %v5862 = vpack.c.b16 %v5552, %v5542
  %v5863 = vpack.c.b16 %v5553, %v5543
  %v5864 = vpack.c.b16 %v5554, %v5544
  %v5865 = vpack.c.b16 %v5555, %v5545
  %v5866 = vpack.c.b16 %v5556, %v5546
  %v5867 = vpack.c.b16 %v5557, %v5547
  %v5868 = vpack.c.b16 %v5568, %v5558
  %v5869 = vpack.c.b16 %v5569, %v5559
  %v5870 = vpack.c.b16 %v5570, %v5560
  %v5871 = vpack.c.b16 %v5571, %v5561
  %v5872 = vpack.c.b16 %v5572, %v5562
  %v5873 = vpack.c.b16 %v5573, %v5563
  %v5874 = vpack.c.b16 %v5574, %v5564
  %v5875 = vpack.c.b16 %v5575, %v5565
  %v5876 = vpack.c.b16 %v5576, %v5566
  %v5877 = vpack.c.b16 %v5577, %v5567
  %v5878 = vpack.c.b16 %v5588, %v5578
  %v5879 = vpack.c.b16 %v5589, %v5579
  %v5880 = vpack.c.b16 %v5590, %v5580
  %v5881 = vpack.c.b16 %v5591, %v5581
  %v5882 = vpack.c.b16 %v5592, %v5582
  %v5883 = vpack.c.b16 %v5593, %v5583
  %v5884 = vpack.c.b16 %v5594, %v5584
  %v5885 = vpack.c.b16 %v5595, %v5585
  %v5886 = vpack.c.b16 %v5596, %v5586
  %v5887 = vpack.c.b16 %v5597, %v5587
  %v5888 = vpack.c.b16 %v5608, %v5598
  %v5889 = vpack.c.b16 %v5609, %v5599
  %v5890 = vpack.c.b16 %v5610, %v5600
  %v5891 = vpack.c.b16 %v5611, %v5601
  %v5892 = vpack.c.b16 %v5612, %v5602
  %v5893 = vpack.c.b16 %v5613, %v5603
  %v5894 = vpack.c.b16 %v5614, %v5604
  %v5895 = vpack.c.b16 %v5615, %v5605
  %v5896 = vpack.c.b16 %v5616, %v5606
  %v5897 = vpack.c.b16 %v5617, %v5607
  %v5898 = vpack.c.b16 %v5628, %v5618
  %v5899 = vpack.c.b16 %v5629, %v5619
  %v5900 = vpack.c.b16 %v5630, %v5620
  %v5901 = vpack.c.b16 %v5631, %v5621
  %v5902 = vpack.c.b16 %v5632, %v5622
  %v5903 = vpack.c.b16 %v5633, %v5623
  %v5904 = vpack.c.b16 %v5634, %v5624
  %v5905 = vpack.c.b16 %v5635, %v5625
  %v5906 = vpack.c.b16 %v5636, %v5626
  %v5907 = vpack.c.b16 %v5637, %v5627
  %v5908 = vpack.c.b16 %v5648, %v5638
  %v5909 = vpack.c.b16 %v5649, %v5639
  %v5910 = vpack.c.b16 %v5650, %v5640
  %v5911 = vpack.c.b16 %v5651, %v5641
  %v5912 = vpack.c.b16 %v5652, %v5642
  %v5913 = vpack.c.b16 %v5653, %v5643
  %v5914 = vpack.c.b16 %v5654, %v5644
  %v5915 = vpack.c.b16 %v5655, %v5645
  %v5916 = vpack.c.b16 %v5656, %v5646
  %v5917 = vpack.c.b16 %v5657, %v5647
  %v5918 = vpack.c.b16 %v5668, %v5658
  %v5919 = vpack.c.b16 %v5669, %v5659
  %v5920 = vpack.c.b16 %v5670, %v5660
  %v5921 = vpack.c.b16 %v5671, %v5661
  %v5922 = vpack.c.b16 %v5672, %v5662
  %v5923 = vpack.c.b16 %v5673, %v5663
  %v5924 = vpack.c.b16 %v5674, %v5664
  %v5925 = vpack.c.b16 %v5675, %v5665
  %v5926 = vpack.c.b16 %v5676, %v5666
  %v5927 = vpack.c.b16 %v5677, %v5667
  %v5928 = vpack.c.b16 %v5688, %v5678
  %v5929 = vpack.c.b16 %v5689, %v5679
  %v5930 = vpack.c.b16 %v5690, %v5680
  %v5931 = vpack.c.b16 %v5691, %v5681
  %v5932 = vpack.c.b16 %v5692, %v5682
  %v5933 = vpack.c.b16 %v5693, %v5683
  %v5934 = vpack.c.b16 %v5694, %v5684
  %v5935 = vpack.c.b16 %v5695, %v5685
  %v5936 = vpack.c.b16 %v5696, %v5686
  %v5937 = vpack.c.b16 %v5697, %v5687
  %v5938 = vpack.c.b16 %v5708, %v5698
  %v5939 = vpack.c.b16 %v5709, %v5699
  %v5940 = vpack.c.b16 %v5710, %v5700
  %v5941 = vpack.c.b16 %v5711, %v5701
  %v5942 = vpack.c.b16 %v5712, %v5702
  %v5943 = vpack.c.b16 %v5713, %v5703
  %v5944 = vpack.c.b16 %v5714, %v5704
  %v5945 = vpack.c.b16 %v5715, %v5705
  %v5946 = vpack.c.b16 %v5716, %v5706
  %v5947 = vpack.c.b16 %v5717, %v5707
  %v5948 = vpack.c.b16 %v5728, %v5718
  %v5949 = vpack.c.b16 %v5729, %v5719
  %v5950 = vpack.c.b16 %v5730, %v5720
  %v5951 = vpack.c.b16 %v5731, %v5721
  %v5952 = vpack.c.b16 %v5732, %v5722
  %v5953 = vpack.c.b16 %v5733, %v5723
  %v5954 = vpack.c.b16 %v5734, %v5724
  %v5955 = vpack.c.b16 %v5735, %v5725
  %v5956 = vpack.c.b16 %v5736, %v5726
  %v5957 = vpack.c.b16 %v5737, %v5727
  %v5958 = vpack.c.b16 %v5748, %v5738
  %v5959 = vpack.c.b16 %v5749, %v5739
  %v5960 = vpack.c.b16 %v5750, %v5740
  %v5961 = vpack.c.b16 %v5751, %v5741
  %v5962 = vpack.c.b16 %v5752, %v5742
  %v5963 = vpack.c.b16 %v5753, %v5743
  %v5964 = vpack.c.b16 %v5754, %v5744
  %v5965 = vpack.c.b16 %v5755, %v5745
  %v5966 = vpack.c.b16 %v5756, %v5746
  %v5967 = vpack.c.b16 %v5757, %v5747
  %v5968 = vpack.c.b16 %v5768, %v5758
  %v5969 = vpack.c.b16 %v5769, %v5759
  %v5970 = vpack.c.b16 %v5770, %v5760
  %v5971 = vpack.c.b16 %v5771, %v5761
  %v5972 = vpack.c.b16 %v5772, %v5762
  %v5973 = vpack.c.b16 %v5773, %v5763
  %v5974 = vpack.c.b16 %v5774, %v5764
  %v5975 = vpack.c.b16 %v5775, %v5765
  %v5976 = vpack.c.b16 %v5776, %v5766
  %v5977 = vpack.c.b16 %v5777, %v5767
  %v5978 = vpack.c.b16 %v5788, %v5778
  %v5979 = vpack.c.b16 %v5789, %v5779
  %v5980 = vpack.c.b16 %v5790, %v5780
  %v5981 = vpack.c.b16 %v5791, %v5781
  %v5982 = vpack.c.b16 %v5792, %v5782
  %v5983 = vpack.c.b16 %v5793, %v5783
  %v5984 = vpack.c.b16 %v5794, %v5784
  %v5985 = vpack.c.b16 %v5795, %v5785
  %v5986 = vpack.c.b16 %v5796, %v5786
  %v5987 = vpack.c.b16 %v5797, %v5787
  %v5988 = vpack.c.b16 %v5808, %v5798
  %v5989 = vpack.c.b16 %v5809, %v5799
  %v5990 = vpack.c.b16 %v5810, %v5800
  %v5991 = vpack.c.b16 %v5811, %v5801
  %v5992 = vpack.c.b16 %v5812, %v5802
  %v5993 = vpack.c.b16 %v5813, %v5803
  %v5994 = vpack.c.b16 %v5814, %v5804
  %v5995 = vpack.c.b16 %v5815, %v5805
  %v5996 = vpack.c.b16 %v5816, %v5806
  %v5997 = vpack.c.b16 %v5817, %v5807
  %v5998 = vpack.c.b16 %v5828, %v5818
  %v5999 = vpack.c.b16 %v5829, %v5819
  %v6000 = vpack.c.b16 %v5830, %v5820
  %v6001 = vpack.c.b16 %v5831, %v5821
  %v6002 = vpack.c.b16 %v5832, %v5822
  %v6003 = vpack.c.b16 %v5833, %v5823
  %v6004 = vpack.c.b16 %v5834, %v5824
  %v6005 = vpack.c.b16 %v5835, %v5825
  %v6006 = vpack.c.b16 %v5836, %v5826
  %v6007 = vpack.c.b16 %v5837, %v5827
  %v6008 = vpack.c.b16 %v5848, %v5838
  %v6009 = vpack.c.b16 %v5849, %v5839
  %v6010 = vpack.c.b16 %v5850, %v5840
  %v6011 = vpack.c.b16 %v5851, %v5841
  %v6012 = vpack.c.b16 %v5852, %v5842
  %v6013 = vpack.c.b16 %v5853, %v5843
  %v6014 = vpack.c.b16 %v5854, %v5844
  %v6015 = vpack.c.b16 %v5855, %v5845
  %v6016 = vpack.c.b16 %v5856, %v5846
  %v6017 = vpack.c.b16 %v5857, %v5847
  %6178 = vmatprep.subr.bf16.mxu0 %v4448
  %6179 = vmatpush1.bf16.msra.mxu0 %v4447
  %6180 = vmatprep.subr.bf16.mxu0 %v4450
  %6181 = vmatpush1.bf16.msra.mxu0 %v4449
  %6182 = vmatprep.subr.bf16.mxu0 %v4452
  %6183 = vmatpush1.bf16.msra.mxu0 %v4451
  %6184 = vmatprep.subr.bf16.mxu0 %v4454
  %6185 = vmatpush1.bf16.msra.mxu0 %v4453
  %6186 = vmatprep.subr.bf16.mxu0 %v4456
  %6187 = vmatpush1.bf16.msra.mxu0 %v4455
  %6188 = vmatprep.subr.bf16.mxu0 %v4458
  %6189 = vmatpush1.bf16.msra.mxu0 %v4457
  %6190 = vmatprep.subr.bf16.mxu0 %v4460
  %6191 = vmatpush1.bf16.msra.mxu0 %v4459
  %6192 = vmatprep.subr.bf16.mxu0 %v4462
  %6193 = vmatpush1.bf16.msra.mxu0 %v4461
  %6194 = vmatprep.subr.bf16.mxu0 %v4464
  %6195 = vmatpush1.bf16.msra.mxu0 %v4463
  %6196 = vmatprep.subr.bf16.mxu0 %v4466
  %6197 = vmatpush1.bf16.msra.mxu0 %v4465
  %6198 = vmatprep.subr.bf16.mxu0 %v4468
  %6199 = vmatpush1.bf16.msra.mxu0 %v4467
  %6200 = vmatprep.subr.bf16.mxu0 %v4470
  %6201 = vmatpush1.bf16.msra.mxu0 %v4469
  %6202 = vmatprep.subr.bf16.mxu0 %v4472
  %6203 = vmatpush1.bf16.msra.mxu0 %v4471
  %6204 = vmatprep.subr.bf16.mxu0 %v4474
  %6205 = vmatpush1.bf16.msra.mxu0 %v4473
  %6206 = vmatprep.subr.bf16.mxu0 %v4476
  %6207 = vmatpush1.bf16.msra.mxu0 %v4475
  %6208 = vmatprep.subr.bf16.mxu0 %v4478
  %6209 = vmatpush1.bf16.msra.mxu0 %v4477
  %6210 = vmatprep.mubr.bf16.mxu0 %v5859
  %6211 = vmatmul.mubr.bf16.gmra.mrb[0].mxu0 %v5858
  %v6212 = vpop.f32.mrb[0].mxu0
  %v6213 = vadd.f32 0.0, %v6212
  %v6214 = vpop.f32.mrb[0].mxu0
  %v6215 = vadd.f32 0.0, %v6214
  %v6216 = vpop.f32.mrb[0].mxu0
  %v6217 = vadd.f32 0.0, %v6216
  %v6218 = vpop.f32.mrb[0].mxu0
  %v6219 = vadd.f32 0.0, %v6218
  %6220 = vmatprep.mubr.bf16.mxu0 %v5869
  %6221 = vmatmul.mubr.bf16.gmra.mrb[0].mxu0 %v5868
  %v6222 = vpop.f32.mrb[0].mxu0
  %v6223 = vadd.f32 0.0, %v6222
  %v6224 = vpop.f32.mrb[0].mxu0
  %v6225 = vadd.f32 0.0, %v6224
  %v6226 = vpop.f32.mrb[0].mxu0
  %v6227 = vadd.f32 0.0, %v6226
  %v6228 = vpop.f32.mrb[0].mxu0
  %v6229 = vadd.f32 0.0, %v6228
  %6230 = vmatprep.mubr.bf16.mxu0 %v5879
  %6231 = vmatmul.mubr.bf16.gmra.mrb[0].mxu0 %v5878
  %v6232 = vpop.f32.mrb[0].mxu0
  %v6233 = vadd.f32 0.0, %v6232
  %v6234 = vpop.f32.mrb[0].mxu0
  %v6235 = vadd.f32 0.0, %v6234
  %v6236 = vpop.f32.mrb[0].mxu0
  %v6237 = vadd.f32 0.0, %v6236
  %v6238 = vpop.f32.mrb[0].mxu0
  %v6239 = vadd.f32 0.0, %v6238
  %6240 = vmatprep.mubr.bf16.mxu0 %v5889
  %6241 = vmatmul.mubr.bf16.gmra.mrb[0].mxu0 %v5888
  %v6242 = vpop.f32.mrb[0].mxu0
  %v6243 = vadd.f32 0.0, %v6242
  %v6244 = vpop.f32.mrb[0].mxu0
  %v6245 = vadd.f32 0.0, %v6244
  %v6246 = vpop.f32.mrb[0].mxu0
  %v6247 = vadd.f32 0.0, %v6246
  %v6248 = vpop.f32.mrb[0].mxu0
  %v6249 = vadd.f32 0.0, %v6248
  %6250 = vmatprep.mubr.bf16.mxu0 %v5899
  %6251 = vmatmul.mubr.bf16.gmra.mrb[0].mxu0 %v5898
  %v6252 = vpop.f32.mrb[0].mxu0
  %v6253 = vadd.f32 0.0, %v6252
  %v6254 = vpop.f32.mrb[0].mxu0
  %v6255 = vadd.f32 0.0, %v6254
  %v6256 = vpop.f32.mrb[0].mxu0
  %v6257 = vadd.f32 0.0, %v6256
  %v6258 = vpop.f32.mrb[0].mxu0
  %v6259 = vadd.f32 0.0, %v6258
  %6260 = vmatprep.mubr.bf16.mxu0 %v5909
  %6261 = vmatmul.mubr.bf16.gmra.mrb[0].mxu0 %v5908
  %v6262 = vpop.f32.mrb[0].mxu0
  %v6263 = vadd.f32 0.0, %v6262
  %v6264 = vpop.f32.mrb[0].mxu0
  %v6265 = vadd.f32 0.0, %v6264
  %v6266 = vpop.f32.mrb[0].mxu0
  %v6267 = vadd.f32 0.0, %v6266
  %v6268 = vpop.f32.mrb[0].mxu0
  %v6269 = vadd.f32 0.0, %v6268
  %6270 = vmatprep.mubr.bf16.mxu0 %v5919
  %6271 = vmatmul.mubr.bf16.gmra.mrb[0].mxu0 %v5918
  %v6272 = vpop.f32.mrb[0].mxu0
  %v6273 = vadd.f32 0.0, %v6272
  %v6274 = vpop.f32.mrb[0].mxu0
  %v6275 = vadd.f32 0.0, %v6274
  %v6276 = vpop.f32.mrb[0].mxu0
  %v6277 = vadd.f32 0.0, %v6276
  %v6278 = vpop.f32.mrb[0].mxu0
  %v6279 = vadd.f32 0.0, %v6278
  %6280 = vmatprep.mubr.bf16.mxu0 %v5929
  %6281 = vmatmul.mubr.bf16.gmra.mrb[0].mxu0 %v5928
  %v6282 = vpop.f32.mrb[0].mxu0
  %v6283 = vadd.f32 0.0, %v6282
  %v6284 = vpop.f32.mrb[0].mxu0
  %v6285 = vadd.f32 0.0, %v6284
  %v6286 = vpop.f32.mrb[0].mxu0
  %v6287 = vadd.f32 0.0, %v6286
  %v6288 = vpop.f32.mrb[0].mxu0
  %v6289 = vadd.f32 0.0, %v6288
  %6290 = vmatprep.mubr.bf16.mxu0 %v5939
  %6291 = vmatmul.mubr.bf16.gmra.mrb[0].mxu0 %v5938
  %v6292 = vpop.f32.mrb[0].mxu0
  %v6293 = vadd.f32 0.0, %v6292
  %v6294 = vpop.f32.mrb[0].mxu0
  %v6295 = vadd.f32 0.0, %v6294
  %v6296 = vpop.f32.mrb[0].mxu0
  %v6297 = vadd.f32 0.0, %v6296
  %v6298 = vpop.f32.mrb[0].mxu0
  %v6299 = vadd.f32 0.0, %v6298
  %6300 = vmatprep.mubr.bf16.mxu0 %v5949
  %6301 = vmatmul.mubr.bf16.gmra.mrb[0].mxu0 %v5948
  %v6302 = vpop.f32.mrb[0].mxu0
  %v6303 = vadd.f32 0.0, %v6302
  %v6304 = vpop.f32.mrb[0].mxu0
  %v6305 = vadd.f32 0.0, %v6304
  %v6306 = vpop.f32.mrb[0].mxu0
  %v6307 = vadd.f32 0.0, %v6306
  %v6308 = vpop.f32.mrb[0].mxu0
  %v6309 = vadd.f32 0.0, %v6308
  %6310 = vmatprep.mubr.bf16.mxu0 %v5959
  %6311 = vmatmul.mubr.bf16.gmra.mrb[0].mxu0 %v5958
  %v6312 = vpop.f32.mrb[0].mxu0
  %v6313 = vadd.f32 0.0, %v6312
  %v6314 = vpop.f32.mrb[0].mxu0
  %v6315 = vadd.f32 0.0, %v6314
  %v6316 = vpop.f32.mrb[0].mxu0
  %v6317 = vadd.f32 0.0, %v6316
  %v6318 = vpop.f32.mrb[0].mxu0
  %v6319 = vadd.f32 0.0, %v6318
  %6320 = vmatprep.mubr.bf16.mxu0 %v5969
  %6321 = vmatmul.mubr.bf16.gmra.mrb[0].mxu0 %v5968
  %v6322 = vpop.f32.mrb[0].mxu0
  %v6323 = vadd.f32 0.0, %v6322
  %v6324 = vpop.f32.mrb[0].mxu0
  %v6325 = vadd.f32 0.0, %v6324
  %v6326 = vpop.f32.mrb[0].mxu0
  %v6327 = vadd.f32 0.0, %v6326
  %v6328 = vpop.f32.mrb[0].mxu0
  %v6329 = vadd.f32 0.0, %v6328
  %6330 = vmatprep.mubr.bf16.mxu0 %v5979
  %6331 = vmatmul.mubr.bf16.gmra.mrb[0].mxu0 %v5978
  %v6332 = vpop.f32.mrb[0].mxu0
  %v6333 = vadd.f32 0.0, %v6332
  %v6334 = vpop.f32.mrb[0].mxu0
  %v6335 = vadd.f32 0.0, %v6334
  %v6336 = vpop.f32.mrb[0].mxu0
  %v6337 = vadd.f32 0.0, %v6336
  %v6338 = vpop.f32.mrb[0].mxu0
  %v6339 = vadd.f32 0.0, %v6338
  %6340 = vmatprep.mubr.bf16.mxu0 %v5989
  %6341 = vmatmul.mubr.bf16.gmra.mrb[0].mxu0 %v5988
  %v6342 = vpop.f32.mrb[0].mxu0
  %v6343 = vadd.f32 0.0, %v6342
  %v6344 = vpop.f32.mrb[0].mxu0
  %v6345 = vadd.f32 0.0, %v6344
  %v6346 = vpop.f32.mrb[0].mxu0
  %v6347 = vadd.f32 0.0, %v6346
  %v6348 = vpop.f32.mrb[0].mxu0
  %v6349 = vadd.f32 0.0, %v6348
  %6350 = vmatprep.mubr.bf16.mxu0 %v5999
  %6351 = vmatmul.mubr.bf16.gmra.mrb[0].mxu0 %v5998
  %v6352 = vpop.f32.mrb[0].mxu0
  %v6353 = vadd.f32 0.0, %v6352
  %v6354 = vpop.f32.mrb[0].mxu0
  %v6355 = vadd.f32 0.0, %v6354
  %v6356 = vpop.f32.mrb[0].mxu0
  %v6357 = vadd.f32 0.0, %v6356
  %v6358 = vpop.f32.mrb[0].mxu0
  %v6359 = vadd.f32 0.0, %v6358
  %6360 = vmatprep.mubr.bf16.mxu0 %v6009
  %6361 = vmatmul.mubr.bf16.gmra.mrb[0].mxu0 %v6008
  %v6362 = vpop.f32.mrb[0].mxu0
  %v6363 = vadd.f32 0.0, %v6362
  %v6364 = vpop.f32.mrb[0].mxu0
  %v6365 = vadd.f32 0.0, %v6364
  %v6366 = vpop.f32.mrb[0].mxu0
  %v6367 = vadd.f32 0.0, %v6366
  %v6368 = vpop.f32.mrb[0].mxu0
  %v6369 = vadd.f32 0.0, %v6368
  %6370 = vdwg.mxu0
  %6371 = vmatprep.subr.bf16.mxu0 %v4737
  %6372 = vmatpush1.bf16.msra.mxu0 %v4736
  %6373 = vmatprep.subr.bf16.mxu0 %v4739
  %6374 = vmatpush1.bf16.msra.mxu0 %v4738
  %6375 = vmatprep.subr.bf16.mxu0 %v4741
  %6376 = vmatpush1.bf16.msra.mxu0 %v4740
  %6377 = vmatprep.subr.bf16.mxu0 %v4743
  %6378 = vmatpush1.bf16.msra.mxu0 %v4742
  %6379 = vmatprep.subr.bf16.mxu0 %v4745
  %6380 = vmatpush1.bf16.msra.mxu0 %v4744
  %6381 = vmatprep.subr.bf16.mxu0 %v4747
  %6382 = vmatpush1.bf16.msra.mxu0 %v4746
  %6383 = vmatprep.subr.bf16.mxu0 %v4749
  %6384 = vmatpush1.bf16.msra.mxu0 %v4748
  %6385 = vmatprep.subr.bf16.mxu0 %v4751
  %6386 = vmatpush1.bf16.msra.mxu0 %v4750
  %6387 = vmatprep.subr.bf16.mxu0 %v4753
  %6388 = vmatpush1.bf16.msra.mxu0 %v4752
  %6389 = vmatprep.subr.bf16.mxu0 %v4755
  %6390 = vmatpush1.bf16.msra.mxu0 %v4754
  %6391 = vmatprep.subr.bf16.mxu0 %v4757
  %6392 = vmatpush1.bf16.msra.mxu0 %v4756
  %6393 = vmatprep.subr.bf16.mxu0 %v4759
  %6394 = vmatpush1.bf16.msra.mxu0 %v4758
  %6395 = vmatprep.subr.bf16.mxu0 %v4761
  %6396 = vmatpush1.bf16.msra.mxu0 %v4760
  %6397 = vmatprep.subr.bf16.mxu0 %v4763
  %6398 = vmatpush1.bf16.msra.mxu0 %v4762
  %6399 = vmatprep.subr.bf16.mxu0 %v4765
  %6400 = vmatpush1.bf16.msra.mxu0 %v4764
  %6401 = vmatprep.subr.bf16.mxu0 %v4767
  %6402 = vmatpush1.bf16.msra.mxu0 %v4766
  %6403 = vmatprep.mubr.bf16.mxu0 %v5861
  %6404 = vmatmul.mubr.bf16.gmra.mrb[0].mxu0 %v5860
  %v6405 = vpop.f32.mrb[0].mxu0
  %v6406 = vadd.f32 %v6213, %v6405
  %v6407 = vpop.f32.mrb[0].mxu0
  %v6408 = vadd.f32 %v6215, %v6407
  %v6409 = vpop.f32.mrb[0].mxu0
  %v6410 = vadd.f32 %v6217, %v6409
  %v6411 = vpop.f32.mrb[0].mxu0
  %v6412 = vadd.f32 %v6219, %v6411
  %6413 = vmatprep.mubr.bf16.mxu0 %v5871
  %6414 = vmatmul.mubr.bf16.gmra.mrb[0].mxu0 %v5870
  %v6415 = vpop.f32.mrb[0].mxu0
  %v6416 = vadd.f32 %v6223, %v6415
  %v6417 = vpop.f32.mrb[0].mxu0
  %v6418 = vadd.f32 %v6225, %v6417
  %v6419 = vpop.f32.mrb[0].mxu0
  %v6420 = vadd.f32 %v6227, %v6419
  %v6421 = vpop.f32.mrb[0].mxu0
  %v6422 = vadd.f32 %v6229, %v6421
  %6423 = vmatprep.mubr.bf16.mxu0 %v5881
  %6424 = vmatmul.mubr.bf16.gmra.mrb[0].mxu0 %v5880
  %v6425 = vpop.f32.mrb[0].mxu0
  %v6426 = vadd.f32 %v6233, %v6425
  %v6427 = vpop.f32.mrb[0].mxu0
  %v6428 = vadd.f32 %v6235, %v6427
  %v6429 = vpop.f32.mrb[0].mxu0
  %v6430 = vadd.f32 %v6237, %v6429
  %v6431 = vpop.f32.mrb[0].mxu0
  %v6432 = vadd.f32 %v6239, %v6431
  %6433 = vmatprep.mubr.bf16.mxu0 %v5891
  %6434 = vmatmul.mubr.bf16.gmra.mrb[0].mxu0 %v5890
  %v6435 = vpop.f32.mrb[0].mxu0
  %v6436 = vadd.f32 %v6243, %v6435
  %v6437 = vpop.f32.mrb[0].mxu0
  %v6438 = vadd.f32 %v6245, %v6437
  %v6439 = vpop.f32.mrb[0].mxu0
  %v6440 = vadd.f32 %v6247, %v6439
  %v6441 = vpop.f32.mrb[0].mxu0
  %v6442 = vadd.f32 %v6249, %v6441
  %6443 = vmatprep.mubr.bf16.mxu0 %v5901
  %6444 = vmatmul.mubr.bf16.gmra.mrb[0].mxu0 %v5900
  %v6445 = vpop.f32.mrb[0].mxu0
  %v6446 = vadd.f32 %v6253, %v6445
  %v6447 = vpop.f32.mrb[0].mxu0
  %v6448 = vadd.f32 %v6255, %v6447
  %v6449 = vpop.f32.mrb[0].mxu0
  %v6450 = vadd.f32 %v6257, %v6449
  %v6451 = vpop.f32.mrb[0].mxu0
  %v6452 = vadd.f32 %v6259, %v6451
  %6453 = vmatprep.mubr.bf16.mxu0 %v5911
  %6454 = vmatmul.mubr.bf16.gmra.mrb[0].mxu0 %v5910
  %v6455 = vpop.f32.mrb[0].mxu0
  %v6456 = vadd.f32 %v6263, %v6455
  %v6457 = vpop.f32.mrb[0].mxu0
  %v6458 = vadd.f32 %v6265, %v6457
  %v6459 = vpop.f32.mrb[0].mxu0
  %v6460 = vadd.f32 %v6267, %v6459
  %v6461 = vpop.f32.mrb[0].mxu0
  %v6462 = vadd.f32 %v6269, %v6461
  %6463 = vmatprep.mubr.bf16.mxu0 %v5921
  %6464 = vmatmul.mubr.bf16.gmra.mrb[0].mxu0 %v5920
  %v6465 = vpop.f32.mrb[0].mxu0
  %v6466 = vadd.f32 %v6273, %v6465
  %v6467 = vpop.f32.mrb[0].mxu0
  %v6468 = vadd.f32 %v6275, %v6467
  %v6469 = vpop.f32.mrb[0].mxu0
  %v6470 = vadd.f32 %v6277, %v6469
  %v6471 = vpop.f32.mrb[0].mxu0
  %v6472 = vadd.f32 %v6279, %v6471
  %6473 = vmatprep.mubr.bf16.mxu0 %v5931
  %6474 = vmatmul.mubr.bf16.gmra.mrb[0].mxu0 %v5930
  %v6475 = vpop.f32.mrb[0].mxu0
  %v6476 = vadd.f32 %v6283, %v6475
  %v6477 = vpop.f32.mrb[0].mxu0
  %v6478 = vadd.f32 %v6285, %v6477
  %v6479 = vpop.f32.mrb[0].mxu0
  %v6480 = vadd.f32 %v6287, %v6479
  %v6481 = vpop.f32.mrb[0].mxu0
  %v6482 = vadd.f32 %v6289, %v6481
  %6483 = vmatprep.mubr.bf16.mxu0 %v5941
  %6484 = vmatmul.mubr.bf16.gmra.mrb[0].mxu0 %v5940
  %v6485 = vpop.f32.mrb[0].mxu0
  %v6486 = vadd.f32 %v6293, %v6485
  %v6487 = vpop.f32.mrb[0].mxu0
  %v6488 = vadd.f32 %v6295, %v6487
  %v6489 = vpop.f32.mrb[0].mxu0
  %v6490 = vadd.f32 %v6297, %v6489
  %v6491 = vpop.f32.mrb[0].mxu0
  %v6492 = vadd.f32 %v6299, %v6491
  %6493 = vmatprep.mubr.bf16.mxu0 %v5951
  %6494 = vmatmul.mubr.bf16.gmra.mrb[0].mxu0 %v5950
  %v6495 = vpop.f32.mrb[0].mxu0
  %v6496 = vadd.f32 %v6303, %v6495
  %v6497 = vpop.f32.mrb[0].mxu0
  %v6498 = vadd.f32 %v6305, %v6497
  %v6499 = vpop.f32.mrb[0].mxu0
  %v6500 = vadd.f32 %v6307, %v6499
  %v6501 = vpop.f32.mrb[0].mxu0
  %v6502 = vadd.f32 %v6309, %v6501
  %6503 = vmatprep.mubr.bf16.mxu0 %v5961
  %6504 = vmatmul.mubr.bf16.gmra.mrb[0].mxu0 %v5960
  %v6505 = vpop.f32.mrb[0].mxu0
  %v6506 = vadd.f32 %v6313, %v6505
  %v6507 = vpop.f32.mrb[0].mxu0
  %v6508 = vadd.f32 %v6315, %v6507
  %v6509 = vpop.f32.mrb[0].mxu0
  %v6510 = vadd.f32 %v6317, %v6509
  %v6511 = vpop.f32.mrb[0].mxu0
  %v6512 = vadd.f32 %v6319, %v6511
  %6513 = vmatprep.mubr.bf16.mxu0 %v5971
  %6514 = vmatmul.mubr.bf16.gmra.mrb[0].mxu0 %v5970
  %v6515 = vpop.f32.mrb[0].mxu0
  %v6516 = vadd.f32 %v6323, %v6515
  %v6517 = vpop.f32.mrb[0].mxu0
  %v6518 = vadd.f32 %v6325, %v6517
  %v6519 = vpop.f32.mrb[0].mxu0
  %v6520 = vadd.f32 %v6327, %v6519
  %v6521 = vpop.f32.mrb[0].mxu0
  %v6522 = vadd.f32 %v6329, %v6521
  %6523 = vmatprep.mubr.bf16.mxu0 %v5981
  %6524 = vmatmul.mubr.bf16.gmra.mrb[0].mxu0 %v5980
  %v6525 = vpop.f32.mrb[0].mxu0
  %v6526 = vadd.f32 %v6333, %v6525
  %v6527 = vpop.f32.mrb[0].mxu0
  %v6528 = vadd.f32 %v6335, %v6527
  %v6529 = vpop.f32.mrb[0].mxu0
  %v6530 = vadd.f32 %v6337, %v6529
  %v6531 = vpop.f32.mrb[0].mxu0
  %v6532 = vadd.f32 %v6339, %v6531
  %6533 = vmatprep.mubr.bf16.mxu0 %v5991
  %6534 = vmatmul.mubr.bf16.gmra.mrb[0].mxu0 %v5990
  %v6535 = vpop.f32.mrb[0].mxu0
  %v6536 = vadd.f32 %v6343, %v6535
  %v6537 = vpop.f32.mrb[0].mxu0
  %v6538 = vadd.f32 %v6345, %v6537
  %v6539 = vpop.f32.mrb[0].mxu0
  %v6540 = vadd.f32 %v6347, %v6539
  %v6541 = vpop.f32.mrb[0].mxu0
  %v6542 = vadd.f32 %v6349, %v6541
  %6543 = vmatprep.mubr.bf16.mxu0 %v6001
  %6544 = vmatmul.mubr.bf16.gmra.mrb[0].mxu0 %v6000
  %v6545 = vpop.f32.mrb[0].mxu0
  %v6546 = vadd.f32 %v6353, %v6545
  %v6547 = vpop.f32.mrb[0].mxu0
  %v6548 = vadd.f32 %v6355, %v6547
  %v6549 = vpop.f32.mrb[0].mxu0
  %v6550 = vadd.f32 %v6357, %v6549
  %v6551 = vpop.f32.mrb[0].mxu0
  %v6552 = vadd.f32 %v6359, %v6551
  %6553 = vmatprep.mubr.bf16.mxu0 %v6011
  %6554 = vmatmul.mubr.bf16.gmra.mrb[0].mxu0 %v6010
  %v6555 = vpop.f32.mrb[0].mxu0
  %v6556 = vadd.f32 %v6363, %v6555
  %v6557 = vpop.f32.mrb[0].mxu0
  %v6558 = vadd.f32 %v6365, %v6557
  %v6559 = vpop.f32.mrb[0].mxu0
  %v6560 = vadd.f32 %v6367, %v6559
  %v6561 = vpop.f32.mrb[0].mxu0
  %v6562 = vadd.f32 %v6369, %v6561
  %6563 = vdwg.mxu0
  %6564 = vmatprep.subr.bf16.mxu0 %v4769
  %6565 = vmatpush1.bf16.msra.mxu0 %v4768
  %6566 = vmatprep.subr.bf16.mxu0 %v4771
  %6567 = vmatpush1.bf16.msra.mxu0 %v4770
  %6568 = vmatprep.subr.bf16.mxu0 %v4773
  %6569 = vmatpush1.bf16.msra.mxu0 %v4772
  %6570 = vmatprep.subr.bf16.mxu0 %v4775
  %6571 = vmatpush1.bf16.msra.mxu0 %v4774
  %6572 = vmatprep.subr.bf16.mxu0 %v4777
  %6573 = vmatpush1.bf16.msra.mxu0 %v4776
  %6574 = vmatprep.subr.bf16.mxu0 %v4779
  %6575 = vmatpush1.bf16.msra.mxu0 %v4778
  %6576 = vmatprep.subr.bf16.mxu0 %v4781
  %6577 = vmatpush1.bf16.msra.mxu0 %v4780
  %6578 = vmatprep.subr.bf16.mxu0 %v4783
  %6579 = vmatpush1.bf16.msra.mxu0 %v4782
  %6580 = vmatprep.subr.bf16.mxu0 %v4785
  %6581 = vmatpush1.bf16.msra.mxu0 %v4784
  %6582 = vmatprep.subr.bf16.mxu0 %v4787
  %6583 = vmatpush1.bf16.msra.mxu0 %v4786
  %6584 = vmatprep.subr.bf16.mxu0 %v4789
  %6585 = vmatpush1.bf16.msra.mxu0 %v4788
  %6586 = vmatprep.subr.bf16.mxu0 %v4791
  %6587 = vmatpush1.bf16.msra.mxu0 %v4790
  %6588 = vmatprep.subr.bf16.mxu0 %v4793
  %6589 = vmatpush1.bf16.msra.mxu0 %v4792
  %6590 = vmatprep.subr.bf16.mxu0 %v4795
  %6591 = vmatpush1.bf16.msra.mxu0 %v4794
  %6592 = vmatprep.subr.bf16.mxu0 %v4797
  %6593 = vmatpush1.bf16.msra.mxu0 %v4796
  %6594 = vmatprep.subr.bf16.mxu0 %v4799
  %6595 = vmatpush1.bf16.msra.mxu0 %v4798
  %6596 = vmatprep.mubr.bf16.mxu0 %v5863
  %6597 = vmatmul.mubr.bf16.gmra.mrb[0].mxu0 %v5862
  %v6598 = vpop.f32.mrb[0].mxu0
  %v6599 = vadd.f32 %v6406, %v6598
  %v6600 = vpop.f32.mrb[0].mxu0
  %v6601 = vadd.f32 %v6408, %v6600
  %v6602 = vpop.f32.mrb[0].mxu0
  %v6603 = vadd.f32 %v6410, %v6602
  %v6604 = vpop.f32.mrb[0].mxu0
  %v6605 = vadd.f32 %v6412, %v6604
  %6606 = vmatprep.mubr.bf16.mxu0 %v5873
  %6607 = vmatmul.mubr.bf16.gmra.mrb[0].mxu0 %v5872
  %v6608 = vpop.f32.mrb[0].mxu0
  %v6609 = vadd.f32 %v6416, %v6608
  %v6610 = vpop.f32.mrb[0].mxu0
  %v6611 = vadd.f32 %v6418, %v6610
  %v6612 = vpop.f32.mrb[0].mxu0
  %v6613 = vadd.f32 %v6420, %v6612
  %v6614 = vpop.f32.mrb[0].mxu0
  %v6615 = vadd.f32 %v6422, %v6614
  %6616 = vmatprep.mubr.bf16.mxu0 %v5883
  %6617 = vmatmul.mubr.bf16.gmra.mrb[0].mxu0 %v5882
  %v6618 = vpop.f32.mrb[0].mxu0
  %v6619 = vadd.f32 %v6426, %v6618
  %v6620 = vpop.f32.mrb[0].mxu0
  %v6621 = vadd.f32 %v6428, %v6620
  %v6622 = vpop.f32.mrb[0].mxu0
  %v6623 = vadd.f32 %v6430, %v6622
  %v6624 = vpop.f32.mrb[0].mxu0
  %v6625 = vadd.f32 %v6432, %v6624
  %6626 = vmatprep.mubr.bf16.mxu0 %v5893
  %6627 = vmatmul.mubr.bf16.gmra.mrb[0].mxu0 %v5892
  %v6628 = vpop.f32.mrb[0].mxu0
  %v6629 = vadd.f32 %v6436, %v6628
  %v6630 = vpop.f32.mrb[0].mxu0
  %v6631 = vadd.f32 %v6438, %v6630
  %v6632 = vpop.f32.mrb[0].mxu0
  %v6633 = vadd.f32 %v6440, %v6632
  %v6634 = vpop.f32.mrb[0].mxu0
  %v6635 = vadd.f32 %v6442, %v6634
  %6636 = vmatprep.mubr.bf16.mxu0 %v5903
  %6637 = vmatmul.mubr.bf16.gmra.mrb[0].mxu0 %v5902
  %v6638 = vpop.f32.mrb[0].mxu0
  %v6639 = vadd.f32 %v6446, %v6638
  %v6640 = vpop.f32.mrb[0].mxu0
  %v6641 = vadd.f32 %v6448, %v6640
  %v6642 = vpop.f32.mrb[0].mxu0
  %v6643 = vadd.f32 %v6450, %v6642
  %v6644 = vpop.f32.mrb[0].mxu0
  %v6645 = vadd.f32 %v6452, %v6644
  %6646 = vmatprep.mubr.bf16.mxu0 %v5913
  %6647 = vmatmul.mubr.bf16.gmra.mrb[0].mxu0 %v5912
  %v6648 = vpop.f32.mrb[0].mxu0
  %v6649 = vadd.f32 %v6456, %v6648
  %v6650 = vpop.f32.mrb[0].mxu0
  %v6651 = vadd.f32 %v6458, %v6650
  %v6652 = vpop.f32.mrb[0].mxu0
  %v6653 = vadd.f32 %v6460, %v6652
  %v6654 = vpop.f32.mrb[0].mxu0
  %v6655 = vadd.f32 %v6462, %v6654
  %6656 = vmatprep.mubr.bf16.mxu0 %v5923
  %6657 = vmatmul.mubr.bf16.gmra.mrb[0].mxu0 %v5922
  %v6658 = vpop.f32.mrb[0].mxu0
  %v6659 = vadd.f32 %v6466, %v6658
  %v6660 = vpop.f32.mrb[0].mxu0
  %v6661 = vadd.f32 %v6468, %v6660
  %v6662 = vpop.f32.mrb[0].mxu0
  %v6663 = vadd.f32 %v6470, %v6662
  %v6664 = vpop.f32.mrb[0].mxu0
  %v6665 = vadd.f32 %v6472, %v6664
  %6666 = vmatprep.mubr.bf16.mxu0 %v5933
  %6667 = vmatmul.mubr.bf16.gmra.mrb[0].mxu0 %v5932
  %v6668 = vpop.f32.mrb[0].mxu0
  %v6669 = vadd.f32 %v6476, %v6668
  %v6670 = vpop.f32.mrb[0].mxu0
  %v6671 = vadd.f32 %v6478, %v6670
  %v6672 = vpop.f32.mrb[0].mxu0
  %v6673 = vadd.f32 %v6480, %v6672
  %v6674 = vpop.f32.mrb[0].mxu0
  %v6675 = vadd.f32 %v6482, %v6674
  %6676 = vmatprep.mubr.bf16.mxu0 %v5943
  %6677 = vmatmul.mubr.bf16.gmra.mrb[0].mxu0 %v5942
  %v6678 = vpop.f32.mrb[0].mxu0
  %v6679 = vadd.f32 %v6486, %v6678
  %v6680 = vpop.f32.mrb[0].mxu0
  %v6681 = vadd.f32 %v6488, %v6680
  %v6682 = vpop.f32.mrb[0].mxu0
  %v6683 = vadd.f32 %v6490, %v6682
  %v6684 = vpop.f32.mrb[0].mxu0
  %v6685 = vadd.f32 %v6492, %v6684
  %6686 = vmatprep.mubr.bf16.mxu0 %v5953
  %6687 = vmatmul.mubr.bf16.gmra.mrb[0].mxu0 %v5952
  %v6688 = vpop.f32.mrb[0].mxu0
  %v6689 = vadd.f32 %v6496, %v6688
  %v6690 = vpop.f32.mrb[0].mxu0
  %v6691 = vadd.f32 %v6498, %v6690
  %v6692 = vpop.f32.mrb[0].mxu0
  %v6693 = vadd.f32 %v6500, %v6692
  %v6694 = vpop.f32.mrb[0].mxu0
  %v6695 = vadd.f32 %v6502, %v6694
  %6696 = vmatprep.mubr.bf16.mxu0 %v5963
  %6697 = vmatmul.mubr.bf16.gmra.mrb[0].mxu0 %v5962
  %v6698 = vpop.f32.mrb[0].mxu0
  %v6699 = vadd.f32 %v6506, %v6698
  %v6700 = vpop.f32.mrb[0].mxu0
  %v6701 = vadd.f32 %v6508, %v6700
  %v6702 = vpop.f32.mrb[0].mxu0
  %v6703 = vadd.f32 %v6510, %v6702
  %v6704 = vpop.f32.mrb[0].mxu0
  %v6705 = vadd.f32 %v6512, %v6704
  %6706 = vmatprep.mubr.bf16.mxu0 %v5973
  %6707 = vmatmul.mubr.bf16.gmra.mrb[0].mxu0 %v5972
  %v6708 = vpop.f32.mrb[0].mxu0
  %v6709 = vadd.f32 %v6516, %v6708
  %v6710 = vpop.f32.mrb[0].mxu0
  %v6711 = vadd.f32 %v6518, %v6710
  %v6712 = vpop.f32.mrb[0].mxu0
  %v6713 = vadd.f32 %v6520, %v6712
  %v6714 = vpop.f32.mrb[0].mxu0
  %v6715 = vadd.f32 %v6522, %v6714
  %6716 = vmatprep.mubr.bf16.mxu0 %v5983
  %6717 = vmatmul.mubr.bf16.gmra.mrb[0].mxu0 %v5982
  %v6718 = vpop.f32.mrb[0].mxu0
  %v6719 = vadd.f32 %v6526, %v6718
  %v6720 = vpop.f32.mrb[0].mxu0
  %v6721 = vadd.f32 %v6528, %v6720
  %v6722 = vpop.f32.mrb[0].mxu0
  %v6723 = vadd.f32 %v6530, %v6722
  %v6724 = vpop.f32.mrb[0].mxu0
  %v6725 = vadd.f32 %v6532, %v6724
  %6726 = vmatprep.mubr.bf16.mxu0 %v5993
  %6727 = vmatmul.mubr.bf16.gmra.mrb[0].mxu0 %v5992
  %v6728 = vpop.f32.mrb[0].mxu0
  %v6729 = vadd.f32 %v6536, %v6728
  %v6730 = vpop.f32.mrb[0].mxu0
  %v6731 = vadd.f32 %v6538, %v6730
  %v6732 = vpop.f32.mrb[0].mxu0
  %v6733 = vadd.f32 %v6540, %v6732
  %v6734 = vpop.f32.mrb[0].mxu0
  %v6735 = vadd.f32 %v6542, %v6734
  %6736 = vmatprep.mubr.bf16.mxu0 %v6003
  %6737 = vmatmul.mubr.bf16.gmra.mrb[0].mxu0 %v6002
  %v6738 = vpop.f32.mrb[0].mxu0
  %v6739 = vadd.f32 %v6546, %v6738
  %v6740 = vpop.f32.mrb[0].mxu0
  %v6741 = vadd.f32 %v6548, %v6740
  %v6742 = vpop.f32.mrb[0].mxu0
  %v6743 = vadd.f32 %v6550, %v6742
  %v6744 = vpop.f32.mrb[0].mxu0
  %v6745 = vadd.f32 %v6552, %v6744
  %6746 = vmatprep.mubr.bf16.mxu0 %v6013
  %6747 = vmatmul.mubr.bf16.gmra.mrb[0].mxu0 %v6012
  %v6748 = vpop.f32.mrb[0].mxu0
  %v6749 = vadd.f32 %v6556, %v6748
  %v6750 = vpop.f32.mrb[0].mxu0
  %v6751 = vadd.f32 %v6558, %v6750
  %v6752 = vpop.f32.mrb[0].mxu0
  %v6753 = vadd.f32 %v6560, %v6752
  %v6754 = vpop.f32.mrb[0].mxu0
  %v6755 = vadd.f32 %v6562, %v6754
  %6756 = vdwg.mxu0
  %6757 = vmatprep.subr.bf16.mxu0 %v5058
  %6758 = vmatpush1.bf16.msra.mxu0 %v5057
  %6759 = vmatprep.subr.bf16.mxu0 %v5060
  %6760 = vmatpush1.bf16.msra.mxu0 %v5059
  %6761 = vmatprep.subr.bf16.mxu0 %v5062
  %6762 = vmatpush1.bf16.msra.mxu0 %v5061
  %6763 = vmatprep.subr.bf16.mxu0 %v5064
  %6764 = vmatpush1.bf16.msra.mxu0 %v5063
  %6765 = vmatprep.subr.bf16.mxu0 %v5066
  %6766 = vmatpush1.bf16.msra.mxu0 %v5065
  %6767 = vmatprep.subr.bf16.mxu0 %v5068
  %6768 = vmatpush1.bf16.msra.mxu0 %v5067
  %6769 = vmatprep.subr.bf16.mxu0 %v5070
  %6770 = vmatpush1.bf16.msra.mxu0 %v5069
  %6771 = vmatprep.subr.bf16.mxu0 %v5072
  %6772 = vmatpush1.bf16.msra.mxu0 %v5071
  %6773 = vmatprep.subr.bf16.mxu0 %v5074
  %6774 = vmatpush1.bf16.msra.mxu0 %v5073
  %6775 = vmatprep.subr.bf16.mxu0 %v5076
  %6776 = vmatpush1.bf16.msra.mxu0 %v5075
  %6777 = vmatprep.subr.bf16.mxu0 %v5078
  %6778 = vmatpush1.bf16.msra.mxu0 %v5077
  %6779 = vmatprep.subr.bf16.mxu0 %v5080
  %6780 = vmatpush1.bf16.msra.mxu0 %v5079
  %6781 = vmatprep.subr.bf16.mxu0 %v5082
  %6782 = vmatpush1.bf16.msra.mxu0 %v5081
  %6783 = vmatprep.subr.bf16.mxu0 %v5084
  %6784 = vmatpush1.bf16.msra.mxu0 %v5083
  %6785 = vmatprep.subr.bf16.mxu0 %v5086
  %6786 = vmatpush1.bf16.msra.mxu0 %v5085
  %6787 = vmatprep.subr.bf16.mxu0 %v5088
  %6788 = vmatpush1.bf16.msra.mxu0 %v5087
  %6789 = vmatprep.mubr.bf16.mxu0 %v5865
  %6790 = vmatmul.mubr.bf16.gmra.mrb[0].mxu0 %v5864
  %v6791 = vpop.f32.mrb[0].mxu0
  %v6792 = vadd.f32 %v6599, %v6791
  %v6793 = vpop.f32.mrb[0].mxu0
  %v6794 = vadd.f32 %v6601, %v6793
  %v6795 = vpop.f32.mrb[0].mxu0
  %v6796 = vadd.f32 %v6603, %v6795
  %v6797 = vpop.f32.mrb[0].mxu0
  %v6798 = vadd.f32 %v6605, %v6797
  %6799 = vmatprep.mubr.bf16.mxu0 %v5875
  %6800 = vmatmul.mubr.bf16.gmra.mrb[0].mxu0 %v5874
  %v6801 = vpop.f32.mrb[0].mxu0
  %v6802 = vadd.f32 %v6609, %v6801
  %v6803 = vpop.f32.mrb[0].mxu0
  %v6804 = vadd.f32 %v6611, %v6803
  %v6805 = vpop.f32.mrb[0].mxu0
  %v6806 = vadd.f32 %v6613, %v6805
  %v6807 = vpop.f32.mrb[0].mxu0
  %v6808 = vadd.f32 %v6615, %v6807
  %6809 = vmatprep.mubr.bf16.mxu0 %v5885
  %6810 = vmatmul.mubr.bf16.gmra.mrb[0].mxu0 %v5884
  %v6811 = vpop.f32.mrb[0].mxu0
  %v6812 = vadd.f32 %v6619, %v6811
  %v6813 = vpop.f32.mrb[0].mxu0
  %v6814 = vadd.f32 %v6621, %v6813
  %v6815 = vpop.f32.mrb[0].mxu0
  %v6816 = vadd.f32 %v6623, %v6815
  %v6817 = vpop.f32.mrb[0].mxu0
  %v6818 = vadd.f32 %v6625, %v6817
  %6819 = vmatprep.mubr.bf16.mxu0 %v5895
  %6820 = vmatmul.mubr.bf16.gmra.mrb[0].mxu0 %v5894
  %v6821 = vpop.f32.mrb[0].mxu0
  %v6822 = vadd.f32 %v6629, %v6821
  %v6823 = vpop.f32.mrb[0].mxu0
  %v6824 = vadd.f32 %v6631, %v6823
  %v6825 = vpop.f32.mrb[0].mxu0
  %v6826 = vadd.f32 %v6633, %v6825
  %v6827 = vpop.f32.mrb[0].mxu0
  %v6828 = vadd.f32 %v6635, %v6827
  %6829 = vmatprep.mubr.bf16.mxu0 %v5905
  %6830 = vmatmul.mubr.bf16.gmra.mrb[0].mxu0 %v5904
  %v6831 = vpop.f32.mrb[0].mxu0
  %v6832 = vadd.f32 %v6639, %v6831
  %v6833 = vpop.f32.mrb[0].mxu0
  %v6834 = vadd.f32 %v6641, %v6833
  %v6835 = vpop.f32.mrb[0].mxu0
  %v6836 = vadd.f32 %v6643, %v6835
  %v6837 = vpop.f32.mrb[0].mxu0
  %v6838 = vadd.f32 %v6645, %v6837
  %6839 = vmatprep.mubr.bf16.mxu0 %v5915
  %6840 = vmatmul.mubr.bf16.gmra.mrb[0].mxu0 %v5914
  %v6841 = vpop.f32.mrb[0].mxu0
  %v6842 = vadd.f32 %v6649, %v6841
  %v6843 = vpop.f32.mrb[0].mxu0
  %v6844 = vadd.f32 %v6651, %v6843
  %v6845 = vpop.f32.mrb[0].mxu0
  %v6846 = vadd.f32 %v6653, %v6845
  %v6847 = vpop.f32.mrb[0].mxu0
  %v6848 = vadd.f32 %v6655, %v6847
  %6849 = vmatprep.mubr.bf16.mxu0 %v5925
  %6850 = vmatmul.mubr.bf16.gmra.mrb[0].mxu0 %v5924
  %v6851 = vpop.f32.mrb[0].mxu0
  %v6852 = vadd.f32 %v6659, %v6851
  %v6853 = vpop.f32.mrb[0].mxu0
  %v6854 = vadd.f32 %v6661, %v6853
  %v6855 = vpop.f32.mrb[0].mxu0
  %v6856 = vadd.f32 %v6663, %v6855
  %v6857 = vpop.f32.mrb[0].mxu0
  %v6858 = vadd.f32 %v6665, %v6857
  %6859 = vmatprep.mubr.bf16.mxu0 %v5935
  %6860 = vmatmul.mubr.bf16.gmra.mrb[0].mxu0 %v5934
  %v6861 = vpop.f32.mrb[0].mxu0
  %v6862 = vadd.f32 %v6669, %v6861
  %v6863 = vpop.f32.mrb[0].mxu0
  %v6864 = vadd.f32 %v6671, %v6863
  %v6865 = vpop.f32.mrb[0].mxu0
  %v6866 = vadd.f32 %v6673, %v6865
  %v6867 = vpop.f32.mrb[0].mxu0
  %v6868 = vadd.f32 %v6675, %v6867
  %6869 = vmatprep.mubr.bf16.mxu0 %v5945
  %6870 = vmatmul.mubr.bf16.gmra.mrb[0].mxu0 %v5944
  %v6871 = vpop.f32.mrb[0].mxu0
  %v6872 = vadd.f32 %v6679, %v6871
  %v6873 = vpop.f32.mrb[0].mxu0
  %v6874 = vadd.f32 %v6681, %v6873
  %v6875 = vpop.f32.mrb[0].mxu0
  %v6876 = vadd.f32 %v6683, %v6875
  %v6877 = vpop.f32.mrb[0].mxu0
  %v6878 = vadd.f32 %v6685, %v6877
  %6879 = vmatprep.mubr.bf16.mxu0 %v5955
  %6880 = vmatmul.mubr.bf16.gmra.mrb[0].mxu0 %v5954
  %v6881 = vpop.f32.mrb[0].mxu0
  %v6882 = vadd.f32 %v6689, %v6881
  %v6883 = vpop.f32.mrb[0].mxu0
  %v6884 = vadd.f32 %v6691, %v6883
  %v6885 = vpop.f32.mrb[0].mxu0
  %v6886 = vadd.f32 %v6693, %v6885
  %v6887 = vpop.f32.mrb[0].mxu0
  %v6888 = vadd.f32 %v6695, %v6887
  %6889 = vmatprep.mubr.bf16.mxu0 %v5965
  %6890 = vmatmul.mubr.bf16.gmra.mrb[0].mxu0 %v5964
  %v6891 = vpop.f32.mrb[0].mxu0
  %v6892 = vadd.f32 %v6699, %v6891
  %v6893 = vpop.f32.mrb[0].mxu0
  %v6894 = vadd.f32 %v6701, %v6893
  %v6895 = vpop.f32.mrb[0].mxu0
  %v6896 = vadd.f32 %v6703, %v6895
  %v6897 = vpop.f32.mrb[0].mxu0
  %v6898 = vadd.f32 %v6705, %v6897
  %6899 = vmatprep.mubr.bf16.mxu0 %v5975
  %6900 = vmatmul.mubr.bf16.gmra.mrb[0].mxu0 %v5974
  %v6901 = vpop.f32.mrb[0].mxu0
  %v6902 = vadd.f32 %v6709, %v6901
  %v6903 = vpop.f32.mrb[0].mxu0
  %v6904 = vadd.f32 %v6711, %v6903
  %v6905 = vpop.f32.mrb[0].mxu0
  %v6906 = vadd.f32 %v6713, %v6905
  %v6907 = vpop.f32.mrb[0].mxu0
  %v6908 = vadd.f32 %v6715, %v6907
  %6909 = vmatprep.mubr.bf16.mxu0 %v5985
  %6910 = vmatmul.mubr.bf16.gmra.mrb[0].mxu0 %v5984
  %v6911 = vpop.f32.mrb[0].mxu0
  %v6912 = vadd.f32 %v6719, %v6911
  %v6913 = vpop.f32.mrb[0].mxu0
  %v6914 = vadd.f32 %v6721, %v6913
  %v6915 = vpop.f32.mrb[0].mxu0
  %v6916 = vadd.f32 %v6723, %v6915
  %v6917 = vpop.f32.mrb[0].mxu0
  %v6918 = vadd.f32 %v6725, %v6917
  %6919 = vmatprep.mubr.bf16.mxu0 %v5995
  %6920 = vmatmul.mubr.bf16.gmra.mrb[0].mxu0 %v5994
  %v6921 = vpop.f32.mrb[0].mxu0
  %v6922 = vadd.f32 %v6729, %v6921
  %v6923 = vpop.f32.mrb[0].mxu0
  %v6924 = vadd.f32 %v6731, %v6923
  %v6925 = vpop.f32.mrb[0].mxu0
  %v6926 = vadd.f32 %v6733, %v6925
  %v6927 = vpop.f32.mrb[0].mxu0
  %v6928 = vadd.f32 %v6735, %v6927
  %6929 = vmatprep.mubr.bf16.mxu0 %v6005
  %6930 = vmatmul.mubr.bf16.gmra.mrb[0].mxu0 %v6004
  %v6931 = vpop.f32.mrb[0].mxu0
  %v6932 = vadd.f32 %v6739, %v6931
  %v6933 = vpop.f32.mrb[0].mxu0
  %v6934 = vadd.f32 %v6741, %v6933
  %v6935 = vpop.f32.mrb[0].mxu0
  %v6936 = vadd.f32 %v6743, %v6935
  %v6937 = vpop.f32.mrb[0].mxu0
  %v6938 = vadd.f32 %v6745, %v6937
  %6939 = vmatprep.mubr.bf16.mxu0 %v6015
  %6940 = vmatmul.mubr.bf16.gmra.mrb[0].mxu0 %v6014
  %v6941 = vpop.f32.mrb[0].mxu0
  %v6942 = vadd.f32 %v6749, %v6941
  %v6943 = vpop.f32.mrb[0].mxu0
  %v6944 = vadd.f32 %v6751, %v6943
  %v6945 = vpop.f32.mrb[0].mxu0
  %v6946 = vadd.f32 %v6753, %v6945
  %v6947 = vpop.f32.mrb[0].mxu0
  %v6948 = vadd.f32 %v6755, %v6947
  %6949 = vdwg.mxu0
  %6950 = vmatprep.subr.bf16.mxu0 %v5347
  %6951 = vmatpush1.bf16.msra.mxu0 %v5346
  %6952 = vmatprep.subr.bf16.mxu0 %v5349
  %6953 = vmatpush1.bf16.msra.mxu0 %v5348
  %6954 = vmatprep.subr.bf16.mxu0 %v5351
  %6955 = vmatpush1.bf16.msra.mxu0 %v5350
  %6956 = vmatprep.subr.bf16.mxu0 %v5353
  %6957 = vmatpush1.bf16.msra.mxu0 %v5352
  %6958 = vmatprep.subr.bf16.mxu0 %v5355
  %6959 = vmatpush1.bf16.msra.mxu0 %v5354
  %6960 = vmatprep.subr.bf16.mxu0 %v5357
  %6961 = vmatpush1.bf16.msra.mxu0 %v5356
  %6962 = vmatprep.subr.bf16.mxu0 %v5359
  %6963 = vmatpush1.bf16.msra.mxu0 %v5358
  %6964 = vmatprep.subr.bf16.mxu0 %v5361
  %6965 = vmatpush1.bf16.msra.mxu0 %v5360
  %6966 = vmatprep.subr.bf16.mxu0 %v5363
  %6967 = vmatpush1.bf16.msra.mxu0 %v5362
  %6968 = vmatprep.subr.bf16.mxu0 %v5365
  %6969 = vmatpush1.bf16.msra.mxu0 %v5364
  %6970 = vmatprep.subr.bf16.mxu0 %v5367
  %6971 = vmatpush1.bf16.msra.mxu0 %v5366
  %6972 = vmatprep.subr.bf16.mxu0 %v5369
  %6973 = vmatpush1.bf16.msra.mxu0 %v5368
  %6974 = vmatprep.subr.bf16.mxu0 %v5371
  %6975 = vmatpush1.bf16.msra.mxu0 %v5370
  %6976 = vmatprep.subr.bf16.mxu0 %v5373
  %6977 = vmatpush1.bf16.msra.mxu0 %v5372
  %6978 = vmatprep.subr.bf16.mxu0 %v5375
  %6979 = vmatpush1.bf16.msra.mxu0 %v5374
  %6980 = vmatprep.subr.bf16.mxu0 %v5377
  %6981 = vmatpush1.bf16.msra.mxu0 %v5376
  %6982 = vmatprep.mubr.bf16.mxu0 %v5867
  %6983 = vmatmul.mubr.bf16.gmra.mrb[0].mxu0 %v5866
  %v6984 = vpop.f32.mrb[0].mxu0
  %v6985 = vadd.f32 %v6792, %v6984
  %v6986 = vpop.f32.mrb[0].mxu0
  %v6987 = vadd.f32 %v6794, %v6986
  %v6988 = vpop.f32.mrb[0].mxu0
  %v6989 = vadd.f32 %v6796, %v6988
  %v6990 = vpop.f32.mrb[0].mxu0
  %v6991 = vadd.f32 %v6798, %v6990
  %6992 = vmatprep.mubr.bf16.mxu0 %v5877
  %6993 = vmatmul.mubr.bf16.gmra.mrb[0].mxu0 %v5876
  %v6994 = vpop.f32.mrb[0].mxu0
  %v6995 = vadd.f32 %v6802, %v6994
  %v6996 = vpop.f32.mrb[0].mxu0
  %v6997 = vadd.f32 %v6804, %v6996
  %v6998 = vpop.f32.mrb[0].mxu0
  %v6999 = vadd.f32 %v6806, %v6998
  %v7000 = vpop.f32.mrb[0].mxu0
  %v7001 = vadd.f32 %v6808, %v7000
  %7002 = vmatprep.mubr.bf16.mxu0 %v5887
  %7003 = vmatmul.mubr.bf16.gmra.mrb[0].mxu0 %v5886
  %v7004 = vpop.f32.mrb[0].mxu0
  %v7005 = vadd.f32 %v6812, %v7004
  %v7006 = vpop.f32.mrb[0].mxu0
  %v7007 = vadd.f32 %v6814, %v7006
  %v7008 = vpop.f32.mrb[0].mxu0
  %v7009 = vadd.f32 %v6816, %v7008
  %v7010 = vpop.f32.mrb[0].mxu0
  %v7011 = vadd.f32 %v6818, %v7010
  %7012 = vmatprep.mubr.bf16.mxu0 %v5897
  %7013 = vmatmul.mubr.bf16.gmra.mrb[0].mxu0 %v5896
  %v7014 = vpop.f32.mrb[0].mxu0
  %v7015 = vadd.f32 %v6822, %v7014
  %v7016 = vpop.f32.mrb[0].mxu0
  %v7017 = vadd.f32 %v6824, %v7016
  %v7018 = vpop.f32.mrb[0].mxu0
  %v7019 = vadd.f32 %v6826, %v7018
  %v7020 = vpop.f32.mrb[0].mxu0
  %v7021 = vadd.f32 %v6828, %v7020
  %7022 = vmatprep.mubr.bf16.mxu0 %v5907
  %7023 = vmatmul.mubr.bf16.gmra.mrb[0].mxu0 %v5906
  %v7024 = vpop.f32.mrb[0].mxu0
  %v7025 = vadd.f32 %v6832, %v7024
  %v7026 = vpop.f32.mrb[0].mxu0
  %v7027 = vadd.f32 %v6834, %v7026
  %v7028 = vpop.f32.mrb[0].mxu0
  %v7029 = vadd.f32 %v6836, %v7028
  %v7030 = vpop.f32.mrb[0].mxu0
  %v7031 = vadd.f32 %v6838, %v7030
  %7032 = vmatprep.mubr.bf16.mxu0 %v5917
  %7033 = vmatmul.mubr.bf16.gmra.mrb[0].mxu0 %v5916
  %v7034 = vpop.f32.mrb[0].mxu0
  %v7035 = vadd.f32 %v6842, %v7034
  %v7036 = vpop.f32.mrb[0].mxu0
  %v7037 = vadd.f32 %v6844, %v7036
  %v7038 = vpop.f32.mrb[0].mxu0
  %v7039 = vadd.f32 %v6846, %v7038
  %v7040 = vpop.f32.mrb[0].mxu0
  %v7041 = vadd.f32 %v6848, %v7040
  %7042 = vmatprep.mubr.bf16.mxu0 %v5927
  %7043 = vmatmul.mubr.bf16.gmra.mrb[0].mxu0 %v5926
  %v7044 = vpop.f32.mrb[0].mxu0
  %v7045 = vadd.f32 %v6852, %v7044
  %v7046 = vpop.f32.mrb[0].mxu0
  %v7047 = vadd.f32 %v6854, %v7046
  %v7048 = vpop.f32.mrb[0].mxu0
  %v7049 = vadd.f32 %v6856, %v7048
  %v7050 = vpop.f32.mrb[0].mxu0
  %v7051 = vadd.f32 %v6858, %v7050
  %7052 = vmatprep.mubr.bf16.mxu0 %v5937
  %7053 = vmatmul.mubr.bf16.gmra.mrb[0].mxu0 %v5936
  %v7054 = vpop.f32.mrb[0].mxu0
  %v7055 = vadd.f32 %v6862, %v7054
  %v7056 = vpop.f32.mrb[0].mxu0
  %v7057 = vadd.f32 %v6864, %v7056
  %v7058 = vpop.f32.mrb[0].mxu0
  %v7059 = vadd.f32 %v6866, %v7058
  %v7060 = vpop.f32.mrb[0].mxu0
  %v7061 = vadd.f32 %v6868, %v7060
  %7062 = vmatprep.mubr.bf16.mxu0 %v5947
  %7063 = vmatmul.mubr.bf16.gmra.mrb[0].mxu0 %v5946
  %v7064 = vpop.f32.mrb[0].mxu0
  %v7065 = vadd.f32 %v6872, %v7064
  %v7066 = vpop.f32.mrb[0].mxu0
  %v7067 = vadd.f32 %v6874, %v7066
  %v7068 = vpop.f32.mrb[0].mxu0
  %v7069 = vadd.f32 %v6876, %v7068
  %v7070 = vpop.f32.mrb[0].mxu0
  %v7071 = vadd.f32 %v6878, %v7070
  %7072 = vmatprep.mubr.bf16.mxu0 %v5957
  %7073 = vmatmul.mubr.bf16.gmra.mrb[0].mxu0 %v5956
  %v7074 = vpop.f32.mrb[0].mxu0
  %v7075 = vadd.f32 %v6882, %v7074
  %v7076 = vpop.f32.mrb[0].mxu0
  %v7077 = vadd.f32 %v6884, %v7076
  %v7078 = vpop.f32.mrb[0].mxu0
  %v7079 = vadd.f32 %v6886, %v7078
  %v7080 = vpop.f32.mrb[0].mxu0
  %v7081 = vadd.f32 %v6888, %v7080
  %7082 = vmatprep.mubr.bf16.mxu0 %v5967
  %7083 = vmatmul.mubr.bf16.gmra.mrb[0].mxu0 %v5966
  %v7084 = vpop.f32.mrb[0].mxu0
  %v7085 = vadd.f32 %v6892, %v7084
  %v7086 = vpop.f32.mrb[0].mxu0
  %v7087 = vadd.f32 %v6894, %v7086
  %v7088 = vpop.f32.mrb[0].mxu0
  %v7089 = vadd.f32 %v6896, %v7088
  %v7090 = vpop.f32.mrb[0].mxu0
  %v7091 = vadd.f32 %v6898, %v7090
  %7092 = vmatprep.mubr.bf16.mxu0 %v5977
  %7093 = vmatmul.mubr.bf16.gmra.mrb[0].mxu0 %v5976
  %v7094 = vpop.f32.mrb[0].mxu0
  %v7095 = vadd.f32 %v6902, %v7094
  %v7096 = vpop.f32.mrb[0].mxu0
  %v7097 = vadd.f32 %v6904, %v7096
  %v7098 = vpop.f32.mrb[0].mxu0
  %v7099 = vadd.f32 %v6906, %v7098
  %v7100 = vpop.f32.mrb[0].mxu0
  %v7101 = vadd.f32 %v6908, %v7100
  %7102 = vmatprep.mubr.bf16.mxu0 %v5987
  %7103 = vmatmul.mubr.bf16.gmra.mrb[0].mxu0 %v5986
  %v7104 = vpop.f32.mrb[0].mxu0
  %v7105 = vadd.f32 %v6912, %v7104
  %v7106 = vpop.f32.mrb[0].mxu0
  %v7107 = vadd.f32 %v6914, %v7106
  %v7108 = vpop.f32.mrb[0].mxu0
  %v7109 = vadd.f32 %v6916, %v7108
  %v7110 = vpop.f32.mrb[0].mxu0
  %v7111 = vadd.f32 %v6918, %v7110
  %7112 = vmatprep.mubr.bf16.mxu0 %v5997
  %7113 = vmatmul.mubr.bf16.gmra.mrb[0].mxu0 %v5996
  %v7114 = vpop.f32.mrb[0].mxu0
  %v7115 = vadd.f32 %v6922, %v7114
  %v7116 = vpop.f32.mrb[0].mxu0
  %v7117 = vadd.f32 %v6924, %v7116
  %v7118 = vpop.f32.mrb[0].mxu0
  %v7119 = vadd.f32 %v6926, %v7118
  %v7120 = vpop.f32.mrb[0].mxu0
  %v7121 = vadd.f32 %v6928, %v7120
  %7122 = vmatprep.mubr.bf16.mxu0 %v6007
  %7123 = vmatmul.mubr.bf16.gmra.mrb[0].mxu0 %v6006
  %v7124 = vpop.f32.mrb[0].mxu0
  %v7125 = vadd.f32 %v6932, %v7124
  %v7126 = vpop.f32.mrb[0].mxu0
  %v7127 = vadd.f32 %v6934, %v7126
  %v7128 = vpop.f32.mrb[0].mxu0
  %v7129 = vadd.f32 %v6936, %v7128
  %v7130 = vpop.f32.mrb[0].mxu0
  %v7131 = vadd.f32 %v6938, %v7130
  %7132 = vmatprep.mubr.bf16.mxu0 %v6017
  %7133 = vmatmul.mubr.bf16.gmra.mrb[0].mxu0 %v6016
  %v7134 = vpop.f32.mrb[0].mxu0
  %v7135 = vadd.f32 %v6942, %v7134
  %v7136 = vpop.f32.mrb[0].mxu0
  %v7137 = vadd.f32 %v6944, %v7136
  %v7138 = vpop.f32.mrb[0].mxu0
  %v7139 = vadd.f32 %v6946, %v7138
  %v7140 = vpop.f32.mrb[0].mxu0
  %v7141 = vadd.f32 %v6948, %v7140
  %7142 = vdwg.mxu0
  %v7143 = vmul.f32 %v6985, %v92
  %v7144 = vmul.f32 %v6987, %v93
  %v7145 = vmul.f32 %v6989, %v92
  %v7146 = vmul.f32 %v6991, %v93
  %v7147 = vmul.f32 %v6995, %v92
  %v7148 = vmul.f32 %v6997, %v93
  %v7149 = vmul.f32 %v6999, %v92
  %v7150 = vmul.f32 %v7001, %v93
  %v7151 = vmul.f32 %v7005, %v92
  %v7152 = vmul.f32 %v7007, %v93
  %v7153 = vmul.f32 %v7009, %v92
  %v7154 = vmul.f32 %v7011, %v93
  %v7155 = vmul.f32 %v7015, %v92
  %v7156 = vmul.f32 %v7017, %v93
  %v7157 = vmul.f32 %v7019, %v92
  %v7158 = vmul.f32 %v7021, %v93
  %v7159 = vmul.f32 %v7025, %v92
  %v7160 = vmul.f32 %v7027, %v93
  %v7161 = vmul.f32 %v7029, %v92
  %v7162 = vmul.f32 %v7031, %v93
  %v7163 = vmul.f32 %v7035, %v92
  %v7164 = vmul.f32 %v7037, %v93
  %v7165 = vmul.f32 %v7039, %v92
  %v7166 = vmul.f32 %v7041, %v93
  %v7167 = vmul.f32 %v7045, %v92
  %v7168 = vmul.f32 %v7047, %v93
  %v7169 = vmul.f32 %v7049, %v92
  %v7170 = vmul.f32 %v7051, %v93
  %v7171 = vmul.f32 %v7055, %v92
  %v7172 = vmul.f32 %v7057, %v93
  %v7173 = vmul.f32 %v7059, %v92
  %v7174 = vmul.f32 %v7061, %v93
  %v7175 = vadd.f32 %v7143, %v7144
  %7176 = vadd.xlane.f32.xlu0 %v7175
  %v7177 = vpop.xlane.xlu0 %7176
  %v7178 = vadd.f32 %v7145, %v7146
  %7179 = vadd.xlane.f32.xlu0 %v7178
  %v7180 = vpop.xlane.xlu0 %7179
  %v7181 = vadd.f32 %v7147, %v7148
  %7182 = vadd.xlane.f32.xlu0 %v7181
  %v7183 = vpop.xlane.xlu0 %7182
  %v7184 = vadd.f32 %v7149, %v7150
  %7185 = vadd.xlane.f32.xlu0 %v7184
  %v7186 = vpop.xlane.xlu0 %7185
  %v7187 = vadd.f32 %v7151, %v7152
  %7188 = vadd.xlane.f32.xlu0 %v7187
  %v7189 = vpop.xlane.xlu0 %7188
  %v7190 = vadd.f32 %v7153, %v7154
  %7191 = vadd.xlane.f32.xlu0 %v7190
  %v7192 = vpop.xlane.xlu0 %7191
  %v7193 = vadd.f32 %v7155, %v7156
  %7194 = vadd.xlane.f32.xlu0 %v7193
  %v7195 = vpop.xlane.xlu0 %7194
  %v7196 = vadd.f32 %v7157, %v7158
  %7197 = vadd.xlane.f32.xlu0 %v7196
  %v7198 = vpop.xlane.xlu0 %7197
  %v7199 = vadd.f32 %v7159, %v7160
  %7200 = vadd.xlane.f32.xlu0 %v7199
  %v7201 = vpop.xlane.xlu0 %7200
  %v7202 = vadd.f32 %v7161, %v7162
  %7203 = vadd.xlane.f32.xlu0 %v7202
  %v7204 = vpop.xlane.xlu0 %7203
  %v7205 = vadd.f32 %v7163, %v7164
  %7206 = vadd.xlane.f32.xlu0 %v7205
  %v7207 = vpop.xlane.xlu0 %7206
  %v7208 = vadd.f32 %v7165, %v7166
  %7209 = vadd.xlane.f32.xlu0 %v7208
  %v7210 = vpop.xlane.xlu0 %7209
  %v7211 = vadd.f32 %v7167, %v7168
  %7212 = vadd.xlane.f32.xlu0 %v7211
  %v7213 = vpop.xlane.xlu0 %7212
  %v7214 = vadd.f32 %v7169, %v7170
  %7215 = vadd.xlane.f32.xlu0 %v7214
  %v7216 = vpop.xlane.xlu0 %7215
  %v7217 = vadd.f32 %v7171, %v7172
  %7218 = vadd.xlane.f32.xlu0 %v7217
  %v7219 = vpop.xlane.xlu0 %7218
  %v7220 = vadd.f32 %v7173, %v7174
  %7221 = vadd.xlane.f32.xlu0 %v7220
  %v7222 = vpop.xlane.xlu0 %7221
  %v7223 = vmul.f32 %v7143, %v6985
  %v7224 = vmul.f32 %v7144, %v6987
  %v7225 = vmul.f32 %v7145, %v6989
  %v7226 = vmul.f32 %v7146, %v6991
  %v7227 = vmul.f32 %v7147, %v6995
  %v7228 = vmul.f32 %v7148, %v6997
  %v7229 = vmul.f32 %v7149, %v6999
  %v7230 = vmul.f32 %v7150, %v7001
  %v7231 = vmul.f32 %v7151, %v7005
  %v7232 = vmul.f32 %v7152, %v7007
  %v7233 = vmul.f32 %v7153, %v7009
  %v7234 = vmul.f32 %v7154, %v7011
  %v7235 = vmul.f32 %v7155, %v7015
  %v7236 = vmul.f32 %v7156, %v7017
  %v7237 = vmul.f32 %v7157, %v7019
  %v7238 = vmul.f32 %v7158, %v7021
  %v7239 = vmul.f32 %v7159, %v7025
  %v7240 = vmul.f32 %v7160, %v7027
  %v7241 = vmul.f32 %v7161, %v7029
  %v7242 = vmul.f32 %v7162, %v7031
  %v7243 = vmul.f32 %v7163, %v7035
  %v7244 = vmul.f32 %v7164, %v7037
  %v7245 = vmul.f32 %v7165, %v7039
  %v7246 = vmul.f32 %v7166, %v7041
  %v7247 = vmul.f32 %v7167, %v7045
  %v7248 = vmul.f32 %v7168, %v7047
  %v7249 = vmul.f32 %v7169, %v7049
  %v7250 = vmul.f32 %v7170, %v7051
  %v7251 = vmul.f32 %v7171, %v7055
  %v7252 = vmul.f32 %v7172, %v7057
  %v7253 = vmul.f32 %v7173, %v7059
  %v7254 = vmul.f32 %v7174, %v7061
  %v7255 = vadd.f32 %v7223, %v7224
  %7256 = vadd.xlane.f32.xlu0 %v7255
  %v7257 = vpop.xlane.xlu0 %7256
  %v7258 = vadd.f32 %v7225, %v7226
  %7259 = vadd.xlane.f32.xlu0 %v7258
  %v7260 = vpop.xlane.xlu0 %7259
  %v7261 = vadd.f32 %v7227, %v7228
  %7262 = vadd.xlane.f32.xlu0 %v7261
  %v7263 = vpop.xlane.xlu0 %7262
  %v7264 = vadd.f32 %v7229, %v7230
  %7265 = vadd.xlane.f32.xlu0 %v7264
  %v7266 = vpop.xlane.xlu0 %7265
  %v7267 = vadd.f32 %v7231, %v7232
  %7268 = vadd.xlane.f32.xlu0 %v7267
  %v7269 = vpop.xlane.xlu0 %7268
  %v7270 = vadd.f32 %v7233, %v7234
  %7271 = vadd.xlane.f32.xlu0 %v7270
  %v7272 = vpop.xlane.xlu0 %7271
  %v7273 = vadd.f32 %v7235, %v7236
  %7274 = vadd.xlane.f32.xlu0 %v7273
  %v7275 = vpop.xlane.xlu0 %7274
  %v7276 = vadd.f32 %v7237, %v7238
  %7277 = vadd.xlane.f32.xlu0 %v7276
  %v7278 = vpop.xlane.xlu0 %7277
  %v7279 = vadd.f32 %v7239, %v7240
  %7280 = vadd.xlane.f32.xlu0 %v7279
  %v7281 = vpop.xlane.xlu0 %7280
  %v7282 = vadd.f32 %v7241, %v7242
  %7283 = vadd.xlane.f32.xlu0 %v7282
  %v7284 = vpop.xlane.xlu0 %7283
  %v7285 = vadd.f32 %v7243, %v7244
  %7286 = vadd.xlane.f32.xlu0 %v7285
  %v7287 = vpop.xlane.xlu0 %7286
  %v7288 = vadd.f32 %v7245, %v7246
  %7289 = vadd.xlane.f32.xlu0 %v7288
  %v7290 = vpop.xlane.xlu0 %7289
  %v7291 = vadd.f32 %v7247, %v7248
  %7292 = vadd.xlane.f32.xlu0 %v7291
  %v7293 = vpop.xlane.xlu0 %7292
  %v7294 = vadd.f32 %v7249, %v7250
  %7295 = vadd.xlane.f32.xlu0 %v7294
  %v7296 = vpop.xlane.xlu0 %7295
  %v7297 = vadd.f32 %v7251, %v7252
  %7298 = vadd.xlane.f32.xlu0 %v7297
  %v7299 = vpop.xlane.xlu0 %7298
  %v7300 = vadd.f32 %v7253, %v7254
  %7301 = vadd.xlane.f32.xlu0 %v7300
  %v7302 = vpop.xlane.xlu0 %7301
  %v7303 = vmul.f32 %v7065, %v92
  %v7304 = vmul.f32 %v7067, %v93
  %v7305 = vmul.f32 %v7069, %v92
  %v7306 = vmul.f32 %v7071, %v93
  %v7307 = vmul.f32 %v7075, %v92
  %v7308 = vmul.f32 %v7077, %v93
  %v7309 = vmul.f32 %v7079, %v92
  %v7310 = vmul.f32 %v7081, %v93
  %v7311 = vmul.f32 %v7085, %v92
  %v7312 = vmul.f32 %v7087, %v93
  %v7313 = vmul.f32 %v7089, %v92
  %v7314 = vmul.f32 %v7091, %v93
  %v7315 = vmul.f32 %v7095, %v92
  %v7316 = vmul.f32 %v7097, %v93
  %v7317 = vmul.f32 %v7099, %v92
  %v7318 = vmul.f32 %v7101, %v93
  %v7319 = vmul.f32 %v7105, %v92
  %v7320 = vmul.f32 %v7107, %v93
  %v7321 = vmul.f32 %v7109, %v92
  %v7322 = vmul.f32 %v7111, %v93
  %v7323 = vmul.f32 %v7115, %v92
  %v7324 = vmul.f32 %v7117, %v93
  %v7325 = vmul.f32 %v7119, %v92
  %v7326 = vmul.f32 %v7121, %v93
  %v7327 = vmul.f32 %v7125, %v92
  %v7328 = vmul.f32 %v7127, %v93
  %v7329 = vmul.f32 %v7129, %v92
  %v7330 = vmul.f32 %v7131, %v93
  %v7331 = vmul.f32 %v7135, %v92
  %v7332 = vmul.f32 %v7137, %v93
  %v7333 = vmul.f32 %v7139, %v92
  %v7334 = vmul.f32 %v7141, %v93
  %v7335 = vadd.f32 %v7303, %v7304
  %7336 = vadd.xlane.f32.xlu0 %v7335
  %v7337 = vpop.xlane.xlu0 %7336
  %v7338 = vadd.f32 %v7305, %v7306
  %7339 = vadd.xlane.f32.xlu0 %v7338
  %v7340 = vpop.xlane.xlu0 %7339
  %v7341 = vadd.f32 %v7307, %v7308
  %7342 = vadd.xlane.f32.xlu0 %v7341
  %v7343 = vpop.xlane.xlu0 %7342
  %v7344 = vadd.f32 %v7309, %v7310
  %7345 = vadd.xlane.f32.xlu0 %v7344
  %v7346 = vpop.xlane.xlu0 %7345
  %v7347 = vadd.f32 %v7311, %v7312
  %7348 = vadd.xlane.f32.xlu0 %v7347
  %v7349 = vpop.xlane.xlu0 %7348
  %v7350 = vadd.f32 %v7313, %v7314
  %7351 = vadd.xlane.f32.xlu0 %v7350
  %v7352 = vpop.xlane.xlu0 %7351
  %v7353 = vadd.f32 %v7315, %v7316
  %7354 = vadd.xlane.f32.xlu0 %v7353
  %v7355 = vpop.xlane.xlu0 %7354
  %v7356 = vadd.f32 %v7317, %v7318
  %7357 = vadd.xlane.f32.xlu0 %v7356
  %v7358 = vpop.xlane.xlu0 %7357
  %v7359 = vadd.f32 %v7319, %v7320
  %7360 = vadd.xlane.f32.xlu0 %v7359
  %v7361 = vpop.xlane.xlu0 %7360
  %v7362 = vadd.f32 %v7321, %v7322
  %7363 = vadd.xlane.f32.xlu0 %v7362
  %v7364 = vpop.xlane.xlu0 %7363
  %v7365 = vadd.f32 %v7323, %v7324
  %7366 = vadd.xlane.f32.xlu0 %v7365
  %v7367 = vpop.xlane.xlu0 %7366
  %v7368 = vadd.f32 %v7325, %v7326
  %7369 = vadd.xlane.f32.xlu0 %v7368
  %v7370 = vpop.xlane.xlu0 %7369
  %v7371 = vadd.f32 %v7327, %v7328
  %7372 = vadd.xlane.f32.xlu0 %v7371
  %v7373 = vpop.xlane.xlu0 %7372
  %v7374 = vadd.f32 %v7329, %v7330
  %7375 = vadd.xlane.f32.xlu0 %v7374
  %v7376 = vpop.xlane.xlu0 %7375
  %v7377 = vadd.f32 %v7331, %v7332
  %7378 = vadd.xlane.f32.xlu0 %v7377
  %v7379 = vpop.xlane.xlu0 %7378
  %v7380 = vadd.f32 %v7333, %v7334
  %7381 = vadd.xlane.f32.xlu0 %v7380
  %v7382 = vpop.xlane.xlu0 %7381
  %v7383 = vmul.f32 %v7303, %v7065
  %v7384 = vmul.f32 %v7304, %v7067
  %v7385 = vmul.f32 %v7305, %v7069
  %v7386 = vmul.f32 %v7306, %v7071
  %v7387 = vmul.f32 %v7307, %v7075
  %v7388 = vmul.f32 %v7308, %v7077
  %v7389 = vmul.f32 %v7309, %v7079
  %v7390 = vmul.f32 %v7310, %v7081
  %v7391 = vmul.f32 %v7311, %v7085
  %v7392 = vmul.f32 %v7312, %v7087
  %v7393 = vmul.f32 %v7313, %v7089
  %v7394 = vmul.f32 %v7314, %v7091
  %v7395 = vmul.f32 %v7315, %v7095
  %v7396 = vmul.f32 %v7316, %v7097
  %v7397 = vmul.f32 %v7317, %v7099
  %v7398 = vmul.f32 %v7318, %v7101
  %v7399 = vmul.f32 %v7319, %v7105
  %v7400 = vmul.f32 %v7320, %v7107
  %v7401 = vmul.f32 %v7321, %v7109
  %v7402 = vmul.f32 %v7322, %v7111
  %v7403 = vmul.f32 %v7323, %v7115
  %v7404 = vmul.f32 %v7324, %v7117
  %v7405 = vmul.f32 %v7325, %v7119
  %v7406 = vmul.f32 %v7326, %v7121
  %v7407 = vmul.f32 %v7327, %v7125
  %v7408 = vmul.f32 %v7328, %v7127
  %v7409 = vmul.f32 %v7329, %v7129
  %v7410 = vmul.f32 %v7330, %v7131
  %v7411 = vmul.f32 %v7331, %v7135
  %v7412 = vmul.f32 %v7332, %v7137
  %v7413 = vmul.f32 %v7333, %v7139
  %v7414 = vmul.f32 %v7334, %v7141
  %v7415 = vadd.f32 %v7383, %v7384
  %7416 = vadd.xlane.f32.xlu0 %v7415
  %v7417 = vpop.xlane.xlu0 %7416
  %v7418 = vadd.f32 %v7385, %v7386
  %7419 = vadd.xlane.f32.xlu0 %v7418
  %v7420 = vpop.xlane.xlu0 %7419
  %v7421 = vadd.f32 %v7387, %v7388
  %7422 = vadd.xlane.f32.xlu0 %v7421
  %v7423 = vpop.xlane.xlu0 %7422
  %v7424 = vadd.f32 %v7389, %v7390
  %7425 = vadd.xlane.f32.xlu0 %v7424
  %v7426 = vpop.xlane.xlu0 %7425
  %v7427 = vadd.f32 %v7391, %v7392
  %7428 = vadd.xlane.f32.xlu0 %v7427
  %v7429 = vpop.xlane.xlu0 %7428
  %v7430 = vadd.f32 %v7393, %v7394
  %7431 = vadd.xlane.f32.xlu0 %v7430
  %v7432 = vpop.xlane.xlu0 %7431
  %v7433 = vadd.f32 %v7395, %v7396
  %7434 = vadd.xlane.f32.xlu0 %v7433
  %v7435 = vpop.xlane.xlu0 %7434
  %v7436 = vadd.f32 %v7397, %v7398
  %7437 = vadd.xlane.f32.xlu0 %v7436
  %v7438 = vpop.xlane.xlu0 %7437
  %v7439 = vadd.f32 %v7399, %v7400
  %7440 = vadd.xlane.f32.xlu0 %v7439
  %v7441 = vpop.xlane.xlu0 %7440
  %v7442 = vadd.f32 %v7401, %v7402
  %7443 = vadd.xlane.f32.xlu0 %v7442
  %v7444 = vpop.xlane.xlu0 %7443
  %v7445 = vadd.f32 %v7403, %v7404
  %7446 = vadd.xlane.f32.xlu0 %v7445
  %v7447 = vpop.xlane.xlu0 %7446
  %v7448 = vadd.f32 %v7405, %v7406
  %7449 = vadd.xlane.f32.xlu0 %v7448
  %v7450 = vpop.xlane.xlu0 %7449
  %v7451 = vadd.f32 %v7407, %v7408
  %7452 = vadd.xlane.f32.xlu0 %v7451
  %v7453 = vpop.xlane.xlu0 %7452
  %v7454 = vadd.f32 %v7409, %v7410
  %7455 = vadd.xlane.f32.xlu0 %v7454
  %v7456 = vpop.xlane.xlu0 %7455
  %v7457 = vadd.f32 %v7411, %v7412
  %7458 = vadd.xlane.f32.xlu0 %v7457
  %v7459 = vpop.xlane.xlu0 %7458
  %v7460 = vadd.f32 %v7413, %v7414
  %7461 = vadd.xlane.f32.xlu0 %v7460
  %v7462 = vpop.xlane.xlu0 %7461
  %v7463 = vadd.f32 %v7177, %v7337
  %v7464 = vadd.f32 %v7180, %v7340
  %v7465 = vadd.f32 %v7183, %v7343
  %v7466 = vadd.f32 %v7186, %v7346
  %v7467 = vadd.f32 %v7189, %v7349
  %v7468 = vadd.f32 %v7192, %v7352
  %v7469 = vadd.f32 %v7195, %v7355
  %v7470 = vadd.f32 %v7198, %v7358
  %v7471 = vadd.f32 %v7201, %v7361
  %v7472 = vadd.f32 %v7204, %v7364
  %v7473 = vadd.f32 %v7207, %v7367
  %v7474 = vadd.f32 %v7210, %v7370
  %v7475 = vadd.f32 %v7213, %v7373
  %v7476 = vadd.f32 %v7216, %v7376
  %v7477 = vadd.f32 %v7219, %v7379
  %v7478 = vadd.f32 %v7222, %v7382
  %v7479 = vadd.f32 %v7257, %v7417
  %v7480 = vadd.f32 %v7260, %v7420
  %v7481 = vadd.f32 %v7263, %v7423
  %v7482 = vadd.f32 %v7266, %v7426
  %v7483 = vadd.f32 %v7269, %v7429
  %v7484 = vadd.f32 %v7272, %v7432
  %v7485 = vadd.f32 %v7275, %v7435
  %v7486 = vadd.f32 %v7278, %v7438
  %v7487 = vadd.f32 %v7281, %v7441
  %v7488 = vadd.f32 %v7284, %v7444
  %v7489 = vadd.f32 %v7287, %v7447
  %v7490 = vadd.f32 %v7290, %v7450
  %v7491 = vadd.f32 %v7293, %v7453
  %v7492 = vadd.f32 %v7296, %v7456
  %v7493 = vadd.f32 %v7299, %v7459
  %v7494 = vadd.f32 %v7302, %v7462
  %v7495 = vrcp.pop 500.0
  %v7496 = vmul.f32 %v7463, %v7495
  %v7497 = vmul.f32 %v7464, %v7495
  %v7498 = vmul.f32 %v7465, %v7495
  %v7499 = vmul.f32 %v7466, %v7495
  %v7500 = vmul.f32 %v7467, %v7495
  %v7501 = vmul.f32 %v7468, %v7495
  %v7502 = vmul.f32 %v7469, %v7495
  %v7503 = vmul.f32 %v7470, %v7495
  %v7504 = vmul.f32 %v7471, %v7495
  %v7505 = vmul.f32 %v7472, %v7495
  %v7506 = vmul.f32 %v7473, %v7495
  %v7507 = vmul.f32 %v7474, %v7495
  %v7508 = vmul.f32 %v7475, %v7495
  %v7509 = vmul.f32 %v7476, %v7495
  %v7510 = vmul.f32 %v7477, %v7495
  %v7511 = vmul.f32 %v7478, %v7495
  %v7512 = vmul.f32 %v7479, %v7495
  %v7513 = vmul.f32 %v7480, %v7495
  %v7514 = vmul.f32 %v7481, %v7495
  %v7515 = vmul.f32 %v7482, %v7495
  %v7516 = vmul.f32 %v7483, %v7495
  %v7517 = vmul.f32 %v7484, %v7495
  %v7518 = vmul.f32 %v7485, %v7495
  %v7519 = vmul.f32 %v7486, %v7495
  %v7520 = vmul.f32 %v7487, %v7495
  %v7521 = vmul.f32 %v7488, %v7495
  %v7522 = vmul.f32 %v7489, %v7495
  %v7523 = vmul.f32 %v7490, %v7495
  %v7524 = vmul.f32 %v7491, %v7495
  %v7525 = vmul.f32 %v7492, %v7495
  %v7526 = vmul.f32 %v7493, %v7495
  %v7527 = vmul.f32 %v7494, %v7495
  %v7528 = vmul.f32 %v7496, %v7496
  %v7529 = vmul.f32 %v7497, %v7497
  %v7530 = vmul.f32 %v7498, %v7498
  %v7531 = vmul.f32 %v7499, %v7499
  %v7532 = vmul.f32 %v7500, %v7500
  %v7533 = vmul.f32 %v7501, %v7501
  %v7534 = vmul.f32 %v7502, %v7502
  %v7535 = vmul.f32 %v7503, %v7503
  %v7536 = vmul.f32 %v7504, %v7504
  %v7537 = vmul.f32 %v7505, %v7505
  %v7538 = vmul.f32 %v7506, %v7506
  %v7539 = vmul.f32 %v7507, %v7507
  %v7540 = vmul.f32 %v7508, %v7508
  %v7541 = vmul.f32 %v7509, %v7509
  %v7542 = vmul.f32 %v7510, %v7510
  %v7543 = vmul.f32 %v7511, %v7511
  %v7544 = vsub.f32 %v7512, %v7528
  %v7545 = vsub.f32 %v7513, %v7529
  %v7546 = vsub.f32 %v7514, %v7530
  %v7547 = vsub.f32 %v7515, %v7531
  %v7548 = vsub.f32 %v7516, %v7532
  %v7549 = vsub.f32 %v7517, %v7533
  %v7550 = vsub.f32 %v7518, %v7534
  %v7551 = vsub.f32 %v7519, %v7535
  %v7552 = vsub.f32 %v7520, %v7536
  %v7553 = vsub.f32 %v7521, %v7537
  %v7554 = vsub.f32 %v7522, %v7538
  %v7555 = vsub.f32 %v7523, %v7539
  %v7556 = vsub.f32 %v7524, %v7540
  %v7557 = vsub.f32 %v7525, %v7541
  %v7558 = vsub.f32 %v7526, %v7542
  %v7559 = vsub.f32 %v7527, %v7543
  %v7560 = vadd.f32 %v7544, 1e-05
  %v7561 = vadd.f32 %v7545, 1e-05
  %v7562 = vadd.f32 %v7546, 1e-05
  %v7563 = vadd.f32 %v7547, 1e-05
  %v7564 = vadd.f32 %v7548, 1e-05
  %v7565 = vadd.f32 %v7549, 1e-05
  %v7566 = vadd.f32 %v7550, 1e-05
  %v7567 = vadd.f32 %v7551, 1e-05
  %v7568 = vadd.f32 %v7552, 1e-05
  %v7569 = vadd.f32 %v7553, 1e-05
  %v7570 = vadd.f32 %v7554, 1e-05
  %v7571 = vadd.f32 %v7555, 1e-05
  %v7572 = vadd.f32 %v7556, 1e-05
  %v7573 = vadd.f32 %v7557, 1e-05
  %v7574 = vadd.f32 %v7558, 1e-05
  %v7575 = vadd.f32 %v7559, 1e-05
  %v7576 = vrsqrt.pop %v7560
  %v7577 = vrsqrt.pop %v7561
  %v7578 = vrsqrt.pop %v7562
  %v7579 = vrsqrt.pop %v7563
  %v7580 = vrsqrt.pop %v7564
  %v7581 = vrsqrt.pop %v7565
  %v7582 = vrsqrt.pop %v7566
  %v7583 = vrsqrt.pop %v7567
  %v7584 = vrsqrt.pop %v7568
  %v7585 = vrsqrt.pop %v7569
  %v7586 = vrsqrt.pop %v7570
  %v7587 = vrsqrt.pop %v7571
  %v7588 = vrsqrt.pop %v7572
  %v7589 = vrsqrt.pop %v7573
  %v7590 = vrsqrt.pop %v7574
  %v7591 = vrsqrt.pop %v7575
  %v7592 = vld [vmem:[%s6] sm:$0xff]
  %v7593 = vld [vmem:[%s6 + $0x8] sm:$0xff]
  %v7594 = vld [vmem:[%s6 + $0x10] sm:$0xff]
  %v7595 = vld [vmem:[%s6 + $0x18] sm:$0xff]
  %v7596 = vld [vmem:[%s6 + $0x20] sm:$0xff]
  %v7597 = vld [vmem:[%s6 + $0x28] sm:$0xff]
  %v7598 = vld [vmem:[%s6 + $0x30] sm:$0xff]
  %v7599 = vld [vmem:[%s6 + $0x38] sm:$0xff]
  %v7600 = vld [vmem:[%s6 + $0x40] sm:$0xff]
  %v7601 = vld [vmem:[%s6 + $0x48] sm:$0xff]
  %v7602 = vld [vmem:[%s6 + $0x50] sm:$0xff]
  %v7603 = vld [vmem:[%s6 + $0x58] sm:$0xff]
  %v7604 = vld [vmem:[%s6 + $0x60] sm:$0xff]
  %v7605 = vld [vmem:[%s6 + $0x68] sm:$0xff]
  %v7606 = vld [vmem:[%s6 + $0x70] sm:$0xff]
  %v7607 = vld [vmem:[%s6 + $0x78] sm:$0xff]
  %v7608 = vmul.f32 %v7576, %v7592
  %v7609 = vmul.f32 %v7577, %v7593
  %v7610 = vmul.f32 %v7578, %v7594
  %v7611 = vmul.f32 %v7579, %v7595
  %v7612 = vmul.f32 %v7580, %v7596
  %v7613 = vmul.f32 %v7581, %v7597
  %v7614 = vmul.f32 %v7582, %v7598
  %v7615 = vmul.f32 %v7583, %v7599
  %v7616 = vmul.f32 %v7584, %v7600
  %v7617 = vmul.f32 %v7585, %v7601
  %v7618 = vmul.f32 %v7586, %v7602
  %v7619 = vmul.f32 %v7587, %v7603
  %v7620 = vmul.f32 %v7588, %v7604
  %v7621 = vmul.f32 %v7589, %v7605
  %v7622 = vmul.f32 %v7590, %v7606
  %v7623 = vmul.f32 %v7591, %v7607
  %v7624 = vld [vmem:[%s7] sm:$0xff]
  %v7625 = vld [vmem:[%s7 + $0x8] sm:$0xff]
  %v7626 = vld [vmem:[%s7 + $0x10] sm:$0xff]
  %v7627 = vld [vmem:[%s7 + $0x18] sm:$0xff]
  %v7628 = vld [vmem:[%s7 + $0x20] sm:$0xff]
  %v7629 = vld [vmem:[%s7 + $0x28] sm:$0xff]
  %v7630 = vld [vmem:[%s7 + $0x30] sm:$0xff]
  %v7631 = vld [vmem:[%s7 + $0x38] sm:$0xff]
  %v7632 = vld [vmem:[%s7 + $0x40] sm:$0xff]
  %v7633 = vld [vmem:[%s7 + $0x48] sm:$0xff]
  %v7634 = vld [vmem:[%s7 + $0x50] sm:$0xff]
  %v7635 = vld [vmem:[%s7 + $0x58] sm:$0xff]
  %v7636 = vld [vmem:[%s7 + $0x60] sm:$0xff]
  %v7637 = vld [vmem:[%s7 + $0x68] sm:$0xff]
  %v7638 = vld [vmem:[%s7 + $0x70] sm:$0xff]
  %v7639 = vld [vmem:[%s7 + $0x78] sm:$0xff]
  %v7640 = vmul.f32 %v7496, %v7608
  %v7641 = vmul.f32 %v7497, %v7609
  %v7642 = vmul.f32 %v7498, %v7610
  %v7643 = vmul.f32 %v7499, %v7611
  %v7644 = vmul.f32 %v7500, %v7612
  %v7645 = vmul.f32 %v7501, %v7613
  %v7646 = vmul.f32 %v7502, %v7614
  %v7647 = vmul.f32 %v7503, %v7615
  %v7648 = vmul.f32 %v7504, %v7616
  %v7649 = vmul.f32 %v7505, %v7617
  %v7650 = vmul.f32 %v7506, %v7618
  %v7651 = vmul.f32 %v7507, %v7619
  %v7652 = vmul.f32 %v7508, %v7620
  %v7653 = vmul.f32 %v7509, %v7621
  %v7654 = vmul.f32 %v7510, %v7622
  %v7655 = vmul.f32 %v7511, %v7623
  %v7656 = vsub.f32 %v7624, %v7640
  %v7657 = vsub.f32 %v7625, %v7641
  %v7658 = vsub.f32 %v7626, %v7642
  %v7659 = vsub.f32 %v7627, %v7643
  %v7660 = vsub.f32 %v7628, %v7644
  %v7661 = vsub.f32 %v7629, %v7645
  %v7662 = vsub.f32 %v7630, %v7646
  %v7663 = vsub.f32 %v7631, %v7647
  %v7664 = vsub.f32 %v7632, %v7648
  %v7665 = vsub.f32 %v7633, %v7649
  %v7666 = vsub.f32 %v7634, %v7650
  %v7667 = vsub.f32 %v7635, %v7651
  %v7668 = vsub.f32 %v7636, %v7652
  %v7669 = vsub.f32 %v7637, %v7653
  %v7670 = vsub.f32 %v7638, %v7654
  %v7671 = vsub.f32 %v7639, %v7655
  %7673 = vset.pattern.permute.xlu0 0
  %7674 = vperm.xlu0 %7673, %v7608
  %v7675 = vpop.permute.xlu0 %7674
  %7678 = vset.pattern.permute.xlu0 0
  %7679 = vperm.xlu0 %7678, %v7609
  %v7680 = vpop.permute.xlu0 %7679
  %7683 = vset.pattern.permute.xlu0 0
  %7684 = vperm.xlu0 %7683, %v7610
  %v7685 = vpop.permute.xlu0 %7684
  %7688 = vset.pattern.permute.xlu0 0
  %7689 = vperm.xlu0 %7688, %v7611
  %v7690 = vpop.permute.xlu0 %7689
  %7693 = vset.pattern.permute.xlu0 0
  %7694 = vperm.xlu0 %7693, %v7612
  %v7695 = vpop.permute.xlu0 %7694
  %7698 = vset.pattern.permute.xlu0 0
  %7699 = vperm.xlu0 %7698, %v7613
  %v7700 = vpop.permute.xlu0 %7699
  %7703 = vset.pattern.permute.xlu0 0
  %7704 = vperm.xlu0 %7703, %v7614
  %v7705 = vpop.permute.xlu0 %7704
  %7708 = vset.pattern.permute.xlu0 0
  %7709 = vperm.xlu0 %7708, %v7615
  %v7710 = vpop.permute.xlu0 %7709
  %7713 = vset.pattern.permute.xlu0 0
  %7714 = vperm.xlu0 %7713, %v7616
  %v7715 = vpop.permute.xlu0 %7714
  %7718 = vset.pattern.permute.xlu0 0
  %7719 = vperm.xlu0 %7718, %v7617
  %v7720 = vpop.permute.xlu0 %7719
  %7723 = vset.pattern.permute.xlu0 0
  %7724 = vperm.xlu0 %7723, %v7618
  %v7725 = vpop.permute.xlu0 %7724
  %7728 = vset.pattern.permute.xlu0 0
  %7729 = vperm.xlu0 %7728, %v7619
  %v7730 = vpop.permute.xlu0 %7729
  %7733 = vset.pattern.permute.xlu0 0
  %7734 = vperm.xlu0 %7733, %v7620
  %v7735 = vpop.permute.xlu0 %7734
  %7738 = vset.pattern.permute.xlu0 0
  %7739 = vperm.xlu0 %7738, %v7621
  %v7740 = vpop.permute.xlu0 %7739
  %7743 = vset.pattern.permute.xlu0 0
  %7744 = vperm.xlu0 %7743, %v7622
  %v7745 = vpop.permute.xlu0 %7744
  %7748 = vset.pattern.permute.xlu0 0
  %7749 = vperm.xlu0 %7748, %v7623
  %v7750 = vpop.permute.xlu0 %7749
  %v7752 = vmul.f32 %v6985, %v7675
  %v7753 = vmul.f32 %v6987, %v7675
  %v7754 = vmul.f32 %v6989, %v7680
  %v7755 = vmul.f32 %v6991, %v7680
  %v7756 = vmul.f32 %v6995, %v7685
  %v7757 = vmul.f32 %v6997, %v7685
  %v7758 = vmul.f32 %v6999, %v7690
  %v7759 = vmul.f32 %v7001, %v7690
  %v7760 = vmul.f32 %v7005, %v7695
  %v7761 = vmul.f32 %v7007, %v7695
  %v7762 = vmul.f32 %v7009, %v7700
  %v7763 = vmul.f32 %v7011, %v7700
  %v7764 = vmul.f32 %v7015, %v7705
  %v7765 = vmul.f32 %v7017, %v7705
  %v7766 = vmul.f32 %v7019, %v7710
  %v7767 = vmul.f32 %v7021, %v7710
  %v7768 = vmul.f32 %v7025, %v7715
  %v7769 = vmul.f32 %v7027, %v7715
  %v7770 = vmul.f32 %v7029, %v7720
  %v7771 = vmul.f32 %v7031, %v7720
  %v7772 = vmul.f32 %v7035, %v7725
  %v7773 = vmul.f32 %v7037, %v7725
  %v7774 = vmul.f32 %v7039, %v7730
  %v7775 = vmul.f32 %v7041, %v7730
  %v7776 = vmul.f32 %v7045, %v7735
  %v7777 = vmul.f32 %v7047, %v7735
  %v7778 = vmul.f32 %v7049, %v7740
  %v7779 = vmul.f32 %v7051, %v7740
  %v7780 = vmul.f32 %v7055, %v7745
  %v7781 = vmul.f32 %v7057, %v7745
  %v7782 = vmul.f32 %v7059, %v7750
  %v7783 = vmul.f32 %v7061, %v7750
  %7785 = vset.pattern.permute.xlu0 0
  %7786 = vperm.xlu0 %7785, %v7656
  %v7787 = vpop.permute.xlu0 %7786
  %7790 = vset.pattern.permute.xlu0 0
  %7791 = vperm.xlu0 %7790, %v7657
  %v7792 = vpop.permute.xlu0 %7791
  %7795 = vset.pattern.permute.xlu0 0
  %7796 = vperm.xlu0 %7795, %v7658
  %v7797 = vpop.permute.xlu0 %7796
  %7800 = vset.pattern.permute.xlu0 0
  %7801 = vperm.xlu0 %7800, %v7659
  %v7802 = vpop.permute.xlu0 %7801
  %7805 = vset.pattern.permute.xlu0 0
  %7806 = vperm.xlu0 %7805, %v7660
  %v7807 = vpop.permute.xlu0 %7806
  %7810 = vset.pattern.permute.xlu0 0
  %7811 = vperm.xlu0 %7810, %v7661
  %v7812 = vpop.permute.xlu0 %7811
  %7815 = vset.pattern.permute.xlu0 0
  %7816 = vperm.xlu0 %7815, %v7662
  %v7817 = vpop.permute.xlu0 %7816
  %7820 = vset.pattern.permute.xlu0 0
  %7821 = vperm.xlu0 %7820, %v7663
  %v7822 = vpop.permute.xlu0 %7821
  %7825 = vset.pattern.permute.xlu0 0
  %7826 = vperm.xlu0 %7825, %v7664
  %v7827 = vpop.permute.xlu0 %7826
  %7830 = vset.pattern.permute.xlu0 0
  %7831 = vperm.xlu0 %7830, %v7665
  %v7832 = vpop.permute.xlu0 %7831
  %7835 = vset.pattern.permute.xlu0 0
  %7836 = vperm.xlu0 %7835, %v7666
  %v7837 = vpop.permute.xlu0 %7836
  %7840 = vset.pattern.permute.xlu0 0
  %7841 = vperm.xlu0 %7840, %v7667
  %v7842 = vpop.permute.xlu0 %7841
  %7845 = vset.pattern.permute.xlu0 0
  %7846 = vperm.xlu0 %7845, %v7668
  %v7847 = vpop.permute.xlu0 %7846
  %7850 = vset.pattern.permute.xlu0 0
  %7851 = vperm.xlu0 %7850, %v7669
  %v7852 = vpop.permute.xlu0 %7851
  %7855 = vset.pattern.permute.xlu0 0
  %7856 = vperm.xlu0 %7855, %v7670
  %v7857 = vpop.permute.xlu0 %7856
  %7860 = vset.pattern.permute.xlu0 0
  %7861 = vperm.xlu0 %7860, %v7671
  %v7862 = vpop.permute.xlu0 %7861
  %v7864 = vadd.f32 %v7752, %v7787
  %v7865 = vadd.f32 %v7753, %v7787
  %v7866 = vadd.f32 %v7754, %v7792
  %v7867 = vadd.f32 %v7755, %v7792
  %v7868 = vadd.f32 %v7756, %v7797
  %v7869 = vadd.f32 %v7757, %v7797
  %v7870 = vadd.f32 %v7758, %v7802
  %v7871 = vadd.f32 %v7759, %v7802
  %v7872 = vadd.f32 %v7760, %v7807
  %v7873 = vadd.f32 %v7761, %v7807
  %v7874 = vadd.f32 %v7762, %v7812
  %v7875 = vadd.f32 %v7763, %v7812
  %v7876 = vadd.f32 %v7764, %v7817
  %v7877 = vadd.f32 %v7765, %v7817
  %v7878 = vadd.f32 %v7766, %v7822
  %v7879 = vadd.f32 %v7767, %v7822
  %v7880 = vadd.f32 %v7768, %v7827
  %v7881 = vadd.f32 %v7769, %v7827
  %v7882 = vadd.f32 %v7770, %v7832
  %v7883 = vadd.f32 %v7771, %v7832
  %v7884 = vadd.f32 %v7772, %v7837
  %v7885 = vadd.f32 %v7773, %v7837
  %v7886 = vadd.f32 %v7774, %v7842
  %v7887 = vadd.f32 %v7775, %v7842
  %v7888 = vadd.f32 %v7776, %v7847
  %v7889 = vadd.f32 %v7777, %v7847
  %v7890 = vadd.f32 %v7778, %v7852
  %v7891 = vadd.f32 %v7779, %v7852
  %v7892 = vadd.f32 %v7780, %v7857
  %v7893 = vadd.f32 %v7781, %v7857
  %v7894 = vadd.f32 %v7782, %v7862
  %v7895 = vadd.f32 %v7783, %v7862
  %v7896 = vmul.f32 %v7065, %v7675
  %v7897 = vmul.f32 %v7067, %v7675
  %v7898 = vmul.f32 %v7069, %v7680
  %v7899 = vmul.f32 %v7071, %v7680
  %v7900 = vmul.f32 %v7075, %v7685
  %v7901 = vmul.f32 %v7077, %v7685
  %v7902 = vmul.f32 %v7079, %v7690
  %v7903 = vmul.f32 %v7081, %v7690
  %v7904 = vmul.f32 %v7085, %v7695
  %v7905 = vmul.f32 %v7087, %v7695
  %v7906 = vmul.f32 %v7089, %v7700
  %v7907 = vmul.f32 %v7091, %v7700
  %v7908 = vmul.f32 %v7095, %v7705
  %v7909 = vmul.f32 %v7097, %v7705
  %v7910 = vmul.f32 %v7099, %v7710
  %v7911 = vmul.f32 %v7101, %v7710
  %v7912 = vmul.f32 %v7105, %v7715
  %v7913 = vmul.f32 %v7107, %v7715
  %v7914 = vmul.f32 %v7109, %v7720
  %v7915 = vmul.f32 %v7111, %v7720
  %v7916 = vmul.f32 %v7115, %v7725
  %v7917 = vmul.f32 %v7117, %v7725
  %v7918 = vmul.f32 %v7119, %v7730
  %v7919 = vmul.f32 %v7121, %v7730
  %v7920 = vmul.f32 %v7125, %v7735
  %v7921 = vmul.f32 %v7127, %v7735
  %v7922 = vmul.f32 %v7129, %v7740
  %v7923 = vmul.f32 %v7131, %v7740
  %v7924 = vmul.f32 %v7135, %v7745
  %v7925 = vmul.f32 %v7137, %v7745
  %v7926 = vmul.f32 %v7139, %v7750
  %v7927 = vmul.f32 %v7141, %v7750
  %v7928 = vadd.f32 %v7896, %v7787
  %v7929 = vadd.f32 %v7897, %v7787
  %v7930 = vadd.f32 %v7898, %v7792
  %v7931 = vadd.f32 %v7899, %v7792
  %v7932 = vadd.f32 %v7900, %v7797
  %v7933 = vadd.f32 %v7901, %v7797
  %v7934 = vadd.f32 %v7902, %v7802
  %v7935 = vadd.f32 %v7903, %v7802
  %v7936 = vadd.f32 %v7904, %v7807
  %v7937 = vadd.f32 %v7905, %v7807
  %v7938 = vadd.f32 %v7906, %v7812
  %v7939 = vadd.f32 %v7907, %v7812
  %v7940 = vadd.f32 %v7908, %v7817
  %v7941 = vadd.f32 %v7909, %v7817
  %v7942 = vadd.f32 %v7910, %v7822
  %v7943 = vadd.f32 %v7911, %v7822
  %v7944 = vadd.f32 %v7912, %v7827
  %v7945 = vadd.f32 %v7913, %v7827
  %v7946 = vadd.f32 %v7914, %v7832
  %v7947 = vadd.f32 %v7915, %v7832
  %v7948 = vadd.f32 %v7916, %v7837
  %v7949 = vadd.f32 %v7917, %v7837
  %v7950 = vadd.f32 %v7918, %v7842
  %v7951 = vadd.f32 %v7919, %v7842
  %v7952 = vadd.f32 %v7920, %v7847
  %v7953 = vadd.f32 %v7921, %v7847
  %v7954 = vadd.f32 %v7922, %v7852
  %v7955 = vadd.f32 %v7923, %v7852
  %v7956 = vadd.f32 %v7924, %v7857
  %v7957 = vadd.f32 %v7925, %v7857
  %v7958 = vadd.f32 %v7926, %v7862
  %v7959 = vadd.f32 %v7927, %v7862
  %vm7960 = vcmp.gt.f32.partialorder %v7864, 0.0
  %vm7961 = vcmp.gt.f32.partialorder %v7865, 0.0
  %vm7962 = vcmp.gt.f32.partialorder %v7866, 0.0
  %vm7963 = vcmp.gt.f32.partialorder %v7867, 0.0
  %vm7964 = vcmp.gt.f32.partialorder %v7868, 0.0
  %vm7965 = vcmp.gt.f32.partialorder %v7869, 0.0
  %vm7966 = vcmp.gt.f32.partialorder %v7870, 0.0
  %vm7967 = vcmp.gt.f32.partialorder %v7871, 0.0
  %vm7968 = vcmp.gt.f32.partialorder %v7872, 0.0
  %vm7969 = vcmp.gt.f32.partialorder %v7873, 0.0
  %vm7970 = vcmp.gt.f32.partialorder %v7874, 0.0
  %vm7971 = vcmp.gt.f32.partialorder %v7875, 0.0
  %vm7972 = vcmp.gt.f32.partialorder %v7876, 0.0
  %vm7973 = vcmp.gt.f32.partialorder %v7877, 0.0
  %vm7974 = vcmp.gt.f32.partialorder %v7878, 0.0
  %vm7975 = vcmp.gt.f32.partialorder %v7879, 0.0
  %vm7976 = vcmp.gt.f32.partialorder %v7880, 0.0
  %vm7977 = vcmp.gt.f32.partialorder %v7881, 0.0
  %vm7978 = vcmp.gt.f32.partialorder %v7882, 0.0
  %vm7979 = vcmp.gt.f32.partialorder %v7883, 0.0
  %vm7980 = vcmp.gt.f32.partialorder %v7884, 0.0
  %vm7981 = vcmp.gt.f32.partialorder %v7885, 0.0
  %vm7982 = vcmp.gt.f32.partialorder %v7886, 0.0
  %vm7983 = vcmp.gt.f32.partialorder %v7887, 0.0
  %vm7984 = vcmp.gt.f32.partialorder %v7888, 0.0
  %vm7985 = vcmp.gt.f32.partialorder %v7889, 0.0
  %vm7986 = vcmp.gt.f32.partialorder %v7890, 0.0
  %vm7987 = vcmp.gt.f32.partialorder %v7891, 0.0
  %vm7988 = vcmp.gt.f32.partialorder %v7892, 0.0
  %vm7989 = vcmp.gt.f32.partialorder %v7893, 0.0
  %vm7990 = vcmp.gt.f32.partialorder %v7894, 0.0
  %vm7991 = vcmp.gt.f32.partialorder %v7895, 0.0
  %v7992 = vmul.f32 %v7864, 0.2
  %v7993 = vmul.f32 %v7865, 0.2
  %v7994 = vmul.f32 %v7866, 0.2
  %v7995 = vmul.f32 %v7867, 0.2
  %v7996 = vmul.f32 %v7868, 0.2
  %v7997 = vmul.f32 %v7869, 0.2
  %v7998 = vmul.f32 %v7870, 0.2
  %v7999 = vmul.f32 %v7871, 0.2
  %v8000 = vmul.f32 %v7872, 0.2
  %v8001 = vmul.f32 %v7873, 0.2
  %v8002 = vmul.f32 %v7874, 0.2
  %v8003 = vmul.f32 %v7875, 0.2
  %v8004 = vmul.f32 %v7876, 0.2
  %v8005 = vmul.f32 %v7877, 0.2
  %v8006 = vmul.f32 %v7878, 0.2
  %v8007 = vmul.f32 %v7879, 0.2
  %v8008 = vmul.f32 %v7880, 0.2
  %v8009 = vmul.f32 %v7881, 0.2
  %v8010 = vmul.f32 %v7882, 0.2
  %v8011 = vmul.f32 %v7883, 0.2
  %v8012 = vmul.f32 %v7884, 0.2
  %v8013 = vmul.f32 %v7885, 0.2
  %v8014 = vmul.f32 %v7886, 0.2
  %v8015 = vmul.f32 %v7887, 0.2
  %v8016 = vmul.f32 %v7888, 0.2
  %v8017 = vmul.f32 %v7889, 0.2
  %v8018 = vmul.f32 %v7890, 0.2
  %v8019 = vmul.f32 %v7891, 0.2
  %v8020 = vmul.f32 %v7892, 0.2
  %v8021 = vmul.f32 %v7893, 0.2
  %v8022 = vmul.f32 %v7894, 0.2
  %v8023 = vmul.f32 %v7895, 0.2
  %v8024 = vsel %vm7960, %v7864, %v7992
  %v8025 = vsel %vm7961, %v7865, %v7993
  %v8026 = vsel %vm7962, %v7866, %v7994
  %v8027 = vsel %vm7963, %v7867, %v7995
  %v8028 = vsel %vm7964, %v7868, %v7996
  %v8029 = vsel %vm7965, %v7869, %v7997
  %v8030 = vsel %vm7966, %v7870, %v7998
  %v8031 = vsel %vm7967, %v7871, %v7999
  %v8032 = vsel %vm7968, %v7872, %v8000
  %v8033 = vsel %vm7969, %v7873, %v8001
  %v8034 = vsel %vm7970, %v7874, %v8002
  %v8035 = vsel %vm7971, %v7875, %v8003
  %v8036 = vsel %vm7972, %v7876, %v8004
  %v8037 = vsel %vm7973, %v7877, %v8005
  %v8038 = vsel %vm7974, %v7878, %v8006
  %v8039 = vsel %vm7975, %v7879, %v8007
  %v8040 = vsel %vm7976, %v7880, %v8008
  %v8041 = vsel %vm7977, %v7881, %v8009
  %v8042 = vsel %vm7978, %v7882, %v8010
  %v8043 = vsel %vm7979, %v7883, %v8011
  %v8044 = vsel %vm7980, %v7884, %v8012
  %v8045 = vsel %vm7981, %v7885, %v8013
  %v8046 = vsel %vm7982, %v7886, %v8014
  %v8047 = vsel %vm7983, %v7887, %v8015
  %v8048 = vsel %vm7984, %v7888, %v8016
  %v8049 = vsel %vm7985, %v7889, %v8017
  %v8050 = vsel %vm7986, %v7890, %v8018
  %v8051 = vsel %vm7987, %v7891, %v8019
  %v8052 = vsel %vm7988, %v7892, %v8020
  %v8053 = vsel %vm7989, %v7893, %v8021
  %v8054 = vsel %vm7990, %v7894, %v8022
  %v8055 = vsel %vm7991, %v7895, %v8023
  %vm8056 = vcmp.gt.f32.partialorder %v7928, 0.0
  %vm8057 = vcmp.gt.f32.partialorder %v7929, 0.0
  %vm8058 = vcmp.gt.f32.partialorder %v7930, 0.0
  %vm8059 = vcmp.gt.f32.partialorder %v7931, 0.0
  %vm8060 = vcmp.gt.f32.partialorder %v7932, 0.0
  %vm8061 = vcmp.gt.f32.partialorder %v7933, 0.0
  %vm8062 = vcmp.gt.f32.partialorder %v7934, 0.0
  %vm8063 = vcmp.gt.f32.partialorder %v7935, 0.0
  %vm8064 = vcmp.gt.f32.partialorder %v7936, 0.0
  %vm8065 = vcmp.gt.f32.partialorder %v7937, 0.0
  %vm8066 = vcmp.gt.f32.partialorder %v7938, 0.0
  %vm8067 = vcmp.gt.f32.partialorder %v7939, 0.0
  %vm8068 = vcmp.gt.f32.partialorder %v7940, 0.0
  %vm8069 = vcmp.gt.f32.partialorder %v7941, 0.0
  %vm8070 = vcmp.gt.f32.partialorder %v7942, 0.0
  %vm8071 = vcmp.gt.f32.partialorder %v7943, 0.0
  %vm8072 = vcmp.gt.f32.partialorder %v7944, 0.0
  %vm8073 = vcmp.gt.f32.partialorder %v7945, 0.0
  %vm8074 = vcmp.gt.f32.partialorder %v7946, 0.0
  %vm8075 = vcmp.gt.f32.partialorder %v7947, 0.0
  %vm8076 = vcmp.gt.f32.partialorder %v7948, 0.0
  %vm8077 = vcmp.gt.f32.partialorder %v7949, 0.0
  %vm8078 = vcmp.gt.f32.partialorder %v7950, 0.0
  %vm8079 = vcmp.gt.f32.partialorder %v7951, 0.0
  %vm8080 = vcmp.gt.f32.partialorder %v7952, 0.0
  %vm8081 = vcmp.gt.f32.partialorder %v7953, 0.0
  %vm8082 = vcmp.gt.f32.partialorder %v7954, 0.0
  %vm8083 = vcmp.gt.f32.partialorder %v7955, 0.0
  %vm8084 = vcmp.gt.f32.partialorder %v7956, 0.0
  %vm8085 = vcmp.gt.f32.partialorder %v7957, 0.0
  %vm8086 = vcmp.gt.f32.partialorder %v7958, 0.0
  %vm8087 = vcmp.gt.f32.partialorder %v7959, 0.0
  %v8088 = vmul.f32 %v7928, 0.2
  %v8089 = vmul.f32 %v7929, 0.2
  %v8090 = vmul.f32 %v7930, 0.2
  %v8091 = vmul.f32 %v7931, 0.2
  %v8092 = vmul.f32 %v7932, 0.2
  %v8093 = vmul.f32 %v7933, 0.2
  %v8094 = vmul.f32 %v7934, 0.2
  %v8095 = vmul.f32 %v7935, 0.2
  %v8096 = vmul.f32 %v7936, 0.2
  %v8097 = vmul.f32 %v7937, 0.2
  %v8098 = vmul.f32 %v7938, 0.2
  %v8099 = vmul.f32 %v7939, 0.2
  %v8100 = vmul.f32 %v7940, 0.2
  %v8101 = vmul.f32 %v7941, 0.2
  %v8102 = vmul.f32 %v7942, 0.2
  %v8103 = vmul.f32 %v7943, 0.2
  %v8104 = vmul.f32 %v7944, 0.2
  %v8105 = vmul.f32 %v7945, 0.2
  %v8106 = vmul.f32 %v7946, 0.2
  %v8107 = vmul.f32 %v7947, 0.2
  %v8108 = vmul.f32 %v7948, 0.2
  %v8109 = vmul.f32 %v7949, 0.2
  %v8110 = vmul.f32 %v7950, 0.2
  %v8111 = vmul.f32 %v7951, 0.2
  %v8112 = vmul.f32 %v7952, 0.2
  %v8113 = vmul.f32 %v7953, 0.2
  %v8114 = vmul.f32 %v7954, 0.2
  %v8115 = vmul.f32 %v7955, 0.2
  %v8116 = vmul.f32 %v7956, 0.2
  %v8117 = vmul.f32 %v7957, 0.2
  %v8118 = vmul.f32 %v7958, 0.2
  %v8119 = vmul.f32 %v7959, 0.2
  %v8120 = vsel %vm8056, %v7928, %v8088
  %v8121 = vsel %vm8057, %v7929, %v8089
  %v8122 = vsel %vm8058, %v7930, %v8090
  %v8123 = vsel %vm8059, %v7931, %v8091
  %v8124 = vsel %vm8060, %v7932, %v8092
  %v8125 = vsel %vm8061, %v7933, %v8093
  %v8126 = vsel %vm8062, %v7934, %v8094
  %v8127 = vsel %vm8063, %v7935, %v8095
  %v8128 = vsel %vm8064, %v7936, %v8096
  %v8129 = vsel %vm8065, %v7937, %v8097
  %v8130 = vsel %vm8066, %v7938, %v8098
  %v8131 = vsel %vm8067, %v7939, %v8099
  %v8132 = vsel %vm8068, %v7940, %v8100
  %v8133 = vsel %vm8069, %v7941, %v8101
  %v8134 = vsel %vm8070, %v7942, %v8102
  %v8135 = vsel %vm8071, %v7943, %v8103
  %v8136 = vsel %vm8072, %v7944, %v8104
  %v8137 = vsel %vm8073, %v7945, %v8105
  %v8138 = vsel %vm8074, %v7946, %v8106
  %v8139 = vsel %vm8075, %v7947, %v8107
  %v8140 = vsel %vm8076, %v7948, %v8108
  %v8141 = vsel %vm8077, %v7949, %v8109
  %v8142 = vsel %vm8078, %v7950, %v8110
  %v8143 = vsel %vm8079, %v7951, %v8111
  %v8144 = vsel %vm8080, %v7952, %v8112
  %v8145 = vsel %vm8081, %v7953, %v8113
  %v8146 = vsel %vm8082, %v7954, %v8114
  %v8147 = vsel %vm8083, %v7955, %v8115
  %v8148 = vsel %vm8084, %v7956, %v8116
  %v8149 = vsel %vm8085, %v7957, %v8117
  %v8150 = vsel %vm8086, %v7958, %v8118
  %v8151 = vsel %vm8087, %v7959, %v8119
  %v8152 = vld [vmem:[%s8] sm:$0xff]
  %v8153 = vld [vmem:[%s8 + $0x8] sm:$0xff]
  %v8154 = vld [vmem:[%s8 + $0x10] sm:$0xf]
  %v8155 = vld [vmem:[%s8 + $0x14] sm:$0xff]
  %v8156 = vld [vmem:[%s8 + $0x1c] sm:$0xff]
  %v8157 = vld [vmem:[%s8 + $0x24] sm:$0xf]
  %v8158 = vld [vmem:[%s8 + $0x28] sm:$0xff]
  %v8159 = vld [vmem:[%s8 + $0x30] sm:$0xff]
  %v8160 = vld [vmem:[%s8 + $0x38] sm:$0xf]
  %v8161 = vld [vmem:[%s8 + $0x3c] sm:$0xff]
  %v8162 = vld [vmem:[%s8 + $0x44] sm:$0xff]
  %v8163 = vld [vmem:[%s8 + $0x4c] sm:$0xf]
  %v8164 = vld [vmem:[%s8 + $0x50] sm:$0xff]
  %v8165 = vld [vmem:[%s8 + $0x58] sm:$0xff]
  %v8166 = vld [vmem:[%s8 + $0x60] sm:$0xf]
  %v8167 = vld [vmem:[%s8 + $0x64] sm:$0xff]
  %v8168 = vld [vmem:[%s8 + $0x6c] sm:$0xff]
  %v8169 = vld [vmem:[%s8 + $0x74] sm:$0xf]
  %v8170 = vld [vmem:[%s8 + $0x78] sm:$0xff]
  %v8171 = vld [vmem:[%s8 + $0x80] sm:$0xff]
  %v8172 = vld [vmem:[%s8 + $0x88] sm:$0xf]
  %v8173 = vld [vmem:[%s8 + $0x8c] sm:$0xff]
  %v8174 = vld [vmem:[%s8 + $0x94] sm:$0xff]
  %v8175 = vld [vmem:[%s8 + $0x9c] sm:$0xf]
  %8176 = vrot.lane.b32.xlu0 %v8024, 1
  %v8177 = vpop.permute.xlu0 %8176
  %8178 = vrot.lane.b32.xlu0 %v8026, 1
  %v8179 = vpop.permute.xlu0 %8178
  %8180 = vrot.lane.b32.xlu0 %v8028, 1
  %v8181 = vpop.permute.xlu0 %8180
  %8182 = vrot.lane.b32.xlu0 %v8030, 1
  %v8183 = vpop.permute.xlu0 %8182
  %8184 = vrot.lane.b32.xlu0 %v8032, 1
  %v8185 = vpop.permute.xlu0 %8184
  %8186 = vrot.lane.b32.xlu0 %v8034, 1
  %v8187 = vpop.permute.xlu0 %8186
  %8188 = vrot.lane.b32.xlu0 %v8036, 1
  %v8189 = vpop.permute.xlu0 %8188
  %8190 = vrot.lane.b32.xlu0 %v8038, 1
  %v8191 = vpop.permute.xlu0 %8190
  %8192 = vrot.lane.b32.xlu0 %v8040, 1
  %v8193 = vpop.permute.xlu0 %8192
  %8194 = vrot.lane.b32.xlu0 %v8042, 1
  %v8195 = vpop.permute.xlu0 %8194
  %8196 = vrot.lane.b32.xlu0 %v8044, 1
  %v8197 = vpop.permute.xlu0 %8196
  %8198 = vrot.lane.b32.xlu0 %v8046, 1
  %v8199 = vpop.permute.xlu0 %8198
  %8200 = vrot.lane.b32.xlu0 %v8048, 1
  %v8201 = vpop.permute.xlu0 %8200
  %8202 = vrot.lane.b32.xlu0 %v8050, 1
  %v8203 = vpop.permute.xlu0 %8202
  %8204 = vrot.lane.b32.xlu0 %v8052, 1
  %v8205 = vpop.permute.xlu0 %8204
  %8206 = vrot.lane.b32.xlu0 %v8054, 1
  %v8207 = vpop.permute.xlu0 %8206
  %8208 = vrot.lane.b32.xlu0 %v8025, 1
  %v8209 = vpop.permute.xlu0 %8208
  %8210 = vrot.lane.b32.xlu0 %v8027, 1
  %v8211 = vpop.permute.xlu0 %8210
  %8212 = vrot.lane.b32.xlu0 %v8029, 1
  %v8213 = vpop.permute.xlu0 %8212
  %8214 = vrot.lane.b32.xlu0 %v8031, 1
  %v8215 = vpop.permute.xlu0 %8214
  %8216 = vrot.lane.b32.xlu0 %v8033, 1
  %v8217 = vpop.permute.xlu0 %8216
  %8218 = vrot.lane.b32.xlu0 %v8035, 1
  %v8219 = vpop.permute.xlu0 %8218
  %8220 = vrot.lane.b32.xlu0 %v8037, 1
  %v8221 = vpop.permute.xlu0 %8220
  %8222 = vrot.lane.b32.xlu0 %v8039, 1
  %v8223 = vpop.permute.xlu0 %8222
  %8224 = vrot.lane.b32.xlu0 %v8041, 1
  %v8225 = vpop.permute.xlu0 %8224
  %8226 = vrot.lane.b32.xlu0 %v8043, 1
  %v8227 = vpop.permute.xlu0 %8226
  %8228 = vrot.lane.b32.xlu0 %v8045, 1
  %v8229 = vpop.permute.xlu0 %8228
  %8230 = vrot.lane.b32.xlu0 %v8047, 1
  %v8231 = vpop.permute.xlu0 %8230
  %8232 = vrot.lane.b32.xlu0 %v8049, 1
  %v8233 = vpop.permute.xlu0 %8232
  %8234 = vrot.lane.b32.xlu0 %v8051, 1
  %v8235 = vpop.permute.xlu0 %8234
  %8236 = vrot.lane.b32.xlu0 %v8053, 1
  %v8237 = vpop.permute.xlu0 %8236
  %8238 = vrot.lane.b32.xlu0 %v8055, 1
  %v8239 = vpop.permute.xlu0 %8238
  %v8240 = vsel %vm4607, %v8177, %v8209
  %v8241 = vsel %vm4607, %v8179, %v8211
  %v8242 = vsel %vm4607, %v8181, %v8213
  %v8243 = vsel %vm4607, %v8183, %v8215
  %v8244 = vsel %vm4607, %v8185, %v8217
  %v8245 = vsel %vm4607, %v8187, %v8219
  %v8246 = vsel %vm4607, %v8189, %v8221
  %v8247 = vsel %vm4607, %v8191, %v8223
  %v8248 = vsel %vm4607, %v8193, %v8225
  %v8249 = vsel %vm4607, %v8195, %v8227
  %v8250 = vsel %vm4607, %v8197, %v8229
  %v8251 = vsel %vm4607, %v8199, %v8231
  %v8252 = vsel %vm4607, %v8201, %v8233
  %v8253 = vsel %vm4607, %v8203, %v8235
  %v8254 = vsel %vm4607, %v8205, %v8237
  %v8255 = vsel %vm4607, %v8207, %v8239
  %v8256 = vsel %vm4607, %v8209, %v8177
  %v8257 = vsel %vm4607, %v8211, %v8179
  %v8258 = vsel %vm4607, %v8213, %v8181
  %v8259 = vsel %vm4607, %v8215, %v8183
  %v8260 = vsel %vm4607, %v8217, %v8185
  %v8261 = vsel %vm4607, %v8219, %v8187
  %v8262 = vsel %vm4607, %v8221, %v8189
  %v8263 = vsel %vm4607, %v8223, %v8191
  %v8264 = vsel %vm4607, %v8225, %v8193
  %v8265 = vsel %vm4607, %v8227, %v8195
  %v8266 = vsel %vm4607, %v8229, %v8197
  %v8267 = vsel %vm4607, %v8231, %v8199
  %v8268 = vsel %vm4607, %v8233, %v8201
  %v8269 = vsel %vm4607, %v8235, %v8203
  %v8270 = vsel %vm4607, %v8237, %v8205
  %v8271 = vsel %vm4607, %v8239, %v8207
  %v8272 = vmul.f32 %v8256, %v116
  %v8273 = vmul.f32 %v8240, %v117
  %v8274 = vmul.f32 %v8257, %v116
  %v8275 = vmul.f32 %v8241, %v117
  %v8276 = vmul.f32 %v8258, %v116
  %v8277 = vmul.f32 %v8242, %v117
  %v8278 = vmul.f32 %v8259, %v116
  %v8279 = vmul.f32 %v8243, %v117
  %v8280 = vmul.f32 %v8260, %v116
  %v8281 = vmul.f32 %v8244, %v117
  %v8282 = vmul.f32 %v8261, %v116
  %v8283 = vmul.f32 %v8245, %v117
  %v8284 = vmul.f32 %v8262, %v116
  %v8285 = vmul.f32 %v8246, %v117
  %v8286 = vmul.f32 %v8263, %v116
  %v8287 = vmul.f32 %v8247, %v117
  %v8288 = vmul.f32 %v8264, %v116
  %v8289 = vmul.f32 %v8248, %v117
  %v8290 = vmul.f32 %v8265, %v116
  %v8291 = vmul.f32 %v8249, %v117
  %v8292 = vmul.f32 %v8266, %v116
  %v8293 = vmul.f32 %v8250, %v117
  %v8294 = vmul.f32 %v8267, %v116
  %v8295 = vmul.f32 %v8251, %v117
  %v8296 = vmul.f32 %v8268, %v116
  %v8297 = vmul.f32 %v8252, %v117
  %v8298 = vmul.f32 %v8269, %v116
  %v8299 = vmul.f32 %v8253, %v117
  %v8300 = vmul.f32 %v8270, %v116
  %v8301 = vmul.f32 %v8254, %v117
  %v8302 = vmul.f32 %v8271, %v116
  %v8303 = vmul.f32 %v8255, %v117
  %v8304 = vpack.c.bf16 %v8274, %v8272
  %v8305 = vpack.c.bf16 %v8275, %v8273
  %v8306 = vpack.c.bf16 %v8278, %v8276
  %v8307 = vpack.c.bf16 %v8279, %v8277
  %v8308 = vpack.c.bf16 %v8282, %v8280
  %v8309 = vpack.c.bf16 %v8283, %v8281
  %v8310 = vpack.c.bf16 %v8286, %v8284
  %v8311 = vpack.c.bf16 %v8287, %v8285
  %v8312 = vpack.c.bf16 %v8290, %v8288
  %v8313 = vpack.c.bf16 %v8291, %v8289
  %v8314 = vpack.c.bf16 %v8294, %v8292
  %v8315 = vpack.c.bf16 %v8295, %v8293
  %v8316 = vpack.c.bf16 %v8298, %v8296
  %v8317 = vpack.c.bf16 %v8299, %v8297
  %v8318 = vpack.c.bf16 %v8302, %v8300
  %v8319 = vpack.c.bf16 %v8303, %v8301
  %8320 = vrot.lane.b32.xlu0 %v8120, 1
  %v8321 = vpop.permute.xlu0 %8320
  %8322 = vrot.lane.b32.xlu0 %v8122, 1
  %v8323 = vpop.permute.xlu0 %8322
  %8324 = vrot.lane.b32.xlu0 %v8124, 1
  %v8325 = vpop.permute.xlu0 %8324
  %8326 = vrot.lane.b32.xlu0 %v8126, 1
  %v8327 = vpop.permute.xlu0 %8326
  %8328 = vrot.lane.b32.xlu0 %v8128, 1
  %v8329 = vpop.permute.xlu0 %8328
  %8330 = vrot.lane.b32.xlu0 %v8130, 1
  %v8331 = vpop.permute.xlu0 %8330
  %8332 = vrot.lane.b32.xlu0 %v8132, 1
  %v8333 = vpop.permute.xlu0 %8332
  %8334 = vrot.lane.b32.xlu0 %v8134, 1
  %v8335 = vpop.permute.xlu0 %8334
  %8336 = vrot.lane.b32.xlu0 %v8136, 1
  %v8337 = vpop.permute.xlu0 %8336
  %8338 = vrot.lane.b32.xlu0 %v8138, 1
  %v8339 = vpop.permute.xlu0 %8338
  %8340 = vrot.lane.b32.xlu0 %v8140, 1
  %v8341 = vpop.permute.xlu0 %8340
  %8342 = vrot.lane.b32.xlu0 %v8142, 1
  %v8343 = vpop.permute.xlu0 %8342
  %8344 = vrot.lane.b32.xlu0 %v8144, 1
  %v8345 = vpop.permute.xlu0 %8344
  %8346 = vrot.lane.b32.xlu0 %v8146, 1
  %v8347 = vpop.permute.xlu0 %8346
  %8348 = vrot.lane.b32.xlu0 %v8148, 1
  %v8349 = vpop.permute.xlu0 %8348
  %8350 = vrot.lane.b32.xlu0 %v8150, 1
  %v8351 = vpop.permute.xlu0 %8350
  %8352 = vrot.lane.b32.xlu0 %v8121, 1
  %v8353 = vpop.permute.xlu0 %8352
  %8354 = vrot.lane.b32.xlu0 %v8123, 1
  %v8355 = vpop.permute.xlu0 %8354
  %8356 = vrot.lane.b32.xlu0 %v8125, 1
  %v8357 = vpop.permute.xlu0 %8356
  %8358 = vrot.lane.b32.xlu0 %v8127, 1
  %v8359 = vpop.permute.xlu0 %8358
  %8360 = vrot.lane.b32.xlu0 %v8129, 1
  %v8361 = vpop.permute.xlu0 %8360
  %8362 = vrot.lane.b32.xlu0 %v8131, 1
  %v8363 = vpop.permute.xlu0 %8362
  %8364 = vrot.lane.b32.xlu0 %v8133, 1
  %v8365 = vpop.permute.xlu0 %8364
  %8366 = vrot.lane.b32.xlu0 %v8135, 1
  %v8367 = vpop.permute.xlu0 %8366
  %8368 = vrot.lane.b32.xlu0 %v8137, 1
  %v8369 = vpop.permute.xlu0 %8368
  %8370 = vrot.lane.b32.xlu0 %v8139, 1
  %v8371 = vpop.permute.xlu0 %8370
  %8372 = vrot.lane.b32.xlu0 %v8141, 1
  %v8373 = vpop.permute.xlu0 %8372
  %8374 = vrot.lane.b32.xlu0 %v8143, 1
  %v8375 = vpop.permute.xlu0 %8374
  %8376 = vrot.lane.b32.xlu0 %v8145, 1
  %v8377 = vpop.permute.xlu0 %8376
  %8378 = vrot.lane.b32.xlu0 %v8147, 1
  %v8379 = vpop.permute.xlu0 %8378
  %8380 = vrot.lane.b32.xlu0 %v8149, 1
  %v8381 = vpop.permute.xlu0 %8380
  %8382 = vrot.lane.b32.xlu0 %v8151, 1
  %v8383 = vpop.permute.xlu0 %8382
  %v8384 = vsel %vm4607, %v8321, %v8353
  %v8385 = vsel %vm4607, %v8323, %v8355
  %v8386 = vsel %vm4607, %v8325, %v8357
  %v8387 = vsel %vm4607, %v8327, %v8359
  %v8388 = vsel %vm4607, %v8329, %v8361
  %v8389 = vsel %vm4607, %v8331, %v8363
  %v8390 = vsel %vm4607, %v8333, %v8365
  %v8391 = vsel %vm4607, %v8335, %v8367
  %v8392 = vsel %vm4607, %v8337, %v8369
  %v8393 = vsel %vm4607, %v8339, %v8371
  %v8394 = vsel %vm4607, %v8341, %v8373
  %v8395 = vsel %vm4607, %v8343, %v8375
  %v8396 = vsel %vm4607, %v8345, %v8377
  %v8397 = vsel %vm4607, %v8347, %v8379
  %v8398 = vsel %vm4607, %v8349, %v8381
  %v8399 = vsel %vm4607, %v8351, %v8383
  %v8400 = vsel %vm4607, %v8353, %v8321
  %v8401 = vsel %vm4607, %v8355, %v8323
  %v8402 = vsel %vm4607, %v8357, %v8325
  %v8403 = vsel %vm4607, %v8359, %v8327
  %v8404 = vsel %vm4607, %v8361, %v8329
  %v8405 = vsel %vm4607, %v8363, %v8331
  %v8406 = vsel %vm4607, %v8365, %v8333
  %v8407 = vsel %vm4607, %v8367, %v8335
  %v8408 = vsel %vm4607, %v8369, %v8337
  %v8409 = vsel %vm4607, %v8371, %v8339
  %v8410 = vsel %vm4607, %v8373, %v8341
  %v8411 = vsel %vm4607, %v8375, %v8343
  %v8412 = vsel %vm4607, %v8377, %v8345
  %v8413 = vsel %vm4607, %v8379, %v8347
  %v8414 = vsel %vm4607, %v8381, %v8349
  %v8415 = vsel %vm4607, %v8383, %v8351
  %v8416 = vmul.f32 %v8400, %v116
  %v8417 = vmul.f32 %v8384, %v117
  %v8418 = vmul.f32 %v8401, %v116
  %v8419 = vmul.f32 %v8385, %v117
  %v8420 = vmul.f32 %v8402, %v116
  %v8421 = vmul.f32 %v8386, %v117
  %v8422 = vmul.f32 %v8403, %v116
  %v8423 = vmul.f32 %v8387, %v117
  %v8424 = vmul.f32 %v8404, %v116
  %v8425 = vmul.f32 %v8388, %v117
  %v8426 = vmul.f32 %v8405, %v116
  %v8427 = vmul.f32 %v8389, %v117
  %v8428 = vmul.f32 %v8406, %v116
  %v8429 = vmul.f32 %v8390, %v117
  %v8430 = vmul.f32 %v8407, %v116
  %v8431 = vmul.f32 %v8391, %v117
  %v8432 = vmul.f32 %v8408, %v116
  %v8433 = vmul.f32 %v8392, %v117
  %v8434 = vmul.f32 %v8409, %v116
  %v8435 = vmul.f32 %v8393, %v117
  %v8436 = vmul.f32 %v8410, %v116
  %v8437 = vmul.f32 %v8394, %v117
  %v8438 = vmul.f32 %v8411, %v116
  %v8439 = vmul.f32 %v8395, %v117
  %v8440 = vmul.f32 %v8412, %v116
  %v8441 = vmul.f32 %v8396, %v117
  %v8442 = vmul.f32 %v8413, %v116
  %v8443 = vmul.f32 %v8397, %v117
  %v8444 = vmul.f32 %v8414, %v116
  %v8445 = vmul.f32 %v8398, %v117
  %v8446 = vmul.f32 %v8415, %v116
  %v8447 = vmul.f32 %v8399, %v117
  %v8448 = vpack.c.bf16 %v8418, %v8416
  %v8449 = vpack.c.bf16 %v8419, %v8417
  %v8450 = vpack.c.bf16 %v8422, %v8420
  %v8451 = vpack.c.bf16 %v8423, %v8421
  %v8452 = vpack.c.bf16 %v8426, %v8424
  %v8453 = vpack.c.bf16 %v8427, %v8425
  %v8454 = vpack.c.bf16 %v8430, %v8428
  %v8455 = vpack.c.bf16 %v8431, %v8429
  %v8456 = vpack.c.bf16 %v8434, %v8432
  %v8457 = vpack.c.bf16 %v8435, %v8433
  %v8458 = vpack.c.bf16 %v8438, %v8436
  %v8459 = vpack.c.bf16 %v8439, %v8437
  %v8460 = vpack.c.bf16 %v8442, %v8440
  %v8461 = vpack.c.bf16 %v8443, %v8441
  %v8462 = vpack.c.bf16 %v8446, %v8444
  %v8463 = vpack.c.bf16 %v8447, %v8445
  %v8464 = vpack.c.bf16 %v8026, %v8024
  %v8465 = vpack.c.bf16 %v8027, %v8025
  %v8466 = vpack.c.bf16 %v8030, %v8028
  %v8467 = vpack.c.bf16 %v8031, %v8029
  %v8468 = vpack.c.bf16 %v8034, %v8032
  %v8469 = vpack.c.bf16 %v8035, %v8033
  %v8470 = vpack.c.bf16 %v8038, %v8036
  %v8471 = vpack.c.bf16 %v8039, %v8037
  %v8472 = vpack.c.bf16 %v8042, %v8040
  %v8473 = vpack.c.bf16 %v8043, %v8041
  %v8474 = vpack.c.bf16 %v8046, %v8044
  %v8475 = vpack.c.bf16 %v8047, %v8045
  %v8476 = vpack.c.bf16 %v8050, %v8048
  %v8477 = vpack.c.bf16 %v8051, %v8049
  %v8478 = vpack.c.bf16 %v8054, %v8052
  %v8479 = vpack.c.bf16 %v8055, %v8053
  %v8480 = vpack.c.bf16 %v8122, %v8120
  %v8481 = vpack.c.bf16 %v8123, %v8121
  %v8482 = vpack.c.bf16 %v8126, %v8124
  %v8483 = vpack.c.bf16 %v8127, %v8125
  %v8484 = vpack.c.bf16 %v8130, %v8128
  %v8485 = vpack.c.bf16 %v8131, %v8129
  %v8486 = vpack.c.bf16 %v8134, %v8132
  %v8487 = vpack.c.bf16 %v8135, %v8133
  %v8488 = vpack.c.bf16 %v8138, %v8136
  %v8489 = vpack.c.bf16 %v8139, %v8137
  %v8490 = vpack.c.bf16 %v8142, %v8140
  %v8491 = vpack.c.bf16 %v8143, %v8141
  %v8492 = vpack.c.bf16 %v8146, %v8144
  %v8493 = vpack.c.bf16 %v8147, %v8145
  %v8494 = vpack.c.bf16 %v8150, %v8148
  %v8495 = vpack.c.bf16 %v8151, %v8149
  %8496 = vrot.lane.b32.xlu0 %v8024, 127
  %v8497 = vpop.permute.xlu0 %8496
  %8498 = vrot.lane.b32.xlu0 %v8026, 127
  %v8499 = vpop.permute.xlu0 %8498
  %8500 = vrot.lane.b32.xlu0 %v8028, 127
  %v8501 = vpop.permute.xlu0 %8500
  %8502 = vrot.lane.b32.xlu0 %v8030, 127
  %v8503 = vpop.permute.xlu0 %8502
  %8504 = vrot.lane.b32.xlu0 %v8032, 127
  %v8505 = vpop.permute.xlu0 %8504
  %8506 = vrot.lane.b32.xlu0 %v8034, 127
  %v8507 = vpop.permute.xlu0 %8506
  %8508 = vrot.lane.b32.xlu0 %v8036, 127
  %v8509 = vpop.permute.xlu0 %8508
  %8510 = vrot.lane.b32.xlu0 %v8038, 127
  %v8511 = vpop.permute.xlu0 %8510
  %8512 = vrot.lane.b32.xlu0 %v8040, 127
  %v8513 = vpop.permute.xlu0 %8512
  %8514 = vrot.lane.b32.xlu0 %v8042, 127
  %v8515 = vpop.permute.xlu0 %8514
  %8516 = vrot.lane.b32.xlu0 %v8044, 127
  %v8517 = vpop.permute.xlu0 %8516
  %8518 = vrot.lane.b32.xlu0 %v8046, 127
  %v8519 = vpop.permute.xlu0 %8518
  %8520 = vrot.lane.b32.xlu0 %v8048, 127
  %v8521 = vpop.permute.xlu0 %8520
  %8522 = vrot.lane.b32.xlu0 %v8050, 127
  %v8523 = vpop.permute.xlu0 %8522
  %8524 = vrot.lane.b32.xlu0 %v8052, 127
  %v8525 = vpop.permute.xlu0 %8524
  %8526 = vrot.lane.b32.xlu0 %v8054, 127
  %v8527 = vpop.permute.xlu0 %8526
  %8528 = vrot.lane.b32.xlu0 %v8025, 127
  %v8529 = vpop.permute.xlu0 %8528
  %8530 = vrot.lane.b32.xlu0 %v8027, 127
  %v8531 = vpop.permute.xlu0 %8530
  %8532 = vrot.lane.b32.xlu0 %v8029, 127
  %v8533 = vpop.permute.xlu0 %8532
  %8534 = vrot.lane.b32.xlu0 %v8031, 127
  %v8535 = vpop.permute.xlu0 %8534
  %8536 = vrot.lane.b32.xlu0 %v8033, 127
  %v8537 = vpop.permute.xlu0 %8536
  %8538 = vrot.lane.b32.xlu0 %v8035, 127
  %v8539 = vpop.permute.xlu0 %8538
  %8540 = vrot.lane.b32.xlu0 %v8037, 127
  %v8541 = vpop.permute.xlu0 %8540
  %8542 = vrot.lane.b32.xlu0 %v8039, 127
  %v8543 = vpop.permute.xlu0 %8542
  %8544 = vrot.lane.b32.xlu0 %v8041, 127
  %v8545 = vpop.permute.xlu0 %8544
  %8546 = vrot.lane.b32.xlu0 %v8043, 127
  %v8547 = vpop.permute.xlu0 %8546
  %8548 = vrot.lane.b32.xlu0 %v8045, 127
  %v8549 = vpop.permute.xlu0 %8548
  %8550 = vrot.lane.b32.xlu0 %v8047, 127
  %v8551 = vpop.permute.xlu0 %8550
  %8552 = vrot.lane.b32.xlu0 %v8049, 127
  %v8553 = vpop.permute.xlu0 %8552
  %8554 = vrot.lane.b32.xlu0 %v8051, 127
  %v8555 = vpop.permute.xlu0 %8554
  %8556 = vrot.lane.b32.xlu0 %v8053, 127
  %v8557 = vpop.permute.xlu0 %8556
  %8558 = vrot.lane.b32.xlu0 %v8055, 127
  %v8559 = vpop.permute.xlu0 %8558
  %v8560 = vsel %vm4928, %v8497, %v8529
  %v8561 = vsel %vm4928, %v8499, %v8531
  %v8562 = vsel %vm4928, %v8501, %v8533
  %v8563 = vsel %vm4928, %v8503, %v8535
  %v8564 = vsel %vm4928, %v8505, %v8537
  %v8565 = vsel %vm4928, %v8507, %v8539
  %v8566 = vsel %vm4928, %v8509, %v8541
  %v8567 = vsel %vm4928, %v8511, %v8543
  %v8568 = vsel %vm4928, %v8513, %v8545
  %v8569 = vsel %vm4928, %v8515, %v8547
  %v8570 = vsel %vm4928, %v8517, %v8549
  %v8571 = vsel %vm4928, %v8519, %v8551
  %v8572 = vsel %vm4928, %v8521, %v8553
  %v8573 = vsel %vm4928, %v8523, %v8555
  %v8574 = vsel %vm4928, %v8525, %v8557
  %v8575 = vsel %vm4928, %v8527, %v8559
  %v8576 = vsel %vm4928, %v8529, %v8497
  %v8577 = vsel %vm4928, %v8531, %v8499
  %v8578 = vsel %vm4928, %v8533, %v8501
  %v8579 = vsel %vm4928, %v8535, %v8503
  %v8580 = vsel %vm4928, %v8537, %v8505
  %v8581 = vsel %vm4928, %v8539, %v8507
  %v8582 = vsel %vm4928, %v8541, %v8509
  %v8583 = vsel %vm4928, %v8543, %v8511
  %v8584 = vsel %vm4928, %v8545, %v8513
  %v8585 = vsel %vm4928, %v8547, %v8515
  %v8586 = vsel %vm4928, %v8549, %v8517
  %v8587 = vsel %vm4928, %v8551, %v8519
  %v8588 = vsel %vm4928, %v8553, %v8521
  %v8589 = vsel %vm4928, %v8555, %v8523
  %v8590 = vsel %vm4928, %v8557, %v8525
  %v8591 = vsel %vm4928, %v8559, %v8527
  %v8592 = vmul.f32 %v8560, %v128
  %v8593 = vmul.f32 %v8576, %v129
  %v8594 = vmul.f32 %v8561, %v128
  %v8595 = vmul.f32 %v8577, %v129
  %v8596 = vmul.f32 %v8562, %v128
  %v8597 = vmul.f32 %v8578, %v129
  %v8598 = vmul.f32 %v8563, %v128
  %v8599 = vmul.f32 %v8579, %v129
  %v8600 = vmul.f32 %v8564, %v128
  %v8601 = vmul.f32 %v8580, %v129
  %v8602 = vmul.f32 %v8565, %v128
  %v8603 = vmul.f32 %v8581, %v129
  %v8604 = vmul.f32 %v8566, %v128
  %v8605 = vmul.f32 %v8582, %v129
  %v8606 = vmul.f32 %v8567, %v128
  %v8607 = vmul.f32 %v8583, %v129
  %v8608 = vmul.f32 %v8568, %v128
  %v8609 = vmul.f32 %v8584, %v129
  %v8610 = vmul.f32 %v8569, %v128
  %v8611 = vmul.f32 %v8585, %v129
  %v8612 = vmul.f32 %v8570, %v128
  %v8613 = vmul.f32 %v8586, %v129
  %v8614 = vmul.f32 %v8571, %v128
  %v8615 = vmul.f32 %v8587, %v129
  %v8616 = vmul.f32 %v8572, %v128
  %v8617 = vmul.f32 %v8588, %v129
  %v8618 = vmul.f32 %v8573, %v128
  %v8619 = vmul.f32 %v8589, %v129
  %v8620 = vmul.f32 %v8574, %v128
  %v8621 = vmul.f32 %v8590, %v129
  %v8622 = vmul.f32 %v8575, %v128
  %v8623 = vmul.f32 %v8591, %v129
  %v8624 = vpack.c.bf16 %v8594, %v8592
  %v8625 = vpack.c.bf16 %v8595, %v8593
  %v8626 = vpack.c.bf16 %v8598, %v8596
  %v8627 = vpack.c.bf16 %v8599, %v8597
  %v8628 = vpack.c.bf16 %v8602, %v8600
  %v8629 = vpack.c.bf16 %v8603, %v8601
  %v8630 = vpack.c.bf16 %v8606, %v8604
  %v8631 = vpack.c.bf16 %v8607, %v8605
  %v8632 = vpack.c.bf16 %v8610, %v8608
  %v8633 = vpack.c.bf16 %v8611, %v8609
  %v8634 = vpack.c.bf16 %v8614, %v8612
  %v8635 = vpack.c.bf16 %v8615, %v8613
  %v8636 = vpack.c.bf16 %v8618, %v8616
  %v8637 = vpack.c.bf16 %v8619, %v8617
  %v8638 = vpack.c.bf16 %v8622, %v8620
  %v8639 = vpack.c.bf16 %v8623, %v8621
  %8640 = vrot.lane.b32.xlu0 %v8120, 127
  %v8641 = vpop.permute.xlu0 %8640
  %8642 = vrot.lane.b32.xlu0 %v8122, 127
  %v8643 = vpop.permute.xlu0 %8642
  %8644 = vrot.lane.b32.xlu0 %v8124, 127
  %v8645 = vpop.permute.xlu0 %8644
  %8646 = vrot.lane.b32.xlu0 %v8126, 127
  %v8647 = vpop.permute.xlu0 %8646
  %8648 = vrot.lane.b32.xlu0 %v8128, 127
  %v8649 = vpop.permute.xlu0 %8648
  %8650 = vrot.lane.b32.xlu0 %v8130, 127
  %v8651 = vpop.permute.xlu0 %8650
  %8652 = vrot.lane.b32.xlu0 %v8132, 127
  %v8653 = vpop.permute.xlu0 %8652
  %8654 = vrot.lane.b32.xlu0 %v8134, 127
  %v8655 = vpop.permute.xlu0 %8654
  %8656 = vrot.lane.b32.xlu0 %v8136, 127
  %v8657 = vpop.permute.xlu0 %8656
  %8658 = vrot.lane.b32.xlu0 %v8138, 127
  %v8659 = vpop.permute.xlu0 %8658
  %8660 = vrot.lane.b32.xlu0 %v8140, 127
  %v8661 = vpop.permute.xlu0 %8660
  %8662 = vrot.lane.b32.xlu0 %v8142, 127
  %v8663 = vpop.permute.xlu0 %8662
  %8664 = vrot.lane.b32.xlu0 %v8144, 127
  %v8665 = vpop.permute.xlu0 %8664
  %8666 = vrot.lane.b32.xlu0 %v8146, 127
  %v8667 = vpop.permute.xlu0 %8666
  %8668 = vrot.lane.b32.xlu0 %v8148, 127
  %v8669 = vpop.permute.xlu0 %8668
  %8670 = vrot.lane.b32.xlu0 %v8150, 127
  %v8671 = vpop.permute.xlu0 %8670
  %8672 = vrot.lane.b32.xlu0 %v8121, 127
  %v8673 = vpop.permute.xlu0 %8672
  %8674 = vrot.lane.b32.xlu0 %v8123, 127
  %v8675 = vpop.permute.xlu0 %8674
  %8676 = vrot.lane.b32.xlu0 %v8125, 127
  %v8677 = vpop.permute.xlu0 %8676
  %8678 = vrot.lane.b32.xlu0 %v8127, 127
  %v8679 = vpop.permute.xlu0 %8678
  %8680 = vrot.lane.b32.xlu0 %v8129, 127
  %v8681 = vpop.permute.xlu0 %8680
  %8682 = vrot.lane.b32.xlu0 %v8131, 127
  %v8683 = vpop.permute.xlu0 %8682
  %8684 = vrot.lane.b32.xlu0 %v8133, 127
  %v8685 = vpop.permute.xlu0 %8684
  %8686 = vrot.lane.b32.xlu0 %v8135, 127
  %v8687 = vpop.permute.xlu0 %8686
  %8688 = vrot.lane.b32.xlu0 %v8137, 127
  %v8689 = vpop.permute.xlu0 %8688
  %8690 = vrot.lane.b32.xlu0 %v8139, 127
  %v8691 = vpop.permute.xlu0 %8690
  %8692 = vrot.lane.b32.xlu0 %v8141, 127
  %v8693 = vpop.permute.xlu0 %8692
  %8694 = vrot.lane.b32.xlu0 %v8143, 127
  %v8695 = vpop.permute.xlu0 %8694
  %8696 = vrot.lane.b32.xlu0 %v8145, 127
  %v8697 = vpop.permute.xlu0 %8696
  %8698 = vrot.lane.b32.xlu0 %v8147, 127
  %v8699 = vpop.permute.xlu0 %8698
  %8700 = vrot.lane.b32.xlu0 %v8149, 127
  %v8701 = vpop.permute.xlu0 %8700
  %8702 = vrot.lane.b32.xlu0 %v8151, 127
  %v8703 = vpop.permute.xlu0 %8702
  %v8704 = vsel %vm4928, %v8641, %v8673
  %v8705 = vsel %vm4928, %v8643, %v8675
  %v8706 = vsel %vm4928, %v8645, %v8677
  %v8707 = vsel %vm4928, %v8647, %v8679
  %v8708 = vsel %vm4928, %v8649, %v8681
  %v8709 = vsel %vm4928, %v8651, %v8683
  %v8710 = vsel %vm4928, %v8653, %v8685
  %v8711 = vsel %vm4928, %v8655, %v8687
  %v8712 = vsel %vm4928, %v8657, %v8689
  %v8713 = vsel %vm4928, %v8659, %v8691
  %v8714 = vsel %vm4928, %v8661, %v8693
  %v8715 = vsel %vm4928, %v8663, %v8695
  %v8716 = vsel %vm4928, %v8665, %v8697
  %v8717 = vsel %vm4928, %v8667, %v8699
  %v8718 = vsel %vm4928, %v8669, %v8701
  %v8719 = vsel %vm4928, %v8671, %v8703
  %v8720 = vsel %vm4928, %v8673, %v8641
  %v8721 = vsel %vm4928, %v8675, %v8643
  %v8722 = vsel %vm4928, %v8677, %v8645
  %v8723 = vsel %vm4928, %v8679, %v8647
  %v8724 = vsel %vm4928, %v8681, %v8649
  %v8725 = vsel %vm4928, %v8683, %v8651
  %v8726 = vsel %vm4928, %v8685, %v8653
  %v8727 = vsel %vm4928, %v8687, %v8655
  %v8728 = vsel %vm4928, %v8689, %v8657
  %v8729 = vsel %vm4928, %v8691, %v8659
  %v8730 = vsel %vm4928, %v8693, %v8661
  %v8731 = vsel %vm4928, %v8695, %v8663
  %v8732 = vsel %vm4928, %v8697, %v8665
  %v8733 = vsel %vm4928, %v8699, %v8667
  %v8734 = vsel %vm4928, %v8701, %v8669
  %v8735 = vsel %vm4928, %v8703, %v8671
  %v8736 = vmul.f32 %v8704, %v128
  %v8737 = vmul.f32 %v8720, %v129
  %v8738 = vmul.f32 %v8705, %v128
  %v8739 = vmul.f32 %v8721, %v129
  %v8740 = vmul.f32 %v8706, %v128
  %v8741 = vmul.f32 %v8722, %v129
  %v8742 = vmul.f32 %v8707, %v128
  %v8743 = vmul.f32 %v8723, %v129
  %v8744 = vmul.f32 %v8708, %v128
  %v8745 = vmul.f32 %v8724, %v129
  %v8746 = vmul.f32 %v8709, %v128
  %v8747 = vmul.f32 %v8725, %v129
  %v8748 = vmul.f32 %v8710, %v128
  %v8749 = vmul.f32 %v8726, %v129
  %v8750 = vmul.f32 %v8711, %v128
  %v8751 = vmul.f32 %v8727, %v129
  %v8752 = vmul.f32 %v8712, %v128
  %v8753 = vmul.f32 %v8728, %v129
  %v8754 = vmul.f32 %v8713, %v128
  %v8755 = vmul.f32 %v8729, %v129
  %v8756 = vmul.f32 %v8714, %v128
  %v8757 = vmul.f32 %v8730, %v129
  %v8758 = vmul.f32 %v8715, %v128
  %v8759 = vmul.f32 %v8731, %v129
  %v8760 = vmul.f32 %v8716, %v128
  %v8761 = vmul.f32 %v8732, %v129
  %v8762 = vmul.f32 %v8717, %v128
  %v8763 = vmul.f32 %v8733, %v129
  %v8764 = vmul.f32 %v8718, %v128
  %v8765 = vmul.f32 %v8734, %v129
  %v8766 = vmul.f32 %v8719, %v128
  %v8767 = vmul.f32 %v8735, %v129
  %v8768 = vpack.c.bf16 %v8738, %v8736
  %v8769 = vpack.c.bf16 %v8739, %v8737
  %v8770 = vpack.c.bf16 %v8742, %v8740
  %v8771 = vpack.c.bf16 %v8743, %v8741
  %v8772 = vpack.c.bf16 %v8746, %v8744
  %v8773 = vpack.c.bf16 %v8747, %v8745
  %v8774 = vpack.c.bf16 %v8750, %v8748
  %v8775 = vpack.c.bf16 %v8751, %v8749
  %v8776 = vpack.c.bf16 %v8754, %v8752
  %v8777 = vpack.c.bf16 %v8755, %v8753
  %v8778 = vpack.c.bf16 %v8758, %v8756
  %v8779 = vpack.c.bf16 %v8759, %v8757
  %v8780 = vpack.c.bf16 %v8762, %v8760
  %v8781 = vpack.c.bf16 %v8763, %v8761
  %v8782 = vpack.c.bf16 %v8766, %v8764
  %v8783 = vpack.c.bf16 %v8767, %v8765
  %v8808 = vunpack.c.l.b16 %v8152
  %v8809 = vunpack.c.h.b16 %v8152
  %v8810 = vunpack.c.l.b16 %v8153
  %v8811 = vunpack.c.h.b16 %v8153
  %v8812 = vunpack.c.l.b16 %v8154
  %v8813 = vunpack.c.l.b16 %v8155
  %v8814 = vunpack.c.h.b16 %v8155
  %v8815 = vunpack.c.l.b16 %v8156
  %v8816 = vunpack.c.h.b16 %v8156
  %v8817 = vunpack.c.l.b16 %v8157
  %v8818 = vunpack.c.l.b16 %v8158
  %v8819 = vunpack.c.h.b16 %v8158
  %v8820 = vunpack.c.l.b16 %v8159
  %v8821 = vunpack.c.h.b16 %v8159
  %v8822 = vunpack.c.l.b16 %v8160
  %v8823 = vunpack.c.l.b16 %v8161
  %v8824 = vunpack.c.h.b16 %v8161
  %v8825 = vunpack.c.l.b16 %v8162
  %v8826 = vunpack.c.h.b16 %v8162
  %v8827 = vunpack.c.l.b16 %v8163
  %v8828 = vunpack.c.l.b16 %v8164
  %v8829 = vunpack.c.h.b16 %v8164
  %v8830 = vunpack.c.l.b16 %v8165
  %v8831 = vunpack.c.h.b16 %v8165
  %v8832 = vunpack.c.l.b16 %v8166
  %v8833 = vunpack.c.l.b16 %v8167
  %v8834 = vunpack.c.h.b16 %v8167
  %v8835 = vunpack.c.l.b16 %v8168
  %v8836 = vunpack.c.h.b16 %v8168
  %v8837 = vunpack.c.l.b16 %v8169
  %v8838 = vunpack.c.l.b16 %v8170
  %v8839 = vunpack.c.h.b16 %v8170
  %v8840 = vunpack.c.l.b16 %v8171
  %v8841 = vunpack.c.h.b16 %v8171
  %v8842 = vunpack.c.l.b16 %v8172
  %v8843 = vunpack.c.l.b16 %v8173
  %v8844 = vunpack.c.h.b16 %v8173
  %v8845 = vunpack.c.l.b16 %v8174
  %v8846 = vunpack.c.h.b16 %v8174
  %v8847 = vunpack.c.l.b16 %v8175
  %v8848 = vpack.c.b16 %v8813, %v8808
  %v8849 = vpack.c.b16 %v8814, %v8809
  %v8850 = vpack.c.b16 %v8815, %v8810
  %v8851 = vpack.c.b16 %v8816, %v8811
  %v8852 = vpack.c.b16 %v8817, %v8812
  %v8853 = vpack.c.b16 %v8823, %v8818
  %v8854 = vpack.c.b16 %v8824, %v8819
  %v8855 = vpack.c.b16 %v8825, %v8820
  %v8856 = vpack.c.b16 %v8826, %v8821
  %v8857 = vpack.c.b16 %v8827, %v8822
  %v8858 = vpack.c.b16 %v8833, %v8828
  %v8859 = vpack.c.b16 %v8834, %v8829
  %v8860 = vpack.c.b16 %v8835, %v8830
  %v8861 = vpack.c.b16 %v8836, %v8831
  %v8862 = vpack.c.b16 %v8837, %v8832
  %v8863 = vpack.c.b16 %v8843, %v8838
  %v8864 = vpack.c.b16 %v8844, %v8839
  %v8865 = vpack.c.b16 %v8845, %v8840
  %v8866 = vpack.c.b16 %v8846, %v8841
  %v8867 = vpack.c.b16 %v8847, %v8842
  %8888 = vmatprep.subr.bf16.mxu0 %v8305
  %8889 = vmatpush1.bf16.msra.mxu0 %v8304
  %8890 = vmatprep.subr.bf16.mxu0 %v8307
  %8891 = vmatpush1.bf16.msra.mxu0 %v8306
  %8892 = vmatprep.subr.bf16.mxu0 %v8309
  %8893 = vmatpush1.bf16.msra.mxu0 %v8308
  %8894 = vmatprep.subr.bf16.mxu0 %v8311
  %8895 = vmatpush1.bf16.msra.mxu0 %v8310
  %8896 = vmatprep.subr.bf16.mxu0 %v8313
  %8897 = vmatpush1.bf16.msra.mxu0 %v8312
  %8898 = vmatprep.subr.bf16.mxu0 %v8315
  %8899 = vmatpush1.bf16.msra.mxu0 %v8314
  %8900 = vmatprep.subr.bf16.mxu0 %v8317
  %8901 = vmatpush1.bf16.msra.mxu0 %v8316
  %8902 = vmatprep.subr.bf16.mxu0 %v8319
  %8903 = vmatpush1.bf16.msra.mxu0 %v8318
  %8904 = vmatprep.subr.bf16.mxu0 %v8449
  %8905 = vmatpush1.bf16.msra.mxu0 %v8448
  %8906 = vmatprep.subr.bf16.mxu0 %v8451
  %8907 = vmatpush1.bf16.msra.mxu0 %v8450
  %8908 = vmatprep.subr.bf16.mxu0 %v8453
  %8909 = vmatpush1.bf16.msra.mxu0 %v8452
  %8910 = vmatprep.subr.bf16.mxu0 %v8455
  %8911 = vmatpush1.bf16.msra.mxu0 %v8454
  %8912 = vmatprep.subr.bf16.mxu0 %v8457
  %8913 = vmatpush1.bf16.msra.mxu0 %v8456
  %8914 = vmatprep.subr.bf16.mxu0 %v8459
  %8915 = vmatpush1.bf16.msra.mxu0 %v8458
  %8916 = vmatprep.subr.bf16.mxu0 %v8461
  %8917 = vmatpush1.bf16.msra.mxu0 %v8460
  %8918 = vmatprep.subr.bf16.mxu0 %v8463
  %8919 = vmatpush1.bf16.msra.mxu0 %v8462
  %8920 = vmatprep.mubr.bf16.mxu0 %v8849
  %8921 = vmatmul.mubr.bf16.gmra.mrb[0].mxu0 %v8848
  %v8922 = vpop.f32.mrb[0].mxu0
  %v8923 = vadd.f32 0.0, %v8922
  %v8924 = vpop.f32.mrb[0].mxu0
  %v8925 = vadd.f32 0.0, %v8924
  %v8926 = vpop.f32.mrb[0].mxu0
  %v8927 = vadd.f32 0.0, %v8926
  %v8928 = vpop.f32.mrb[0].mxu0
  %v8929 = vadd.f32 0.0, %v8928
  %8930 = vmatprep.mubr.bf16.mxu0 %v8854
  %8931 = vmatmul.mubr.bf16.gmra.mrb[0].mxu0 %v8853
  %v8932 = vpop.f32.mrb[0].mxu0
  %v8933 = vadd.f32 0.0, %v8932
  %v8934 = vpop.f32.mrb[0].mxu0
  %v8935 = vadd.f32 0.0, %v8934
  %v8936 = vpop.f32.mrb[0].mxu0
  %v8937 = vadd.f32 0.0, %v8936
  %v8938 = vpop.f32.mrb[0].mxu0
  %v8939 = vadd.f32 0.0, %v8938
  %8940 = vmatprep.mubr.bf16.mxu0 %v8859
  %8941 = vmatmul.mubr.bf16.gmra.mrb[0].mxu0 %v8858
  %v8942 = vpop.f32.mrb[0].mxu0
  %v8943 = vadd.f32 0.0, %v8942
  %v8944 = vpop.f32.mrb[0].mxu0
  %v8945 = vadd.f32 0.0, %v8944
  %v8946 = vpop.f32.mrb[0].mxu0
  %v8947 = vadd.f32 0.0, %v8946
  %v8948 = vpop.f32.mrb[0].mxu0
  %v8949 = vadd.f32 0.0, %v8948
  %8950 = vmatprep.mubr.bf16.mxu0 %v8864
  %8951 = vmatmul.mubr.bf16.gmra.mrb[0].mxu0 %v8863
  %v8952 = vpop.f32.mrb[0].mxu0
  %v8953 = vadd.f32 0.0, %v8952
  %v8954 = vpop.f32.mrb[0].mxu0
  %v8955 = vadd.f32 0.0, %v8954
  %v8956 = vpop.f32.mrb[0].mxu0
  %v8957 = vadd.f32 0.0, %v8956
  %v8958 = vpop.f32.mrb[0].mxu0
  %v8959 = vadd.f32 0.0, %v8958
  %8960 = vdwg.mxu0
  %8961 = vmatprep.subr.bf16.mxu0 %v8465
  %8962 = vmatpush1.bf16.msra.mxu0 %v8464
  %8963 = vmatprep.subr.bf16.mxu0 %v8467
  %8964 = vmatpush1.bf16.msra.mxu0 %v8466
  %8965 = vmatprep.subr.bf16.mxu0 %v8469
  %8966 = vmatpush1.bf16.msra.mxu0 %v8468
  %8967 = vmatprep.subr.bf16.mxu0 %v8471
  %8968 = vmatpush1.bf16.msra.mxu0 %v8470
  %8969 = vmatprep.subr.bf16.mxu0 %v8473
  %8970 = vmatpush1.bf16.msra.mxu0 %v8472
  %8971 = vmatprep.subr.bf16.mxu0 %v8475
  %8972 = vmatpush1.bf16.msra.mxu0 %v8474
  %8973 = vmatprep.subr.bf16.mxu0 %v8477
  %8974 = vmatpush1.bf16.msra.mxu0 %v8476
  %8975 = vmatprep.subr.bf16.mxu0 %v8479
  %8976 = vmatpush1.bf16.msra.mxu0 %v8478
  %8977 = vmatprep.subr.bf16.mxu0 %v8481
  %8978 = vmatpush1.bf16.msra.mxu0 %v8480
  %8979 = vmatprep.subr.bf16.mxu0 %v8483
  %8980 = vmatpush1.bf16.msra.mxu0 %v8482
  %8981 = vmatprep.subr.bf16.mxu0 %v8485
  %8982 = vmatpush1.bf16.msra.mxu0 %v8484
  %8983 = vmatprep.subr.bf16.mxu0 %v8487
  %8984 = vmatpush1.bf16.msra.mxu0 %v8486
  %8985 = vmatprep.subr.bf16.mxu0 %v8489
  %8986 = vmatpush1.bf16.msra.mxu0 %v8488
  %8987 = vmatprep.subr.bf16.mxu0 %v8491
  %8988 = vmatpush1.bf16.msra.mxu0 %v8490
  %8989 = vmatprep.subr.bf16.mxu0 %v8493
  %8990 = vmatpush1.bf16.msra.mxu0 %v8492
  %8991 = vmatprep.subr.bf16.mxu0 %v8495
  %8992 = vmatpush1.bf16.msra.mxu0 %v8494
  %8993 = vmatprep.mubr.bf16.mxu0 %v8851
  %8994 = vmatmul.mubr.bf16.gmra.mrb[0].mxu0 %v8850
  %v8995 = vpop.f32.mrb[0].mxu0
  %v8996 = vadd.f32 %v8923, %v8995
  %v8997 = vpop.f32.mrb[0].mxu0
  %v8998 = vadd.f32 %v8925, %v8997
  %v8999 = vpop.f32.mrb[0].mxu0
  %v9000 = vadd.f32 %v8927, %v8999
  %v9001 = vpop.f32.mrb[0].mxu0
  %v9002 = vadd.f32 %v8929, %v9001
  %9003 = vmatprep.mubr.bf16.mxu0 %v8856
  %9004 = vmatmul.mubr.bf16.gmra.mrb[0].mxu0 %v8855
  %v9005 = vpop.f32.mrb[0].mxu0
  %v9006 = vadd.f32 %v8933, %v9005
  %v9007 = vpop.f32.mrb[0].mxu0
  %v9008 = vadd.f32 %v8935, %v9007
  %v9009 = vpop.f32.mrb[0].mxu0
  %v9010 = vadd.f32 %v8937, %v9009
  %v9011 = vpop.f32.mrb[0].mxu0
  %v9012 = vadd.f32 %v8939, %v9011
  %9013 = vmatprep.mubr.bf16.mxu0 %v8861
  %9014 = vmatmul.mubr.bf16.gmra.mrb[0].mxu0 %v8860
  %v9015 = vpop.f32.mrb[0].mxu0
  %v9016 = vadd.f32 %v8943, %v9015
  %v9017 = vpop.f32.mrb[0].mxu0
  %v9018 = vadd.f32 %v8945, %v9017
  %v9019 = vpop.f32.mrb[0].mxu0
  %v9020 = vadd.f32 %v8947, %v9019
  %v9021 = vpop.f32.mrb[0].mxu0
  %v9022 = vadd.f32 %v8949, %v9021
  %9023 = vmatprep.mubr.bf16.mxu0 %v8866
  %9024 = vmatmul.mubr.bf16.gmra.mrb[0].mxu0 %v8865
  %v9025 = vpop.f32.mrb[0].mxu0
  %v9026 = vadd.f32 %v8953, %v9025
  %v9027 = vpop.f32.mrb[0].mxu0
  %v9028 = vadd.f32 %v8955, %v9027
  %v9029 = vpop.f32.mrb[0].mxu0
  %v9030 = vadd.f32 %v8957, %v9029
  %v9031 = vpop.f32.mrb[0].mxu0
  %v9032 = vadd.f32 %v8959, %v9031
  %9033 = vdwg.mxu0
  %9034 = vmatprep.subr.bf16.mxu0 %v8625
  %9035 = vmatpush1.bf16.msra.mxu0 %v8624
  %9036 = vmatprep.subr.bf16.mxu0 %v8627
  %9037 = vmatpush1.bf16.msra.mxu0 %v8626
  %9038 = vmatprep.subr.bf16.mxu0 %v8629
  %9039 = vmatpush1.bf16.msra.mxu0 %v8628
  %9040 = vmatprep.subr.bf16.mxu0 %v8631
  %9041 = vmatpush1.bf16.msra.mxu0 %v8630
  %9042 = vmatprep.subr.bf16.mxu0 %v8633
  %9043 = vmatpush1.bf16.msra.mxu0 %v8632
  %9044 = vmatprep.subr.bf16.mxu0 %v8635
  %9045 = vmatpush1.bf16.msra.mxu0 %v8634
  %9046 = vmatprep.subr.bf16.mxu0 %v8637
  %9047 = vmatpush1.bf16.msra.mxu0 %v8636
  %9048 = vmatprep.subr.bf16.mxu0 %v8639
  %9049 = vmatpush1.bf16.msra.mxu0 %v8638
  %9050 = vmatprep.subr.bf16.mxu0 0
  %9051 = vmatpush1.bf16.msra.mxu0 0
  %9052 = vmatprep.subr.bf16.mxu0 0
  %9053 = vmatpush1.bf16.msra.mxu0 0
  %9054 = vmatprep.subr.bf16.mxu0 0
  %9055 = vmatpush1.bf16.msra.mxu0 0
  %9056 = vmatprep.subr.bf16.mxu0 0
  %9057 = vmatpush1.bf16.msra.mxu0 0
  %9058 = vmatprep.subr.bf16.mxu0 0
  %9059 = vmatpush1.bf16.msra.mxu0 0
  %9060 = vmatprep.subr.bf16.mxu0 0
  %9061 = vmatpush1.bf16.msra.mxu0 0
  %9062 = vmatprep.subr.bf16.mxu0 0
  %9063 = vmatpush1.bf16.msra.mxu0 0
  %9064 = vmatprep.subr.bf16.mxu0 0
  %9065 = vmatpush1.bf16.msra.mxu0 0
  %9066 = vmatprep.mubr.bf16.mxu0 0
  %9067 = vmatmul.mubr.bf16.gmra.mrb[0].mxu0 %v8852
  %v9068 = vpop.f32.mrb[0].mxu0
  %v9069 = vadd.f32 %v8996, %v9068
  %v9070 = vpop.f32.mrb[0].mxu0
  %v9071 = vadd.f32 %v8998, %v9070
  %v9072 = vpop.f32.mrb[0].mxu0
  %v9073 = vadd.f32 %v9000, %v9072
  %v9074 = vpop.f32.mrb[0].mxu0
  %v9075 = vadd.f32 %v9002, %v9074
  %9076 = vmatprep.mubr.bf16.mxu0 0
  %9077 = vmatmul.mubr.bf16.gmra.mrb[0].mxu0 %v8857
  %v9078 = vpop.f32.mrb[0].mxu0
  %v9079 = vadd.f32 %v9006, %v9078
  %v9080 = vpop.f32.mrb[0].mxu0
  %v9081 = vadd.f32 %v9008, %v9080
  %v9082 = vpop.f32.mrb[0].mxu0
  %v9083 = vadd.f32 %v9010, %v9082
  %v9084 = vpop.f32.mrb[0].mxu0
  %v9085 = vadd.f32 %v9012, %v9084
  %9086 = vmatprep.mubr.bf16.mxu0 0
  %9087 = vmatmul.mubr.bf16.gmra.mrb[0].mxu0 %v8862
  %v9088 = vpop.f32.mrb[0].mxu0
  %v9089 = vadd.f32 %v9016, %v9088
  %v9090 = vpop.f32.mrb[0].mxu0
  %v9091 = vadd.f32 %v9018, %v9090
  %v9092 = vpop.f32.mrb[0].mxu0
  %v9093 = vadd.f32 %v9020, %v9092
  %v9094 = vpop.f32.mrb[0].mxu0
  %v9095 = vadd.f32 %v9022, %v9094
  %9096 = vmatprep.mubr.bf16.mxu0 0
  %9097 = vmatmul.mubr.bf16.gmra.mrb[0].mxu0 %v8867
  %v9098 = vpop.f32.mrb[0].mxu0
  %v9099 = vadd.f32 %v9026, %v9098
  %v9100 = vpop.f32.mrb[0].mxu0
  %v9101 = vadd.f32 %v9028, %v9100
  %v9102 = vpop.f32.mrb[0].mxu0
  %v9103 = vadd.f32 %v9030, %v9102
  %v9104 = vpop.f32.mrb[0].mxu0
  %v9105 = vadd.f32 %v9032, %v9104
  %9106 = vdwg.mxu0
  %9107 = vmatprep.subr.bf16.mxu0 %v8449
  %9108 = vmatpush1.bf16.msra.mxu0 %v8448
  %9109 = vmatprep.subr.bf16.mxu0 %v8451
  %9110 = vmatpush1.bf16.msra.mxu0 %v8450
  %9111 = vmatprep.subr.bf16.mxu0 %v8453
  %9112 = vmatpush1.bf16.msra.mxu0 %v8452
  %9113 = vmatprep.subr.bf16.mxu0 %v8455
  %9114 = vmatpush1.bf16.msra.mxu0 %v8454
  %9115 = vmatprep.subr.bf16.mxu0 %v8457
  %9116 = vmatpush1.bf16.msra.mxu0 %v8456
  %9117 = vmatprep.subr.bf16.mxu0 %v8459
  %9118 = vmatpush1.bf16.msra.mxu0 %v8458
  %9119 = vmatprep.subr.bf16.mxu0 %v8461
  %9120 = vmatpush1.bf16.msra.mxu0 %v8460
  %9121 = vmatprep.subr.bf16.mxu0 %v8463
  %9122 = vmatpush1.bf16.msra.mxu0 %v8462
  %9123 = vmatprep.subr.bf16.mxu0 %v8465
  %9124 = vmatpush1.bf16.msra.mxu0 %v8464
  %9125 = vmatprep.subr.bf16.mxu0 %v8467
  %9126 = vmatpush1.bf16.msra.mxu0 %v8466
  %9127 = vmatprep.subr.bf16.mxu0 %v8469
  %9128 = vmatpush1.bf16.msra.mxu0 %v8468
  %9129 = vmatprep.subr.bf16.mxu0 %v8471
  %9130 = vmatpush1.bf16.msra.mxu0 %v8470
  %9131 = vmatprep.subr.bf16.mxu0 %v8473
  %9132 = vmatpush1.bf16.msra.mxu0 %v8472
  %9133 = vmatprep.subr.bf16.mxu0 %v8475
  %9134 = vmatpush1.bf16.msra.mxu0 %v8474
  %9135 = vmatprep.subr.bf16.mxu0 %v8477
  %9136 = vmatpush1.bf16.msra.mxu0 %v8476
  %9137 = vmatprep.subr.bf16.mxu0 %v8479
  %9138 = vmatpush1.bf16.msra.mxu0 %v8478
  %9139 = vmatprep.mubr.bf16.mxu0 %v8849
  %9140 = vmatmul.mubr.bf16.gmra.mrb[0].mxu0 %v8848
  %v9141 = vpop.f32.mrb[0].mxu0
  %v9142 = vadd.f32 0.0, %v9141
  %v9143 = vpop.f32.mrb[0].mxu0
  %v9144 = vadd.f32 0.0, %v9143
  %v9145 = vpop.f32.mrb[0].mxu0
  %v9146 = vadd.f32 0.0, %v9145
  %v9147 = vpop.f32.mrb[0].mxu0
  %v9148 = vadd.f32 0.0, %v9147
  %9149 = vmatprep.mubr.bf16.mxu0 %v8854
  %9150 = vmatmul.mubr.bf16.gmra.mrb[0].mxu0 %v8853
  %v9151 = vpop.f32.mrb[0].mxu0
  %v9152 = vadd.f32 0.0, %v9151
  %v9153 = vpop.f32.mrb[0].mxu0
  %v9154 = vadd.f32 0.0, %v9153
  %v9155 = vpop.f32.mrb[0].mxu0
  %v9156 = vadd.f32 0.0, %v9155
  %v9157 = vpop.f32.mrb[0].mxu0
  %v9158 = vadd.f32 0.0, %v9157
  %9159 = vmatprep.mubr.bf16.mxu0 %v8859
  %9160 = vmatmul.mubr.bf16.gmra.mrb[0].mxu0 %v8858
  %v9161 = vpop.f32.mrb[0].mxu0
  %v9162 = vadd.f32 0.0, %v9161
  %v9163 = vpop.f32.mrb[0].mxu0
  %v9164 = vadd.f32 0.0, %v9163
  %v9165 = vpop.f32.mrb[0].mxu0
  %v9166 = vadd.f32 0.0, %v9165
  %v9167 = vpop.f32.mrb[0].mxu0
  %v9168 = vadd.f32 0.0, %v9167
  %9169 = vmatprep.mubr.bf16.mxu0 %v8864
  %9170 = vmatmul.mubr.bf16.gmra.mrb[0].mxu0 %v8863
  %v9171 = vpop.f32.mrb[0].mxu0
  %v9172 = vadd.f32 0.0, %v9171
  %v9173 = vpop.f32.mrb[0].mxu0
  %v9174 = vadd.f32 0.0, %v9173
  %v9175 = vpop.f32.mrb[0].mxu0
  %v9176 = vadd.f32 0.0, %v9175
  %v9177 = vpop.f32.mrb[0].mxu0
  %v9178 = vadd.f32 0.0, %v9177
  %9179 = vdwg.mxu0
  %9180 = vmatprep.subr.bf16.mxu0 %v8481
  %9181 = vmatpush1.bf16.msra.mxu0 %v8480
  %9182 = vmatprep.subr.bf16.mxu0 %v8483
  %9183 = vmatpush1.bf16.msra.mxu0 %v8482
  %9184 = vmatprep.subr.bf16.mxu0 %v8485
  %9185 = vmatpush1.bf16.msra.mxu0 %v8484
  %9186 = vmatprep.subr.bf16.mxu0 %v8487
  %9187 = vmatpush1.bf16.msra.mxu0 %v8486
  %9188 = vmatprep.subr.bf16.mxu0 %v8489
  %9189 = vmatpush1.bf16.msra.mxu0 %v8488
  %9190 = vmatprep.subr.bf16.mxu0 %v8491
  %9191 = vmatpush1.bf16.msra.mxu0 %v8490
  %9192 = vmatprep.subr.bf16.mxu0 %v8493
  %9193 = vmatpush1.bf16.msra.mxu0 %v8492
  %9194 = vmatprep.subr.bf16.mxu0 %v8495
  %9195 = vmatpush1.bf16.msra.mxu0 %v8494
  %9196 = vmatprep.subr.bf16.mxu0 %v8625
  %9197 = vmatpush1.bf16.msra.mxu0 %v8624
  %9198 = vmatprep.subr.bf16.mxu0 %v8627
  %9199 = vmatpush1.bf16.msra.mxu0 %v8626
  %9200 = vmatprep.subr.bf16.mxu0 %v8629
  %9201 = vmatpush1.bf16.msra.mxu0 %v8628
  %9202 = vmatprep.subr.bf16.mxu0 %v8631
  %9203 = vmatpush1.bf16.msra.mxu0 %v8630
  %9204 = vmatprep.subr.bf16.mxu0 %v8633
  %9205 = vmatpush1.bf16.msra.mxu0 %v8632
  %9206 = vmatprep.subr.bf16.mxu0 %v8635
  %9207 = vmatpush1.bf16.msra.mxu0 %v8634
  %9208 = vmatprep.subr.bf16.mxu0 %v8637
  %9209 = vmatpush1.bf16.msra.mxu0 %v8636
  %9210 = vmatprep.subr.bf16.mxu0 %v8639
  %9211 = vmatpush1.bf16.msra.mxu0 %v8638
  %9212 = vmatprep.mubr.bf16.mxu0 %v8851
  %9213 = vmatmul.mubr.bf16.gmra.mrb[0].mxu0 %v8850
  %v9214 = vpop.f32.mrb[0].mxu0
  %v9215 = vadd.f32 %v9142, %v9214
  %v9216 = vpop.f32.mrb[0].mxu0
  %v9217 = vadd.f32 %v9144, %v9216
  %v9218 = vpop.f32.mrb[0].mxu0
  %v9219 = vadd.f32 %v9146, %v9218
  %v9220 = vpop.f32.mrb[0].mxu0
  %v9221 = vadd.f32 %v9148, %v9220
  %9222 = vmatprep.mubr.bf16.mxu0 %v8856
  %9223 = vmatmul.mubr.bf16.gmra.mrb[0].mxu0 %v8855
  %v9224 = vpop.f32.mrb[0].mxu0
  %v9225 = vadd.f32 %v9152, %v9224
  %v9226 = vpop.f32.mrb[0].mxu0
  %v9227 = vadd.f32 %v9154, %v9226
  %v9228 = vpop.f32.mrb[0].mxu0
  %v9229 = vadd.f32 %v9156, %v9228
  %v9230 = vpop.f32.mrb[0].mxu0
  %v9231 = vadd.f32 %v9158, %v9230
  %9232 = vmatprep.mubr.bf16.mxu0 %v8861
  %9233 = vmatmul.mubr.bf16.gmra.mrb[0].mxu0 %v8860
  %v9234 = vpop.f32.mrb[0].mxu0
  %v9235 = vadd.f32 %v9162, %v9234
  %v9236 = vpop.f32.mrb[0].mxu0
  %v9237 = vadd.f32 %v9164, %v9236
  %v9238 = vpop.f32.mrb[0].mxu0
  %v9239 = vadd.f32 %v9166, %v9238
  %v9240 = vpop.f32.mrb[0].mxu0
  %v9241 = vadd.f32 %v9168, %v9240
  %9242 = vmatprep.mubr.bf16.mxu0 %v8866
  %9243 = vmatmul.mubr.bf16.gmra.mrb[0].mxu0 %v8865
  %v9244 = vpop.f32.mrb[0].mxu0
  %v9245 = vadd.f32 %v9172, %v9244
  %v9246 = vpop.f32.mrb[0].mxu0
  %v9247 = vadd.f32 %v9174, %v9246
  %v9248 = vpop.f32.mrb[0].mxu0
  %v9249 = vadd.f32 %v9176, %v9248
  %v9250 = vpop.f32.mrb[0].mxu0
  %v9251 = vadd.f32 %v9178, %v9250
  %9252 = vdwg.mxu0
  %9253 = vmatprep.subr.bf16.mxu0 %v8769
  %9254 = vmatpush1.bf16.msra.mxu0 %v8768
  %9255 = vmatprep.subr.bf16.mxu0 %v8771
  %9256 = vmatpush1.bf16.msra.mxu0 %v8770
  %9257 = vmatprep.subr.bf16.mxu0 %v8773
  %9258 = vmatpush1.bf16.msra.mxu0 %v8772
  %9259 = vmatprep.subr.bf16.mxu0 %v8775
  %9260 = vmatpush1.bf16.msra.mxu0 %v8774
  %9261 = vmatprep.subr.bf16.mxu0 %v8777
  %9262 = vmatpush1.bf16.msra.mxu0 %v8776
  %9263 = vmatprep.subr.bf16.mxu0 %v8779
  %9264 = vmatpush1.bf16.msra.mxu0 %v8778
  %9265 = vmatprep.subr.bf16.mxu0 %v8781
  %9266 = vmatpush1.bf16.msra.mxu0 %v8780
  %9267 = vmatprep.subr.bf16.mxu0 %v8783
  %9268 = vmatpush1.bf16.msra.mxu0 %v8782
  %9269 = vmatprep.subr.bf16.mxu0 0
  %9270 = vmatpush1.bf16.msra.mxu0 0
  %9271 = vmatprep.subr.bf16.mxu0 0
  %9272 = vmatpush1.bf16.msra.mxu0 0
  %9273 = vmatprep.subr.bf16.mxu0 0
  %9274 = vmatpush1.bf16.msra.mxu0 0
  %9275 = vmatprep.subr.bf16.mxu0 0
  %9276 = vmatpush1.bf16.msra.mxu0 0
  %9277 = vmatprep.subr.bf16.mxu0 0
  %9278 = vmatpush1.bf16.msra.mxu0 0
  %9279 = vmatprep.subr.bf16.mxu0 0
  %9280 = vmatpush1.bf16.msra.mxu0 0
  %9281 = vmatprep.subr.bf16.mxu0 0
  %9282 = vmatpush1.bf16.msra.mxu0 0
  %9283 = vmatprep.subr.bf16.mxu0 0
  %9284 = vmatpush1.bf16.msra.mxu0 0
  %9285 = vmatprep.mubr.bf16.mxu0 0
  %9286 = vmatmul.mubr.bf16.gmra.mrb[0].mxu0 %v8852
  %v9287 = vpop.f32.mrb[0].mxu0
  %v9288 = vadd.f32 %v9215, %v9287
  %v9289 = vpop.f32.mrb[0].mxu0
  %v9290 = vadd.f32 %v9217, %v9289
  %v9291 = vpop.f32.mrb[0].mxu0
  %v9292 = vadd.f32 %v9219, %v9291
  %v9293 = vpop.f32.mrb[0].mxu0
  %v9294 = vadd.f32 %v9221, %v9293
  %9295 = vmatprep.mubr.bf16.mxu0 0
  %9296 = vmatmul.mubr.bf16.gmra.mrb[0].mxu0 %v8857
  %v9297 = vpop.f32.mrb[0].mxu0
  %v9298 = vadd.f32 %v9225, %v9297
  %v9299 = vpop.f32.mrb[0].mxu0
  %v9300 = vadd.f32 %v9227, %v9299
  %v9301 = vpop.f32.mrb[0].mxu0
  %v9302 = vadd.f32 %v9229, %v9301
  %v9303 = vpop.f32.mrb[0].mxu0
  %v9304 = vadd.f32 %v9231, %v9303
  %9305 = vmatprep.mubr.bf16.mxu0 0
  %9306 = vmatmul.mubr.bf16.gmra.mrb[0].mxu0 %v8862
  %v9307 = vpop.f32.mrb[0].mxu0
  %v9308 = vadd.f32 %v9235, %v9307
  %v9309 = vpop.f32.mrb[0].mxu0
  %v9310 = vadd.f32 %v9237, %v9309
  %v9311 = vpop.f32.mrb[0].mxu0
  %v9312 = vadd.f32 %v9239, %v9311
  %v9313 = vpop.f32.mrb[0].mxu0
  %v9314 = vadd.f32 %v9241, %v9313
  %9315 = vmatprep.mubr.bf16.mxu0 0
  %9316 = vmatmul.mubr.bf16.gmra.mrb[0].mxu0 %v8867
  %v9317 = vpop.f32.mrb[0].mxu0
  %v9318 = vadd.f32 %v9245, %v9317
  %v9319 = vpop.f32.mrb[0].mxu0
  %v9320 = vadd.f32 %v9247, %v9319
  %v9321 = vpop.f32.mrb[0].mxu0
  %v9322 = vadd.f32 %v9249, %v9321
  %v9323 = vpop.f32.mrb[0].mxu0
  %v9324 = vadd.f32 %v9251, %v9323
  %9325 = vdwg.mxu0
  %v9326 = vmul.f32 %v9069, %v92
  %v9327 = vmul.f32 %v9071, %v93
  %v9328 = vmul.f32 %v9073, %v92
  %v9329 = vmul.f32 %v9075, %v93
  %v9330 = vmul.f32 %v9079, %v92
  %v9331 = vmul.f32 %v9081, %v93
  %v9332 = vmul.f32 %v9083, %v92
  %v9333 = vmul.f32 %v9085, %v93
  %v9334 = vadd.f32 %v9326, %v9327
  %9335 = vadd.xlane.f32.xlu0 %v9334
  %v9336 = vpop.xlane.xlu0 %9335
  %v9337 = vadd.f32 %v9328, %v9329
  %9338 = vadd.xlane.f32.xlu0 %v9337
  %v9339 = vpop.xlane.xlu0 %9338
  %v9340 = vadd.f32 %v9330, %v9331
  %9341 = vadd.xlane.f32.xlu0 %v9340
  %v9342 = vpop.xlane.xlu0 %9341
  %v9343 = vadd.f32 %v9332, %v9333
  %9344 = vadd.xlane.f32.xlu0 %v9343
  %v9345 = vpop.xlane.xlu0 %9344
  %v9346 = vmul.f32 %v9326, %v9069
  %v9347 = vmul.f32 %v9327, %v9071
  %v9348 = vmul.f32 %v9328, %v9073
  %v9349 = vmul.f32 %v9329, %v9075
  %v9350 = vmul.f32 %v9330, %v9079
  %v9351 = vmul.f32 %v9331, %v9081
  %v9352 = vmul.f32 %v9332, %v9083
  %v9353 = vmul.f32 %v9333, %v9085
  %v9354 = vadd.f32 %v9346, %v9347
  %9355 = vadd.xlane.f32.xlu0 %v9354
  %v9356 = vpop.xlane.xlu0 %9355
  %v9357 = vadd.f32 %v9348, %v9349
  %9358 = vadd.xlane.f32.xlu0 %v9357
  %v9359 = vpop.xlane.xlu0 %9358
  %v9360 = vadd.f32 %v9350, %v9351
  %9361 = vadd.xlane.f32.xlu0 %v9360
  %v9362 = vpop.xlane.xlu0 %9361
  %v9363 = vadd.f32 %v9352, %v9353
  %9364 = vadd.xlane.f32.xlu0 %v9363
  %v9365 = vpop.xlane.xlu0 %9364
  %v9366 = vmul.f32 %v9089, %v92
  %v9367 = vmul.f32 %v9091, %v93
  %v9368 = vmul.f32 %v9093, %v92
  %v9369 = vmul.f32 %v9095, %v93
  %v9370 = vmul.f32 %v9099, %v92
  %v9371 = vmul.f32 %v9101, %v93
  %v9372 = vmul.f32 %v9103, %v92
  %v9373 = vmul.f32 %v9105, %v93
  %v9374 = vadd.f32 %v9366, %v9367
  %9375 = vadd.xlane.f32.xlu0 %v9374
  %v9376 = vpop.xlane.xlu0 %9375
  %v9377 = vadd.f32 %v9368, %v9369
  %9378 = vadd.xlane.f32.xlu0 %v9377
  %v9379 = vpop.xlane.xlu0 %9378
  %v9380 = vadd.f32 %v9370, %v9371
  %9381 = vadd.xlane.f32.xlu0 %v9380
  %v9382 = vpop.xlane.xlu0 %9381
  %v9383 = vadd.f32 %v9372, %v9373
  %9384 = vadd.xlane.f32.xlu0 %v9383
  %v9385 = vpop.xlane.xlu0 %9384
  %v9386 = vmul.f32 %v9366, %v9089
  %v9387 = vmul.f32 %v9367, %v9091
  %v9388 = vmul.f32 %v9368, %v9093
  %v9389 = vmul.f32 %v9369, %v9095
  %v9390 = vmul.f32 %v9370, %v9099
  %v9391 = vmul.f32 %v9371, %v9101
  %v9392 = vmul.f32 %v9372, %v9103
  %v9393 = vmul.f32 %v9373, %v9105
  %v9394 = vadd.f32 %v9386, %v9387
  %9395 = vadd.xlane.f32.xlu0 %v9394
  %v9396 = vpop.xlane.xlu0 %9395
  %v9397 = vadd.f32 %v9388, %v9389
  %9398 = vadd.xlane.f32.xlu0 %v9397
  %v9399 = vpop.xlane.xlu0 %9398
  %v9400 = vadd.f32 %v9390, %v9391
  %9401 = vadd.xlane.f32.xlu0 %v9400
  %v9402 = vpop.xlane.xlu0 %9401
  %v9403 = vadd.f32 %v9392, %v9393
  %9404 = vadd.xlane.f32.xlu0 %v9403
  %v9405 = vpop.xlane.xlu0 %9404
  %v9406 = vadd.f32 %v9336, %v9376
  %v9407 = vadd.f32 %v9339, %v9379
  %v9408 = vadd.f32 %v9342, %v9382
  %v9409 = vadd.f32 %v9345, %v9385
  %v9410 = vadd.f32 %v9356, %v9396
  %v9411 = vadd.f32 %v9359, %v9399
  %v9412 = vadd.f32 %v9362, %v9402
  %v9413 = vadd.f32 %v9365, %v9405
  %v9414 = vmul.f32 %v9288, %v92
  %v9415 = vmul.f32 %v9290, %v93
  %v9416 = vmul.f32 %v9292, %v92
  %v9417 = vmul.f32 %v9294, %v93
  %v9418 = vmul.f32 %v9298, %v92
  %v9419 = vmul.f32 %v9300, %v93
  %v9420 = vmul.f32 %v9302, %v92
  %v9421 = vmul.f32 %v9304, %v93
  %v9422 = vadd.f32 %v9414, %v9415
  %9423 = vadd.xlane.f32.xlu0 %v9422
  %v9424 = vpop.xlane.xlu0 %9423
  %v9425 = vadd.f32 %v9416, %v9417
  %9426 = vadd.xlane.f32.xlu0 %v9425
  %v9427 = vpop.xlane.xlu0 %9426
  %v9428 = vadd.f32 %v9418, %v9419
  %9429 = vadd.xlane.f32.xlu0 %v9428
  %v9430 = vpop.xlane.xlu0 %9429
  %v9431 = vadd.f32 %v9420, %v9421
  %9432 = vadd.xlane.f32.xlu0 %v9431
  %v9433 = vpop.xlane.xlu0 %9432
  %v9434 = vmul.f32 %v9414, %v9288
  %v9435 = vmul.f32 %v9415, %v9290
  %v9436 = vmul.f32 %v9416, %v9292
  %v9437 = vmul.f32 %v9417, %v9294
  %v9438 = vmul.f32 %v9418, %v9298
  %v9439 = vmul.f32 %v9419, %v9300
  %v9440 = vmul.f32 %v9420, %v9302
  %v9441 = vmul.f32 %v9421, %v9304
  %v9442 = vadd.f32 %v9434, %v9435
  %9443 = vadd.xlane.f32.xlu0 %v9442
  %v9444 = vpop.xlane.xlu0 %9443
  %v9445 = vadd.f32 %v9436, %v9437
  %9446 = vadd.xlane.f32.xlu0 %v9445
  %v9447 = vpop.xlane.xlu0 %9446
  %v9448 = vadd.f32 %v9438, %v9439
  %9449 = vadd.xlane.f32.xlu0 %v9448
  %v9450 = vpop.xlane.xlu0 %9449
  %v9451 = vadd.f32 %v9440, %v9441
  %9452 = vadd.xlane.f32.xlu0 %v9451
  %v9453 = vpop.xlane.xlu0 %9452
  %v9454 = vadd.f32 %v9406, %v9424
  %v9455 = vadd.f32 %v9407, %v9427
  %v9456 = vadd.f32 %v9408, %v9430
  %v9457 = vadd.f32 %v9409, %v9433
  %v9458 = vadd.f32 %v9410, %v9444
  %v9459 = vadd.f32 %v9411, %v9447
  %v9460 = vadd.f32 %v9412, %v9450
  %v9461 = vadd.f32 %v9413, %v9453
  %v9462 = vmul.f32 %v9308, %v92
  %v9463 = vmul.f32 %v9310, %v93
  %v9464 = vmul.f32 %v9312, %v92
  %v9465 = vmul.f32 %v9314, %v93
  %v9466 = vmul.f32 %v9318, %v92
  %v9467 = vmul.f32 %v9320, %v93
  %v9468 = vmul.f32 %v9322, %v92
  %v9469 = vmul.f32 %v9324, %v93
  %v9470 = vadd.f32 %v9462, %v9463
  %9471 = vadd.xlane.f32.xlu0 %v9470
  %v9472 = vpop.xlane.xlu0 %9471
  %v9473 = vadd.f32 %v9464, %v9465
  %9474 = vadd.xlane.f32.xlu0 %v9473
  %v9475 = vpop.xlane.xlu0 %9474
  %v9476 = vadd.f32 %v9466, %v9467
  %9477 = vadd.xlane.f32.xlu0 %v9476
  %v9478 = vpop.xlane.xlu0 %9477
  %v9479 = vadd.f32 %v9468, %v9469
  %9480 = vadd.xlane.f32.xlu0 %v9479
  %v9481 = vpop.xlane.xlu0 %9480
  %v9482 = vmul.f32 %v9462, %v9308
  %v9483 = vmul.f32 %v9463, %v9310
  %v9484 = vmul.f32 %v9464, %v9312
  %v9485 = vmul.f32 %v9465, %v9314
  %v9486 = vmul.f32 %v9466, %v9318
  %v9487 = vmul.f32 %v9467, %v9320
  %v9488 = vmul.f32 %v9468, %v9322
  %v9489 = vmul.f32 %v9469, %v9324
  %v9490 = vadd.f32 %v9482, %v9483
  %9491 = vadd.xlane.f32.xlu0 %v9490
  %v9492 = vpop.xlane.xlu0 %9491
  %v9493 = vadd.f32 %v9484, %v9485
  %9494 = vadd.xlane.f32.xlu0 %v9493
  %v9495 = vpop.xlane.xlu0 %9494
  %v9496 = vadd.f32 %v9486, %v9487
  %9497 = vadd.xlane.f32.xlu0 %v9496
  %v9498 = vpop.xlane.xlu0 %9497
  %v9499 = vadd.f32 %v9488, %v9489
  %9500 = vadd.xlane.f32.xlu0 %v9499
  %v9501 = vpop.xlane.xlu0 %9500
  %v9502 = vadd.f32 %v9454, %v9472
  %v9503 = vadd.f32 %v9455, %v9475
  %v9504 = vadd.f32 %v9456, %v9478
  %v9505 = vadd.f32 %v9457, %v9481
  %v9506 = vadd.f32 %v9458, %v9492
  %v9507 = vadd.f32 %v9459, %v9495
  %v9508 = vadd.f32 %v9460, %v9498
  %v9509 = vadd.f32 %v9461, %v9501
  %v9510 = vrcp.pop 1000.0
  %v9511 = vmul.f32 %v9502, %v9510
  %v9512 = vmul.f32 %v9503, %v9510
  %v9513 = vmul.f32 %v9504, %v9510
  %v9514 = vmul.f32 %v9505, %v9510
  %v9515 = vmul.f32 %v9506, %v9510
  %v9516 = vmul.f32 %v9507, %v9510
  %v9517 = vmul.f32 %v9508, %v9510
  %v9518 = vmul.f32 %v9509, %v9510
  %v9519 = vmul.f32 %v9511, %v9511
  %v9520 = vmul.f32 %v9512, %v9512
  %v9521 = vmul.f32 %v9513, %v9513
  %v9522 = vmul.f32 %v9514, %v9514
  %v9523 = vsub.f32 %v9515, %v9519
  %v9524 = vsub.f32 %v9516, %v9520
  %v9525 = vsub.f32 %v9517, %v9521
  %v9526 = vsub.f32 %v9518, %v9522
  %v9527 = vadd.f32 %v9523, 1e-05
  %v9528 = vadd.f32 %v9524, 1e-05
  %v9529 = vadd.f32 %v9525, 1e-05
  %v9530 = vadd.f32 %v9526, 1e-05
  %v9531 = vrsqrt.pop %v9527
  %v9532 = vrsqrt.pop %v9528
  %v9533 = vrsqrt.pop %v9529
  %v9534 = vrsqrt.pop %v9530
  %v9535 = vld [vmem:[%s9] sm:$0xff]
  %v9536 = vld [vmem:[%s9 + $0x8] sm:$0xff]
  %v9537 = vld [vmem:[%s9 + $0x10] sm:$0xff]
  %v9538 = vld [vmem:[%s9 + $0x18] sm:$0xff]
  %v9539 = vmul.f32 %v9531, %v9535
  %v9540 = vmul.f32 %v9532, %v9536
  %v9541 = vmul.f32 %v9533, %v9537
  %v9542 = vmul.f32 %v9534, %v9538
  %v9543 = vld [vmem:[%s10] sm:$0xff]
  %v9544 = vld [vmem:[%s10 + $0x8] sm:$0xff]
  %v9545 = vld [vmem:[%s10 + $0x10] sm:$0xff]
  %v9546 = vld [vmem:[%s10 + $0x18] sm:$0xff]
  %v9547 = vmul.f32 %v9511, %v9539
  %v9548 = vmul.f32 %v9512, %v9540
  %v9549 = vmul.f32 %v9513, %v9541
  %v9550 = vmul.f32 %v9514, %v9542
  %v9551 = vsub.f32 %v9543, %v9547
  %v9552 = vsub.f32 %v9544, %v9548
  %v9553 = vsub.f32 %v9545, %v9549
  %v9554 = vsub.f32 %v9546, %v9550
  %9556 = vset.pattern.permute.xlu0 0
  %9557 = vperm.xlu0 %9556, %v9539
  %v9558 = vpop.permute.xlu0 %9557
  %9561 = vset.pattern.permute.xlu0 0
  %9562 = vperm.xlu0 %9561, %v9540
  %v9563 = vpop.permute.xlu0 %9562
  %9566 = vset.pattern.permute.xlu0 0
  %9567 = vperm.xlu0 %9566, %v9541
  %v9568 = vpop.permute.xlu0 %9567
  %9571 = vset.pattern.permute.xlu0 0
  %9572 = vperm.xlu0 %9571, %v9542
  %v9573 = vpop.permute.xlu0 %9572
  %v9575 = vmul.f32 %v9069, %v9558
  %v9576 = vmul.f32 %v9071, %v9558
  %v9577 = vmul.f32 %v9073, %v9563
  %v9578 = vmul.f32 %v9075, %v9563
  %v9579 = vmul.f32 %v9079, %v9568
  %v9580 = vmul.f32 %v9081, %v9568
  %v9581 = vmul.f32 %v9083, %v9573
  %v9582 = vmul.f32 %v9085, %v9573
  %9584 = vset.pattern.permute.xlu0 0
  %9585 = vperm.xlu0 %9584, %v9551
  %v9586 = vpop.permute.xlu0 %9585
  %9589 = vset.pattern.permute.xlu0 0
  %9590 = vperm.xlu0 %9589, %v9552
  %v9591 = vpop.permute.xlu0 %9590
  %9594 = vset.pattern.permute.xlu0 0
  %9595 = vperm.xlu0 %9594, %v9553
  %v9596 = vpop.permute.xlu0 %9595
  %9599 = vset.pattern.permute.xlu0 0
  %9600 = vperm.xlu0 %9599, %v9554
  %v9601 = vpop.permute.xlu0 %9600
  %v9603 = vadd.f32 %v9575, %v9586
  %v9604 = vadd.f32 %v9576, %v9586
  %v9605 = vadd.f32 %v9577, %v9591
  %v9606 = vadd.f32 %v9578, %v9591
  %v9607 = vadd.f32 %v9579, %v9596
  %v9608 = vadd.f32 %v9580, %v9596
  %v9609 = vadd.f32 %v9581, %v9601
  %v9610 = vadd.f32 %v9582, %v9601
  %v9611 = vmul.f32 %v9089, %v9558
  %v9612 = vmul.f32 %v9091, %v9558
  %v9613 = vmul.f32 %v9093, %v9563
  %v9614 = vmul.f32 %v9095, %v9563
  %v9615 = vmul.f32 %v9099, %v9568
  %v9616 = vmul.f32 %v9101, %v9568
  %v9617 = vmul.f32 %v9103, %v9573
  %v9618 = vmul.f32 %v9105, %v9573
  %v9619 = vadd.f32 %v9611, %v9586
  %v9620 = vadd.f32 %v9612, %v9586
  %v9621 = vadd.f32 %v9613, %v9591
  %v9622 = vadd.f32 %v9614, %v9591
  %v9623 = vadd.f32 %v9615, %v9596
  %v9624 = vadd.f32 %v9616, %v9596
  %v9625 = vadd.f32 %v9617, %v9601
  %v9626 = vadd.f32 %v9618, %v9601
  %v9627 = vmul.f32 %v9288, %v9558
  %v9628 = vmul.f32 %v9290, %v9558
  %v9629 = vmul.f32 %v9292, %v9563
  %v9630 = vmul.f32 %v9294, %v9563
  %v9631 = vmul.f32 %v9298, %v9568
  %v9632 = vmul.f32 %v9300, %v9568
  %v9633 = vmul.f32 %v9302, %v9573
  %v9634 = vmul.f32 %v9304, %v9573
  %v9635 = vadd.f32 %v9627, %v9586
  %v9636 = vadd.f32 %v9628, %v9586
  %v9637 = vadd.f32 %v9629, %v9591
  %v9638 = vadd.f32 %v9630, %v9591
  %v9639 = vadd.f32 %v9631, %v9596
  %v9640 = vadd.f32 %v9632, %v9596
  %v9641 = vadd.f32 %v9633, %v9601
  %v9642 = vadd.f32 %v9634, %v9601
  %v9643 = vmul.f32 %v9308, %v9558
  %v9644 = vmul.f32 %v9310, %v9558
  %v9645 = vmul.f32 %v9312, %v9563
  %v9646 = vmul.f32 %v9314, %v9563
  %v9647 = vmul.f32 %v9318, %v9568
  %v9648 = vmul.f32 %v9320, %v9568
  %v9649 = vmul.f32 %v9322, %v9573
  %v9650 = vmul.f32 %v9324, %v9573
  %v9651 = vadd.f32 %v9643, %v9586
  %v9652 = vadd.f32 %v9644, %v9586
  %v9653 = vadd.f32 %v9645, %v9591
  %v9654 = vadd.f32 %v9646, %v9591
  %v9655 = vadd.f32 %v9647, %v9596
  %v9656 = vadd.f32 %v9648, %v9596
  %v9657 = vadd.f32 %v9649, %v9601
  %v9658 = vadd.f32 %v9650, %v9601
  %vm9659 = vcmp.gt.f32.partialorder %v9603, 0.0
  %vm9660 = vcmp.gt.f32.partialorder %v9604, 0.0
  %vm9661 = vcmp.gt.f32.partialorder %v9605, 0.0
  %vm9662 = vcmp.gt.f32.partialorder %v9606, 0.0
  %vm9663 = vcmp.gt.f32.partialorder %v9607, 0.0
  %vm9664 = vcmp.gt.f32.partialorder %v9608, 0.0
  %vm9665 = vcmp.gt.f32.partialorder %v9609, 0.0
  %vm9666 = vcmp.gt.f32.partialorder %v9610, 0.0
  %v9667 = vmul.f32 %v9603, 0.2
  %v9668 = vmul.f32 %v9604, 0.2
  %v9669 = vmul.f32 %v9605, 0.2
  %v9670 = vmul.f32 %v9606, 0.2
  %v9671 = vmul.f32 %v9607, 0.2
  %v9672 = vmul.f32 %v9608, 0.2
  %v9673 = vmul.f32 %v9609, 0.2
  %v9674 = vmul.f32 %v9610, 0.2
  %v9675 = vsel %vm9659, %v9603, %v9667
  %v9676 = vsel %vm9660, %v9604, %v9668
  %v9677 = vsel %vm9661, %v9605, %v9669
  %v9678 = vsel %vm9662, %v9606, %v9670
  %v9679 = vsel %vm9663, %v9607, %v9671
  %v9680 = vsel %vm9664, %v9608, %v9672
  %v9681 = vsel %vm9665, %v9609, %v9673
  %v9682 = vsel %vm9666, %v9610, %v9674
  %vm9683 = vcmp.gt.f32.partialorder %v9619, 0.0
  %vm9684 = vcmp.gt.f32.partialorder %v9620, 0.0
  %vm9685 = vcmp.gt.f32.partialorder %v9621, 0.0
  %vm9686 = vcmp.gt.f32.partialorder %v9622, 0.0
  %vm9687 = vcmp.gt.f32.partialorder %v9623, 0.0
  %vm9688 = vcmp.gt.f32.partialorder %v9624, 0.0
  %vm9689 = vcmp.gt.f32.partialorder %v9625, 0.0
  %vm9690 = vcmp.gt.f32.partialorder %v9626, 0.0
  %v9691 = vmul.f32 %v9619, 0.2
  %v9692 = vmul.f32 %v9620, 0.2
  %v9693 = vmul.f32 %v9621, 0.2
  %v9694 = vmul.f32 %v9622, 0.2
  %v9695 = vmul.f32 %v9623, 0.2
  %v9696 = vmul.f32 %v9624, 0.2
  %v9697 = vmul.f32 %v9625, 0.2
  %v9698 = vmul.f32 %v9626, 0.2
  %v9699 = vsel %vm9683, %v9619, %v9691
  %v9700 = vsel %vm9684, %v9620, %v9692
  %v9701 = vsel %vm9685, %v9621, %v9693
  %v9702 = vsel %vm9686, %v9622, %v9694
  %v9703 = vsel %vm9687, %v9623, %v9695
  %v9704 = vsel %vm9688, %v9624, %v9696
  %v9705 = vsel %vm9689, %v9625, %v9697
  %v9706 = vsel %vm9690, %v9626, %v9698
  %vm9707 = vcmp.gt.f32.partialorder %v9635, 0.0
  %vm9708 = vcmp.gt.f32.partialorder %v9636, 0.0
  %vm9709 = vcmp.gt.f32.partialorder %v9637, 0.0
  %vm9710 = vcmp.gt.f32.partialorder %v9638, 0.0
  %vm9711 = vcmp.gt.f32.partialorder %v9639, 0.0
  %vm9712 = vcmp.gt.f32.partialorder %v9640, 0.0
  %vm9713 = vcmp.gt.f32.partialorder %v9641, 0.0
  %vm9714 = vcmp.gt.f32.partialorder %v9642, 0.0
  %v9715 = vmul.f32 %v9635, 0.2
  %v9716 = vmul.f32 %v9636, 0.2
  %v9717 = vmul.f32 %v9637, 0.2
  %v9718 = vmul.f32 %v9638, 0.2
  %v9719 = vmul.f32 %v9639, 0.2
  %v9720 = vmul.f32 %v9640, 0.2
  %v9721 = vmul.f32 %v9641, 0.2
  %v9722 = vmul.f32 %v9642, 0.2
  %v9723 = vsel %vm9707, %v9635, %v9715
  %v9724 = vsel %vm9708, %v9636, %v9716
  %v9725 = vsel %vm9709, %v9637, %v9717
  %v9726 = vsel %vm9710, %v9638, %v9718
  %v9727 = vsel %vm9711, %v9639, %v9719
  %v9728 = vsel %vm9712, %v9640, %v9720
  %v9729 = vsel %vm9713, %v9641, %v9721
  %v9730 = vsel %vm9714, %v9642, %v9722
  %vm9731 = vcmp.gt.f32.partialorder %v9651, 0.0
  %vm9732 = vcmp.gt.f32.partialorder %v9652, 0.0
  %vm9733 = vcmp.gt.f32.partialorder %v9653, 0.0
  %vm9734 = vcmp.gt.f32.partialorder %v9654, 0.0
  %vm9735 = vcmp.gt.f32.partialorder %v9655, 0.0
  %vm9736 = vcmp.gt.f32.partialorder %v9656, 0.0
  %vm9737 = vcmp.gt.f32.partialorder %v9657, 0.0
  %vm9738 = vcmp.gt.f32.partialorder %v9658, 0.0
  %v9739 = vmul.f32 %v9651, 0.2
  %v9740 = vmul.f32 %v9652, 0.2
  %v9741 = vmul.f32 %v9653, 0.2
  %v9742 = vmul.f32 %v9654, 0.2
  %v9743 = vmul.f32 %v9655, 0.2
  %v9744 = vmul.f32 %v9656, 0.2
  %v9745 = vmul.f32 %v9657, 0.2
  %v9746 = vmul.f32 %v9658, 0.2
  %v9747 = vsel %vm9731, %v9651, %v9739
  %v9748 = vsel %vm9732, %v9652, %v9740
  %v9749 = vsel %vm9733, %v9653, %v9741
  %v9750 = vsel %vm9734, %v9654, %v9742
  %v9751 = vsel %vm9735, %v9655, %v9743
  %v9752 = vsel %vm9736, %v9656, %v9744
  %v9753 = vsel %vm9737, %v9657, %v9745
  %v9754 = vsel %vm9738, %v9658, %v9746
  %v9755 = vld [vmem:[%s11] sm:$0xff]
  %v9756 = vld [vmem:[%s11 + $0x8] sm:$0xff]
  %9757 = vrot.lane.b32.xlu0 %v9723, 1
  %v9758 = vpop.permute.xlu0 %9757
  %9759 = vrot.lane.b32.xlu0 %v9725, 1
  %v9760 = vpop.permute.xlu0 %9759
  %9761 = vrot.lane.b32.xlu0 %v9727, 1
  %v9762 = vpop.permute.xlu0 %9761
  %9763 = vrot.lane.b32.xlu0 %v9729, 1
  %v9764 = vpop.permute.xlu0 %9763
  %9765 = vrot.lane.b32.xlu0 %v9724, 1
  %v9766 = vpop.permute.xlu0 %9765
  %9767 = vrot.lane.b32.xlu0 %v9726, 1
  %v9768 = vpop.permute.xlu0 %9767
  %9769 = vrot.lane.b32.xlu0 %v9728, 1
  %v9770 = vpop.permute.xlu0 %9769
  %9771 = vrot.lane.b32.xlu0 %v9730, 1
  %v9772 = vpop.permute.xlu0 %9771
  %v9773 = vsel %vm4607, %v9758, %v9766
  %v9774 = vsel %vm4607, %v9760, %v9768
  %v9775 = vsel %vm4607, %v9762, %v9770
  %v9776 = vsel %vm4607, %v9764, %v9772
  %v9777 = vsel %vm4607, %v9766, %v9758
  %v9778 = vsel %vm4607, %v9768, %v9760
  %v9779 = vsel %vm4607, %v9770, %v9762
  %v9780 = vsel %vm4607, %v9772, %v9764
  %v9781 = vmul.f32 %v9777, %v116
  %v9782 = vmul.f32 %v9773, %v117
  %v9783 = vmul.f32 %v9778, %v116
  %v9784 = vmul.f32 %v9774, %v117
  %v9785 = vmul.f32 %v9779, %v116
  %v9786 = vmul.f32 %v9775, %v117
  %v9787 = vmul.f32 %v9780, %v116
  %v9788 = vmul.f32 %v9776, %v117
  %v9789 = vpack.c.bf16 %v9783, %v9781
  %v9790 = vpack.c.bf16 %v9784, %v9782
  %v9791 = vpack.c.bf16 %v9787, %v9785
  %v9792 = vpack.c.bf16 %v9788, %v9786
  %9793 = vrot.lane.b32.xlu0 %v9747, 1
  %v9794 = vpop.permute.xlu0 %9793
  %9795 = vrot.lane.b32.xlu0 %v9749, 1
  %v9796 = vpop.permute.xlu0 %9795
  %9797 = vrot.lane.b32.xlu0 %v9751, 1
  %v9798 = vpop.permute.xlu0 %9797
  %9799 = vrot.lane.b32.xlu0 %v9753, 1
  %v9800 = vpop.permute.xlu0 %9799
  %9801 = vrot.lane.b32.xlu0 %v9748, 1
  %v9802 = vpop.permute.xlu0 %9801
  %9803 = vrot.lane.b32.xlu0 %v9750, 1
  %v9804 = vpop.permute.xlu0 %9803
  %9805 = vrot.lane.b32.xlu0 %v9752, 1
  %v9806 = vpop.permute.xlu0 %9805
  %9807 = vrot.lane.b32.xlu0 %v9754, 1
  %v9808 = vpop.permute.xlu0 %9807
  %v9809 = vsel %vm4607, %v9794, %v9802
  %v9810 = vsel %vm4607, %v9796, %v9804
  %v9811 = vsel %vm4607, %v9798, %v9806
  %v9812 = vsel %vm4607, %v9800, %v9808
  %v9813 = vsel %vm4607, %v9802, %v9794
  %v9814 = vsel %vm4607, %v9804, %v9796
  %v9815 = vsel %vm4607, %v9806, %v9798
  %v9816 = vsel %vm4607, %v9808, %v9800
  %v9817 = vmul.f32 %v9813, %v116
  %v9818 = vmul.f32 %v9809, %v117
  %v9819 = vmul.f32 %v9814, %v116
  %v9820 = vmul.f32 %v9810, %v117
  %v9821 = vmul.f32 %v9815, %v116
  %v9822 = vmul.f32 %v9811, %v117
  %v9823 = vmul.f32 %v9816, %v116
  %v9824 = vmul.f32 %v9812, %v117
  %v9825 = vpack.c.bf16 %v9819, %v9817
  %v9826 = vpack.c.bf16 %v9820, %v9818
  %v9827 = vpack.c.bf16 %v9823, %v9821
  %v9828 = vpack.c.bf16 %v9824, %v9822
  %v9829 = vpack.c.bf16 %v9677, %v9675
  %v9830 = vpack.c.bf16 %v9678, %v9676
  %v9831 = vpack.c.bf16 %v9681, %v9679
  %v9832 = vpack.c.bf16 %v9682, %v9680
  %v9833 = vpack.c.bf16 %v9701, %v9699
  %v9834 = vpack.c.bf16 %v9702, %v9700
  %v9835 = vpack.c.bf16 %v9705, %v9703
  %v9836 = vpack.c.bf16 %v9706, %v9704
  %v9837 = vpack.c.bf16 %v9725, %v9723
  %v9838 = vpack.c.bf16 %v9726, %v9724
  %v9839 = vpack.c.bf16 %v9729, %v9727
  %v9840 = vpack.c.bf16 %v9730, %v9728
  %v9841 = vpack.c.bf16 %v9749, %v9747
  %v9842 = vpack.c.bf16 %v9750, %v9748
  %v9843 = vpack.c.bf16 %v9753, %v9751
  %v9844 = vpack.c.bf16 %v9754, %v9752
  %9845 = vrot.lane.b32.xlu0 %v9675, 127
  %v9846 = vpop.permute.xlu0 %9845
  %9847 = vrot.lane.b32.xlu0 %v9677, 127
  %v9848 = vpop.permute.xlu0 %9847
  %9849 = vrot.lane.b32.xlu0 %v9679, 127
  %v9850 = vpop.permute.xlu0 %9849
  %9851 = vrot.lane.b32.xlu0 %v9681, 127
  %v9852 = vpop.permute.xlu0 %9851
  %9853 = vrot.lane.b32.xlu0 %v9676, 127
  %v9854 = vpop.permute.xlu0 %9853
  %9855 = vrot.lane.b32.xlu0 %v9678, 127
  %v9856 = vpop.permute.xlu0 %9855
  %9857 = vrot.lane.b32.xlu0 %v9680, 127
  %v9858 = vpop.permute.xlu0 %9857
  %9859 = vrot.lane.b32.xlu0 %v9682, 127
  %v9860 = vpop.permute.xlu0 %9859
  %v9861 = vsel %vm4928, %v9846, %v9854
  %v9862 = vsel %vm4928, %v9848, %v9856
  %v9863 = vsel %vm4928, %v9850, %v9858
  %v9864 = vsel %vm4928, %v9852, %v9860
  %v9865 = vsel %vm4928, %v9854, %v9846
  %v9866 = vsel %vm4928, %v9856, %v9848
  %v9867 = vsel %vm4928, %v9858, %v9850
  %v9868 = vsel %vm4928, %v9860, %v9852
  %v9869 = vmul.f32 %v9861, %v128
  %v9870 = vmul.f32 %v9865, %v129
  %v9871 = vmul.f32 %v9862, %v128
  %v9872 = vmul.f32 %v9866, %v129
  %v9873 = vmul.f32 %v9863, %v128
  %v9874 = vmul.f32 %v9867, %v129
  %v9875 = vmul.f32 %v9864, %v128
  %v9876 = vmul.f32 %v9868, %v129
  %v9877 = vpack.c.bf16 %v9871, %v9869
  %v9878 = vpack.c.bf16 %v9872, %v9870
  %v9879 = vpack.c.bf16 %v9875, %v9873
  %v9880 = vpack.c.bf16 %v9876, %v9874
  %9881 = vrot.lane.b32.xlu0 %v9699, 127
  %v9882 = vpop.permute.xlu0 %9881
  %9883 = vrot.lane.b32.xlu0 %v9701, 127
  %v9884 = vpop.permute.xlu0 %9883
  %9885 = vrot.lane.b32.xlu0 %v9703, 127
  %v9886 = vpop.permute.xlu0 %9885
  %9887 = vrot.lane.b32.xlu0 %v9705, 127
  %v9888 = vpop.permute.xlu0 %9887
  %9889 = vrot.lane.b32.xlu0 %v9700, 127
  %v9890 = vpop.permute.xlu0 %9889
  %9891 = vrot.lane.b32.xlu0 %v9702, 127
  %v9892 = vpop.permute.xlu0 %9891
  %9893 = vrot.lane.b32.xlu0 %v9704, 127
  %v9894 = vpop.permute.xlu0 %9893
  %9895 = vrot.lane.b32.xlu0 %v9706, 127
  %v9896 = vpop.permute.xlu0 %9895
  %v9897 = vsel %vm4928, %v9882, %v9890
  %v9898 = vsel %vm4928, %v9884, %v9892
  %v9899 = vsel %vm4928, %v9886, %v9894
  %v9900 = vsel %vm4928, %v9888, %v9896
  %v9901 = vsel %vm4928, %v9890, %v9882
  %v9902 = vsel %vm4928, %v9892, %v9884
  %v9903 = vsel %vm4928, %v9894, %v9886
  %v9904 = vsel %vm4928, %v9896, %v9888
  %v9905 = vmul.f32 %v9897, %v128
  %v9906 = vmul.f32 %v9901, %v129
  %v9907 = vmul.f32 %v9898, %v128
  %v9908 = vmul.f32 %v9902, %v129
  %v9909 = vmul.f32 %v9899, %v128
  %v9910 = vmul.f32 %v9903, %v129
  %v9911 = vmul.f32 %v9900, %v128
  %v9912 = vmul.f32 %v9904, %v129
  %v9913 = vpack.c.bf16 %v9907, %v9905
  %v9914 = vpack.c.bf16 %v9908, %v9906
  %v9915 = vpack.c.bf16 %v9911, %v9909
  %v9916 = vpack.c.bf16 %v9912, %v9910
  %v9919 = vunpack.c.l.b16 %v9755
  %v9920 = vunpack.c.h.b16 %v9755
  %v9921 = vunpack.c.l.b16 %v9756
  %v9922 = vunpack.c.h.b16 %v9756
  %v9923 = vpack.c.b16 %v9921, %v9919
  %v9924 = vpack.c.b16 %v9922, %v9920
  %vm9926 = vcmask 261120
  %v9928 = vsel %vm9926, %v9924, 0
  %9930 = vmatprep.subr.bf16.mxu0 %v9790
  %9931 = vmatpush1.bf16.msra.mxu0 %v9789
  %9932 = vmatprep.subr.bf16.mxu0 %v9792
  %9933 = vmatpush1.bf16.msra.mxu0 %v9791
  %9934 = vmatprep.subr.bf16.mxu0 %v9826
  %9935 = vmatpush1.bf16.msra.mxu0 %v9825
  %9936 = vmatprep.subr.bf16.mxu0 %v9828
  %9937 = vmatpush1.bf16.msra.mxu0 %v9827
  %9938 = vmatprep.subr.bf16.mxu0 %v9830
  %9939 = vmatpush1.bf16.msra.mxu0 %v9829
  %9940 = vmatprep.subr.bf16.mxu0 %v9832
  %9941 = vmatpush1.bf16.msra.mxu0 %v9831
  %9942 = vmatprep.subr.bf16.mxu0 %v9834
  %9943 = vmatpush1.bf16.msra.mxu0 %v9833
  %9944 = vmatprep.subr.bf16.mxu0 %v9836
  %9945 = vmatpush1.bf16.msra.mxu0 %v9835
  %9946 = vmatprep.subr.bf16.mxu0 %v9838
  %9947 = vmatpush1.bf16.msra.mxu0 %v9837
  %9948 = vmatprep.subr.bf16.mxu0 %v9840
  %9949 = vmatpush1.bf16.msra.mxu0 %v9839
  %9950 = vmatprep.subr.bf16.mxu0 0
  %9951 = vmatpush1.bf16.msra.mxu0 0
  %9952 = vmatprep.subr.bf16.mxu0 0
  %9953 = vmatpush1.bf16.msra.mxu0 0
  %9954 = vmatprep.subr.bf16.mxu0 0
  %9955 = vmatpush1.bf16.msra.mxu0 0
  %9956 = vmatprep.subr.bf16.mxu0 0
  %9957 = vmatpush1.bf16.msra.mxu0 0
  %9958 = vmatprep.subr.bf16.mxu0 0
  %9959 = vmatpush1.bf16.msra.mxu0 0
  %9960 = vmatprep.subr.bf16.mxu0 0
  %9961 = vmatpush1.bf16.msra.mxu0 0
  %9962 = vmatprep.mubr.bf16.mxu0 %v9928
  %9963 = vmatmul.mubr.bf16.gmra.mrb[0].mxu0 %v9923
  %v9964 = vpop.f32.mrb[0].mxu0
  %v9965 = vadd.f32 0.0, %v9964
  %v9966 = vpop.f32.mrb[0].mxu0
  %v9967 = vadd.f32 0.0, %v9966
  %v9968 = vpop.f32.mrb[0].mxu0
  %v9969 = vadd.f32 0.0, %v9968
  %v9970 = vpop.f32.mrb[0].mxu0
  %v9971 = vadd.f32 0.0, %v9970
  %9972 = vdwg.mxu0
  %9973 = vmatprep.subr.bf16.mxu0 %v9826
  %9974 = vmatpush1.bf16.msra.mxu0 %v9825
  %9975 = vmatprep.subr.bf16.mxu0 %v9828
  %9976 = vmatpush1.bf16.msra.mxu0 %v9827
  %9977 = vmatprep.subr.bf16.mxu0 %v9830
  %9978 = vmatpush1.bf16.msra.mxu0 %v9829
  %9979 = vmatprep.subr.bf16.mxu0 %v9832
  %9980 = vmatpush1.bf16.msra.mxu0 %v9831
  %9981 = vmatprep.subr.bf16.mxu0 %v9834
  %9982 = vmatpush1.bf16.msra.mxu0 %v9833
  %9983 = vmatprep.subr.bf16.mxu0 %v9836
  %9984 = vmatpush1.bf16.msra.mxu0 %v9835
  %9985 = vmatprep.subr.bf16.mxu0 %v9838
  %9986 = vmatpush1.bf16.msra.mxu0 %v9837
  %9987 = vmatprep.subr.bf16.mxu0 %v9840
  %9988 = vmatpush1.bf16.msra.mxu0 %v9839
  %9989 = vmatprep.subr.bf16.mxu0 %v9842
  %9990 = vmatpush1.bf16.msra.mxu0 %v9841
  %9991 = vmatprep.subr.bf16.mxu0 %v9844
  %9992 = vmatpush1.bf16.msra.mxu0 %v9843
  %9993 = vmatprep.subr.bf16.mxu0 0
  %9994 = vmatpush1.bf16.msra.mxu0 0
  %9995 = vmatprep.subr.bf16.mxu0 0
  %9996 = vmatpush1.bf16.msra.mxu0 0
  %9997 = vmatprep.subr.bf16.mxu0 0
  %9998 = vmatpush1.bf16.msra.mxu0 0
  %9999 = vmatprep.subr.bf16.mxu0 0
  %10000 = vmatpush1.bf16.msra.mxu0 0
  %10001 = vmatprep.subr.bf16.mxu0 0
  %10002 = vmatpush1.bf16.msra.mxu0 0
  %10003 = vmatprep.subr.bf16.mxu0 0
  %10004 = vmatpush1.bf16.msra.mxu0 0
  %10005 = vmatprep.mubr.bf16.mxu0 %v9928
  %10006 = vmatmul.mubr.bf16.gmra.mrb[0].mxu0 %v9923
  %v10007 = vpop.f32.mrb[0].mxu0
  %v10008 = vadd.f32 0.0, %v10007
  %v10009 = vpop.f32.mrb[0].mxu0
  %v10010 = vadd.f32 0.0, %v10009
  %v10011 = vpop.f32.mrb[0].mxu0
  %v10012 = vadd.f32 0.0, %v10011
  %v10013 = vpop.f32.mrb[0].mxu0
  %v10014 = vadd.f32 0.0, %v10013
  %10015 = vdwg.mxu0
  %10016 = vmatprep.subr.bf16.mxu0 %v9830
  %10017 = vmatpush1.bf16.msra.mxu0 %v9829
  %10018 = vmatprep.subr.bf16.mxu0 %v9832
  %10019 = vmatpush1.bf16.msra.mxu0 %v9831
  %10020 = vmatprep.subr.bf16.mxu0 %v9834
  %10021 = vmatpush1.bf16.msra.mxu0 %v9833
  %10022 = vmatprep.subr.bf16.mxu0 %v9836
  %10023 = vmatpush1.bf16.msra.mxu0 %v9835
  %10024 = vmatprep.subr.bf16.mxu0 %v9838
  %10025 = vmatpush1.bf16.msra.mxu0 %v9837
  %10026 = vmatprep.subr.bf16.mxu0 %v9840
  %10027 = vmatpush1.bf16.msra.mxu0 %v9839
  %10028 = vmatprep.subr.bf16.mxu0 %v9842
  %10029 = vmatpush1.bf16.msra.mxu0 %v9841
  %10030 = vmatprep.subr.bf16.mxu0 %v9844
  %10031 = vmatpush1.bf16.msra.mxu0 %v9843
  %10032 = vmatprep.subr.bf16.mxu0 %v9878
  %10033 = vmatpush1.bf16.msra.mxu0 %v9877
  %10034 = vmatprep.subr.bf16.mxu0 %v9880
  %10035 = vmatpush1.bf16.msra.mxu0 %v9879
  %10036 = vmatprep.subr.bf16.mxu0 0
  %10037 = vmatpush1.bf16.msra.mxu0 0
  %10038 = vmatprep.subr.bf16.mxu0 0
  %10039 = vmatpush1.bf16.msra.mxu0 0
  %10040 = vmatprep.subr.bf16.mxu0 0
  %10041 = vmatpush1.bf16.msra.mxu0 0
  %10042 = vmatprep.subr.bf16.mxu0 0
  %10043 = vmatpush1.bf16.msra.mxu0 0
  %10044 = vmatprep.subr.bf16.mxu0 0
  %10045 = vmatpush1.bf16.msra.mxu0 0
  %10046 = vmatprep.subr.bf16.mxu0 0
  %10047 = vmatpush1.bf16.msra.mxu0 0
  %10048 = vmatprep.mubr.bf16.mxu0 %v9928
  %10049 = vmatmul.mubr.bf16.gmra.mrb[0].mxu0 %v9923
  %v10050 = vpop.f32.mrb[0].mxu0
  %v10051 = vadd.f32 0.0, %v10050
  %v10052 = vpop.f32.mrb[0].mxu0
  %v10053 = vadd.f32 0.0, %v10052
  %v10054 = vpop.f32.mrb[0].mxu0
  %v10055 = vadd.f32 0.0, %v10054
  %v10056 = vpop.f32.mrb[0].mxu0
  %v10057 = vadd.f32 0.0, %v10056
  %10058 = vdwg.mxu0
  %10059 = vmatprep.subr.bf16.mxu0 %v9834
  %10060 = vmatpush1.bf16.msra.mxu0 %v9833
  %10061 = vmatprep.subr.bf16.mxu0 %v9836
  %10062 = vmatpush1.bf16.msra.mxu0 %v9835
  %10063 = vmatprep.subr.bf16.mxu0 %v9838
  %10064 = vmatpush1.bf16.msra.mxu0 %v9837
  %10065 = vmatprep.subr.bf16.mxu0 %v9840
  %10066 = vmatpush1.bf16.msra.mxu0 %v9839
  %10067 = vmatprep.subr.bf16.mxu0 %v9842
  %10068 = vmatpush1.bf16.msra.mxu0 %v9841
  %10069 = vmatprep.subr.bf16.mxu0 %v9844
  %10070 = vmatpush1.bf16.msra.mxu0 %v9843
  %10071 = vmatprep.subr.bf16.mxu0 %v9878
  %10072 = vmatpush1.bf16.msra.mxu0 %v9877
  %10073 = vmatprep.subr.bf16.mxu0 %v9880
  %10074 = vmatpush1.bf16.msra.mxu0 %v9879
  %10075 = vmatprep.subr.bf16.mxu0 %v9914
  %10076 = vmatpush1.bf16.msra.mxu0 %v9913
  %10077 = vmatprep.subr.bf16.mxu0 %v9916
  %10078 = vmatpush1.bf16.msra.mxu0 %v9915
  %10079 = vmatprep.subr.bf16.mxu0 0
  %10080 = vmatpush1.bf16.msra.mxu0 0
  %10081 = vmatprep.subr.bf16.mxu0 0
  %10082 = vmatpush1.bf16.msra.mxu0 0
  %10083 = vmatprep.subr.bf16.mxu0 0
  %10084 = vmatpush1.bf16.msra.mxu0 0
  %10085 = vmatprep.subr.bf16.mxu0 0
  %10086 = vmatpush1.bf16.msra.mxu0 0
  %10087 = vmatprep.subr.bf16.mxu0 0
  %10088 = vmatpush1.bf16.msra.mxu0 0
  %10089 = vmatprep.subr.bf16.mxu0 0
  %10090 = vmatpush1.bf16.msra.mxu0 0
  %10091 = vmatprep.mubr.bf16.mxu0 %v9928
  %10092 = vmatmul.mubr.bf16.gmra.mrb[0].mxu0 %v9923
  %v10093 = vpop.f32.mrb[0].mxu0
  %v10094 = vadd.f32 0.0, %v10093
  %v10095 = vpop.f32.mrb[0].mxu0
  %v10096 = vadd.f32 0.0, %v10095
  %v10097 = vpop.f32.mrb[0].mxu0
  %v10098 = vadd.f32 0.0, %v10097
  %v10099 = vpop.f32.mrb[0].mxu0
  %v10100 = vadd.f32 0.0, %v10099
  %10101 = vdwg.mxu0
  %v10102 = vmul.f32 %v9965, %v92
  %v10103 = vmul.f32 %v9967, %v93
  %v10104 = vadd.f32 %v10102, %v10103
  %10105 = vadd.xlane.f32.xlu0 %v10104
  %v10106 = vpop.xlane.xlu0 %10105
  %v10107 = vmul.f32 %v10102, %v9965
  %v10108 = vmul.f32 %v10103, %v9967
  %v10109 = vadd.f32 %v10107, %v10108
  %10110 = vadd.xlane.f32.xlu0 %v10109
  %v10111 = vpop.xlane.xlu0 %10110
  %v10112 = vmul.f32 %v9969, %v92
  %v10113 = vmul.f32 %v9971, %v93
  %v10114 = vadd.f32 %v10112, %v10113
  %10115 = vadd.xlane.f32.xlu0 %v10114
  %v10116 = vpop.xlane.xlu0 %10115
  %v10117 = vmul.f32 %v10112, %v9969
  %v10118 = vmul.f32 %v10113, %v9971
  %v10119 = vadd.f32 %v10117, %v10118
  %10120 = vadd.xlane.f32.xlu0 %v10119
  %v10121 = vpop.xlane.xlu0 %10120
  %v10122 = vadd.f32 %v10106, %v10116
  %v10123 = vadd.f32 %v10111, %v10121
  %v10124 = vmul.f32 %v10008, %v92
  %v10125 = vmul.f32 %v10010, %v93
  %v10126 = vadd.f32 %v10124, %v10125
  %10127 = vadd.xlane.f32.xlu0 %v10126
  %v10128 = vpop.xlane.xlu0 %10127
  %v10129 = vmul.f32 %v10124, %v10008
  %v10130 = vmul.f32 %v10125, %v10010
  %v10131 = vadd.f32 %v10129, %v10130
  %10132 = vadd.xlane.f32.xlu0 %v10131
  %v10133 = vpop.xlane.xlu0 %10132
  %v10134 = vadd.f32 %v10122, %v10128
  %v10135 = vadd.f32 %v10123, %v10133
  %v10136 = vmul.f32 %v10012, %v92
  %v10137 = vmul.f32 %v10014, %v93
  %v10138 = vadd.f32 %v10136, %v10137
  %10139 = vadd.xlane.f32.xlu0 %v10138
  %v10140 = vpop.xlane.xlu0 %10139
  %v10141 = vmul.f32 %v10136, %v10012
  %v10142 = vmul.f32 %v10137, %v10014
  %v10143 = vadd.f32 %v10141, %v10142
  %10144 = vadd.xlane.f32.xlu0 %v10143
  %v10145 = vpop.xlane.xlu0 %10144
  %v10146 = vadd.f32 %v10134, %v10140
  %v10147 = vadd.f32 %v10135, %v10145
  %v10148 = vmul.f32 %v10051, %v92
  %v10149 = vmul.f32 %v10053, %v93
  %v10150 = vadd.f32 %v10148, %v10149
  %10151 = vadd.xlane.f32.xlu0 %v10150
  %v10152 = vpop.xlane.xlu0 %10151
  %v10153 = vmul.f32 %v10148, %v10051
  %v10154 = vmul.f32 %v10149, %v10053
  %v10155 = vadd.f32 %v10153, %v10154
  %10156 = vadd.xlane.f32.xlu0 %v10155
  %v10157 = vpop.xlane.xlu0 %10156
  %v10158 = vadd.f32 %v10146, %v10152
  %v10159 = vadd.f32 %v10147, %v10157
  %v10160 = vmul.f32 %v10055, %v92
  %v10161 = vmul.f32 %v10057, %v93
  %v10162 = vadd.f32 %v10160, %v10161
  %10163 = vadd.xlane.f32.xlu0 %v10162
  %v10164 = vpop.xlane.xlu0 %10163
  %v10165 = vmul.f32 %v10160, %v10055
  %v10166 = vmul.f32 %v10161, %v10057
  %v10167 = vadd.f32 %v10165, %v10166
  %10168 = vadd.xlane.f32.xlu0 %v10167
  %v10169 = vpop.xlane.xlu0 %10168
  %v10170 = vadd.f32 %v10158, %v10164
  %v10171 = vadd.f32 %v10159, %v10169
  %v10172 = vmul.f32 %v10094, %v92
  %v10173 = vmul.f32 %v10096, %v93
  %v10174 = vadd.f32 %v10172, %v10173
  %10175 = vadd.xlane.f32.xlu0 %v10174
  %v10176 = vpop.xlane.xlu0 %10175
  %v10177 = vmul.f32 %v10172, %v10094
  %v10178 = vmul.f32 %v10173, %v10096
  %v10179 = vadd.f32 %v10177, %v10178
  %10180 = vadd.xlane.f32.xlu0 %v10179
  %v10181 = vpop.xlane.xlu0 %10180
  %v10182 = vadd.f32 %v10170, %v10176
  %v10183 = vadd.f32 %v10171, %v10181
  %v10184 = vmul.f32 %v10098, %v92
  %v10185 = vmul.f32 %v10100, %v93
  %v10186 = vadd.f32 %v10184, %v10185
  %10187 = vadd.xlane.f32.xlu0 %v10186
  %v10188 = vpop.xlane.xlu0 %10187
  %v10189 = vmul.f32 %v10184, %v10098
  %v10190 = vmul.f32 %v10185, %v10100
  %v10191 = vadd.f32 %v10189, %v10190
  %10192 = vadd.xlane.f32.xlu0 %v10191
  %v10193 = vpop.xlane.xlu0 %10192
  %v10194 = vadd.f32 %v10182, %v10188
  %v10195 = vadd.f32 %v10183, %v10193
  %v10196 = vrcp.pop 2000.0
  %v10197 = vmul.f32 %v10194, %v10196
  %v10198 = vmul.f32 %v10195, %v10196
  %v10199 = vmul.f32 %v10197, %v10197
  %v10200 = vsub.f32 %v10198, %v10199
  %v10201 = vadd.f32 %v10200, 1e-05
  %v10202 = vrsqrt.pop %v10201
  %v10203 = vld [vmem:[%s12] sm:$0xff]
  %v10204 = vmul.f32 %v10202, %v10203
  %v10205 = vld [vmem:[%s13] sm:$0xff]
  %v10206 = vmul.f32 %v10197, %v10204
  %v10207 = vsub.f32 %v10205, %v10206
  %10209 = vset.pattern.permute.xlu0 0
  %10210 = vperm.xlu0 %10209, %v10204
  %v10211 = vpop.permute.xlu0 %10210
  %v10213 = vmul.f32 %v9965, %v10211
  %v10214 = vmul.f32 %v9967, %v10211
  %10216 = vset.pattern.permute.xlu0 0
  %10217 = vperm.xlu0 %10216, %v10207
  %v10218 = vpop.permute.xlu0 %10217
  %v10220 = vadd.f32 %v10213, %v10218
  %v10221 = vadd.f32 %v10214, %v10218
  %v10222 = vmul.f32 %v9969, %v10211
  %v10223 = vmul.f32 %v9971, %v10211
  %v10224 = vadd.f32 %v10222, %v10218
  %v10225 = vadd.f32 %v10223, %v10218
  %v10226 = vmul.f32 %v10008, %v10211
  %v10227 = vmul.f32 %v10010, %v10211
  %v10228 = vadd.f32 %v10226, %v10218
  %v10229 = vadd.f32 %v10227, %v10218
  %v10230 = vmul.f32 %v10012, %v10211
  %v10231 = vmul.f32 %v10014, %v10211
  %v10232 = vadd.f32 %v10230, %v10218
  %v10233 = vadd.f32 %v10231, %v10218
  %v10234 = vmul.f32 %v10051, %v10211
  %v10235 = vmul.f32 %v10053, %v10211
  %v10236 = vadd.f32 %v10234, %v10218
  %v10237 = vadd.f32 %v10235, %v10218
  %v10238 = vmul.f32 %v10055, %v10211
  %v10239 = vmul.f32 %v10057, %v10211
  %v10240 = vadd.f32 %v10238, %v10218
  %v10241 = vadd.f32 %v10239, %v10218
  %v10242 = vmul.f32 %v10094, %v10211
  %v10243 = vmul.f32 %v10096, %v10211
  %v10244 = vadd.f32 %v10242, %v10218
  %v10245 = vadd.f32 %v10243, %v10218
  %v10246 = vmul.f32 %v10098, %v10211
  %v10247 = vmul.f32 %v10100, %v10211
  %v10248 = vadd.f32 %v10246, %v10218
  %v10249 = vadd.f32 %v10247, %v10218
  %vm10250 = vcmp.gt.f32.partialorder %v10220, 0.0
  %vm10251 = vcmp.gt.f32.partialorder %v10221, 0.0
  %v10252 = vmul.f32 %v10220, 0.2
  %v10253 = vmul.f32 %v10221, 0.2
  %v10254 = vsel %vm10250, %v10220, %v10252
  %v10255 = vsel %vm10251, %v10221, %v10253
  %vm10256 = vcmp.gt.f32.partialorder %v10224, 0.0
  %vm10257 = vcmp.gt.f32.partialorder %v10225, 0.0
  %v10258 = vmul.f32 %v10224, 0.2
  %v10259 = vmul.f32 %v10225, 0.2
  %v10260 = vsel %vm10256, %v10224, %v10258
  %v10261 = vsel %vm10257, %v10225, %v10259
  %vm10262 = vcmp.gt.f32.partialorder %v10228, 0.0
  %vm10263 = vcmp.gt.f32.partialorder %v10229, 0.0
  %v10264 = vmul.f32 %v10228, 0.2
  %v10265 = vmul.f32 %v10229, 0.2
  %v10266 = vsel %vm10262, %v10228, %v10264
  %v10267 = vsel %vm10263, %v10229, %v10265
  %vm10268 = vcmp.gt.f32.partialorder %v10232, 0.0
  %vm10269 = vcmp.gt.f32.partialorder %v10233, 0.0
  %v10270 = vmul.f32 %v10232, 0.2
  %v10271 = vmul.f32 %v10233, 0.2
  %v10272 = vsel %vm10268, %v10232, %v10270
  %v10273 = vsel %vm10269, %v10233, %v10271
  %vm10274 = vcmp.gt.f32.partialorder %v10236, 0.0
  %vm10275 = vcmp.gt.f32.partialorder %v10237, 0.0
  %v10276 = vmul.f32 %v10236, 0.2
  %v10277 = vmul.f32 %v10237, 0.2
  %v10278 = vsel %vm10274, %v10236, %v10276
  %v10279 = vsel %vm10275, %v10237, %v10277
  %vm10280 = vcmp.gt.f32.partialorder %v10240, 0.0
  %vm10281 = vcmp.gt.f32.partialorder %v10241, 0.0
  %v10282 = vmul.f32 %v10240, 0.2
  %v10283 = vmul.f32 %v10241, 0.2
  %v10284 = vsel %vm10280, %v10240, %v10282
  %v10285 = vsel %vm10281, %v10241, %v10283
  %vm10286 = vcmp.gt.f32.partialorder %v10244, 0.0
  %vm10287 = vcmp.gt.f32.partialorder %v10245, 0.0
  %v10288 = vmul.f32 %v10244, 0.2
  %v10289 = vmul.f32 %v10245, 0.2
  %v10290 = vsel %vm10286, %v10244, %v10288
  %v10291 = vsel %vm10287, %v10245, %v10289
  %vm10292 = vcmp.gt.f32.partialorder %v10248, 0.0
  %vm10293 = vcmp.gt.f32.partialorder %v10249, 0.0
  %v10294 = vmul.f32 %v10248, 0.2
  %v10295 = vmul.f32 %v10249, 0.2
  %v10296 = vsel %vm10292, %v10248, %v10294
  %v10297 = vsel %vm10293, %v10249, %v10295
  %v10298 = vld [vmem:[%s14] sm:$0x1]
  %10299 = vrot.lane.b32.xlu0 %v10290, 1
  %v10300 = vpop.permute.xlu0 %10299
  %10301 = vrot.lane.b32.xlu0 %v10291, 1
  %v10302 = vpop.permute.xlu0 %10301
  %v10303 = vsel %vm4607, %v10300, %v10302
  %v10304 = vsel %vm4607, %v10302, %v10300
  %v10305 = vmul.f32 %v10304, %v116
  %v10306 = vmul.f32 %v10303, %v117
  %v10307 = vpack.c.bf16 %v10305, %v10305
  %v10308 = vpack.c.bf16 %v10306, %v10306
  %10309 = vrot.lane.b32.xlu0 %v10296, 1
  %v10310 = vpop.permute.xlu0 %10309
  %10311 = vrot.lane.b32.xlu0 %v10297, 1
  %v10312 = vpop.permute.xlu0 %10311
  %v10313 = vsel %vm4607, %v10310, %v10312
  %v10314 = vsel %vm4607, %v10312, %v10310
  %v10315 = vmul.f32 %v10314, %v116
  %v10316 = vmul.f32 %v10313, %v117
  %v10317 = vpack.c.bf16 %v10315, %v10315
  %v10318 = vpack.c.bf16 %v10316, %v10316
  %v10319 = vpack.c.bf16 %v10254, %v10254
  %v10320 = vpack.c.bf16 %v10255, %v10255
  %v10321 = vpack.c.bf16 %v10260, %v10260
  %v10322 = vpack.c.bf16 %v10261, %v10261
  %v10323 = vpack.c.bf16 %v10266, %v10266
  %v10324 = vpack.c.bf16 %v10267, %v10267
  %v10325 = vpack.c.bf16 %v10272, %v10272
  %v10326 = vpack.c.bf16 %v10273, %v10273
  %v10327 = vpack.c.bf16 %v10278, %v10278
  %v10328 = vpack.c.bf16 %v10279, %v10279
  %v10329 = vpack.c.bf16 %v10284, %v10284
  %v10330 = vpack.c.bf16 %v10285, %v10285
  %v10331 = vpack.c.bf16 %v10290, %v10290
  %v10332 = vpack.c.bf16 %v10291, %v10291
  %v10333 = vpack.c.bf16 %v10296, %v10296
  %v10334 = vpack.c.bf16 %v10297, %v10297
  %10335 = vrot.lane.b32.xlu0 %v10254, 127
  %v10336 = vpop.permute.xlu0 %10335
  %10337 = vrot.lane.b32.xlu0 %v10255, 127
  %v10338 = vpop.permute.xlu0 %10337
  %v10339 = vsel %vm4928, %v10336, %v10338
  %v10340 = vsel %vm4928, %v10338, %v10336
  %v10341 = vmul.f32 %v10339, %v128
  %v10342 = vmul.f32 %v10340, %v129
  %v10343 = vpack.c.bf16 %v10341, %v10341
  %v10344 = vpack.c.bf16 %v10342, %v10342
  %10345 = vrot.lane.b32.xlu0 %v10260, 127
  %v10346 = vpop.permute.xlu0 %10345
  %10347 = vrot.lane.b32.xlu0 %v10261, 127
  %v10348 = vpop.permute.xlu0 %10347
  %v10349 = vsel %vm4928, %v10346, %v10348
  %v10350 = vsel %vm4928, %v10348, %v10346
  %v10351 = vmul.f32 %v10349, %v128
  %v10352 = vmul.f32 %v10350, %v129
  %v10353 = vpack.c.bf16 %v10351, %v10351
  %v10354 = vpack.c.bf16 %v10352, %v10352
  %v10371 = vrot.slane %v10317, 4
  %v10372 = vrot.slane %v10318, 4
  %v10373 = vrot.slane %v10319, 4
  %v10374 = vrot.slane %v10320, 4
  %v10375 = vrot.slane %v10321, 4
  %v10376 = vrot.slane %v10322, 4
  %v10377 = vrot.slane %v10323, 4
  %v10378 = vrot.slane %v10324, 4
  %v10379 = vrot.slane %v10325, 4
  %v10380 = vrot.slane %v10326, 4
  %v10381 = vrot.slane %v10327, 4
  %v10382 = vrot.slane %v10328, 4
  %v10383 = vrot.slane %v10329, 4
  %v10384 = vrot.slane %v10330, 4
  %v10385 = vrot.slane %v10331, 4
  %v10386 = vrot.slane %v10332, 4
  %v10391 = vrot.slane %v10333, 4
  %v10392 = vrot.slane %v10334, 4
  %v10393 = vrot.slane %v10343, 4
  %v10394 = vrot.slane %v10344, 4
  %vm10395 = vcmask 1043456
  %v10398 = vsel %vm10395, %v10307, %v10371
  %v10402 = vsel %vm10395, %v10308, %v10372
  %v10406 = vsel %vm10395, %v10317, %v10373
  %v10410 = vsel %vm10395, %v10318, %v10374
  %v10414 = vsel %vm10395, %v10319, %v10375
  %v10418 = vsel %vm10395, %v10320, %v10376
  %v10422 = vsel %vm10395, %v10321, %v10377
  %v10426 = vsel %vm10395, %v10322, %v10378
  %v10430 = vsel %vm10395, %v10323, %v10379
  %v10434 = vsel %vm10395, %v10324, %v10380
  %v10438 = vsel %vm10395, %v10325, %v10381
  %v10442 = vsel %vm10395, %v10326, %v10382
  %v10446 = vsel %vm10395, %v10327, %v10383
  %v10450 = vsel %vm10395, %v10328, %v10384
  %v10454 = vsel %vm10395, %v10329, %v10385
  %v10458 = vsel %vm10395, %v10330, %v10386
  %v10462 = vsel %vm10395, %v10331, %v10391
  %v10466 = vsel %vm10395, %v10332, %v10392
  %v10470 = vsel %vm10395, %v10333, %v10393
  %v10474 = vsel %vm10395, %v10334, %v10394
  %vm10476 = vcmask 326656
  %v10478 = vsel %vm10476, %v10298, 0
  %v10480 = vsel %vm10395, %v10323, 0
  %v10482 = vsel %vm10395, %v10324, 0
  %v10484 = vsel %vm10395, %v10325, 0
  %v10486 = vsel %vm10395, %v10326, 0
  %v10488 = vsel %vm10395, %v10327, 0
  %v10490 = vsel %vm10395, %v10328, 0
  %v10492 = vsel %vm10395, %v10329, 0
  %v10494 = vsel %vm10395, %v10330, 0
  %v10496 = vsel %vm10395, %v10331, 0
  %v10498 = vsel %vm10395, %v10332, 0
  %v10500 = vsel %vm10395, %v10333, 0
  %v10502 = vsel %vm10395, %v10334, 0
  %v10505 = vsel %vm10395, %v10343, 0
  %v10508 = vsel %vm10395, %v10344, 0
  %v10511 = vsel %vm10395, %v10353, 0
  %v10514 = vsel %vm10395, %v10354, 0
  %10516 = vmatprep.subr.bf16.mxu0 %v10402
  %10517 = vmatpush1.bf16.msra.mxu0 %v10398
  %10518 = vmatprep.subr.bf16.mxu0 %v10418
  %10519 = vmatpush1.bf16.msra.mxu0 %v10414
  %10520 = vmatprep.subr.bf16.mxu0 %v10482
  %10521 = vmatpush1.bf16.msra.mxu0 %v10480
  %10522 = vmatprep.subr.bf16.mxu0 0
  %10523 = vmatpush1.bf16.msra.mxu0 0
  %10524 = vmatprep.subr.bf16.mxu0 0
  %10525 = vmatpush1.bf16.msra.mxu0 0
  %10526 = vmatprep.subr.bf16.mxu0 0
  %10527 = vmatpush1.bf16.msra.mxu0 0
  %10528 = vmatprep.subr.bf16.mxu0 0
  %10529 = vmatpush1.bf16.msra.mxu0 0
  %10530 = vmatprep.subr.bf16.mxu0 0
  %10531 = vmatpush1.bf16.msra.mxu0 0
  %10532 = vmatprep.subr.bf16.mxu0 0
  %10533 = vmatpush1.bf16.msra.mxu0 0
  %10534 = vmatprep.subr.bf16.mxu0 0
  %10535 = vmatpush1.bf16.msra.mxu0 0
  %10536 = vmatprep.subr.bf16.mxu0 0
  %10537 = vmatpush1.bf16.msra.mxu0 0
  %10538 = vmatprep.subr.bf16.mxu0 0
  %10539 = vmatpush1.bf16.msra.mxu0 0
  %10540 = vmatprep.subr.bf16.mxu0 0
  %10541 = vmatpush1.bf16.msra.mxu0 0
  %10542 = vmatprep.subr.bf16.mxu0 0
  %10543 = vmatpush1.bf16.msra.mxu0 0
  %10544 = vmatprep.subr.bf16.mxu0 0
  %10545 = vmatpush1.bf16.msra.mxu0 0
  %10546 = vmatprep.subr.bf16.mxu0 0
  %10547 = vmatpush1.bf16.msra.mxu0 0
  %10548 = vmatprep.mubr.bf16.mxu0 0
  %10549 = vmatmul.mubr.bf16.gmra.mrb[0].mxu0 %v10478
  %v10550 = vpop.f32.mrb[0].mxu0
  %v10551 = vadd.f32 0.0, %v10550
  %v10552 = vpop.f32.mrb[0].mxu0
  %v10553 = vadd.f32 0.0, %v10552
  %v10554 = vpop.f32.mrb[0].mxu0
  %v10555 = vpop.f32.mrb[0].mxu0
  %10556 = vdwg.mxu0
  %10557 = vmatprep.subr.bf16.mxu0 %v10410
  %10558 = vmatpush1.bf16.msra.mxu0 %v10406
  %10559 = vmatprep.subr.bf16.mxu0 %v10426
  %10560 = vmatpush1.bf16.msra.mxu0 %v10422
  %10561 = vmatprep.subr.bf16.mxu0 %v10486
  %10562 = vmatpush1.bf16.msra.mxu0 %v10484
  %10563 = vmatprep.subr.bf16.mxu0 0
  %10564 = vmatpush1.bf16.msra.mxu0 0
  %10565 = vmatprep.subr.bf16.mxu0 0
  %10566 = vmatpush1.bf16.msra.mxu0 0
  %10567 = vmatprep.subr.bf16.mxu0 0
  %10568 = vmatpush1.bf16.msra.mxu0 0
  %10569 = vmatprep.subr.bf16.mxu0 0
  %10570 = vmatpush1.bf16.msra.mxu0 0
  %10571 = vmatprep.subr.bf16.mxu0 0
  %10572 = vmatpush1.bf16.msra.mxu0 0
  %10573 = vmatprep.subr.bf16.mxu0 0
  %10574 = vmatpush1.bf16.msra.mxu0 0
  %10575 = vmatprep.subr.bf16.mxu0 0
  %10576 = vmatpush1.bf16.msra.mxu0 0
  %10577 = vmatprep.subr.bf16.mxu0 0
  %10578 = vmatpush1.bf16.msra.mxu0 0
  %10579 = vmatprep.subr.bf16.mxu0 0
  %10580 = vmatpush1.bf16.msra.mxu0 0
  %10581 = vmatprep.subr.bf16.mxu0 0
  %10582 = vmatpush1.bf16.msra.mxu0 0
  %10583 = vmatprep.subr.bf16.mxu0 0
  %10584 = vmatpush1.bf16.msra.mxu0 0
  %10585 = vmatprep.subr.bf16.mxu0 0
  %10586 = vmatpush1.bf16.msra.mxu0 0
  %10587 = vmatprep.subr.bf16.mxu0 0
  %10588 = vmatpush1.bf16.msra.mxu0 0
  %10589 = vmatprep.mubr.bf16.mxu0 0
  %10590 = vmatmul.mubr.bf16.gmra.mrb[0].mxu0 %v10478
  %v10591 = vpop.f32.mrb[0].mxu0
  %v10592 = vadd.f32 0.0, %v10591
  %v10593 = vpop.f32.mrb[0].mxu0
  %v10594 = vadd.f32 0.0, %v10593
  %v10595 = vpop.f32.mrb[0].mxu0
  %v10596 = vpop.f32.mrb[0].mxu0
  %10597 = vdwg.mxu0
  %10598 = vmatprep.subr.bf16.mxu0 %v10418
  %10599 = vmatpush1.bf16.msra.mxu0 %v10414
  %10600 = vmatprep.subr.bf16.mxu0 %v10434
  %10601 = vmatpush1.bf16.msra.mxu0 %v10430
  %10602 = vmatprep.subr.bf16.mxu0 %v10490
  %10603 = vmatpush1.bf16.msra.mxu0 %v10488
  %10604 = vmatprep.subr.bf16.mxu0 0
  %10605 = vmatpush1.bf16.msra.mxu0 0
  %10606 = vmatprep.subr.bf16.mxu0 0
  %10607 = vmatpush1.bf16.msra.mxu0 0
  %10608 = vmatprep.subr.bf16.mxu0 0
  %10609 = vmatpush1.bf16.msra.mxu0 0
  %10610 = vmatprep.subr.bf16.mxu0 0
  %10611 = vmatpush1.bf16.msra.mxu0 0
  %10612 = vmatprep.subr.bf16.mxu0 0
  %10613 = vmatpush1.bf16.msra.mxu0 0
  %10614 = vmatprep.subr.bf16.mxu0 0
  %10615 = vmatpush1.bf16.msra.mxu0 0
  %10616 = vmatprep.subr.bf16.mxu0 0
  %10617 = vmatpush1.bf16.msra.mxu0 0
  %10618 = vmatprep.subr.bf16.mxu0 0
  %10619 = vmatpush1.bf16.msra.mxu0 0
  %10620 = vmatprep.subr.bf16.mxu0 0
  %10621 = vmatpush1.bf16.msra.mxu0 0
  %10622 = vmatprep.subr.bf16.mxu0 0
  %10623 = vmatpush1.bf16.msra.mxu0 0
  %10624 = vmatprep.subr.bf16.mxu0 0
  %10625 = vmatpush1.bf16.msra.mxu0 0
  %10626 = vmatprep.subr.bf16.mxu0 0
  %10627 = vmatpush1.bf16.msra.mxu0 0
  %10628 = vmatprep.subr.bf16.mxu0 0
  %10629 = vmatpush1.bf16.msra.mxu0 0
  %10630 = vmatprep.mubr.bf16.mxu0 0
  %10631 = vmatmul.mubr.bf16.gmra.mrb[0].mxu0 %v10478
  %v10632 = vpop.f32.mrb[0].mxu0
  %v10633 = vadd.f32 0.0, %v10632
  %v10634 = vpop.f32.mrb[0].mxu0
  %v10635 = vadd.f32 0.0, %v10634
  %v10636 = vpop.f32.mrb[0].mxu0
  %v10637 = vpop.f32.mrb[0].mxu0
  %10638 = vdwg.mxu0
  %10639 = vmatprep.subr.bf16.mxu0 %v10426
  %10640 = vmatpush1.bf16.msra.mxu0 %v10422
  %10641 = vmatprep.subr.bf16.mxu0 %v10442
  %10642 = vmatpush1.bf16.msra.mxu0 %v10438
  %10643 = vmatprep.subr.bf16.mxu0 %v10494
  %10644 = vmatpush1.bf16.msra.mxu0 %v10492
  %10645 = vmatprep.subr.bf16.mxu0 0
  %10646 = vmatpush1.bf16.msra.mxu0 0
  %10647 = vmatprep.subr.bf16.mxu0 0
  %10648 = vmatpush1.bf16.msra.mxu0 0
  %10649 = vmatprep.subr.bf16.mxu0 0
  %10650 = vmatpush1.bf16.msra.mxu0 0
  %10651 = vmatprep.subr.bf16.mxu0 0
  %10652 = vmatpush1.bf16.msra.mxu0 0
  %10653 = vmatprep.subr.bf16.mxu0 0
  %10654 = vmatpush1.bf16.msra.mxu0 0
  %10655 = vmatprep.subr.bf16.mxu0 0
  %10656 = vmatpush1.bf16.msra.mxu0 0
  %10657 = vmatprep.subr.bf16.mxu0 0
  %10658 = vmatpush1.bf16.msra.mxu0 0
  %10659 = vmatprep.subr.bf16.mxu0 0
  %10660 = vmatpush1.bf16.msra.mxu0 0
  %10661 = vmatprep.subr.bf16.mxu0 0
  %10662 = vmatpush1.bf16.msra.mxu0 0
  %10663 = vmatprep.subr.bf16.mxu0 0
  %10664 = vmatpush1.bf16.msra.mxu0 0
  %10665 = vmatprep.subr.bf16.mxu0 0
  %10666 = vmatpush1.bf16.msra.mxu0 0
  %10667 = vmatprep.subr.bf16.mxu0 0
  %10668 = vmatpush1.bf16.msra.mxu0 0
  %10669 = vmatprep.subr.bf16.mxu0 0
  %10670 = vmatpush1.bf16.msra.mxu0 0
  %10671 = vmatprep.mubr.bf16.mxu0 0
  %10672 = vmatmul.mubr.bf16.gmra.mrb[0].mxu0 %v10478
  %v10673 = vpop.f32.mrb[0].mxu0
  %v10674 = vadd.f32 0.0, %v10673
  %v10675 = vpop.f32.mrb[0].mxu0
  %v10676 = vadd.f32 0.0, %v10675
  %v10677 = vpop.f32.mrb[0].mxu0
  %v10678 = vpop.f32.mrb[0].mxu0
  %10679 = vdwg.mxu0
  %10680 = vmatprep.subr.bf16.mxu0 %v10434
  %10681 = vmatpush1.bf16.msra.mxu0 %v10430
  %10682 = vmatprep.subr.bf16.mxu0 %v10450
  %10683 = vmatpush1.bf16.msra.mxu0 %v10446
  %10684 = vmatprep.subr.bf16.mxu0 %v10498
  %10685 = vmatpush1.bf16.msra.mxu0 %v10496
  %10686 = vmatprep.subr.bf16.mxu0 0
  %10687 = vmatpush1.bf16.msra.mxu0 0
  %10688 = vmatprep.subr.bf16.mxu0 0
  %10689 = vmatpush1.bf16.msra.mxu0 0
  %10690 = vmatprep.subr.bf16.mxu0 0
  %10691 = vmatpush1.bf16.msra.mxu0 0
  %10692 = vmatprep.subr.bf16.mxu0 0
  %10693 = vmatpush1.bf16.msra.mxu0 0
  %10694 = vmatprep.subr.bf16.mxu0 0
  %10695 = vmatpush1.bf16.msra.mxu0 0
  %10696 = vmatprep.subr.bf16.mxu0 0
  %10697 = vmatpush1.bf16.msra.mxu0 0
  %10698 = vmatprep.subr.bf16.mxu0 0
  %10699 = vmatpush1.bf16.msra.mxu0 0
  %10700 = vmatprep.subr.bf16.mxu0 0
  %10701 = vmatpush1.bf16.msra.mxu0 0
  %10702 = vmatprep.subr.bf16.mxu0 0
  %10703 = vmatpush1.bf16.msra.mxu0 0
  %10704 = vmatprep.subr.bf16.mxu0 0
  %10705 = vmatpush1.bf16.msra.mxu0 0
  %10706 = vmatprep.subr.bf16.mxu0 0
  %10707 = vmatpush1.bf16.msra.mxu0 0
  %10708 = vmatprep.subr.bf16.mxu0 0
  %10709 = vmatpush1.bf16.msra.mxu0 0
  %10710 = vmatprep.subr.bf16.mxu0 0
  %10711 = vmatpush1.bf16.msra.mxu0 0
  %10712 = vmatprep.mubr.bf16.mxu0 0
  %10713 = vmatmul.mubr.bf16.gmra.mrb[0].mxu0 %v10478
  %v10714 = vpop.f32.mrb[0].mxu0
  %v10715 = vadd.f32 0.0, %v10714
  %v10716 = vpop.f32.mrb[0].mxu0
  %v10717 = vadd.f32 0.0, %v10716
  %v10718 = vpop.f32.mrb[0].mxu0
  %v10719 = vpop.f32.mrb[0].mxu0
  %10720 = vdwg.mxu0
  %10721 = vmatprep.subr.bf16.mxu0 %v10442
  %10722 = vmatpush1.bf16.msra.mxu0 %v10438
  %10723 = vmatprep.subr.bf16.mxu0 %v10458
  %10724 = vmatpush1.bf16.msra.mxu0 %v10454
  %10725 = vmatprep.subr.bf16.mxu0 %v10502
  %10726 = vmatpush1.bf16.msra.mxu0 %v10500
  %10727 = vmatprep.subr.bf16.mxu0 0
  %10728 = vmatpush1.bf16.msra.mxu0 0
  %10729 = vmatprep.subr.bf16.mxu0 0
  %10730 = vmatpush1.bf16.msra.mxu0 0
  %10731 = vmatprep.subr.bf16.mxu0 0
  %10732 = vmatpush1.bf16.msra.mxu0 0
  %10733 = vmatprep.subr.bf16.mxu0 0
  %10734 = vmatpush1.bf16.msra.mxu0 0
  %10735 = vmatprep.subr.bf16.mxu0 0
  %10736 = vmatpush1.bf16.msra.mxu0 0
  %10737 = vmatprep.subr.bf16.mxu0 0
  %10738 = vmatpush1.bf16.msra.mxu0 0
  %10739 = vmatprep.subr.bf16.mxu0 0
  %10740 = vmatpush1.bf16.msra.mxu0 0
  %10741 = vmatprep.subr.bf16.mxu0 0
  %10742 = vmatpush1.bf16.msra.mxu0 0
  %10743 = vmatprep.subr.bf16.mxu0 0
  %10744 = vmatpush1.bf16.msra.mxu0 0
  %10745 = vmatprep.subr.bf16.mxu0 0
  %10746 = vmatpush1.bf16.msra.mxu0 0
  %10747 = vmatprep.subr.bf16.mxu0 0
  %10748 = vmatpush1.bf16.msra.mxu0 0
  %10749 = vmatprep.subr.bf16.mxu0 0
  %10750 = vmatpush1.bf16.msra.mxu0 0
  %10751 = vmatprep.subr.bf16.mxu0 0
  %10752 = vmatpush1.bf16.msra.mxu0 0
  %10753 = vmatprep.mubr.bf16.mxu0 0
  %10754 = vmatmul.mubr.bf16.gmra.mrb[0].mxu0 %v10478
  %v10755 = vpop.f32.mrb[0].mxu0
  %v10756 = vadd.f32 0.0, %v10755
  %v10757 = vpop.f32.mrb[0].mxu0
  %v10758 = vadd.f32 0.0, %v10757
  %v10759 = vpop.f32.mrb[0].mxu0
  %v10760 = vpop.f32.mrb[0].mxu0
  %10761 = vdwg.mxu0
  %10762 = vmatprep.subr.bf16.mxu0 %v10450
  %10763 = vmatpush1.bf16.msra.mxu0 %v10446
  %10764 = vmatprep.subr.bf16.mxu0 %v10466
  %10765 = vmatpush1.bf16.msra.mxu0 %v10462
  %10766 = vmatprep.subr.bf16.mxu0 %v10508
  %10767 = vmatpush1.bf16.msra.mxu0 %v10505
  %10768 = vmatprep.subr.bf16.mxu0 0
  %10769 = vmatpush1.bf16.msra.mxu0 0
  %10770 = vmatprep.subr.bf16.mxu0 0
  %10771 = vmatpush1.bf16.msra.mxu0 0
  %10772 = vmatprep.subr.bf16.mxu0 0
  %10773 = vmatpush1.bf16.msra.mxu0 0
  %10774 = vmatprep.subr.bf16.mxu0 0
  %10775 = vmatpush1.bf16.msra.mxu0 0
  %10776 = vmatprep.subr.bf16.mxu0 0
  %10777 = vmatpush1.bf16.msra.mxu0 0
  %10778 = vmatprep.subr.bf16.mxu0 0
  %10779 = vmatpush1.bf16.msra.mxu0 0
  %10780 = vmatprep.subr.bf16.mxu0 0
  %10781 = vmatpush1.bf16.msra.mxu0 0
  %10782 = vmatprep.subr.bf16.mxu0 0
  %10783 = vmatpush1.bf16.msra.mxu0 0
  %10784 = vmatprep.subr.bf16.mxu0 0
  %10785 = vmatpush1.bf16.msra.mxu0 0
  %10786 = vmatprep.subr.bf16.mxu0 0
  %10787 = vmatpush1.bf16.msra.mxu0 0
  %10788 = vmatprep.subr.bf16.mxu0 0
  %10789 = vmatpush1.bf16.msra.mxu0 0
  %10790 = vmatprep.subr.bf16.mxu0 0
  %10791 = vmatpush1.bf16.msra.mxu0 0
  %10792 = vmatprep.subr.bf16.mxu0 0
  %10793 = vmatpush1.bf16.msra.mxu0 0
  %10794 = vmatprep.mubr.bf16.mxu0 0
  %10795 = vmatmul.mubr.bf16.gmra.mrb[0].mxu0 %v10478
  %v10796 = vpop.f32.mrb[0].mxu0
  %v10797 = vadd.f32 0.0, %v10796
  %v10798 = vpop.f32.mrb[0].mxu0
  %v10799 = vadd.f32 0.0, %v10798
  %v10800 = vpop.f32.mrb[0].mxu0
  %v10801 = vpop.f32.mrb[0].mxu0
  %10802 = vdwg.mxu0
  %10803 = vmatprep.subr.bf16.mxu0 %v10458
  %10804 = vmatpush1.bf16.msra.mxu0 %v10454
  %10805 = vmatprep.subr.bf16.mxu0 %v10474
  %10806 = vmatpush1.bf16.msra.mxu0 %v10470
  %10807 = vmatprep.subr.bf16.mxu0 %v10514
  %10808 = vmatpush1.bf16.msra.mxu0 %v10511
  %10809 = vmatprep.subr.bf16.mxu0 0
  %10810 = vmatpush1.bf16.msra.mxu0 0
  %10811 = vmatprep.subr.bf16.mxu0 0
  %10812 = vmatpush1.bf16.msra.mxu0 0
  %10813 = vmatprep.subr.bf16.mxu0 0
  %10814 = vmatpush1.bf16.msra.mxu0 0
  %10815 = vmatprep.subr.bf16.mxu0 0
  %10816 = vmatpush1.bf16.msra.mxu0 0
  %10817 = vmatprep.subr.bf16.mxu0 0
  %10818 = vmatpush1.bf16.msra.mxu0 0
  %10819 = vmatprep.subr.bf16.mxu0 0
  %10820 = vmatpush1.bf16.msra.mxu0 0
  %10821 = vmatprep.subr.bf16.mxu0 0
  %10822 = vmatpush1.bf16.msra.mxu0 0
  %10823 = vmatprep.subr.bf16.mxu0 0
  %10824 = vmatpush1.bf16.msra.mxu0 0
  %10825 = vmatprep.subr.bf16.mxu0 0
  %10826 = vmatpush1.bf16.msra.mxu0 0
  %10827 = vmatprep.subr.bf16.mxu0 0
  %10828 = vmatpush1.bf16.msra.mxu0 0
  %10829 = vmatprep.subr.bf16.mxu0 0
  %10830 = vmatpush1.bf16.msra.mxu0 0
  %10831 = vmatprep.subr.bf16.mxu0 0
  %10832 = vmatpush1.bf16.msra.mxu0 0
  %10833 = vmatprep.subr.bf16.mxu0 0
  %10834 = vmatpush1.bf16.msra.mxu0 0
  %10835 = vmatprep.mubr.bf16.mxu0 0
  %10836 = vmatmul.mubr.bf16.gmra.mrb[0].mxu0 %v10478
  %v10837 = vpop.f32.mrb[0].mxu0
  %v10838 = vadd.f32 0.0, %v10837
  %v10839 = vpop.f32.mrb[0].mxu0
  %v10840 = vadd.f32 0.0, %v10839
  %v10841 = vpop.f32.mrb[0].mxu0
  %v10842 = vpop.f32.mrb[0].mxu0
  %10843 = vdwg.mxu0
  %v10846 = vrot.slane %v10592, 6
  %v10847 = vrot.slane %v10594, 6
  %v10852 = vrot.slane %v10633, 4
  %v10853 = vrot.slane %v10635, 4
  %v10858 = vrot.slane %v10674, 2
  %v10859 = vrot.slane %v10676, 2
  %v10864 = vrot.slane %v10756, 6
  %v10865 = vrot.slane %v10758, 6
  %v10870 = vrot.slane %v10797, 4
  %v10871 = vrot.slane %v10799, 4
  %v10876 = vrot.slane %v10838, 2
  %v10877 = vrot.slane %v10840, 2
  %vm10880 = vcmask 1041408
  %v10881 = vsel %vm10880, %v10551, %v10846
  %v10882 = vsel %vm10880, %v10553, %v10847
  %vm10883 = vcmask 1042432
  %v10884 = vsel %vm10883, %v10881, %v10846
  %v10885 = vsel %vm10883, %v10882, %v10847
  %v10886 = vsel %vm10395, %v10884, %v10852
  %v10887 = vsel %vm10395, %v10885, %v10853
  %vm10888 = vcmask 1044480
  %v10889 = vsel %vm10888, %v10886, %v10852
  %v10890 = vsel %vm10888, %v10887, %v10853
  %vm10891 = vcmask 1045504
  %v10892 = vsel %vm10891, %v10889, %v10858
  %v10893 = vsel %vm10891, %v10890, %v10859
  %vm10894 = vcmask 1046528
  %v10895 = vsel %vm10894, %v10892, %v10858
  %v10896 = vsel %vm10894, %v10893, %v10859
  %v10897 = vsel %vm10880, %v10715, %v10864
  %v10898 = vsel %vm10880, %v10717, %v10865
  %v10899 = vsel %vm10883, %v10897, %v10864
  %v10900 = vsel %vm10883, %v10898, %v10865
  %v10901 = vsel %vm10395, %v10899, %v10870
  %v10902 = vsel %vm10395, %v10900, %v10871
  %v10903 = vsel %vm10888, %v10901, %v10870
  %v10904 = vsel %vm10888, %v10902, %v10871
  %v10905 = vsel %vm10891, %v10903, %v10876
  %v10906 = vsel %vm10891, %v10904, %v10877
  %v10907 = vsel %vm10894, %v10905, %v10876
  %v10908 = vsel %vm10894, %v10906, %v10877
  %v10909 = vmul.f32 %v10895, %v92
  %v10910 = vmul.f32 %v10896, %v93
  %v10911 = vmul.f32 %v10907, %v92
  %v10912 = vmul.f32 %v10908, %v93
  %v10913 = vadd.f32 %v10909, %v10910
  %10914 = vadd.xlane.f32.xlu0 %v10913
  %v10915 = vpop.xlane.xlu0 %10914
  %v10916 = vadd.f32 %v10911, %v10912
  %10917 = vadd.xlane.f32.xlu0 %v10916
  %v10918 = vpop.xlane.xlu0 %10917
  %v10919 = vadd.f32 %v10915, %v10918
  %v10920 = vrot.slane %v10919, 4
  %v10921 = vadd.f32 %v10919, %v10920
  %v10922 = vrot.slane %v10921, 2
  %v10923 = vadd.f32 %v10921, %v10922
  %v10924 = vrot.slane %v10923, 1
  %v10925 = vadd.f32 %v10923, %v10924
  %v10926 = vmul.f32 %v10909, %v10895
  %v10927 = vmul.f32 %v10910, %v10896
  %v10928 = vmul.f32 %v10911, %v10907
  %v10929 = vmul.f32 %v10912, %v10908
  %v10930 = vadd.f32 %v10926, %v10927
  %10931 = vadd.xlane.f32.xlu0 %v10930
  %v10932 = vpop.xlane.xlu0 %10931
  %v10933 = vadd.f32 %v10928, %v10929
  %10934 = vadd.xlane.f32.xlu0 %v10933
  %v10935 = vpop.xlane.xlu0 %10934
  %v10936 = vadd.f32 %v10932, %v10935
  %v10937 = vrot.slane %v10936, 4
  %v10938 = vadd.f32 %v10936, %v10937
  %v10939 = vrot.slane %v10938, 2
  %v10940 = vadd.f32 %v10938, %v10939
  %v10941 = vrot.slane %v10940, 1
  %v10942 = vadd.f32 %v10940, %v10941
  %v10943 = vrcp.pop 4000.0
  %v10944 = vmul.f32 %v10925, %v10943
  %v10945 = vmul.f32 %v10942, %v10943
  %v10946 = vmul.f32 %v10944, %v10944
  %v10947 = vsub.f32 %v10945, %v10946
  %v10948 = vadd.f32 %v10947, 1e-05
  %v10949 = vrsqrt.pop %v10948
  %v10950 = vld [vmem:[#allocation2] sm:$0x1]
  %v10951 = vmul.f32 %v10949, %v10950
  %v10952 = vsub.f32 %v10895, %v10944
  %v10953 = vsub.f32 %v10896, %v10944
  %v10954 = vsub.f32 %v10907, %v10944
  %v10955 = vsub.f32 %v10908, %v10944
  %v10957 = vlaneseq
  %v10958 = vshrl.u32 %v10957, 7
  %v10959 = vsub.s32 0, %v10958
  %v10960 = vrot.slane %v10951, %v10959
  %10961 = vset.pattern.permute.xlu0 0
  %10962 = vperm.xlu0 %10961, %v10960
  %v10963 = vpop.permute.xlu0 %10962
  %v10965 = vmul.f32 %v10952, %v10963
  %v10966 = vmul.f32 %v10953, %v10963
  %v10967 = vmul.f32 %v10954, %v10963
  %v10968 = vmul.f32 %v10955, %v10963
  %v10969 = vld [vmem:[#allocation3] sm:$0x1]
  %v10971 = vlaneseq
  %v10972 = vshrl.u32 %v10971, 7
  %v10973 = vsub.s32 0, %v10972
  %v10974 = vrot.slane %v10969, %v10973
  %10975 = vset.pattern.permute.xlu0 0
  %10976 = vperm.xlu0 %10975, %v10974
  %v10977 = vpop.permute.xlu0 %10976
  %v10979 = vadd.f32 %v10965, %v10977
  %v10980 = vadd.f32 %v10966, %v10977
  %v10981 = vadd.f32 %v10967, %v10977
  %v10982 = vadd.f32 %v10968, %v10977
  %v10983 = vtanh.pop %v10979
  %v10984 = vtanh.pop %v10980
  %v10985 = vtanh.pop %v10981
  %v10986 = vtanh.pop %v10982
  %10987 = vst [vmem:[%s17] sm:$0xff] %v10983
  %10988 = vst [vmem:[%s17 + $0x8] sm:$0xff] %v10984
  %10989 = vst [vmem:[%s17 + $0x10] sm:$0xff] %v10985
  %10990 = vst [vmem:[%s17 + $0x18] sm:$0xff] %v10986
  // Predicated region
  $region70: #{generator_forward.1} parent=0 // pred_check
    _
  $region71: #{generator_forward.1} parent=0 // pred_check_branch
    %10992 = sbr.rel (0) target = $region73
  $region72: #{generator_forward.1} parent=0 // pred_region
    _
  $region73: #{generator_forward.1} parent=0 // pred_fallthru
    _
  // Predicated region
  $region74: #{generator_forward.1} parent=0 // pred_check
    _
  $region75: #{generator_forward.1} parent=0 // pred_check_branch
    %10994 = sbr.rel (0) target = $region77
  $region76: #{generator_forward.1} parent=0 // pred_region
    _
  $region77: #{generator_forward.1} parent=0 // pred_fallthru
    _

</llo_original>
